<compile_context>
chip_gen: v7x
topology: tpu7x:2x2x1
jax: 0.10.0
libtpu: 0.0.40
codegen_flags: <defaults>
</compile_context>

<pallas_src>
import functools

import numpy as np
import jax
import jax.numpy as jnp
from jax.experimental import pallas as pl
from jax.experimental.pallas import tpu as pltpu


# ----------------------------------------------------------------------------
# helpers used inside kernels
# ----------------------------------------------------------------------------
def _layernorm(x, g, b, eps=1e-5):
    mu = jnp.mean(x, axis=-1, keepdims=True)
    var = jnp.mean((x - mu) ** 2, axis=-1, keepdims=True)
    return (x - mu) * jax.lax.rsqrt(var + eps) * g + b


def _erf_f32(x):
    # Abramowitz & Stegun 7.1.26 polynomial (|err| <= 1.5e-7, f32-accurate).
    # Implemented here so the exact (erf) GELU of nn.GELU() can be fused
    # in-kernel without relying on an erf primitive lowering in Mosaic.
    t = 1.0 / (1.0 + 0.3275911 * jnp.abs(x))
    poly = t * (0.254829592 + t * (-0.284496736 + t * (1.421413741
               + t * (-1.453152027 + t * 1.061405429))))
    y = 1.0 - poly * jnp.exp(-x * x)
    return jnp.where(x >= 0.0, y, -y)


def _gelu_exact(x):
    return 0.5 * x * (1.0 + _erf_f32(x * 0.7071067811865476))


def _pick_row_tile(m):
    """Largest row tile (<=256, multiple of 8, divisor of m) that still leaves
    >= 2 grid steps, so the grid has a 'parallel' axis (pipelining + megacore)
    and per-tile VMEM stays tiny (v7x has only 64 MiB physical VMEM)."""
    for t in (256, 128, 64, 32, 16, 8):
        if m % t == 0 and m // t >= 2:
            return t
    return m


_PARALLEL = pltpu.CompilerParams(dimension_semantics=("parallel",))


# ----------------------------------------------------------------------------
# Pallas kernels
# ----------------------------------------------------------------------------
def _conv_in_ln_kernel(p_ref, w_ref, b_ref, g_ref, beta_ref, o_ref):
    # im2col rows @ conv weight + conv bias, then the module's in_ln — fused.
    y = jnp.dot(p_ref[...], w_ref[...], preferred_element_type=jnp.float32) + b_ref[...]
    o_ref[...] = _layernorm(y, g_ref[...], beta_ref[...])


def _ln_matmul_kernel(x_ref, g_ref, b_ref, w_ref, wb_ref, o_ref):
    # LayerNorm prologue fused with a matmul (norm1 + qkv projection).
    xn = _layernorm(x_ref[...], g_ref[...], b_ref[...])
    o_ref[...] = jnp.dot(xn, w_ref[...], preferred_element_type=jnp.float32) + wb_ref[...]


def _matmul_bias_res_kernel(x_ref, w_ref, b_ref, r_ref, o_ref):
    # attention output projection + bias + residual add.
    o_ref[...] = (jnp.dot(x_ref[...], w_ref[...], preferred_element_type=jnp.float32)
                  + b_ref[...] + r_ref[...])


def _mlp_kernel(x_ref, g_ref, b_ref, w1_ref, b1_ref, w2_ref, b2_ref,
                og_ref, ob_ref, o_ref, *, apply_out_ln):
    # norm2 -> fc1 -> GELU -> fc2 -> +residual (-> optional final out_ln).
    # The hidden activations (tile_M, 3C) never leave VMEM / vregs.
    x = x_ref[...]
    xn = _layernorm(x, g_ref[...], b_ref[...])
    h = jnp.dot(xn, w1_ref[...], preferred_element_type=jnp.float32) + b1_ref[...]
    h = _gelu_exact(h)
    y = x + jnp.dot(h, w2_ref[...], preferred_element_type=jnp.float32) + b2_ref[...]
    if apply_out_ln:
        y = _layernorm(y, og_ref[...], ob_ref[...])
    o_ref[...] = y


def _window_attn_kernel(q_ref, k_ref, v_ref, bias_ref, o_ref, *, n_tok, head_dim):
    # Lane-dense window attention: G = B*nW*heads sits on the 128-lane (last)
    # axis, tokens / head_dim are tiny leading axes.
    #   q: (N, d, G)  k: (d, N, G)  v: (N, d, G)  bias: (N, N, G)  o: (N, d, G)
    # Scores and P@V are whole-tile VPU ops (no per-pair scalars); the softmax
    # (exp + approximate reciprocal on the EUP) runs once over the full tile.
    # The d**-0.5 scale is already folded into q via the qkv weights.
    # TODO(synk): for large windows (N >= 49) switch to an MXU einsum form with
    # G tiled over a parallel grid axis.
    q = q_ref[...]
    k = k_ref[...]
    v = v_ref[...]
    s = bias_ref[...]                                   # rel-pos (+ shift mask) bias
    for dd in range(head_dim):                          # unrolled: head_dim is tiny
        s = s + q[:, dd:dd + 1, :] * k[dd:dd + 1, :, :]
    m = jnp.max(s, axis=1, keepdims=True)
    p = jnp.exp(s - m)
    inv = pl.reciprocal(jnp.sum(p, axis=1, keepdims=True), approx=True)
    p = p * inv
    acc = p[:, 0:1, :] * v[0:1, :, :]
    for mm in range(1, n_tok):                          # unrolled: n_tok is tiny
        acc = acc + p[:, mm:mm + 1, :] * v[mm:mm + 1, :, :]
    o_ref[...] = acc


def _proj_out_fuse_kernel(p_ref, w_ref, b_ref, i1_ref, i2_ref, o_ref, lm_ref):
    # proj_out conv (as matmul) + bias, channel softmax, LM = softmax(p / 0.2),
    # and the final blend I = I1*M1 + I2*M2 — fused per row tile.
    z = jnp.dot(p_ref[...], w_ref[...], preferred_element_type=jnp.float32) + b_ref[...]
    z = z - jnp.max(z, axis=-1, keepdims=True)
    e = jnp.exp(z)
    probs = e / jnp.sum(e, axis=-1, keepdims=True)          # F.softmax(I, dim=1)
    zl = probs * 5.0                                        # I / 0.2
    zl = zl - jnp.max(zl, axis=-1, keepdims=True)
    el = jnp.exp(zl)
    lm_ref[...] = el / jnp.sum(el, axis=-1, keepdims=True)  # F.softmax(I/0.2, dim=1)
    m1 = probs[:, 1:2]
    m2 = probs[:, 0:1]
    o_ref[...] = i1_ref[...] * m1 + i2_ref[...] * m2


# ----------------------------------------------------------------------------
# pallas_call wrappers (row-tiled, parallel grid)
# ----------------------------------------------------------------------------
def _conv_in_ln(patches, w, b, g, beta):
    M, K = patches.shape
    C = w.shape[1]
    bm = _pick_row_tile(M)
    return pl.pallas_call(
        _conv_in_ln_kernel,
        grid=(M // bm,),
        in_specs=[
            pl.BlockSpec((bm, K), lambda i: (i, 0)),
            pl.BlockSpec((K, C), lambda i: (0, 0)),
            pl.BlockSpec((1, C), lambda i: (0, 0)),
            pl.BlockSpec((1, C), lambda i: (0, 0)),
            pl.BlockSpec((1, C), lambda i: (0, 0)),
        ],
        out_specs=pl.BlockSpec((bm, C), lambda i: (i, 0)),
        out_shape=jax.ShapeDtypeStruct((M, C), jnp.float32),
        compiler_params=_PARALLEL,
    )(patches, w, b, g, beta)


def _ln_matmul(x, g, b, w, wb):
    M, C = x.shape
    N = w.shape[1]
    bm = _pick_row_tile(M)
    return pl.pallas_call(
        _ln_matmul_kernel,
        grid=(M // bm,),
        in_specs=[
            pl.BlockSpec((bm, C), lambda i: (i, 0)),
            pl.BlockSpec((1, C), lambda i: (0, 0)),
            pl.BlockSpec((1, C), lambda i: (0, 0)),
            pl.BlockSpec((C, N), lambda i: (0, 0)),
            pl.BlockSpec((1, N), lambda i: (0, 0)),
        ],
        out_specs=pl.BlockSpec((bm, N), lambda i: (i, 0)),
        out_shape=jax.ShapeDtypeStruct((M, N), jnp.float32),
        compiler_params=_PARALLEL,
    )(x, g, b, w, wb)


def _matmul_bias_res(x, w, b, r):
    M, C = x.shape
    N = w.shape[1]
    bm = _pick_row_tile(M)
    return pl.pallas_call(
        _matmul_bias_res_kernel,
        grid=(M // bm,),
        in_specs=[
            pl.BlockSpec((bm, C), lambda i: (i, 0)),
            pl.BlockSpec((C, N), lambda i: (0, 0)),
            pl.BlockSpec((1, N), lambda i: (0, 0)),
            pl.BlockSpec((bm, N), lambda i: (i, 0)),
        ],
        out_specs=pl.BlockSpec((bm, N), lambda i: (i, 0)),
        out_shape=jax.ShapeDtypeStruct((M, N), jnp.float32),
        compiler_params=_PARALLEL,
    )(x, w, b, r)


def _mlp(x, g, b, w1, b1, w2, b2, og, ob, apply_out_ln):
    M, C = x.shape
    Hd = w1.shape[1]
    bm = _pick_row_tile(M)
    kern = functools.partial(_mlp_kernel, apply_out_ln=apply_out_ln)
    return pl.pallas_call(
        kern,
        grid=(M // bm,),
        in_specs=[
            pl.BlockSpec((bm, C), lambda i: (i, 0)),
            pl.BlockSpec((1, C), lambda i: (0, 0)),
            pl.BlockSpec((1, C), lambda i: (0, 0)),
            pl.BlockSpec((C, Hd), lambda i: (0, 0)),
            pl.BlockSpec((1, Hd), lambda i: (0, 0)),
            pl.BlockSpec((Hd, C), lambda i: (0, 0)),
            pl.BlockSpec((1, C), lambda i: (0, 0)),
            pl.BlockSpec((1, C), lambda i: (0, 0)),
            pl.BlockSpec((1, C), lambda i: (0, 0)),
        ],
        out_specs=pl.BlockSpec((bm, C), lambda i: (i, 0)),
        out_shape=jax.ShapeDtypeStruct((M, C), jnp.float32),
        compiler_params=_PARALLEL,
    )(x, g, b, w1, b1, w2, b2, og, ob)


def _window_attention(q, k, v, bias):
    N, d, G = q.shape
    kern = functools.partial(_window_attn_kernel, n_tok=N, head_dim=d)
    return pl.pallas_call(
        kern,
        grid=(1,),
        in_specs=[
            pl.BlockSpec((N, d, G), lambda i: (0, 0, 0)),
            pl.BlockSpec((d, N, G), lambda i: (0, 0, 0)),
            pl.BlockSpec((N, d, G), lambda i: (0, 0, 0)),
            pl.BlockSpec((N, N, G), lambda i: (0, 0, 0)),
        ],
        out_specs=pl.BlockSpec((N, d, G), lambda i: (0, 0, 0)),
        out_shape=jax.ShapeDtypeStruct((N, d, G), jnp.float32),
        compiler_params=pltpu.CompilerParams(dimension_semantics=("arbitrary",)),
    )(q, k, v, bias)


def _proj_out_fuse(patches, w, b, i1_tok, i2_tok):
    M, K = patches.shape
    C = i1_tok.shape[1]
    bm = _pick_row_tile(M)
    return pl.pallas_call(
        _proj_out_fuse_kernel,
        grid=(M // bm,),
        in_specs=[
            pl.BlockSpec((bm, K), lambda i: (i, 0)),
            pl.BlockSpec((K, 2), lambda i: (0, 0)),
            pl.BlockSpec((1, 2), lambda i: (0, 0)),
            pl.BlockSpec((bm, C), lambda i: (i, 0)),
            pl.BlockSpec((bm, C), lambda i: (i, 0)),
        ],
        out_specs=[
            pl.BlockSpec((bm, C), lambda i: (i, 0)),
            pl.BlockSpec((bm, 2), lambda i: (i, 0)),
        ],
        out_shape=(
            jax.ShapeDtypeStruct((M, C), jnp.float32),
            jax.ShapeDtypeStruct((M, 2), jnp.float32),
        ),
        compiler_params=_PARALLEL,
    )(patches, w, b, i1_tok, i2_tok)


# ----------------------------------------------------------------------------
# glue: im2col / window bookkeeping / masks (plain JAX + numpy, trace-time)
# ----------------------------------------------------------------------------
def _im2col_reflect3x3(x_nhwc):
    B, H, W, C = x_nhwc.shape
    xp = jnp.pad(x_nhwc, ((0, 0), (1, 1), (1, 1), (0, 0)), mode="reflect")
    cols = [xp[:, dy:dy + H, dx:dx + W, :] for dy in range(3) for dx in range(3)]
    return jnp.stack(cols, axis=3).reshape(B * H * W, 9 * C)
    # TODO(synk): for large images on v5e, do the 9 shifted matmuls in-kernel
    # from a VMEM-resident padded tile instead of materializing 9x im2col rows.


def window_partition(x, ws):
    B, H, W, C = x.shape
    x = x.reshape(B, H // ws, ws, W // ws, ws, C)
    x = jnp.transpose(x, (0, 1, 3, 2, 4, 5))
    return x.reshape(-1, ws * ws, C)


def window_reverse(windows, ws, H, W, B):
    C = windows.shape[-1]
    x = windows.reshape(B, H // ws, W // ws, ws, ws, C)
    x = jnp.transpose(x, (0, 1, 3, 2, 4, 5))
    return x.reshape(B, H, W, C)


def relative_position_index(ws):
    coords = np.stack(np.meshgrid(np.arange(ws), np.arange(ws), indexing="ij"))
    cf = coords.reshape(2, -1)
    rc = (cf[:, :, None] - cf[:, None, :]).transpose(1, 2, 0).astype(np.int64)
    rc[:, :, 0] += ws - 1
    rc[:, :, 1] += ws - 1
    rc[:, :, 0] *= 2 * ws - 1
    return rc.sum(-1)                                   # (ws*ws, ws*ws)


def calculate_mask(H, W, ws, shift):
    img = np.zeros((1, H, W, 1), np.float32)
    cnt = 0
    for hs in (slice(0, -ws), slice(-ws, -shift), slice(-shift, None)):
        for wsl in (slice(0, -ws), slice(-ws, -shift), slice(-shift, None)):
            img[:, hs, wsl, :] = cnt
            cnt += 1
    mw = (img.reshape(1, H // ws, ws, W // ws, ws, 1)
             .transpose(0, 1, 3, 2, 4, 5).reshape(-1, ws * ws))
    am = mw[:, None, :] - mw[:, :, None]
    am = np.where(am != 0, -100.0, 0.0).astype(np.float32)
    return jnp.asarray(am)                              # (nW, N, N)


def _attn_bias(rpb, ws, heads, B, H, W, shift):
    """Pre-broadcast (rel-pos bias [+ shifted-window mask]) to the lane-dense
    (N, N, G) layout used by the attention kernel (G = B*nW*heads).  For
    shift == 0 no zero-mask is built — only the rel-pos bias is broadcast."""
    N = ws * ws
    nW = (H // ws) * (W // ws)
    idx = relative_position_index(ws).reshape(-1)
    rel = rpb[idx].reshape(N, N, heads)
    rel = jnp.transpose(rel, (2, 0, 1))                 # (heads, N, N)
    if shift > 0:
        mask = calculate_mask(H, W, ws, shift)          # (nW, N, N)
        bias = rel[None, None] + mask[None, :, None]    # (1, nW, heads, N, N)
    else:
        bias = jnp.broadcast_to(rel[None, None], (1, nW, heads, N, N))
    bias = jnp.broadcast_to(bias, (B, nW, heads, N, N)).reshape(B * nW * heads, N, N)
    return jnp.transpose(bias, (1, 2, 0)).astype(jnp.float32)   # (N, N, G)


# ----------------------------------------------------------------------------
# forward pass
# ----------------------------------------------------------------------------
def _swin_block(x, bp, B, H, W, C, ws, heads, shift, out_g, out_b, apply_out_ln):
    M = B * H * W
    d = C // heads
    N = ws * ws
    B_ = B * (H // ws) * (W // ws)
    G = B_ * heads

    # norm1 + qkv (attention scale already folded into the q columns)
    qkv = _ln_matmul(x, bp["norm1_g"], bp["norm1_b"], bp["qkv_w"], bp["qkv_b"])

    t = qkv.reshape(B, H, W, 3 * C)
    if shift > 0:
        t = jnp.roll(t, shift=(-shift, -shift), axis=(1, 2))
    t = window_partition(t, ws).reshape(B_, N, 3, heads, d)
    q = jnp.transpose(t[:, :, 0], (1, 3, 0, 2)).reshape(N, d, G)   # (N, d, G)
    k = jnp.transpose(t[:, :, 1], (3, 1, 0, 2)).reshape(d, N, G)   # (d, N, G)
    v = jnp.transpose(t[:, :, 2], (1, 3, 0, 2)).reshape(N, d, G)   # (N, d, G)

    o = _window_attention(q, k, v, bp["attn_bias"])                # (N, d, G)
    o = jnp.transpose(o.reshape(N, d, B_, heads), (2, 0, 3, 1)).reshape(B_, N, C)
    o = window_reverse(o, ws, H, W, B)
    if shift > 0:
        o = jnp.roll(o, shift=(shift, shift), axis=(1, 2))
    attn_tok = o.reshape(M, C)

    # proj + bias + residual, then norm2 + MLP + residual (+ out_ln on last block)
    x = _matmul_bias_res(attn_tok, bp["proj_w"], bp["proj_b"], x)
    x = _mlp(x, bp["norm2_g"], bp["norm2_b"], bp["fc1_w"], bp["fc1_b"],
             bp["fc2_w"], bp["fc2_b"], out_g, out_b, apply_out_ln)
    return x


def mask_fuse_forward(I1, I2, prep, *, window_size, num_heads):
    """Mask_Fuse.forward(I1, I2, gs=False): returns (fused image, LM[:, 1:2])."""
    B, C, H, W = I1.shape
    ws = window_size
    M = B * H * W

    # proj_in(pad(I1 - I2)) fused with in_ln
    diff_nhwc = jnp.transpose(I1 - I2, (0, 2, 3, 1))
    patches = _im2col_reflect3x3(diff_nhwc)
    x = _conv_in_ln(patches, prep["in_w"], prep["in_b"],
                    prep["in_ln_g"], prep["in_ln_b"])              # (M, C) tokens

    depth = len(prep["blocks"])
    for i, bp in enumerate(prep["blocks"]):
        shift = 0 if i % 2 == 0 else ws // 2
        x = _swin_block(x, bp, B, H, W, C, ws, num_heads, shift,
                        prep["out_ln_g"], prep["out_ln_b"],
                        apply_out_ln=(i == depth - 1))

    # proj_out(pad(.)) + softmax + LM + blend, fused in one kernel
    xh = x.reshape(B, H, W, C)
    patches2 = _im2col_reflect3x3(xh)
    I1_tok = jnp.transpose(I1, (0, 2, 3, 1)).reshape(M, C)
    I2_tok = jnp.transpose(I2, (0, 2, 3, 1)).reshape(M, C)
    fused_tok, lm = _proj_out_fuse(patches2, prep["out_w"], prep["out_b"],
                                   I1_tok, I2_tok)

    I_out = jnp.transpose(fused_tok.reshape(B, H, W, C), (0, 3, 1, 2))
    LM1 = jnp.transpose(lm[:, 1:2].reshape(B, H, W, 1), (0, 3, 1, 2))
    return I_out, LM1


# ----------------------------------------------------------------------------
# parameters (synthetic, shapes mirror the nn.Module) + kernel-ready prep
# ----------------------------------------------------------------------------
def init_params(key, C, heads, ws, depth):
    def nrm(k, shape, std=0.02):
        return (jax.random.normal(k, shape, jnp.float32) * std).astype(jnp.float32)

    keys = jax.random.split(key, 4 + depth)
    params = {
        "in_conv_w": nrm(keys[0], (C, C, 3, 3)),
        "in_conv_b": nrm(keys[1], (C,)),
        "out_conv_w": nrm(keys[2], (2, C, 3, 3)),
        "out_conv_b": nrm(keys[3], (2,)),
        "in_ln_g": jnp.ones((C,), jnp.float32),
        "in_ln_b": jnp.zeros((C,), jnp.float32),
        "out_ln_g": jnp.ones((C,), jnp.float32),
        "out_ln_b": jnp.zeros((C,), jnp.float32),
        "blocks": [],
    }
    hidden = 3 * C                      # mlp_ratio = 3
    for i in range(depth):
        bk = jax.random.split(keys[4 + i], 8)
        params["blocks"].append(dict(
            norm1_g=jnp.ones((C,), jnp.float32),
            norm1_b=jnp.zeros((C,), jnp.float32),
            qkv_w=nrm(bk[0], (C, 3 * C)),
            qkv_b=nrm(bk[1], (3 * C,)),
            rpb=nrm(bk[2], ((2 * ws - 1) ** 2, heads)),
            proj_w=nrm(bk[3], (C, C)),
            proj_b=nrm(bk[4], (C,)),
            norm2_g=jnp.ones((C,), jnp.float32),
            norm2_b=jnp.zeros((C,), jnp.float32),
            fc1_w=nrm(bk[5], (C, hidden)),
            fc1_b=nrm(bk[6], (hidden,)),
            fc2_w=nrm(bk[7], (hidden, C)),
            fc2_b=jnp.zeros((C,), jnp.float32),
        ))
    return params


def prepare_params(p, *, B, H, W, ws, heads):
    """Kernel-ready parameters: conv weights in matmul form, biases/LN params as
    (1, C) rows, d**-0.5 folded into the q part of qkv, and the attention bias
    (rel-pos + shift mask) pre-broadcast to the lane-dense (N, N, G) layout."""
    C = p["in_ln_g"].shape[0]
    d = C // heads
    scale = jnp.float32(d ** -0.5)

    def conv_w(w):                      # torch (Cout, Cin, 3, 3) -> (9*Cin, Cout)
        cout, cin = w.shape[0], w.shape[1]
        return jnp.transpose(w, (2, 3, 1, 0)).reshape(9 * cin, cout)

    def row(v):
        return v.reshape(1, -1).astype(jnp.float32)

    prep = {
        "in_w": conv_w(p["in_conv_w"]), "in_b": row(p["in_conv_b"]),
        "in_ln_g": row(p["in_ln_g"]), "in_ln_b": row(p["in_ln_b"]),
        "out_ln_g": row(p["out_ln_g"]), "out_ln_b": row(p["out_ln_b"]),
        "out_w": conv_w(p["out_conv_w"]), "out_b": row(p["out_conv_b"]),
        "blocks": [],
    }
    col_scale = jnp.concatenate([jnp.full((C,), scale, jnp.float32),
                                 jnp.ones((2 * C,), jnp.float32)])
    for i, bp in enumerate(p["blocks"]):
        shift = 0 if i % 2 == 0 else ws // 2
        prep["blocks"].append(dict(
            norm1_g=row(bp["norm1_g"]), norm1_b=row(bp["norm1_b"]),
            qkv_w=bp["qkv_w"] * col_scale[None, :],
            qkv_b=row(bp["qkv_b"] * col_scale),
            attn_bias=_attn_bias(bp["rpb"], ws, heads, B, H, W, shift),
            proj_w=bp["proj_w"], proj_b=row(bp["proj_b"]),
            norm2_g=row(bp["norm2_g"]), norm2_b=row(bp["norm2_b"]),
            fc1_w=bp["fc1_w"], fc1_b=row(bp["fc1_b"]),
            fc2_w=bp["fc2_w"], fc2_b=row(bp["fc2_b"]),
        ))
    return prep


if __name__ == "__main__":
    # num_spectral=24 (divisible by 6 heads), window_size=2, BasicLayer depth=2.
    B, C, H, W = 2, 24, 8, 8
    window_size, depth, num_heads = 2, 2, 6

    key = jax.random.PRNGKey(0)
    k1, k2, kp = jax.random.split(key, 3)
    I1 = jax.random.normal(k1, (B, C, H, W), jnp.float32)
    I2 = jax.random.normal(k2, (B, C, H, W), jnp.float32)

    raw = init_params(kp, C, num_heads, window_size, depth)
    prep = prepare_params(raw, B=B, H=H, W=W, ws=window_size, heads=num_heads)

    fwd = jax.jit(functools.partial(mask_fuse_forward,
                                    window_size=window_size, num_heads=num_heads))
    I_out, LM1 = fwd(I1, I2, prep)
    I_out, LM1 = jax.block_until_ready((I_out, LM1))

    assert I_out.shape == (B, C, H, W) and I_out.dtype == jnp.float32
    assert LM1.shape == (B, 1, H, W) and LM1.dtype == jnp.float32
    assert bool(jnp.all(jnp.isfinite(I_out))) and bool(jnp.all(jnp.isfinite(LM1)))
    # Sanity: the fused image is a per-pixel convex combination of I1 and I2
    # (the two softmax masks sum to 1) and LM is a valid probability.
    lo = jnp.minimum(I1, I2) - 1e-4
    hi = jnp.maximum(I1, I2) + 1e-4
    assert bool(jnp.all((I_out >= lo) & (I_out <= hi)))
    assert bool(jnp.all((LM1 >= 0.0) & (LM1 <= 1.0)))
    print("KERNEL_OK")
</pallas_src>

<mosaic_0001>
module attributes {stable_mosaic.version = 11 : i64} {
  func.func @_ln_matmul_kernel(%arg0: i32, %arg1: memref<64x24xf32, #tpu.memory_space<vmem>>, %arg2: memref<1x24xf32, #tpu.memory_space<vmem>>, %arg3: memref<1x24xf32, #tpu.memory_space<vmem>>, %arg4: memref<24x72xf32, #tpu.memory_space<vmem>>, %arg5: memref<1x72xf32, #tpu.memory_space<vmem>>, %arg6: memref<64x72xf32, #tpu.memory_space<vmem>>) attributes {dimension_semantics = [#tpu.dimension_semantics<parallel>], iteration_bounds = array<i64: 2>, scalar_prefetch = 0 : i64, scratch_operands = 0 : i64, tpu.core_type = #tpu.core_type<tc>, window_params = [{transform_indices = @transform_0, window_bounds = array<i64: 64, 24>}, {pipeline_mode = #tpu.pipeline_mode<synchronous>, transform_indices = @transform_1, window_bounds = array<i64: 1, 24>}, {pipeline_mode = #tpu.pipeline_mode<synchronous>, transform_indices = @transform_2, window_bounds = array<i64: 1, 24>}, {pipeline_mode = #tpu.pipeline_mode<synchronous>, transform_indices = @transform_3, window_bounds = array<i64: 24, 72>}, {pipeline_mode = #tpu.pipeline_mode<synchronous>, transform_indices = @transform_4, window_bounds = array<i64: 1, 72>}, {transform_indices = @transform_5, window_bounds = array<i64: 64, 72>}]} {
    %c0 = arith.constant 0 : index
    %c0_0 = arith.constant 0 : index
    %0 = vector.load %arg1[%c0, %c0_0] : memref<64x24xf32, #tpu.memory_space<vmem>>, vector<64x24xf32>
    %c0_1 = arith.constant 0 : index
    %c0_2 = arith.constant 0 : index
    %1 = vector.load %arg2[%c0_1, %c0_2] : memref<1x24xf32, #tpu.memory_space<vmem>>, vector<1x24xf32>
    %c0_3 = arith.constant 0 : index
    %c0_4 = arith.constant 0 : index
    %2 = vector.load %arg3[%c0_3, %c0_4] : memref<1x24xf32, #tpu.memory_space<vmem>>, vector<1x24xf32>
    %cst = arith.constant dense<0.000000e+00> : vector<64xf32>
    %3 = vector.multi_reduction <add>, %0, %cst [1] : vector<64x24xf32> to vector<64xf32>
    %4 = vector.shape_cast %3 : vector<64xf32> to vector<64x1xf32>
    %cst_5 = arith.constant 2.400000e+01 : f32
    %5 = vector.broadcast %cst_5 : f32 to vector<64x1xf32>
    %6 = arith.divf %4, %5 : vector<64x1xf32>
    %7 = vector.broadcast %6 : vector<64x1xf32> to vector<64x24xf32>
    %8 = arith.subf %0, %7 : vector<64x24xf32>
    %9 = arith.mulf %8, %8 : vector<64x24xf32>
    %cst_6 = arith.constant dense<0.000000e+00> : vector<64xf32>
    %10 = vector.multi_reduction <add>, %9, %cst_6 [1] : vector<64x24xf32> to vector<64xf32>
    %11 = vector.shape_cast %10 : vector<64xf32> to vector<64x1xf32>
    %cst_7 = arith.constant 2.400000e+01 : f32
    %12 = vector.broadcast %cst_7 : f32 to vector<64x1xf32>
    %13 = arith.divf %11, %12 : vector<64x1xf32>
    %14 = vector.broadcast %6 : vector<64x1xf32> to vector<64x24xf32>
    %15 = arith.subf %0, %14 : vector<64x24xf32>
    %cst_8 = arith.constant 9.99999974E-6 : f32
    %16 = vector.broadcast %cst_8 : f32 to vector<64x1xf32>
    %17 = arith.addf %13, %16 : vector<64x1xf32>
    %18 = math.rsqrt %17 : vector<64x1xf32>
    %19 = vector.broadcast %18 : vector<64x1xf32> to vector<64x24xf32>
    %20 = arith.mulf %15, %19 : vector<64x24xf32>
    %21 = vector.broadcast %1 : vector<1x24xf32> to vector<64x24xf32>
    %22 = arith.mulf %20, %21 : vector<64x24xf32>
    %23 = vector.broadcast %2 : vector<1x24xf32> to vector<64x24xf32>
    %24 = arith.addf %22, %23 : vector<64x24xf32>
    %c0_9 = arith.constant 0 : index
    %c0_10 = arith.constant 0 : index
    %25 = vector.load %arg4[%c0_9, %c0_10] : memref<24x72xf32, #tpu.memory_space<vmem>>, vector<24x72xf32>
    %cst_11 = arith.constant dense<0.000000e+00> : vector<64x72xf32>
    %26 = tpu.matmul %24, %25, %cst_11 {dimension_numbers = #tpu.dot_dimension_numbers<[1], [0], [0], [1], [0, 0, 1, 1], [], []>} : vector<64x24xf32>, vector<24x72xf32>, vector<64x72xf32> -> vector<64x72xf32>
    %c0_12 = arith.constant 0 : index
    %c0_13 = arith.constant 0 : index
    %27 = vector.load %arg5[%c0_12, %c0_13] : memref<1x72xf32, #tpu.memory_space<vmem>>, vector<1x72xf32>
    %28 = vector.broadcast %27 : vector<1x72xf32> to vector<64x72xf32>
    %29 = arith.addf %26, %28 : vector<64x72xf32>
    %c0_14 = arith.constant 0 : index
    %c0_15 = arith.constant 0 : index
    %30 = vector.load %arg6[%c0_14, %c0_15] : memref<64x72xf32, #tpu.memory_space<vmem>>, vector<64x72xf32>
    tpu.vector_store %arg6[%c0_14, %c0_15], %29 {strides = array<i32>} : memref<64x72xf32, #tpu.memory_space<vmem>>, vector<64x72xf32>,
    return
  }
  func.func @transform_0(%arg0: i32) -> (i32, i32) {
    %c0_i32 = arith.constant 0 : i32
    %c0_i32_0 = arith.constant 0 : i32
    return %arg0, %c0_i32 : i32, i32
  }
  func.func @transform_1(%arg0: i32) -> (i32, i32) {
    %c0_i32 = arith.constant 0 : i32
    %c0_i32_0 = arith.constant 0 : i32
    %c0_i32_1 = arith.constant 0 : i32
    return %c0_i32, %c0_i32_0 : i32, i32
  }
  func.func @transform_2(%arg0: i32) -> (i32, i32) {
    %c0_i32 = arith.constant 0 : i32
    %c0_i32_0 = arith.constant 0 : i32
    %c0_i32_1 = arith.constant 0 : i32
    return %c0_i32, %c0_i32_0 : i32, i32
  }
  func.func @transform_3(%arg0: i32) -> (i32, i32) {
    %c0_i32 = arith.constant 0 : i32
    %c0_i32_0 = arith.constant 0 : i32
    %c0_i32_1 = arith.constant 0 : i32
    return %c0_i32, %c0_i32_0 : i32, i32
  }
  func.func @transform_4(%arg0: i32) -> (i32, i32) {
    %c0_i32 = arith.constant 0 : i32
    %c0_i32_0 = arith.constant 0 : i32
    %c0_i32_1 = arith.constant 0 : i32
    return %c0_i32, %c0_i32_0 : i32, i32
  }
  func.func @transform_5(%arg0: i32) -> (i32, i32) {
    %c0_i32 = arith.constant 0 : i32
    %c0_i32_0 = arith.constant 0 : i32
    return %arg0, %c0_i32 : i32, i32
  }
}

module attributes {stable_mosaic.version = 11 : i64} {
  func.func @_conv_in_ln_kernel(%arg0: i32, %arg1: memref<64x216xf32, #tpu.memory_space<vmem>>, %arg2: memref<216x24xf32, #tpu.memory_space<vmem>>, %arg3: memref<1x24xf32, #tpu.memory_space<vmem>>, %arg4: memref<1x24xf32, #tpu.memory_space<vmem>>, %arg5: memref<1x24xf32, #tpu.memory_space<vmem>>, %arg6: memref<64x24xf32, #tpu.memory_space<vmem>>) attributes {dimension_semantics = [#tpu.dimension_semantics<parallel>], iteration_bounds = array<i64: 2>, scalar_prefetch = 0 : i64, scratch_operands = 0 : i64, tpu.core_type = #tpu.core_type<tc>, window_params = [{transform_indices = @transform_0, window_bounds = array<i64: 64, 216>}, {pipeline_mode = #tpu.pipeline_mode<synchronous>, transform_indices = @transform_1, window_bounds = array<i64: 216, 24>}, {pipeline_mode = #tpu.pipeline_mode<synchronous>, transform_indices = @transform_2, window_bounds = array<i64: 1, 24>}, {pipeline_mode = #tpu.pipeline_mode<synchronous>, transform_indices = @transform_3, window_bounds = array<i64: 1, 24>}, {pipeline_mode = #tpu.pipeline_mode<synchronous>, transform_indices = @transform_4, window_bounds = array<i64: 1, 24>}, {transform_indices = @transform_5, window_bounds = array<i64: 64, 24>}]} {
    %c0 = arith.constant 0 : index
    %c0_0 = arith.constant 0 : index
    %0 = vector.load %arg1[%c0, %c0_0] : memref<64x216xf32, #tpu.memory_space<vmem>>, vector<64x216xf32>
    %c0_1 = arith.constant 0 : index
    %c0_2 = arith.constant 0 : index
    %1 = vector.load %arg2[%c0_1, %c0_2] : memref<216x24xf32, #tpu.memory_space<vmem>>, vector<216x24xf32>
    %cst = arith.constant dense<0.000000e+00> : vector<64x24xf32>
    %2 = tpu.matmul %0, %1, %cst {dimension_numbers = #tpu.dot_dimension_numbers<[1], [0], [0], [1], [0, 0, 1, 1], [], []>} : vector<64x216xf32>, vector<216x24xf32>, vector<64x24xf32> -> vector<64x24xf32>
    %c0_3 = arith.constant 0 : index
    %c0_4 = arith.constant 0 : index
    %3 = vector.load %arg3[%c0_3, %c0_4] : memref<1x24xf32, #tpu.memory_space<vmem>>, vector<1x24xf32>
    %4 = vector.broadcast %3 : vector<1x24xf32> to vector<64x24xf32>
    %5 = arith.addf %2, %4 : vector<64x24xf32>
    %c0_5 = arith.constant 0 : index
    %c0_6 = arith.constant 0 : index
    %6 = vector.load %arg4[%c0_5, %c0_6] : memref<1x24xf32, #tpu.memory_space<vmem>>, vector<1x24xf32>
    %c0_7 = arith.constant 0 : index
    %c0_8 = arith.constant 0 : index
    %7 = vector.load %arg5[%c0_7, %c0_8] : memref<1x24xf32, #tpu.memory_space<vmem>>, vector<1x24xf32>
    %cst_9 = arith.constant dense<0.000000e+00> : vector<64xf32>
    %8 = vector.multi_reduction <add>, %5, %cst_9 [1] : vector<64x24xf32> to vector<64xf32>
    %9 = vector.shape_cast %8 : vector<64xf32> to vector<64x1xf32>
    %cst_10 = arith.constant 2.400000e+01 : f32
    %10 = vector.broadcast %cst_10 : f32 to vector<64x1xf32>
    %11 = arith.divf %9, %10 : vector<64x1xf32>
    %12 = vector.broadcast %11 : vector<64x1xf32> to vector<64x24xf32>
    %13 = arith.subf %5, %12 : vector<64x24xf32>
    %14 = arith.mulf %13, %13 : vector<64x24xf32>
    %cst_11 = arith.constant dense<0.000000e+00> : vector<64xf32>
    %15 = vector.multi_reduction <add>, %14, %cst_11 [1] : vector<64x24xf32> to vector<64xf32>
    %16 = vector.shape_cast %15 : vector<64xf32> to vector<64x1xf32>
    %cst_12 = arith.constant 2.400000e+01 : f32
    %17 = vector.broadcast %cst_12 : f32 to vector<64x1xf32>
    %18 = arith.divf %16, %17 : vector<64x1xf32>
    %19 = vector.broadcast %11 : vector<64x1xf32> to vector<64x24xf32>
    %20 = arith.subf %5, %19 : vector<64x24xf32>
    %cst_13 = arith.constant 9.99999974E-6 : f32
    %21 = vector.broadcast %cst_13 : f32 to vector<64x1xf32>
    %22 = arith.addf %18, %21 : vector<64x1xf32>
    %23 = math.rsqrt %22 : vector<64x1xf32>
    %24 = vector.broadcast %23 : vector<64x1xf32> to vector<64x24xf32>
    %25 = arith.mulf %20, %24 : vector<64x24xf32>
    %26 = vector.broadcast %6 : vector<1x24xf32> to vector<64x24xf32>
    %27 = arith.mulf %25, %26 : vector<64x24xf32>
    %28 = vector.broadcast %7 : vector<1x24xf32> to vector<64x24xf32>
    %29 = arith.addf %27, %28 : vector<64x24xf32>
    %c0_14 = arith.constant 0 : index
    %c0_15 = arith.constant 0 : index
    %30 = vector.load %arg6[%c0_14, %c0_15] : memref<64x24xf32, #tpu.memory_space<vmem>>, vector<64x24xf32>
    tpu.vector_store %arg6[%c0_14, %c0_15], %29 {strides = array<i32>} : memref<64x24xf32, #tpu.memory_space<vmem>>, vector<64x24xf32>,
    return
  }
  func.func @transform_0(%arg0: i32) -> (i32, i32) {
    %c0_i32 = arith.constant 0 : i32
    %c0_i32_0 = arith.constant 0 : i32
    return %arg0, %c0_i32 : i32, i32
  }
  func.func @transform_1(%arg0: i32) -> (i32, i32) {
    %c0_i32 = arith.constant 0 : i32
    %c0_i32_0 = arith.constant 0 : i32
    %c0_i32_1 = arith.constant 0 : i32
    return %c0_i32, %c0_i32_0 : i32, i32
  }
  func.func @transform_2(%arg0: i32) -> (i32, i32) {
    %c0_i32 = arith.constant 0 : i32
    %c0_i32_0 = arith.constant 0 : i32
    %c0_i32_1 = arith.constant 0 : i32
    return %c0_i32, %c0_i32_0 : i32, i32
  }
  func.func @transform_3(%arg0: i32) -> (i32, i32) {
    %c0_i32 = arith.constant 0 : i32
    %c0_i32_0 = arith.constant 0 : i32
    %c0_i32_1 = arith.constant 0 : i32
    return %c0_i32, %c0_i32_0 : i32, i32
  }
  func.func @transform_4(%arg0: i32) -> (i32, i32) {
    %c0_i32 = arith.constant 0 : i32
    %c0_i32_0 = arith.constant 0 : i32
    %c0_i32_1 = arith.constant 0 : i32
    return %c0_i32, %c0_i32_0 : i32, i32
  }
  func.func @transform_5(%arg0: i32) -> (i32, i32) {
    %c0_i32 = arith.constant 0 : i32
    %c0_i32_0 = arith.constant 0 : i32
    return %arg0, %c0_i32 : i32, i32
  }
}

module attributes {stable_mosaic.version = 11 : i64} {
  func.func @_window_attn_kernel(%arg0: i32, %arg1: memref<4x4x192xf32, #tpu.memory_space<vmem>>, %arg2: memref<4x4x192xf32, #tpu.memory_space<vmem>>, %arg3: memref<4x4x192xf32, #tpu.memory_space<vmem>>, %arg4: memref<4x4x192xf32, #tpu.memory_space<vmem>>, %arg5: memref<4x4x192xf32, #tpu.memory_space<vmem>>) attributes {dimension_semantics = [#tpu.dimension_semantics<arbitrary>], iteration_bounds = array<i64: 1>, scalar_prefetch = 0 : i64, scratch_operands = 0 : i64, tpu.core_type = #tpu.core_type<tc>, window_params = [{pipeline_mode = #tpu.pipeline_mode<synchronous>, transform_indices = @transform_0, window_bounds = array<i64: 4, 4, 192>}, {pipeline_mode = #tpu.pipeline_mode<synchronous>, transform_indices = @transform_1, window_bounds = array<i64: 4, 4, 192>}, {pipeline_mode = #tpu.pipeline_mode<synchronous>, transform_indices = @transform_2, window_bounds = array<i64: 4, 4, 192>}, {pipeline_mode = #tpu.pipeline_mode<synchronous>, transform_indices = @transform_3, window_bounds = array<i64: 4, 4, 192>}, {pipeline_mode = #tpu.pipeline_mode<synchronous>, transform_indices = @transform_4, window_bounds = array<i64: 4, 4, 192>}]} {
    %c0 = arith.constant 0 : index
    %c0_0 = arith.constant 0 : index
    %c0_1 = arith.constant 0 : index
    %0 = vector.load %arg1[%c0, %c0_0, %c0_1] : memref<4x4x192xf32, #tpu.memory_space<vmem>>, vector<4x4x192xf32>
    %c0_2 = arith.constant 0 : index
    %c0_3 = arith.constant 0 : index
    %c0_4 = arith.constant 0 : index
    %1 = vector.load %arg2[%c0_2, %c0_3, %c0_4] : memref<4x4x192xf32, #tpu.memory_space<vmem>>, vector<4x4x192xf32>
    %c0_5 = arith.constant 0 : index
    %c0_6 = arith.constant 0 : index
    %c0_7 = arith.constant 0 : index
    %2 = vector.load %arg3[%c0_5, %c0_6, %c0_7] : memref<4x4x192xf32, #tpu.memory_space<vmem>>, vector<4x4x192xf32>
    %c0_8 = arith.constant 0 : index
    %c0_9 = arith.constant 0 : index
    %c0_10 = arith.constant 0 : index
    %3 = vector.load %arg4[%c0_8, %c0_9, %c0_10] : memref<4x4x192xf32, #tpu.memory_space<vmem>>, vector<4x4x192xf32>
    %4 = vector.extract_strided_slice %0 {offsets = [0, 0, 0], sizes = [4, 1, 192], strides = [1, 1, 1]} : vector<4x4x192xf32> to vector<4x1x192xf32>
    %5 = vector.extract_strided_slice %1 {offsets = [0, 0, 0], sizes = [1, 4, 192], strides = [1, 1, 1]} : vector<4x4x192xf32> to vector<1x4x192xf32>
    %6 = vector.broadcast %4 : vector<4x1x192xf32> to vector<4x4x192xf32>
    %7 = vector.broadcast %5 : vector<1x4x192xf32> to vector<4x4x192xf32>
    %8 = arith.mulf %6, %7 : vector<4x4x192xf32>
    %9 = arith.addf %3, %8 : vector<4x4x192xf32>
    %10 = vector.extract_strided_slice %0 {offsets = [0, 1, 0], sizes = [4, 1, 192], strides = [1, 1, 1]} : vector<4x4x192xf32> to vector<4x1x192xf32>
    %11 = vector.extract_strided_slice %1 {offsets = [1, 0, 0], sizes = [1, 4, 192], strides = [1, 1, 1]} : vector<4x4x192xf32> to vector<1x4x192xf32>
    %12 = vector.broadcast %10 : vector<4x1x192xf32> to vector<4x4x192xf32>
    %13 = vector.broadcast %11 : vector<1x4x192xf32> to vector<4x4x192xf32>
    %14 = arith.mulf %12, %13 : vector<4x4x192xf32>
    %15 = arith.addf %9, %14 : vector<4x4x192xf32>
    %16 = vector.extract_strided_slice %0 {offsets = [0, 2, 0], sizes = [4, 1, 192], strides = [1, 1, 1]} : vector<4x4x192xf32> to vector<4x1x192xf32>
    %17 = vector.extract_strided_slice %1 {offsets = [2, 0, 0], sizes = [1, 4, 192], strides = [1, 1, 1]} : vector<4x4x192xf32> to vector<1x4x192xf32>
    %18 = vector.broadcast %16 : vector<4x1x192xf32> to vector<4x4x192xf32>
    %19 = vector.broadcast %17 : vector<1x4x192xf32> to vector<4x4x192xf32>
    %20 = arith.mulf %18, %19 : vector<4x4x192xf32>
    %21 = arith.addf %15, %20 : vector<4x4x192xf32>
    %22 = vector.extract_strided_slice %0 {offsets = [0, 3, 0], sizes = [4, 1, 192], strides = [1, 1, 1]} : vector<4x4x192xf32> to vector<4x1x192xf32>
    %23 = vector.extract_strided_slice %1 {offsets = [3, 0, 0], sizes = [1, 4, 192], strides = [1, 1, 1]} : vector<4x4x192xf32> to vector<1x4x192xf32>
    %24 = vector.broadcast %22 : vector<4x1x192xf32> to vector<4x4x192xf32>
    %25 = vector.broadcast %23 : vector<1x4x192xf32> to vector<4x4x192xf32>
    %26 = arith.mulf %24, %25 : vector<4x4x192xf32>
    %27 = arith.addf %21, %26 : vector<4x4x192xf32>
    %cst = arith.constant dense<0xFF800000> : vector<4x192xf32>
    %28 = vector.multi_reduction <maximumf>, %27, %cst [1] : vector<4x4x192xf32> to vector<4x192xf32>
    %29 = vector.shape_cast %28 : vector<4x192xf32> to vector<4x1x192xf32>
    %30 = vector.broadcast %29 : vector<4x1x192xf32> to vector<4x4x192xf32>
    %31 = arith.subf %27, %30 : vector<4x4x192xf32>
    %32 = math.exp %31 : vector<4x4x192xf32>
    %cst_11 = arith.constant dense<0.000000e+00> : vector<4x192xf32>
    %33 = vector.multi_reduction <add>, %32, %cst_11 [1] : vector<4x4x192xf32> to vector<4x192xf32>
    %34 = vector.shape_cast %33 : vector<4x192xf32> to vector<4x1x192xf32>
    %35 = tpu.reciprocal %34 {approx = true} : vector<4x1x192xf32> -> vector<4x1x192xf32>
    %36 = vector.broadcast %35 : vector<4x1x192xf32> to vector<4x4x192xf32>
    %37 = arith.mulf %32, %36 : vector<4x4x192xf32>
    %38 = vector.extract_strided_slice %37 {offsets = [0, 0, 0], sizes = [4, 1, 192], strides = [1, 1, 1]} : vector<4x4x192xf32> to vector<4x1x192xf32>
    %39 = vector.extract_strided_slice %2 {offsets = [0, 0, 0], sizes = [1, 4, 192], strides = [1, 1, 1]} : vector<4x4x192xf32> to vector<1x4x192xf32>
    %40 = vector.broadcast %38 : vector<4x1x192xf32> to vector<4x4x192xf32>
    %41 = vector.broadcast %39 : vector<1x4x192xf32> to vector<4x4x192xf32>
    %42 = arith.mulf %40, %41 : vector<4x4x192xf32>
    %43 = vector.extract_strided_slice %37 {offsets = [0, 1, 0], sizes = [4, 1, 192], strides = [1, 1, 1]} : vector<4x4x192xf32> to vector<4x1x192xf32>
    %44 = vector.extract_strided_slice %2 {offsets = [1, 0, 0], sizes = [1, 4, 192], strides = [1, 1, 1]} : vector<4x4x192xf32> to vector<1x4x192xf32>
    %45 = vector.broadcast %43 : vector<4x1x192xf32> to vector<4x4x192xf32>
    %46 = vector.broadcast %44 : vector<1x4x192xf32> to vector<4x4x192xf32>
    %47 = arith.mulf %45, %46 : vector<4x4x192xf32>
    %48 = arith.addf %42, %47 : vector<4x4x192xf32>
    %49 = vector.extract_strided_slice %37 {offsets = [0, 2, 0], sizes = [4, 1, 192], strides = [1, 1, 1]} : vector<4x4x192xf32> to vector<4x1x192xf32>
    %50 = vector.extract_strided_slice %2 {offsets = [2, 0, 0], sizes = [1, 4, 192], strides = [1, 1, 1]} : vector<4x4x192xf32> to vector<1x4x192xf32>
    %51 = vector.broadcast %49 : vector<4x1x192xf32> to vector<4x4x192xf32>
    %52 = vector.broadcast %50 : vector<1x4x192xf32> to vector<4x4x192xf32>
    %53 = arith.mulf %51, %52 : vector<4x4x192xf32>
    %54 = arith.addf %48, %53 : vector<4x4x192xf32>
    %55 = vector.extract_strided_slice %37 {offsets = [0, 3, 0], sizes = [4, 1, 192], strides = [1, 1, 1]} : vector<4x4x192xf32> to vector<4x1x192xf32>
    %56 = vector.extract_strided_slice %2 {offsets = [3, 0, 0], sizes = [1, 4, 192], strides = [1, 1, 1]} : vector<4x4x192xf32> to vector<1x4x192xf32>
    %57 = vector.broadcast %55 : vector<4x1x192xf32> to vector<4x4x192xf32>
    %58 = vector.broadcast %56 : vector<1x4x192xf32> to vector<4x4x192xf32>
    %59 = arith.mulf %57, %58 : vector<4x4x192xf32>
    %60 = arith.addf %54, %59 : vector<4x4x192xf32>
    %c0_12 = arith.constant 0 : index
    %c0_13 = arith.constant 0 : index
    %c0_14 = arith.constant 0 : index
    %61 = vector.load %arg5[%c0_12, %c0_13, %c0_14] : memref<4x4x192xf32, #tpu.memory_space<vmem>>, vector<4x4x192xf32>
    tpu.vector_store %arg5[%c0_12, %c0_13, %c0_14], %60 {strides = array<i32>} : memref<4x4x192xf32, #tpu.memory_space<vmem>>, vector<4x4x192xf32>,
    return
  }
  func.func @transform_0(%arg0: i32) -> (i32, i32, i32) {
    %c0_i32 = arith.constant 0 : i32
    %c0_i32_0 = arith.constant 0 : i32
    %c0_i32_1 = arith.constant 0 : i32
    %c0_i32_2 = arith.constant 0 : i32
    return %c0_i32, %c0_i32_0, %c0_i32_1 : i32, i32, i32
  }
  func.func @transform_1(%arg0: i32) -> (i32, i32, i32) {
    %c0_i32 = arith.constant 0 : i32
    %c0_i32_0 = arith.constant 0 : i32
    %c0_i32_1 = arith.constant 0 : i32
    %c0_i32_2 = arith.constant 0 : i32
    return %c0_i32, %c0_i32_0, %c0_i32_1 : i32, i32, i32
  }
  func.func @transform_2(%arg0: i32) -> (i32, i32, i32) {
    %c0_i32 = arith.constant 0 : i32
    %c0_i32_0 = arith.constant 0 : i32
    %c0_i32_1 = arith.constant 0 : i32
    %c0_i32_2 = arith.constant 0 : i32
    return %c0_i32, %c0_i32_0, %c0_i32_1 : i32, i32, i32
  }
  func.func @transform_3(%arg0: i32) -> (i32, i32, i32) {
    %c0_i32 = arith.constant 0 : i32
    %c0_i32_0 = arith.constant 0 : i32
    %c0_i32_1 = arith.constant 0 : i32
    %c0_i32_2 = arith.constant 0 : i32
    return %c0_i32, %c0_i32_0, %c0_i32_1 : i32, i32, i32
  }
  func.func @transform_4(%arg0: i32) -> (i32, i32, i32) {
    %c0_i32 = arith.constant 0 : i32
    %c0_i32_0 = arith.constant 0 : i32
    %c0_i32_1 = arith.constant 0 : i32
    %c0_i32_2 = arith.constant 0 : i32
    return %c0_i32, %c0_i32_0, %c0_i32_1 : i32, i32, i32
  }
}

module attributes {stable_mosaic.version = 11 : i64} {
  func.func @_matmul_bias_res_kernel(%arg0: i32, %arg1: memref<64x24xf32, #tpu.memory_space<vmem>>, %arg2: memref<24x24xf32, #tpu.memory_space<vmem>>, %arg3: memref<1x24xf32, #tpu.memory_space<vmem>>, %arg4: memref<64x24xf32, #tpu.memory_space<vmem>>, %arg5: memref<64x24xf32, #tpu.memory_space<vmem>>) attributes {dimension_semantics = [#tpu.dimension_semantics<parallel>], iteration_bounds = array<i64: 2>, scalar_prefetch = 0 : i64, scratch_operands = 0 : i64, tpu.core_type = #tpu.core_type<tc>, window_params = [{transform_indices = @transform_0, window_bounds = array<i64: 64, 24>}, {pipeline_mode = #tpu.pipeline_mode<synchronous>, transform_indices = @transform_1, window_bounds = array<i64: 24, 24>}, {pipeline_mode = #tpu.pipeline_mode<synchronous>, transform_indices = @transform_2, window_bounds = array<i64: 1, 24>}, {transform_indices = @transform_3, window_bounds = array<i64: 64, 24>}, {transform_indices = @transform_4, window_bounds = array<i64: 64, 24>}]} {
    %c0 = arith.constant 0 : index
    %c0_0 = arith.constant 0 : index
    %0 = vector.load %arg1[%c0, %c0_0] : memref<64x24xf32, #tpu.memory_space<vmem>>, vector<64x24xf32>
    %c0_1 = arith.constant 0 : index
    %c0_2 = arith.constant 0 : index
    %1 = vector.load %arg2[%c0_1, %c0_2] : memref<24x24xf32, #tpu.memory_space<vmem>>, vector<24x24xf32>
    %cst = arith.constant dense<0.000000e+00> : vector<64x24xf32>
    %2 = tpu.matmul %0, %1, %cst {dimension_numbers = #tpu.dot_dimension_numbers<[1], [0], [0], [1], [0, 0, 1, 1], [], []>} : vector<64x24xf32>, vector<24x24xf32>, vector<64x24xf32> -> vector<64x24xf32>
    %c0_3 = arith.constant 0 : index
    %c0_4 = arith.constant 0 : index
    %3 = vector.load %arg3[%c0_3, %c0_4] : memref<1x24xf32, #tpu.memory_space<vmem>>, vector<1x24xf32>
    %4 = vector.broadcast %3 : vector<1x24xf32> to vector<64x24xf32>
    %5 = arith.addf %2, %4 : vector<64x24xf32>
    %c0_5 = arith.constant 0 : index
    %c0_6 = arith.constant 0 : index
    %6 = vector.load %arg4[%c0_5, %c0_6] : memref<64x24xf32, #tpu.memory_space<vmem>>, vector<64x24xf32>
    %7 = arith.addf %5, %6 : vector<64x24xf32>
    %c0_7 = arith.constant 0 : index
    %c0_8 = arith.constant 0 : index
    %8 = vector.load %arg5[%c0_7, %c0_8] : memref<64x24xf32, #tpu.memory_space<vmem>>, vector<64x24xf32>
    tpu.vector_store %arg5[%c0_7, %c0_8], %7 {strides = array<i32>} : memref<64x24xf32, #tpu.memory_space<vmem>>, vector<64x24xf32>,
    return
  }
  func.func @transform_0(%arg0: i32) -> (i32, i32) {
    %c0_i32 = arith.constant 0 : i32
    %c0_i32_0 = arith.constant 0 : i32
    return %arg0, %c0_i32 : i32, i32
  }
  func.func @transform_1(%arg0: i32) -> (i32, i32) {
    %c0_i32 = arith.constant 0 : i32
    %c0_i32_0 = arith.constant 0 : i32
    %c0_i32_1 = arith.constant 0 : i32
    return %c0_i32, %c0_i32_0 : i32, i32
  }
  func.func @transform_2(%arg0: i32) -> (i32, i32) {
    %c0_i32 = arith.constant 0 : i32
    %c0_i32_0 = arith.constant 0 : i32
    %c0_i32_1 = arith.constant 0 : i32
    return %c0_i32, %c0_i32_0 : i32, i32
  }
  func.func @transform_3(%arg0: i32) -> (i32, i32) {
    %c0_i32 = arith.constant 0 : i32
    %c0_i32_0 = arith.constant 0 : i32
    return %arg0, %c0_i32 : i32, i32
  }
  func.func @transform_4(%arg0: i32) -> (i32, i32) {
    %c0_i32 = arith.constant 0 : i32
    %c0_i32_0 = arith.constant 0 : i32
    return %arg0, %c0_i32 : i32, i32
  }
}

module attributes {stable_mosaic.version = 11 : i64} {
  func.func @_mlp_kernel(%arg0: i32, %arg1: memref<64x24xf32, #tpu.memory_space<vmem>>, %arg2: memref<1x24xf32, #tpu.memory_space<vmem>>, %arg3: memref<1x24xf32, #tpu.memory_space<vmem>>, %arg4: memref<24x72xf32, #tpu.memory_space<vmem>>, %arg5: memref<1x72xf32, #tpu.memory_space<vmem>>, %arg6: memref<72x24xf32, #tpu.memory_space<vmem>>, %arg7: memref<1x24xf32, #tpu.memory_space<vmem>>, %arg8: memref<1x24xf32, #tpu.memory_space<vmem>>, %arg9: memref<1x24xf32, #tpu.memory_space<vmem>>, %arg10: memref<64x24xf32, #tpu.memory_space<vmem>>) attributes {dimension_semantics = [#tpu.dimension_semantics<parallel>], iteration_bounds = array<i64: 2>, scalar_prefetch = 0 : i64, scratch_operands = 0 : i64, tpu.core_type = #tpu.core_type<tc>, window_params = [{transform_indices = @transform_0, window_bounds = array<i64: 64, 24>}, {pipeline_mode = #tpu.pipeline_mode<synchronous>, transform_indices = @transform_1, window_bounds = array<i64: 1, 24>}, {pipeline_mode = #tpu.pipeline_mode<synchronous>, transform_indices = @transform_2, window_bounds = array<i64: 1, 24>}, {pipeline_mode = #tpu.pipeline_mode<synchronous>, transform_indices = @transform_3, window_bounds = array<i64: 24, 72>}, {pipeline_mode = #tpu.pipeline_mode<synchronous>, transform_indices = @transform_4, window_bounds = array<i64: 1, 72>}, {pipeline_mode = #tpu.pipeline_mode<synchronous>, transform_indices = @transform_5, window_bounds = array<i64: 72, 24>}, {pipeline_mode = #tpu.pipeline_mode<synchronous>, transform_indices = @transform_6, window_bounds = array<i64: 1, 24>}, {pipeline_mode = #tpu.pipeline_mode<synchronous>, transform_indices = @transform_7, window_bounds = array<i64: 1, 24>}, {pipeline_mode = #tpu.pipeline_mode<synchronous>, transform_indices = @transform_8, window_bounds = array<i64: 1, 24>}, {transform_indices = @transform_9, window_bounds = array<i64: 64, 24>}]} {
    %c0 = arith.constant 0 : index
    %c0_0 = arith.constant 0 : index
    %0 = vector.load %arg1[%c0, %c0_0] : memref<64x24xf32, #tpu.memory_space<vmem>>, vector<64x24xf32>
    %c0_1 = arith.constant 0 : index
    %c0_2 = arith.constant 0 : index
    %1 = vector.load %arg2[%c0_1, %c0_2] : memref<1x24xf32, #tpu.memory_space<vmem>>, vector<1x24xf32>
    %c0_3 = arith.constant 0 : index
    %c0_4 = arith.constant 0 : index
    %2 = vector.load %arg3[%c0_3, %c0_4] : memref<1x24xf32, #tpu.memory_space<vmem>>, vector<1x24xf32>
    %cst = arith.constant dense<0.000000e+00> : vector<64xf32>
    %3 = vector.multi_reduction <add>, %0, %cst [1] : vector<64x24xf32> to vector<64xf32>
    %4 = vector.shape_cast %3 : vector<64xf32> to vector<64x1xf32>
    %cst_5 = arith.constant 2.400000e+01 : f32
    %5 = vector.broadcast %cst_5 : f32 to vector<64x1xf32>
    %6 = arith.divf %4, %5 : vector<64x1xf32>
    %7 = vector.broadcast %6 : vector<64x1xf32> to vector<64x24xf32>
    %8 = arith.subf %0, %7 : vector<64x24xf32>
    %9 = arith.mulf %8, %8 : vector<64x24xf32>
    %cst_6 = arith.constant dense<0.000000e+00> : vector<64xf32>
    %10 = vector.multi_reduction <add>, %9, %cst_6 [1] : vector<64x24xf32> to vector<64xf32>
    %11 = vector.shape_cast %10 : vector<64xf32> to vector<64x1xf32>
    %cst_7 = arith.constant 2.400000e+01 : f32
    %12 = vector.broadcast %cst_7 : f32 to vector<64x1xf32>
    %13 = arith.divf %11, %12 : vector<64x1xf32>
    %14 = vector.broadcast %6 : vector<64x1xf32> to vector<64x24xf32>
    %15 = arith.subf %0, %14 : vector<64x24xf32>
    %cst_8 = arith.constant 9.99999974E-6 : f32
    %16 = vector.broadcast %cst_8 : f32 to vector<64x1xf32>
    %17 = arith.addf %13, %16 : vector<64x1xf32>
    %18 = math.rsqrt %17 : vector<64x1xf32>
    %19 = vector.broadcast %18 : vector<64x1xf32> to vector<64x24xf32>
    %20 = arith.mulf %15, %19 : vector<64x24xf32>
    %21 = vector.broadcast %1 : vector<1x24xf32> to vector<64x24xf32>
    %22 = arith.mulf %20, %21 : vector<64x24xf32>
    %23 = vector.broadcast %2 : vector<1x24xf32> to vector<64x24xf32>
    %24 = arith.addf %22, %23 : vector<64x24xf32>
    %c0_9 = arith.constant 0 : index
    %c0_10 = arith.constant 0 : index
    %25 = vector.load %arg4[%c0_9, %c0_10] : memref<24x72xf32, #tpu.memory_space<vmem>>, vector<24x72xf32>
    %cst_11 = arith.constant dense<0.000000e+00> : vector<64x72xf32>
    %26 = tpu.matmul %24, %25, %cst_11 {dimension_numbers = #tpu.dot_dimension_numbers<[1], [0], [0], [1], [0, 0, 1, 1], [], []>} : vector<64x24xf32>, vector<24x72xf32>, vector<64x72xf32> -> vector<64x72xf32>
    %c0_12 = arith.constant 0 : index
    %c0_13 = arith.constant 0 : index
    %27 = vector.load %arg5[%c0_12, %c0_13] : memref<1x72xf32, #tpu.memory_space<vmem>>, vector<1x72xf32>
    %28 = vector.broadcast %27 : vector<1x72xf32> to vector<64x72xf32>
    %29 = arith.addf %26, %28 : vector<64x72xf32>
    %cst_14 = arith.constant 5.000000e-01 : f32
    %30 = vector.broadcast %cst_14 : f32 to vector<64x72xf32>
    %31 = arith.mulf %30, %29 : vector<64x72xf32>
    %cst_15 = arith.constant 0.707106769 : f32
    %32 = vector.broadcast %cst_15 : f32 to vector<64x72xf32>
    %33 = arith.mulf %29, %32 : vector<64x72xf32>
    %34 = math.absf %33 : vector<64x72xf32>
    %cst_16 = arith.constant 0.327591091 : f32
    %35 = vector.broadcast %cst_16 : f32 to vector<64x72xf32>
    %36 = arith.mulf %35, %34 : vector<64x72xf32>
    %cst_17 = arith.constant 1.000000e+00 : f32
    %37 = vector.broadcast %cst_17 : f32 to vector<64x72xf32>
    %38 = arith.addf %37, %36 : vector<64x72xf32>
    %cst_18 = arith.constant 1.000000e+00 : f32
    %39 = vector.broadcast %cst_18 : f32 to vector<64x72xf32>
    %40 = arith.divf %39, %38 : vector<64x72xf32>
    %cst_19 = arith.constant 1.06140542 : f32
    %41 = vector.broadcast %cst_19 : f32 to vector<64x72xf32>
    %42 = arith.mulf %40, %41 : vector<64x72xf32>
    %cst_20 = arith.constant -1.45315206 : f32
    %43 = vector.broadcast %cst_20 : f32 to vector<64x72xf32>
    %44 = arith.addf %43, %42 : vector<64x72xf32>
    %45 = arith.mulf %40, %44 : vector<64x72xf32>
    %cst_21 = arith.constant 1.42141378 : f32
    %46 = vector.broadcast %cst_21 : f32 to vector<64x72xf32>
    %47 = arith.addf %46, %45 : vector<64x72xf32>
    %48 = arith.mulf %40, %47 : vector<64x72xf32>
    %cst_22 = arith.constant -0.284496725 : f32
    %49 = vector.broadcast %cst_22 : f32 to vector<64x72xf32>
    %50 = arith.addf %49, %48 : vector<64x72xf32>
    %51 = arith.mulf %40, %50 : vector<64x72xf32>
    %cst_23 = arith.constant 0.254829586 : f32
    %52 = vector.broadcast %cst_23 : f32 to vector<64x72xf32>
    %53 = arith.addf %52, %51 : vector<64x72xf32>
    %54 = arith.mulf %40, %53 : vector<64x72xf32>
    %cst_24 = arith.constant 0.000000e+00 : f32
    %55 = vector.broadcast %cst_24 : f32 to vector<64x72xf32>
    %56 = arith.subf %55, %33 : vector<64x72xf32>
    %57 = arith.mulf %56, %33 : vector<64x72xf32>
    %58 = math.exp %57 : vector<64x72xf32>
    %59 = arith.mulf %54, %58 : vector<64x72xf32>
    %cst_25 = arith.constant 1.000000e+00 : f32
    %60 = vector.broadcast %cst_25 : f32 to vector<64x72xf32>
    %61 = arith.subf %60, %59 : vector<64x72xf32>
    %cst_26 = arith.constant 0.000000e+00 : f32
    %62 = vector.broadcast %cst_26 : f32 to vector<64x72xf32>
    %63 = arith.cmpf oge, %33, %62 : vector<64x72xf32>
    %cst_27 = arith.constant 0.000000e+00 : f32
    %64 = vector.broadcast %cst_27 : f32 to vector<64x72xf32>
    %65 = arith.subf %64, %61 : vector<64x72xf32>
    %66 = arith.select %63, %61, %65 : vector<64x72xi1>, vector<64x72xf32>
    %cst_28 = arith.constant 1.000000e+00 : f32
    %67 = vector.broadcast %cst_28 : f32 to vector<64x72xf32>
    %68 = arith.addf %67, %66 : vector<64x72xf32>
    %69 = arith.mulf %31, %68 : vector<64x72xf32>
    %c0_29 = arith.constant 0 : index
    %c0_30 = arith.constant 0 : index
    %70 = vector.load %arg6[%c0_29, %c0_30] : memref<72x24xf32, #tpu.memory_space<vmem>>, vector<72x24xf32>
    %cst_31 = arith.constant dense<0.000000e+00> : vector<64x24xf32>
    %71 = tpu.matmul %69, %70, %cst_31 {dimension_numbers = #tpu.dot_dimension_numbers<[1], [0], [0], [1], [0, 0, 1, 1], [], []>} : vector<64x72xf32>, vector<72x24xf32>, vector<64x24xf32> -> vector<64x24xf32>
    %72 = arith.addf %0, %71 : vector<64x24xf32>
    %c0_32 = arith.constant 0 : index
    %c0_33 = arith.constant 0 : index
    %73 = vector.load %arg7[%c0_32, %c0_33] : memref<1x24xf32, #tpu.memory_space<vmem>>, vector<1x24xf32>
    %74 = vector.broadcast %73 : vector<1x24xf32> to vector<64x24xf32>
    %75 = arith.addf %72, %74 : vector<64x24xf32>
    %c0_34 = arith.constant 0 : index
    %c0_35 = arith.constant 0 : index
    %76 = vector.load %arg10[%c0_34, %c0_35] : memref<64x24xf32, #tpu.memory_space<vmem>>, vector<64x24xf32>
    tpu.vector_store %arg10[%c0_34, %c0_35], %75 {strides = array<i32>} : memref<64x24xf32, #tpu.memory_space<vmem>>, vector<64x24xf32>,
    return
  }
  func.func @transform_0(%arg0: i32) -> (i32, i32) {
    %c0_i32 = arith.constant 0 : i32
    %c0_i32_0 = arith.constant 0 : i32
    return %arg0, %c0_i32 : i32, i32
  }
  func.func @transform_1(%arg0: i32) -> (i32, i32) {
    %c0_i32 = arith.constant 0 : i32
    %c0_i32_0 = arith.constant 0 : i32
    %c0_i32_1 = arith.constant 0 : i32
    return %c0_i32, %c0_i32_0 : i32, i32
  }
  func.func @transform_2(%arg0: i32) -> (i32, i32) {
    %c0_i32 = arith.constant 0 : i32
    %c0_i32_0 = arith.constant 0 : i32
    %c0_i32_1 = arith.constant 0 : i32
    return %c0_i32, %c0_i32_0 : i32, i32
  }
  func.func @transform_3(%arg0: i32) -> (i32, i32) {
    %c0_i32 = arith.constant 0 : i32
    %c0_i32_0 = arith.constant 0 : i32
    %c0_i32_1 = arith.constant 0 : i32
    return %c0_i32, %c0_i32_0 : i32, i32
  }
  func.func @transform_4(%arg0: i32) -> (i32, i32) {
    %c0_i32 = arith.constant 0 : i32
    %c0_i32_0 = arith.constant 0 : i32
    %c0_i32_1 = arith.constant 0 : i32
    return %c0_i32, %c0_i32_0 : i32, i32
  }
  func.func @transform_5(%arg0: i32) -> (i32, i32) {
    %c0_i32 = arith.constant 0 : i32
    %c0_i32_0 = arith.constant 0 : i32
    %c0_i32_1 = arith.constant 0 : i32
    return %c0_i32, %c0_i32_0 : i32, i32
  }
  func.func @transform_6(%arg0: i32) -> (i32, i32) {
    %c0_i32 = arith.constant 0 : i32
    %c0_i32_0 = arith.constant 0 : i32
    %c0_i32_1 = arith.constant 0 : i32
    return %c0_i32, %c0_i32_0 : i32, i32
  }
  func.func @transform_7(%arg0: i32) -> (i32, i32) {
    %c0_i32 = arith.constant 0 : i32
    %c0_i32_0 = arith.constant 0 : i32
    %c0_i32_1 = arith.constant 0 : i32
    return %c0_i32, %c0_i32_0 : i32, i32
  }
  func.func @transform_8(%arg0: i32) -> (i32, i32) {
    %c0_i32 = arith.constant 0 : i32
    %c0_i32_0 = arith.constant 0 : i32
    %c0_i32_1 = arith.constant 0 : i32
    return %c0_i32, %c0_i32_0 : i32, i32
  }
  func.func @transform_9(%arg0: i32) -> (i32, i32) {
    %c0_i32 = arith.constant 0 : i32
    %c0_i32_0 = arith.constant 0 : i32
    return %arg0, %c0_i32 : i32, i32
  }
}

module attributes {stable_mosaic.version = 11 : i64} {
  func.func @_mlp_kernel(%arg0: i32, %arg1: memref<64x24xf32, #tpu.memory_space<vmem>>, %arg2: memref<1x24xf32, #tpu.memory_space<vmem>>, %arg3: memref<1x24xf32, #tpu.memory_space<vmem>>, %arg4: memref<24x72xf32, #tpu.memory_space<vmem>>, %arg5: memref<1x72xf32, #tpu.memory_space<vmem>>, %arg6: memref<72x24xf32, #tpu.memory_space<vmem>>, %arg7: memref<1x24xf32, #tpu.memory_space<vmem>>, %arg8: memref<1x24xf32, #tpu.memory_space<vmem>>, %arg9: memref<1x24xf32, #tpu.memory_space<vmem>>, %arg10: memref<64x24xf32, #tpu.memory_space<vmem>>) attributes {dimension_semantics = [#tpu.dimension_semantics<parallel>], iteration_bounds = array<i64: 2>, scalar_prefetch = 0 : i64, scratch_operands = 0 : i64, tpu.core_type = #tpu.core_type<tc>, window_params = [{transform_indices = @transform_0, window_bounds = array<i64: 64, 24>}, {pipeline_mode = #tpu.pipeline_mode<synchronous>, transform_indices = @transform_1, window_bounds = array<i64: 1, 24>}, {pipeline_mode = #tpu.pipeline_mode<synchronous>, transform_indices = @transform_2, window_bounds = array<i64: 1, 24>}, {pipeline_mode = #tpu.pipeline_mode<synchronous>, transform_indices = @transform_3, window_bounds = array<i64: 24, 72>}, {pipeline_mode = #tpu.pipeline_mode<synchronous>, transform_indices = @transform_4, window_bounds = array<i64: 1, 72>}, {pipeline_mode = #tpu.pipeline_mode<synchronous>, transform_indices = @transform_5, window_bounds = array<i64: 72, 24>}, {pipeline_mode = #tpu.pipeline_mode<synchronous>, transform_indices = @transform_6, window_bounds = array<i64: 1, 24>}, {pipeline_mode = #tpu.pipeline_mode<synchronous>, transform_indices = @transform_7, window_bounds = array<i64: 1, 24>}, {pipeline_mode = #tpu.pipeline_mode<synchronous>, transform_indices = @transform_8, window_bounds = array<i64: 1, 24>}, {transform_indices = @transform_9, window_bounds = array<i64: 64, 24>}]} {
    %c0 = arith.constant 0 : index
    %c0_0 = arith.constant 0 : index
    %0 = vector.load %arg1[%c0, %c0_0] : memref<64x24xf32, #tpu.memory_space<vmem>>, vector<64x24xf32>
    %c0_1 = arith.constant 0 : index
    %c0_2 = arith.constant 0 : index
    %1 = vector.load %arg2[%c0_1, %c0_2] : memref<1x24xf32, #tpu.memory_space<vmem>>, vector<1x24xf32>
    %c0_3 = arith.constant 0 : index
    %c0_4 = arith.constant 0 : index
    %2 = vector.load %arg3[%c0_3, %c0_4] : memref<1x24xf32, #tpu.memory_space<vmem>>, vector<1x24xf32>
    %cst = arith.constant dense<0.000000e+00> : vector<64xf32>
    %3 = vector.multi_reduction <add>, %0, %cst [1] : vector<64x24xf32> to vector<64xf32>
    %4 = vector.shape_cast %3 : vector<64xf32> to vector<64x1xf32>
    %cst_5 = arith.constant 2.400000e+01 : f32
    %5 = vector.broadcast %cst_5 : f32 to vector<64x1xf32>
    %6 = arith.divf %4, %5 : vector<64x1xf32>
    %7 = vector.broadcast %6 : vector<64x1xf32> to vector<64x24xf32>
    %8 = arith.subf %0, %7 : vector<64x24xf32>
    %9 = arith.mulf %8, %8 : vector<64x24xf32>
    %cst_6 = arith.constant dense<0.000000e+00> : vector<64xf32>
    %10 = vector.multi_reduction <add>, %9, %cst_6 [1] : vector<64x24xf32> to vector<64xf32>
    %11 = vector.shape_cast %10 : vector<64xf32> to vector<64x1xf32>
    %cst_7 = arith.constant 2.400000e+01 : f32
    %12 = vector.broadcast %cst_7 : f32 to vector<64x1xf32>
    %13 = arith.divf %11, %12 : vector<64x1xf32>
    %14 = vector.broadcast %6 : vector<64x1xf32> to vector<64x24xf32>
    %15 = arith.subf %0, %14 : vector<64x24xf32>
    %cst_8 = arith.constant 9.99999974E-6 : f32
    %16 = vector.broadcast %cst_8 : f32 to vector<64x1xf32>
    %17 = arith.addf %13, %16 : vector<64x1xf32>
    %18 = math.rsqrt %17 : vector<64x1xf32>
    %19 = vector.broadcast %18 : vector<64x1xf32> to vector<64x24xf32>
    %20 = arith.mulf %15, %19 : vector<64x24xf32>
    %21 = vector.broadcast %1 : vector<1x24xf32> to vector<64x24xf32>
    %22 = arith.mulf %20, %21 : vector<64x24xf32>
    %23 = vector.broadcast %2 : vector<1x24xf32> to vector<64x24xf32>
    %24 = arith.addf %22, %23 : vector<64x24xf32>
    %c0_9 = arith.constant 0 : index
    %c0_10 = arith.constant 0 : index
    %25 = vector.load %arg4[%c0_9, %c0_10] : memref<24x72xf32, #tpu.memory_space<vmem>>, vector<24x72xf32>
    %cst_11 = arith.constant dense<0.000000e+00> : vector<64x72xf32>
    %26 = tpu.matmul %24, %25, %cst_11 {dimension_numbers = #tpu.dot_dimension_numbers<[1], [0], [0], [1], [0, 0, 1, 1], [], []>} : vector<64x24xf32>, vector<24x72xf32>, vector<64x72xf32> -> vector<64x72xf32>
    %c0_12 = arith.constant 0 : index
    %c0_13 = arith.constant 0 : index
    %27 = vector.load %arg5[%c0_12, %c0_13] : memref<1x72xf32, #tpu.memory_space<vmem>>, vector<1x72xf32>
    %28 = vector.broadcast %27 : vector<1x72xf32> to vector<64x72xf32>
    %29 = arith.addf %26, %28 : vector<64x72xf32>
    %cst_14 = arith.constant 5.000000e-01 : f32
    %30 = vector.broadcast %cst_14 : f32 to vector<64x72xf32>
    %31 = arith.mulf %30, %29 : vector<64x72xf32>
    %cst_15 = arith.constant 0.707106769 : f32
    %32 = vector.broadcast %cst_15 : f32 to vector<64x72xf32>
    %33 = arith.mulf %29, %32 : vector<64x72xf32>
    %34 = math.absf %33 : vector<64x72xf32>
    %cst_16 = arith.constant 0.327591091 : f32
    %35 = vector.broadcast %cst_16 : f32 to vector<64x72xf32>
    %36 = arith.mulf %35, %34 : vector<64x72xf32>
    %cst_17 = arith.constant 1.000000e+00 : f32
    %37 = vector.broadcast %cst_17 : f32 to vector<64x72xf32>
    %38 = arith.addf %37, %36 : vector<64x72xf32>
    %cst_18 = arith.constant 1.000000e+00 : f32
    %39 = vector.broadcast %cst_18 : f32 to vector<64x72xf32>
    %40 = arith.divf %39, %38 : vector<64x72xf32>
    %cst_19 = arith.constant 1.06140542 : f32
    %41 = vector.broadcast %cst_19 : f32 to vector<64x72xf32>
    %42 = arith.mulf %40, %41 : vector<64x72xf32>
    %cst_20 = arith.constant -1.45315206 : f32
    %43 = vector.broadcast %cst_20 : f32 to vector<64x72xf32>
    %44 = arith.addf %43, %42 : vector<64x72xf32>
    %45 = arith.mulf %40, %44 : vector<64x72xf32>
    %cst_21 = arith.constant 1.42141378 : f32
    %46 = vector.broadcast %cst_21 : f32 to vector<64x72xf32>
    %47 = arith.addf %46, %45 : vector<64x72xf32>
    %48 = arith.mulf %40, %47 : vector<64x72xf32>
    %cst_22 = arith.constant -0.284496725 : f32
    %49 = vector.broadcast %cst_22 : f32 to vector<64x72xf32>
    %50 = arith.addf %49, %48 : vector<64x72xf32>
    %51 = arith.mulf %40, %50 : vector<64x72xf32>
    %cst_23 = arith.constant 0.254829586 : f32
    %52 = vector.broadcast %cst_23 : f32 to vector<64x72xf32>
    %53 = arith.addf %52, %51 : vector<64x72xf32>
    %54 = arith.mulf %40, %53 : vector<64x72xf32>
    %cst_24 = arith.constant 0.000000e+00 : f32
    %55 = vector.broadcast %cst_24 : f32 to vector<64x72xf32>
    %56 = arith.subf %55, %33 : vector<64x72xf32>
    %57 = arith.mulf %56, %33 : vector<64x72xf32>
    %58 = math.exp %57 : vector<64x72xf32>
    %59 = arith.mulf %54, %58 : vector<64x72xf32>
    %cst_25 = arith.constant 1.000000e+00 : f32
    %60 = vector.broadcast %cst_25 : f32 to vector<64x72xf32>
    %61 = arith.subf %60, %59 : vector<64x72xf32>
    %cst_26 = arith.constant 0.000000e+00 : f32
    %62 = vector.broadcast %cst_26 : f32 to vector<64x72xf32>
    %63 = arith.cmpf oge, %33, %62 : vector<64x72xf32>
    %cst_27 = arith.constant 0.000000e+00 : f32
    %64 = vector.broadcast %cst_27 : f32 to vector<64x72xf32>
    %65 = arith.subf %64, %61 : vector<64x72xf32>
    %66 = arith.select %63, %61, %65 : vector<64x72xi1>, vector<64x72xf32>
    %cst_28 = arith.constant 1.000000e+00 : f32
    %67 = vector.broadcast %cst_28 : f32 to vector<64x72xf32>
    %68 = arith.addf %67, %66 : vector<64x72xf32>
    %69 = arith.mulf %31, %68 : vector<64x72xf32>
    %c0_29 = arith.constant 0 : index
    %c0_30 = arith.constant 0 : index
    %70 = vector.load %arg6[%c0_29, %c0_30] : memref<72x24xf32, #tpu.memory_space<vmem>>, vector<72x24xf32>
    %cst_31 = arith.constant dense<0.000000e+00> : vector<64x24xf32>
    %71 = tpu.matmul %69, %70, %cst_31 {dimension_numbers = #tpu.dot_dimension_numbers<[1], [0], [0], [1], [0, 0, 1, 1], [], []>} : vector<64x72xf32>, vector<72x24xf32>, vector<64x24xf32> -> vector<64x24xf32>
    %72 = arith.addf %0, %71 : vector<64x24xf32>
    %c0_32 = arith.constant 0 : index
    %c0_33 = arith.constant 0 : index
    %73 = vector.load %arg7[%c0_32, %c0_33] : memref<1x24xf32, #tpu.memory_space<vmem>>, vector<1x24xf32>
    %74 = vector.broadcast %73 : vector<1x24xf32> to vector<64x24xf32>
    %75 = arith.addf %72, %74 : vector<64x24xf32>
    %c0_34 = arith.constant 0 : index
    %c0_35 = arith.constant 0 : index
    %76 = vector.load %arg8[%c0_34, %c0_35] : memref<1x24xf32, #tpu.memory_space<vmem>>, vector<1x24xf32>
    %c0_36 = arith.constant 0 : index
    %c0_37 = arith.constant 0 : index
    %77 = vector.load %arg9[%c0_36, %c0_37] : memref<1x24xf32, #tpu.memory_space<vmem>>, vector<1x24xf32>
    %cst_38 = arith.constant dense<0.000000e+00> : vector<64xf32>
    %78 = vector.multi_reduction <add>, %75, %cst_38 [1] : vector<64x24xf32> to vector<64xf32>
    %79 = vector.shape_cast %78 : vector<64xf32> to vector<64x1xf32>
    %cst_39 = arith.constant 2.400000e+01 : f32
    %80 = vector.broadcast %cst_39 : f32 to vector<64x1xf32>
    %81 = arith.divf %79, %80 : vector<64x1xf32>
    %82 = vector.broadcast %81 : vector<64x1xf32> to vector<64x24xf32>
    %83 = arith.subf %75, %82 : vector<64x24xf32>
    %84 = arith.mulf %83, %83 : vector<64x24xf32>
    %cst_40 = arith.constant dense<0.000000e+00> : vector<64xf32>
    %85 = vector.multi_reduction <add>, %84, %cst_40 [1] : vector<64x24xf32> to vector<64xf32>
    %86 = vector.shape_cast %85 : vector<64xf32> to vector<64x1xf32>
    %cst_41 = arith.constant 2.400000e+01 : f32
    %87 = vector.broadcast %cst_41 : f32 to vector<64x1xf32>
    %88 = arith.divf %86, %87 : vector<64x1xf32>
    %89 = vector.broadcast %81 : vector<64x1xf32> to vector<64x24xf32>
    %90 = arith.subf %75, %89 : vector<64x24xf32>
    %cst_42 = arith.constant 9.99999974E-6 : f32
    %91 = vector.broadcast %cst_42 : f32 to vector<64x1xf32>
    %92 = arith.addf %88, %91 : vector<64x1xf32>
    %93 = math.rsqrt %92 : vector<64x1xf32>
    %94 = vector.broadcast %93 : vector<64x1xf32> to vector<64x24xf32>
    %95 = arith.mulf %90, %94 : vector<64x24xf32>
    %96 = vector.broadcast %76 : vector<1x24xf32> to vector<64x24xf32>
    %97 = arith.mulf %95, %96 : vector<64x24xf32>
    %98 = vector.broadcast %77 : vector<1x24xf32> to vector<64x24xf32>
    %99 = arith.addf %97, %98 : vector<64x24xf32>
    %c0_43 = arith.constant 0 : index
    %c0_44 = arith.constant 0 : index
    %100 = vector.load %arg10[%c0_43, %c0_44] : memref<64x24xf32, #tpu.memory_space<vmem>>, vector<64x24xf32>
    tpu.vector_store %arg10[%c0_43, %c0_44], %99 {strides = array<i32>} : memref<64x24xf32, #tpu.memory_space<vmem>>, vector<64x24xf32>,
    return
  }
  func.func @transform_0(%arg0: i32) -> (i32, i32) {
    %c0_i32 = arith.constant 0 : i32
    %c0_i32_0 = arith.constant 0 : i32
    return %arg0, %c0_i32 : i32, i32
  }
  func.func @transform_1(%arg0: i32) -> (i32, i32) {
    %c0_i32 = arith.constant 0 : i32
    %c0_i32_0 = arith.constant 0 : i32
    %c0_i32_1 = arith.constant 0 : i32
    return %c0_i32, %c0_i32_0 : i32, i32
  }
  func.func @transform_2(%arg0: i32) -> (i32, i32) {
    %c0_i32 = arith.constant 0 : i32
    %c0_i32_0 = arith.constant 0 : i32
    %c0_i32_1 = arith.constant 0 : i32
    return %c0_i32, %c0_i32_0 : i32, i32
  }
  func.func @transform_3(%arg0: i32) -> (i32, i32) {
    %c0_i32 = arith.constant 0 : i32
    %c0_i32_0 = arith.constant 0 : i32
    %c0_i32_1 = arith.constant 0 : i32
    return %c0_i32, %c0_i32_0 : i32, i32
  }
  func.func @transform_4(%arg0: i32) -> (i32, i32) {
    %c0_i32 = arith.constant 0 : i32
    %c0_i32_0 = arith.constant 0 : i32
    %c0_i32_1 = arith.constant 0 : i32
    return %c0_i32, %c0_i32_0 : i32, i32
  }
  func.func @transform_5(%arg0: i32) -> (i32, i32) {
    %c0_i32 = arith.constant 0 : i32
    %c0_i32_0 = arith.constant 0 : i32
    %c0_i32_1 = arith.constant 0 : i32
    return %c0_i32, %c0_i32_0 : i32, i32
  }
  func.func @transform_6(%arg0: i32) -> (i32, i32) {
    %c0_i32 = arith.constant 0 : i32
    %c0_i32_0 = arith.constant 0 : i32
    %c0_i32_1 = arith.constant 0 : i32
    return %c0_i32, %c0_i32_0 : i32, i32
  }
  func.func @transform_7(%arg0: i32) -> (i32, i32) {
    %c0_i32 = arith.constant 0 : i32
    %c0_i32_0 = arith.constant 0 : i32
    %c0_i32_1 = arith.constant 0 : i32
    return %c0_i32, %c0_i32_0 : i32, i32
  }
  func.func @transform_8(%arg0: i32) -> (i32, i32) {
    %c0_i32 = arith.constant 0 : i32
    %c0_i32_0 = arith.constant 0 : i32
    %c0_i32_1 = arith.constant 0 : i32
    return %c0_i32, %c0_i32_0 : i32, i32
  }
  func.func @transform_9(%arg0: i32) -> (i32, i32) {
    %c0_i32 = arith.constant 0 : i32
    %c0_i32_0 = arith.constant 0 : i32
    return %arg0, %c0_i32 : i32, i32
  }
}

module attributes {stable_mosaic.version = 11 : i64} {
  func.func @_proj_out_fuse_kernel(%arg0: i32, %arg1: memref<64x216xf32, #tpu.memory_space<vmem>>, %arg2: memref<216x2xf32, #tpu.memory_space<vmem>>, %arg3: memref<1x2xf32, #tpu.memory_space<vmem>>, %arg4: memref<64x24xf32, #tpu.memory_space<vmem>>, %arg5: memref<64x24xf32, #tpu.memory_space<vmem>>, %arg6: memref<64x24xf32, #tpu.memory_space<vmem>>, %arg7: memref<64x2xf32, #tpu.memory_space<vmem>>) attributes {dimension_semantics = [#tpu.dimension_semantics<parallel>], iteration_bounds = array<i64: 2>, scalar_prefetch = 0 : i64, scratch_operands = 0 : i64, tpu.core_type = #tpu.core_type<tc>, window_params = [{transform_indices = @transform_0, window_bounds = array<i64: 64, 216>}, {pipeline_mode = #tpu.pipeline_mode<synchronous>, transform_indices = @transform_1, window_bounds = array<i64: 216, 2>}, {pipeline_mode = #tpu.pipeline_mode<synchronous>, transform_indices = @transform_2, window_bounds = array<i64: 1, 2>}, {transform_indices = @transform_3, window_bounds = array<i64: 64, 24>}, {transform_indices = @transform_4, window_bounds = array<i64: 64, 24>}, {transform_indices = @transform_5, window_bounds = array<i64: 64, 24>}, {transform_indices = @transform_6, window_bounds = array<i64: 64, 2>}]} {
    %c0 = arith.constant 0 : index
    %c0_0 = arith.constant 0 : index
    %0 = vector.load %arg1[%c0, %c0_0] : memref<64x216xf32, #tpu.memory_space<vmem>>, vector<64x216xf32>
    %c0_1 = arith.constant 0 : index
    %c0_2 = arith.constant 0 : index
    %1 = vector.load %arg2[%c0_1, %c0_2] : memref<216x2xf32, #tpu.memory_space<vmem>>, vector<216x2xf32>
    %cst = arith.constant dense<0.000000e+00> : vector<64x2xf32>
    %2 = tpu.matmul %0, %1, %cst {dimension_numbers = #tpu.dot_dimension_numbers<[1], [0], [0], [1], [0, 0, 1, 1], [], []>} : vector<64x216xf32>, vector<216x2xf32>, vector<64x2xf32> -> vector<64x2xf32>
    %c0_3 = arith.constant 0 : index
    %c0_4 = arith.constant 0 : index
    %3 = vector.load %arg3[%c0_3, %c0_4] : memref<1x2xf32, #tpu.memory_space<vmem>>, vector<1x2xf32>
    %4 = vector.broadcast %3 : vector<1x2xf32> to vector<64x2xf32>
    %5 = arith.addf %2, %4 : vector<64x2xf32>
    %cst_5 = arith.constant dense<0xFF800000> : vector<64xf32>
    %6 = vector.multi_reduction <maximumf>, %5, %cst_5 [1] : vector<64x2xf32> to vector<64xf32>
    %7 = vector.shape_cast %6 : vector<64xf32> to vector<64x1xf32>
    %8 = vector.broadcast %7 : vector<64x1xf32> to vector<64x2xf32>
    %9 = arith.subf %5, %8 : vector<64x2xf32>
    %10 = math.exp %9 : vector<64x2xf32>
    %cst_6 = arith.constant dense<0.000000e+00> : vector<64xf32>
    %11 = vector.multi_reduction <add>, %10, %cst_6 [1] : vector<64x2xf32> to vector<64xf32>
    %12 = vector.shape_cast %11 : vector<64xf32> to vector<64x1xf32>
    %13 = vector.broadcast %12 : vector<64x1xf32> to vector<64x2xf32>
    %14 = arith.divf %10, %13 : vector<64x2xf32>
    %cst_7 = arith.constant 5.000000e+00 : f32
    %15 = vector.broadcast %cst_7 : f32 to vector<64x2xf32>
    %16 = arith.mulf %14, %15 : vector<64x2xf32>
    %cst_8 = arith.constant dense<0xFF800000> : vector<64xf32>
    %17 = vector.multi_reduction <maximumf>, %16, %cst_8 [1] : vector<64x2xf32> to vector<64xf32>
    %18 = vector.shape_cast %17 : vector<64xf32> to vector<64x1xf32>
    %19 = vector.broadcast %18 : vector<64x1xf32> to vector<64x2xf32>
    %20 = arith.subf %16, %19 : vector<64x2xf32>
    %21 = math.exp %20 : vector<64x2xf32>
    %cst_9 = arith.constant dense<0.000000e+00> : vector<64xf32>
    %22 = vector.multi_reduction <add>, %21, %cst_9 [1] : vector<64x2xf32> to vector<64xf32>
    %23 = vector.shape_cast %22 : vector<64xf32> to vector<64x1xf32>
    %24 = vector.broadcast %23 : vector<64x1xf32> to vector<64x2xf32>
    %25 = arith.divf %21, %24 : vector<64x2xf32>
    %c0_10 = arith.constant 0 : index
    %c0_11 = arith.constant 0 : index
    %26 = vector.load %arg7[%c0_10, %c0_11] : memref<64x2xf32, #tpu.memory_space<vmem>>, vector<64x2xf32>
    tpu.vector_store %arg7[%c0_10, %c0_11], %25 {strides = array<i32>} : memref<64x2xf32, #tpu.memory_space<vmem>>, vector<64x2xf32>,
    %27 = vector.extract_strided_slice %14 {offsets = [0, 1], sizes = [64, 1], strides = [1, 1]} : vector<64x2xf32> to vector<64x1xf32>
    %28 = vector.extract_strided_slice %14 {offsets = [0, 0], sizes = [64, 1], strides = [1, 1]} : vector<64x2xf32> to vector<64x1xf32>
    %c0_12 = arith.constant 0 : index
    %c0_13 = arith.constant 0 : index
    %29 = vector.load %arg4[%c0_12, %c0_13] : memref<64x24xf32, #tpu.memory_space<vmem>>, vector<64x24xf32>
    %30 = vector.broadcast %27 : vector<64x1xf32> to vector<64x24xf32>
    %31 = arith.mulf %29, %30 : vector<64x24xf32>
    %c0_14 = arith.constant 0 : index
    %c0_15 = arith.constant 0 : index
    %32 = vector.load %arg5[%c0_14, %c0_15] : memref<64x24xf32, #tpu.memory_space<vmem>>, vector<64x24xf32>
    %33 = vector.broadcast %28 : vector<64x1xf32> to vector<64x24xf32>
    %34 = arith.mulf %32, %33 : vector<64x24xf32>
    %35 = arith.addf %31, %34 : vector<64x24xf32>
    %c0_16 = arith.constant 0 : index
    %c0_17 = arith.constant 0 : index
    %36 = vector.load %arg6[%c0_16, %c0_17] : memref<64x24xf32, #tpu.memory_space<vmem>>, vector<64x24xf32>
    tpu.vector_store %arg6[%c0_16, %c0_17], %35 {strides = array<i32>} : memref<64x24xf32, #tpu.memory_space<vmem>>, vector<64x24xf32>,
    return
  }
  func.func @transform_0(%arg0: i32) -> (i32, i32) {
    %c0_i32 = arith.constant 0 : i32
    %c0_i32_0 = arith.constant 0 : i32
    return %arg0, %c0_i32 : i32, i32
  }
  func.func @transform_1(%arg0: i32) -> (i32, i32) {
    %c0_i32 = arith.constant 0 : i32
    %c0_i32_0 = arith.constant 0 : i32
    %c0_i32_1 = arith.constant 0 : i32
    return %c0_i32, %c0_i32_0 : i32, i32
  }
  func.func @transform_2(%arg0: i32) -> (i32, i32) {
    %c0_i32 = arith.constant 0 : i32
    %c0_i32_0 = arith.constant 0 : i32
    %c0_i32_1 = arith.constant 0 : i32
    return %c0_i32, %c0_i32_0 : i32, i32
  }
  func.func @transform_3(%arg0: i32) -> (i32, i32) {
    %c0_i32 = arith.constant 0 : i32
    %c0_i32_0 = arith.constant 0 : i32
    return %arg0, %c0_i32 : i32, i32
  }
  func.func @transform_4(%arg0: i32) -> (i32, i32) {
    %c0_i32 = arith.constant 0 : i32
    %c0_i32_0 = arith.constant 0 : i32
    return %arg0, %c0_i32 : i32, i32
  }
  func.func @transform_5(%arg0: i32) -> (i32, i32) {
    %c0_i32 = arith.constant 0 : i32
    %c0_i32_0 = arith.constant 0 : i32
    return %arg0, %c0_i32 : i32, i32
  }
  func.func @transform_6(%arg0: i32) -> (i32, i32) {
    %c0_i32 = arith.constant 0 : i32
    %c0_i32_0 = arith.constant 0 : i32
    return %arg0, %c0_i32 : i32, i32
  }
}

</mosaic_0001>

<llo_original>
// kernel: mask_fuse_forward.10
$region0: #{mask_fuse_forward.10}
  #allocation0 [shape = 'u32[]', space=smem, size = 0x4, offset = 0x4, fixed_abs, tag = 'smem constant byte address 0x4 - core index']
  #allocation1 [shape = 'u32[144,128]{1,0:T(1,128)}', space=vmem, size = 0x12000, scoped, tag = 'internal scratch']
  %s0 = inlined_call_operand.vmem [shape: f32[128,216], index: 0, kind: input, shape index: {}]
  %s1 = inlined_call_operand.vmem [shape: f32[216,24], index: 1, kind: input, shape index: {}]
  %s2 = inlined_call_operand.vmem [shape: f32[1,24], index: 2, kind: input, shape index: {}]
  %s3 = inlined_call_operand.vmem [shape: f32[1,24], index: 3, kind: input, shape index: {}]
  %s4 = inlined_call_operand.vmem [shape: f32[1,24], index: 4, kind: input, shape index: {}]
  %s5 = inlined_call_operand.vmem [shape: f32[128,24], index: 5, kind: output, shape index: {}]
  %s6 = sld [smem:[#allocation0]]
  $region53: #{mask_fuse_forward.10} parent=0
    _
  %s8 = ssub.s32 1, %s6
  %s9 = scalar_select 0, %s8, %s6
  loop: start=0, step=1, limit=4
  $region2: #{mask_fuse_forward.10} parent=0 // loop_pre_header
    _
  $region3: #{mask_fuse_forward.10} parent=0 // loop_header
    %s11 = sphi 0, %s15
    %p12 = scmp.ge.s32.totalorder %s11, 4
    %s21 = sphi 0, %s23
    %s24 = sphi 0, %s21
    %s25 = sphi 0, %s24
    %s41 = sphi 0, %s25
    %s45 = sphi 0, %s45
    %s47 = sphi 0, %s45
    %s48 = sphi 0, %s47
    %s62 = sphi 0, %s48
    %s66 = sphi 0, %s66
    %s68 = sphi 0, %s66
    %s69 = sphi 0, %s68
    %s83 = sphi 0, %s69
    %s87 = sphi 0, %s87
    %s89 = sphi 0, %s87
    %s90 = sphi 0, %s89
    %s104 = sphi 0, %s90
    %s108 = sphi 0, %s108
    %s110 = sphi 0, %s108
    %s111 = sphi 0, %s110
    %s125 = sphi 0, %s111
    %s131 = sphi 0, %s133
    %s134 = sphi 0, %s131
    %s135 = sphi 0, %s134
    %s151 = sphi 0, %s135
  $region4: #{mask_fuse_forward.10} parent=0 // loop_header_branch
    %14 = sbr.rel (%p12) target = $region8
  $region5: #{mask_fuse_forward.10} parent=0 // loop_body
    %s16 = ssub.s32 %s11, 1
    %s17 = ssub.s32 %s11, 2
    %s18 = sadd.s32 %s11, 1
    %s19 = ssub.s32 %s11, %s18
    %p20 = scmp.eq.s32.totalorder %s19, 0
    %s22 = sadd.s32 %s21, 1
    %s23 = scalar_select %p20, %s21, %s22
    %p26 = pneg %p20
    %p27 = scmp.eq.s32.totalorder %s11, 1
    %p28 = por %p26, %p27
    %p29 = scmp.ne.s32.totalorder %s21, %s24
    %p30 = scmp.eq.s32.totalorder %s11, 0
    %p31 = por %p29, %p30
    %p32 = scmp.ne.s32.totalorder %s21, %s24
    %p33 = scmp.eq.s32.totalorder %s16, 1
    %p34 = por %p32, %p33
    %p35 = scmp.ne.s32.totalorder %s24, %s25
    %p36 = scmp.eq.s32.totalorder %s16, 0
    %p37 = por %p35, %p36
    %p38 = scmp.ne.s32.totalorder %s24, %s25
    %p39 = scmp.eq.s32.totalorder %s17, 1
    %p40 = por %p38, %p39
    %p42 = scmp.ne.s32.totalorder %s25, %s41
    %p43 = scmp.eq.s32.totalorder %s17, 0
    %p44 = por %p42, %p43
    %s46 = sadd.s32 %s45, 1
    %p49 = scmp.eq.s32.totalorder %s11, 1
    %p50 = scmp.ne.s32.totalorder %s45, %s47
    %p51 = scmp.eq.s32.totalorder %s11, 0
    %p52 = por %p50, %p51
    %p53 = scmp.ne.s32.totalorder %s45, %s47
    %p54 = scmp.eq.s32.totalorder %s16, 1
    %p55 = por %p53, %p54
    %p56 = scmp.ne.s32.totalorder %s47, %s48
    %p57 = scmp.eq.s32.totalorder %s16, 0
    %p58 = por %p56, %p57
    %p59 = scmp.ne.s32.totalorder %s47, %s48
    %p60 = scmp.eq.s32.totalorder %s17, 1
    %p61 = por %p59, %p60
    %p63 = scmp.ne.s32.totalorder %s48, %s62
    %p64 = scmp.eq.s32.totalorder %s17, 0
    %p65 = por %p63, %p64
    %s67 = sadd.s32 %s66, 1
    %p70 = scmp.eq.s32.totalorder %s11, 1
    %p71 = scmp.ne.s32.totalorder %s66, %s68
    %p72 = scmp.eq.s32.totalorder %s11, 0
    %p73 = por %p71, %p72
    %p74 = scmp.ne.s32.totalorder %s66, %s68
    %p75 = scmp.eq.s32.totalorder %s16, 1
    %p76 = por %p74, %p75
    %p77 = scmp.ne.s32.totalorder %s68, %s69
    %p78 = scmp.eq.s32.totalorder %s16, 0
    %p79 = por %p77, %p78
    %p80 = scmp.ne.s32.totalorder %s68, %s69
    %p81 = scmp.eq.s32.totalorder %s17, 1
    %p82 = por %p80, %p81
    %p84 = scmp.ne.s32.totalorder %s69, %s83
    %p85 = scmp.eq.s32.totalorder %s17, 0
    %p86 = por %p84, %p85
    %s88 = sadd.s32 %s87, 1
    %p91 = scmp.eq.s32.totalorder %s11, 1
    %p92 = scmp.ne.s32.totalorder %s87, %s89
    %p93 = scmp.eq.s32.totalorder %s11, 0
    %p94 = por %p92, %p93
    %p95 = scmp.ne.s32.totalorder %s87, %s89
    %p96 = scmp.eq.s32.totalorder %s16, 1
    %p97 = por %p95, %p96
    %p98 = scmp.ne.s32.totalorder %s89, %s90
    %p99 = scmp.eq.s32.totalorder %s16, 0
    %p100 = por %p98, %p99
    %p101 = scmp.ne.s32.totalorder %s89, %s90
    %p102 = scmp.eq.s32.totalorder %s17, 1
    %p103 = por %p101, %p102
    %p105 = scmp.ne.s32.totalorder %s90, %s104
    %p106 = scmp.eq.s32.totalorder %s17, 0
    %p107 = por %p105, %p106
    %s109 = sadd.s32 %s108, 1
    %p112 = scmp.eq.s32.totalorder %s11, 1
    %p113 = scmp.ne.s32.totalorder %s108, %s110
    %p114 = scmp.eq.s32.totalorder %s11, 0
    %p115 = por %p113, %p114
    %p116 = scmp.ne.s32.totalorder %s108, %s110
    %p117 = scmp.eq.s32.totalorder %s16, 1
    %p118 = por %p116, %p117
    %p119 = scmp.ne.s32.totalorder %s110, %s111
    %p120 = scmp.eq.s32.totalorder %s16, 0
    %p121 = por %p119, %p120
    %p122 = scmp.ne.s32.totalorder %s110, %s111
    %p123 = scmp.eq.s32.totalorder %s17, 1
    %p124 = por %p122, %p123
    %p126 = scmp.ne.s32.totalorder %s111, %s125
    %p127 = scmp.eq.s32.totalorder %s17, 0
    %p128 = por %p126, %p127
    %s129 = ssub.s32 %s11, %s18
    %p130 = scmp.eq.s32.totalorder %s129, 0
    %s132 = sadd.s32 %s131, 1
    %s133 = scalar_select %p130, %s131, %s132
    %p136 = pneg %p130
    %p137 = scmp.eq.s32.totalorder %s11, 1
    %p138 = por %p136, %p137
    %p139 = scmp.ne.s32.totalorder %s131, %s134
    %p140 = scmp.eq.s32.totalorder %s11, 0
    %p141 = por %p139, %p140
    %p142 = scmp.ne.s32.totalorder %s131, %s134
    %p143 = scmp.eq.s32.totalorder %s16, 1
    %p144 = por %p142, %p143
    %p145 = scmp.ne.s32.totalorder %s134, %s135
    %p146 = scmp.eq.s32.totalorder %s16, 0
    %p147 = por %p145, %p146
    %p148 = scmp.ne.s32.totalorder %s134, %s135
    %p149 = scmp.eq.s32.totalorder %s17, 1
    %p150 = por %p148, %p149
    %p152 = scmp.ne.s32.totalorder %s135, %s151
    %p153 = scmp.eq.s32.totalorder %s17, 0
    %p154 = por %p152, %p153
    %p155 = scmp.le.s32.totalorder 1, %s11
    %p156 = scmp.lt.s32.totalorder %s11, 3
    %p157 = pnand %p155, %p156
    %p158 = pneg %p157
    // Predicated region
    $region9: #{mask_fuse_forward.10} parent=5 // pred_check
      _
    $region10: #{mask_fuse_forward.10} parent=5 // pred_check_branch
      %160 = sbr.rel (%p157) target = $region12
    $region11: #{mask_fuse_forward.10} parent=5 // pred_region
      %s161 = ssub.s32 %s11, 1
      // Predicated region
      $region13: #{mask_fuse_forward.10} parent=11 // pred_check
        %p162 = pneg %p58
      $region14: #{mask_fuse_forward.10} parent=11 // pred_check_branch
        %164 = sbr.rel (%p162) target = $region16
      $region15: #{mask_fuse_forward.10} parent=11 // pred_region
        _
      $region16: #{mask_fuse_forward.10} parent=11 // pred_fallthru
        _
      // Predicated region
      $region17: #{mask_fuse_forward.10} parent=11 // pred_check
        %p165 = pneg %p79
      $region18: #{mask_fuse_forward.10} parent=11 // pred_check_branch
        %167 = sbr.rel (%p165) target = $region20
      $region19: #{mask_fuse_forward.10} parent=11 // pred_region
        _
      $region20: #{mask_fuse_forward.10} parent=11 // pred_fallthru
        _
      // Predicated region
      $region21: #{mask_fuse_forward.10} parent=11 // pred_check
        %p168 = pneg %p100
      $region22: #{mask_fuse_forward.10} parent=11 // pred_check_branch
        %170 = sbr.rel (%p168) target = $region24
      $region23: #{mask_fuse_forward.10} parent=11 // pred_region
        _
      $region24: #{mask_fuse_forward.10} parent=11 // pred_fallthru
        _
      // Predicated region
      $region25: #{mask_fuse_forward.10} parent=11 // pred_check
        %p171 = pneg %p121
      $region26: #{mask_fuse_forward.10} parent=11 // pred_check_branch
        %173 = sbr.rel (%p171) target = $region28
      $region27: #{mask_fuse_forward.10} parent=11 // pred_region
        _
      $region28: #{mask_fuse_forward.10} parent=11 // pred_fallthru
        _
    $region12: #{mask_fuse_forward.10} parent=5 // pred_fallthru
      _
    %p174 = scmp.lt.s32.totalorder %s11, 2
    // Predicated region
    $region29: #{mask_fuse_forward.10} parent=5 // pred_check
      %p175 = pneg %p174
    $region30: #{mask_fuse_forward.10} parent=5 // pred_check_branch
      %177 = sbr.rel (%p175) target = $region32
    $region31: #{mask_fuse_forward.10} parent=5 // pred_region
      // Predicated region
      $region33: #{mask_fuse_forward.10} parent=31 // pred_check
        %p178 = pneg %p31
      $region34: #{mask_fuse_forward.10} parent=31 // pred_check_branch
        %180 = sbr.rel (%p178) target = $region36
      $region35: #{mask_fuse_forward.10} parent=31 // pred_region
        %s181 = smul.u32 8, %s11
        %p182 = scmp.lt.s32.totalorder %s181, 15
        %s183 = scalar_select %p182, %s181, 15
        %s184 = smul.addr %s183, 2
        %s185 = smul.addr %s184, 8
        %s186 = scalar_lea.vmem %s0, %s185
        %s187 = smul.u32 8, %s11
      $region36: #{mask_fuse_forward.10} parent=31 // pred_fallthru
        _
    $region32: #{mask_fuse_forward.10} parent=5 // pred_fallthru
      _
    %p188 = scmp.le.s32.totalorder 1, %s11
    %p189 = scmp.lt.s32.totalorder %s11, 3
    %p190 = pnand %p188, %p189
    %p191 = pneg %p190
    // Predicated region
    $region37: #{mask_fuse_forward.10} parent=5 // pred_check
      _
    $region38: #{mask_fuse_forward.10} parent=5 // pred_check_branch
      %193 = sbr.rel (%p190) target = $region40
    $region39: #{mask_fuse_forward.10} parent=5 // pred_region
      %s194 = ssub.s32 %s11, 1
      %s195 = smul.u32 8, %s16
      %p196 = scmp.lt.s32.totalorder %s195, 15
      %s197 = scalar_select %p196, %s195, 15
      %s198 = smul.addr %s197, 2
      %s199 = smul.addr %s198, 8
      %s200 = scalar_lea.vmem %s0, %s199
      %p201 = pneg %p37
      %p202 = pneg %p34
      %p203 = pneg %p58
      %p204 = pneg %p55
      %p205 = pneg %p79
      %p206 = pneg %p76
      %p207 = pneg %p100
      %p208 = pneg %p97
      %p209 = pneg %p121
      %p210 = pneg %p118
      %p211 = pneg %p147
      %p212 = pneg %p144
      %s213 = smul.u32 8, %s16
      %p214 = scmp.lt.s32.totalorder %s213, 15
      %s215 = scalar_select %p214, %s213, 15
      %s216 = smul.addr %s215, 8
      %s217 = scalar_lea.vmem %s5, %s216
      %s218 = smul.u32 8, %s16
      %p219 = scmp.lt.s32.totalorder %s218, 15
      %s220 = scalar_select %p219, %s218, 15
      %s221 = smul.addr %s220, 2
      %s222 = smul.addr %s221, 8
      %s223 = scalar_lea.vmem %s0, %s222
      %s224 = smul.u32 8, %s16
      %s225 = smul.u32 8, %s16
      %p226 = scmp.lt.s32.totalorder %s225, 15
      %s227 = scalar_select %p226, %s225, 15
      %s228 = smul.addr %s227, 8
      %s229 = scalar_lea.vmem %s5, %s228
      %s230 = smul.u32 8, %s16
      %v231 = vld [vmem:[%s223] sm:$0xff]
      %v232 = vld [vmem:[%s223 + $0x8] sm:$0xff]
      %v233 = vld [vmem:[%s223 + $0x10] sm:$0xff]
      %v234 = vld [vmem:[%s223 + $0x18] sm:$0xff]
      %v235 = vld [vmem:[%s223 + $0x20] sm:$0xff]
      %v236 = vld [vmem:[%s223 + $0x28] sm:$0xff]
      %v237 = vld [vmem:[%s223 + $0x30] sm:$0xff]
      %v238 = vld [vmem:[%s223 + $0x38] sm:$0xff]
      %v239 = vld [vmem:[%s223 + $0x40] sm:$0xff]
      %v240 = vld [vmem:[%s223 + $0x48] sm:$0xff]
      %v241 = vld [vmem:[%s223 + $0x50] sm:$0xff]
      %v242 = vld [vmem:[%s223 + $0x58] sm:$0xff]
      %v243 = vld [vmem:[%s223 + $0x60] sm:$0xff]
      %v244 = vld [vmem:[%s223 + $0x68] sm:$0xff]
      %v245 = vld [vmem:[%s223 + $0x70] sm:$0xff]
      %v246 = vld [vmem:[%s223 + $0x78] sm:$0xff]
      %v247 = vld [vmem:[%s1] sm:$0xff]
      %v248 = vld [vmem:[%s1 + $0x8] sm:$0xff]
      %v249 = vld [vmem:[%s1 + $0x10] sm:$0xff]
      %v250 = vld [vmem:[%s1 + $0x18] sm:$0xff]
      %v251 = vld [vmem:[%s1 + $0x20] sm:$0xff]
      %v252 = vld [vmem:[%s1 + $0x28] sm:$0xff]
      %v253 = vld [vmem:[%s1 + $0x30] sm:$0xff]
      %v254 = vld [vmem:[%s1 + $0x38] sm:$0xff]
      %v255 = vld [vmem:[%s1 + $0x40] sm:$0xff]
      %v256 = vld [vmem:[%s1 + $0x48] sm:$0xff]
      %v257 = vld [vmem:[%s1 + $0x50] sm:$0xff]
      %v258 = vld [vmem:[%s1 + $0x58] sm:$0xff]
      %v259 = vld [vmem:[%s1 + $0x60] sm:$0xff]
      %v260 = vld [vmem:[%s1 + $0x68] sm:$0xff]
      %v261 = vld [vmem:[%s1 + $0x70] sm:$0xff]
      %v262 = vld [vmem:[%s1 + $0x78] sm:$0xff]
      %v263 = vld [vmem:[%s1 + $0x80] sm:$0xff]
      %v264 = vld [vmem:[%s1 + $0x88] sm:$0xff]
      %v265 = vld [vmem:[%s1 + $0x90] sm:$0xff]
      %v266 = vld [vmem:[%s1 + $0x98] sm:$0xff]
      %v267 = vld [vmem:[%s1 + $0xa0] sm:$0xff]
      %v268 = vld [vmem:[%s1 + $0xa8] sm:$0xff]
      %v269 = vld [vmem:[%s1 + $0xb0] sm:$0xff]
      %v270 = vld [vmem:[%s1 + $0xb8] sm:$0xff]
      %v271 = vld [vmem:[%s1 + $0xc0] sm:$0xff]
      %v272 = vld [vmem:[%s1 + $0xc8] sm:$0xff]
      %v273 = vld [vmem:[%s1 + $0xd0] sm:$0xff]
      %v274 = vld [vmem:[%s2] sm:$0x1]
      %v276 = vlaneseq
      %v277 = vshrl.u32 %v276, 7
      %v278 = vsub.s32 0, %v277
      %v279 = vrot.slane %v274, %v278
      %vm281 = vcmask 719872
      %v283 = vsel %vm281, %v232, 0
      %v286 = vsel %vm281, %v234, 0
      %v289 = vsel %vm281, %v236, 0
      %v292 = vsel %vm281, %v238, 0
      %v295 = vsel %vm281, %v240, 0
      %v298 = vsel %vm281, %v242, 0
      %v301 = vsel %vm281, %v244, 0
      %v304 = vsel %vm281, %v246, 0
      %306 = vmatprep.subr.mxu0 0.0
      %307 = vmatpush1.msra.mxu0 %v247
      %308 = vmatprep.subr.mxu0 0.0
      %309 = vmatpush1.msra.mxu0 %v248
      %310 = vmatprep.subr.mxu0 0.0
      %311 = vmatpush1.msra.mxu0 %v249
      %312 = vmatprep.subr.mxu0 0.0
      %313 = vmatpush1.msra.mxu0 %v250
      %314 = vmatprep.subr.mxu0 0.0
      %315 = vmatpush1.msra.mxu0 %v251
      %316 = vmatprep.subr.mxu0 0.0
      %317 = vmatpush1.msra.mxu0 %v252
      %318 = vmatprep.subr.mxu0 0.0
      %319 = vmatpush1.msra.mxu0 %v253
      %320 = vmatprep.subr.mxu0 0.0
      %321 = vmatpush1.msra.mxu0 %v254
      %322 = vmatprep.subr.mxu0 0.0
      %323 = vmatpush1.msra.mxu0 %v255
      %324 = vmatprep.subr.mxu0 0.0
      %325 = vmatpush1.msra.mxu0 %v256
      %326 = vmatprep.subr.mxu0 0.0
      %327 = vmatpush1.msra.mxu0 %v257
      %328 = vmatprep.subr.mxu0 0.0
      %329 = vmatpush1.msra.mxu0 %v258
      %330 = vmatprep.subr.mxu0 0.0
      %331 = vmatpush1.msra.mxu0 %v259
      %332 = vmatprep.subr.mxu0 0.0
      %333 = vmatpush1.msra.mxu0 %v260
      %334 = vmatprep.subr.mxu0 0.0
      %335 = vmatpush1.msra.mxu0 %v261
      %336 = vmatprep.subr.mxu0 0.0
      %337 = vmatpush1.msra.mxu0 %v262
      %338 = vmatprep.subr.mxu0 0.0
      %339 = vmatpush1.msra.mxu0 %v263
      %340 = vmatprep.subr.mxu0 0.0
      %341 = vmatpush1.msra.mxu0 %v264
      %342 = vmatprep.subr.mxu0 0.0
      %343 = vmatpush1.msra.mxu0 %v265
      %344 = vmatprep.subr.mxu0 0.0
      %345 = vmatpush1.msra.mxu0 %v266
      %346 = vmatprep.subr.mxu0 0.0
      %347 = vmatpush1.msra.mxu0 %v267
      %348 = vmatprep.subr.mxu0 0.0
      %349 = vmatpush1.msra.mxu0 %v268
      %350 = vmatprep.subr.mxu0 0.0
      %351 = vmatpush1.msra.mxu0 %v269
      %352 = vmatprep.subr.mxu0 0.0
      %353 = vmatpush1.msra.mxu0 %v270
      %354 = vmatprep.subr.mxu0 0.0
      %355 = vmatpush1.msra.mxu0 %v271
      %356 = vmatprep.subr.mxu0 0.0
      %357 = vmatpush1.msra.mxu0 %v272
      %358 = vmatprep.subr.mxu0 0.0
      %359 = vmatpush1.msra.mxu0 %v273
      %360 = vmatprep.subr.mxu0 0.0
      %361 = vmatpush1.msra.mxu0 0.0
      %362 = vmatprep.subr.mxu0 0.0
      %363 = vmatpush1.msra.mxu0 0.0
      %364 = vmatprep.subr.mxu0 0.0
      %365 = vmatpush1.msra.mxu0 0.0
      %366 = vmatprep.subr.mxu0 0.0
      %367 = vmatpush1.msra.mxu0 0.0
      %368 = vmatprep.subr.mxu0 0.0
      %369 = vmatpush1.msra.mxu0 0.0
      %370 = vmatprep.mubr.f32.mxu0 %v283
      %371 = vmatmul.mubr.f32.gmra.mrb[0].mxu0 %v231
      %v372 = vpop.f32.mrb[0].mxu0
      %v373 = vadd.f32 %v279, %v372
      %v374 = vpop.f32.mrb[0].mxu0
      %375 = vmatprep.mubr.f32.mxu0 %v286
      %376 = vmatmul.mubr.f32.gmra.mrb[0].mxu0 %v233
      %v377 = vpop.f32.mrb[0].mxu0
      %v378 = vadd.f32 %v279, %v377
      %v379 = vpop.f32.mrb[0].mxu0
      %380 = vmatprep.mubr.f32.mxu0 %v289
      %381 = vmatmul.mubr.f32.gmra.mrb[0].mxu0 %v235
      %v382 = vpop.f32.mrb[0].mxu0
      %v383 = vadd.f32 %v279, %v382
      %v384 = vpop.f32.mrb[0].mxu0
      %385 = vmatprep.mubr.f32.mxu0 %v292
      %386 = vmatmul.mubr.f32.gmra.mrb[0].mxu0 %v237
      %v387 = vpop.f32.mrb[0].mxu0
      %v388 = vadd.f32 %v279, %v387
      %v389 = vpop.f32.mrb[0].mxu0
      %390 = vmatprep.mubr.f32.mxu0 %v295
      %391 = vmatmul.mubr.f32.gmra.mrb[0].mxu0 %v239
      %v392 = vpop.f32.mrb[0].mxu0
      %v393 = vadd.f32 %v279, %v392
      %v394 = vpop.f32.mrb[0].mxu0
      %395 = vmatprep.mubr.f32.mxu0 %v298
      %396 = vmatmul.mubr.f32.gmra.mrb[0].mxu0 %v241
      %v397 = vpop.f32.mrb[0].mxu0
      %v398 = vadd.f32 %v279, %v397
      %v399 = vpop.f32.mrb[0].mxu0
      %400 = vmatprep.mubr.f32.mxu0 %v301
      %401 = vmatmul.mubr.f32.gmra.mrb[0].mxu0 %v243
      %v402 = vpop.f32.mrb[0].mxu0
      %v403 = vadd.f32 %v279, %v402
      %v404 = vpop.f32.mrb[0].mxu0
      %405 = vmatprep.mubr.f32.mxu0 %v304
      %406 = vmatmul.mubr.f32.gmra.mrb[0].mxu0 %v245
      %v407 = vpop.f32.mrb[0].mxu0
      %v408 = vadd.f32 %v279, %v407
      %v409 = vpop.f32.mrb[0].mxu0
      %410 = vdwg.mxu0
      %v411 = vld [vmem:[%s3] sm:$0x1]
      %v412 = vld [vmem:[%s4] sm:$0x1]
      %vm413 = vcmask 195584
      %v414 = vsel %vm413, %v373, 0.0
      %415 = vadd.xlane.f32.xlu0 %v414
      %v416 = vpop.xlane.xlu0 %415
      %v417 = vsel %vm413, %v378, 0.0
      %418 = vadd.xlane.f32.xlu0 %v417
      %v419 = vpop.xlane.xlu0 %418
      %v420 = vsel %vm413, %v383, 0.0
      %421 = vadd.xlane.f32.xlu0 %v420
      %v422 = vpop.xlane.xlu0 %421
      %v423 = vsel %vm413, %v388, 0.0
      %424 = vadd.xlane.f32.xlu0 %v423
      %v425 = vpop.xlane.xlu0 %424
      %v426 = vsel %vm413, %v393, 0.0
      %427 = vadd.xlane.f32.xlu0 %v426
      %v428 = vpop.xlane.xlu0 %427
      %v429 = vsel %vm413, %v398, 0.0
      %430 = vadd.xlane.f32.xlu0 %v429
      %v431 = vpop.xlane.xlu0 %430
      %v432 = vsel %vm413, %v403, 0.0
      %433 = vadd.xlane.f32.xlu0 %v432
      %v434 = vpop.xlane.xlu0 %433
      %v435 = vsel %vm413, %v408, 0.0
      %436 = vadd.xlane.f32.xlu0 %v435
      %v437 = vpop.xlane.xlu0 %436
      %v438 = vrcp.pop 24.0
      %v439 = vmul.f32 %v416, %v438
      %v440 = vmul.f32 %v419, %v438
      %v441 = vmul.f32 %v422, %v438
      %v442 = vmul.f32 %v425, %v438
      %v443 = vmul.f32 %v428, %v438
      %v444 = vmul.f32 %v431, %v438
      %v445 = vmul.f32 %v434, %v438
      %v446 = vmul.f32 %v437, %v438
      %v447 = vsub.f32 %v373, %v439
      %v448 = vsub.f32 %v378, %v440
      %v449 = vsub.f32 %v383, %v441
      %v450 = vsub.f32 %v388, %v442
      %v451 = vsub.f32 %v393, %v443
      %v452 = vsub.f32 %v398, %v444
      %v453 = vsub.f32 %v403, %v445
      %v454 = vsub.f32 %v408, %v446
      %v455 = vmul.f32 %v447, %v447
      %v456 = vmul.f32 %v448, %v448
      %v457 = vmul.f32 %v449, %v449
      %v458 = vmul.f32 %v450, %v450
      %v459 = vmul.f32 %v451, %v451
      %v460 = vmul.f32 %v452, %v452
      %v461 = vmul.f32 %v453, %v453
      %v462 = vmul.f32 %v454, %v454
      %v463 = vsel %vm413, %v455, 0.0
      %464 = vadd.xlane.f32.xlu0 %v463
      %v465 = vpop.xlane.xlu0 %464
      %v466 = vsel %vm413, %v456, 0.0
      %467 = vadd.xlane.f32.xlu0 %v466
      %v468 = vpop.xlane.xlu0 %467
      %v469 = vsel %vm413, %v457, 0.0
      %470 = vadd.xlane.f32.xlu0 %v469
      %v471 = vpop.xlane.xlu0 %470
      %v472 = vsel %vm413, %v458, 0.0
      %473 = vadd.xlane.f32.xlu0 %v472
      %v474 = vpop.xlane.xlu0 %473
      %v475 = vsel %vm413, %v459, 0.0
      %476 = vadd.xlane.f32.xlu0 %v475
      %v477 = vpop.xlane.xlu0 %476
      %v478 = vsel %vm413, %v460, 0.0
      %479 = vadd.xlane.f32.xlu0 %v478
      %v480 = vpop.xlane.xlu0 %479
      %v481 = vsel %vm413, %v461, 0.0
      %482 = vadd.xlane.f32.xlu0 %v481
      %v483 = vpop.xlane.xlu0 %482
      %v484 = vsel %vm413, %v462, 0.0
      %485 = vadd.xlane.f32.xlu0 %v484
      %v486 = vpop.xlane.xlu0 %485
      %v487 = vmul.f32 %v465, %v438
      %v488 = vmul.f32 %v468, %v438
      %v489 = vmul.f32 %v471, %v438
      %v490 = vmul.f32 %v474, %v438
      %v491 = vmul.f32 %v477, %v438
      %v492 = vmul.f32 %v480, %v438
      %v493 = vmul.f32 %v483, %v438
      %v494 = vmul.f32 %v486, %v438
      %v495 = vadd.f32 %v487, 1e-05
      %v496 = vadd.f32 %v488, 1e-05
      %v497 = vadd.f32 %v489, 1e-05
      %v498 = vadd.f32 %v490, 1e-05
      %v499 = vadd.f32 %v491, 1e-05
      %v500 = vadd.f32 %v492, 1e-05
      %v501 = vadd.f32 %v493, 1e-05
      %v502 = vadd.f32 %v494, 1e-05
      %v503 = vrsqrt.pop %v495
      %v504 = vrsqrt.pop %v496
      %v505 = vrsqrt.pop %v497
      %v506 = vrsqrt.pop %v498
      %v507 = vrsqrt.pop %v499
      %v508 = vrsqrt.pop %v500
      %v509 = vrsqrt.pop %v501
      %v510 = vrsqrt.pop %v502
      %v511 = vmul.f32 %v447, %v503
      %v512 = vmul.f32 %v448, %v504
      %v513 = vmul.f32 %v449, %v505
      %v514 = vmul.f32 %v450, %v506
      %v515 = vmul.f32 %v451, %v507
      %v516 = vmul.f32 %v452, %v508
      %v517 = vmul.f32 %v453, %v509
      %v518 = vmul.f32 %v454, %v510
      %v520 = vlaneseq
      %v521 = vshrl.u32 %v520, 7
      %v522 = vsub.s32 0, %v521
      %v523 = vrot.slane %v411, %v522
      %v525 = vmul.f32 %v511, %v523
      %v526 = vmul.f32 %v512, %v523
      %v527 = vmul.f32 %v513, %v523
      %v528 = vmul.f32 %v514, %v523
      %v529 = vmul.f32 %v515, %v523
      %v530 = vmul.f32 %v516, %v523
      %v531 = vmul.f32 %v517, %v523
      %v532 = vmul.f32 %v518, %v523
      %v534 = vlaneseq
      %v535 = vshrl.u32 %v534, 7
      %v536 = vsub.s32 0, %v535
      %v537 = vrot.slane %v412, %v536
      %v539 = vadd.f32 %v525, %v537
      %v540 = vadd.f32 %v526, %v537
      %v541 = vadd.f32 %v527, %v537
      %v542 = vadd.f32 %v528, %v537
      %v543 = vadd.f32 %v529, %v537
      %v544 = vadd.f32 %v530, %v537
      %v545 = vadd.f32 %v531, %v537
      %v546 = vadd.f32 %v532, %v537
      %547 = vst.msk [vmem:[%s229] sm:$0xff] %vm413, %v539
      %548 = vst.msk [vmem:[%s229 + $0x8] sm:$0xff] %vm413, %v540
      %549 = vst.msk [vmem:[%s229 + $0x10] sm:$0xff] %vm413, %v541
      %550 = vst.msk [vmem:[%s229 + $0x18] sm:$0xff] %vm413, %v542
      %551 = vst.msk [vmem:[%s229 + $0x20] sm:$0xff] %vm413, %v543
      %552 = vst.msk [vmem:[%s229 + $0x28] sm:$0xff] %vm413, %v544
      %553 = vst.msk [vmem:[%s229 + $0x30] sm:$0xff] %vm413, %v545
      %554 = vst.msk [vmem:[%s229 + $0x38] sm:$0xff] %vm413, %v546
      %s555 = smul.u32 8, %s16
      %p556 = scmp.lt.s32.totalorder %s555, 15
      %s557 = scalar_select %p556, %s555, 15
      %s558 = smul.addr %s557, 8
      %s559 = scalar_lea.vmem %s5, %s558
      // Predicated region
      $region41: #{mask_fuse_forward.10} parent=39 // pred_check
        %p560 = pneg %p144
      $region42: #{mask_fuse_forward.10} parent=39 // pred_check_branch
        %562 = sbr.rel (%p560) target = $region44
      $region43: #{mask_fuse_forward.10} parent=39 // pred_region
        %s563 = smul.u32 8, %s16
      $region44: #{mask_fuse_forward.10} parent=39 // pred_fallthru
        _
    $region40: #{mask_fuse_forward.10} parent=5 // pred_fallthru
      _
    %p564 = scmp.le.s32.totalorder 2, %s11
    // Predicated region
    $region45: #{mask_fuse_forward.10} parent=5 // pred_check
      %p565 = pneg %p564
    $region46: #{mask_fuse_forward.10} parent=5 // pred_check_branch
      %567 = sbr.rel (%p565) target = $region48
    $region47: #{mask_fuse_forward.10} parent=5 // pred_region
      %s568 = ssub.s32 %s11, 2
      // Predicated region
      $region49: #{mask_fuse_forward.10} parent=47 // pred_check
        %p569 = pneg %p150
      $region50: #{mask_fuse_forward.10} parent=47 // pred_check_branch
        %571 = sbr.rel (%p569) target = $region52
      $region51: #{mask_fuse_forward.10} parent=47 // pred_region
        %s572 = smul.u32 8, %s17
        %p573 = scmp.lt.s32.totalorder %s572, 15
        %s574 = scalar_select %p573, %s572, 15
        %s575 = smul.addr %s574, 8
        %s576 = scalar_lea.vmem %s5, %s575
      $region52: #{mask_fuse_forward.10} parent=47 // pred_fallthru
        _
    $region48: #{mask_fuse_forward.10} parent=5 // pred_fallthru
      _
  $region6: #{mask_fuse_forward.10} parent=0 // loop_footer
    %s15 = sadd.s32 1, %s11
  $region7: #{mask_fuse_forward.10} parent=0 // loop_footer_branch
    %10 = sbr.rel target = $region3
  $region8: #{mask_fuse_forward.10} parent=0 // loop_exit
    _

// kernel: mask_fuse_forward.11
$region0: #{mask_fuse_forward.11}
  #allocation0 [shape = 'u32[]', space=smem, size = 0x4, offset = 0x4, fixed_abs, tag = 'smem constant byte address 0x4 - core index']
  #allocation1 [shape = 'u32[144,128]{1,0:T(1,128)}', space=vmem, size = 0x12000, scoped, tag = 'internal scratch']
  %s0 = inlined_call_operand.vmem [shape: f32[128,24], index: 0, kind: input, shape index: {}]
  %s1 = inlined_call_operand.vmem [shape: f32[1,24], index: 1, kind: input, shape index: {}]
  %s2 = inlined_call_operand.vmem [shape: f32[1,24], index: 2, kind: input, shape index: {}]
  %s3 = inlined_call_operand.vmem [shape: f32[24,72], index: 3, kind: input, shape index: {}]
  %s4 = inlined_call_operand.vmem [shape: f32[1,72], index: 4, kind: input, shape index: {}]
  %s5 = inlined_call_operand.vmem [shape: f32[128,72], index: 5, kind: output, shape index: {}]
  %s6 = sld [smem:[#allocation0]]
  $region53: #{mask_fuse_forward.11} parent=0
    _
  %s8 = ssub.s32 1, %s6
  %s9 = scalar_select 0, %s8, %s6
  loop: start=0, step=1, limit=4
  $region2: #{mask_fuse_forward.11} parent=0 // loop_pre_header
    _
  $region3: #{mask_fuse_forward.11} parent=0 // loop_header
    %s11 = sphi 0, %s15
    %p12 = scmp.ge.s32.totalorder %s11, 4
    %s21 = sphi 0, %s23
    %s24 = sphi 0, %s21
    %s25 = sphi 0, %s24
    %s41 = sphi 0, %s25
    %s45 = sphi 0, %s45
    %s47 = sphi 0, %s45
    %s48 = sphi 0, %s47
    %s62 = sphi 0, %s48
    %s66 = sphi 0, %s66
    %s68 = sphi 0, %s66
    %s69 = sphi 0, %s68
    %s83 = sphi 0, %s69
    %s87 = sphi 0, %s87
    %s89 = sphi 0, %s87
    %s90 = sphi 0, %s89
    %s104 = sphi 0, %s90
    %s108 = sphi 0, %s108
    %s110 = sphi 0, %s108
    %s111 = sphi 0, %s110
    %s125 = sphi 0, %s111
    %s131 = sphi 0, %s133
    %s134 = sphi 0, %s131
    %s135 = sphi 0, %s134
    %s151 = sphi 0, %s135
  $region4: #{mask_fuse_forward.11} parent=0 // loop_header_branch
    %14 = sbr.rel (%p12) target = $region8
  $region5: #{mask_fuse_forward.11} parent=0 // loop_body
    %s16 = ssub.s32 %s11, 1
    %s17 = ssub.s32 %s11, 2
    %s18 = sadd.s32 %s11, 1
    %s19 = ssub.s32 %s11, %s18
    %p20 = scmp.eq.s32.totalorder %s19, 0
    %s22 = sadd.s32 %s21, 1
    %s23 = scalar_select %p20, %s21, %s22
    %p26 = pneg %p20
    %p27 = scmp.eq.s32.totalorder %s11, 1
    %p28 = por %p26, %p27
    %p29 = scmp.ne.s32.totalorder %s21, %s24
    %p30 = scmp.eq.s32.totalorder %s11, 0
    %p31 = por %p29, %p30
    %p32 = scmp.ne.s32.totalorder %s21, %s24
    %p33 = scmp.eq.s32.totalorder %s16, 1
    %p34 = por %p32, %p33
    %p35 = scmp.ne.s32.totalorder %s24, %s25
    %p36 = scmp.eq.s32.totalorder %s16, 0
    %p37 = por %p35, %p36
    %p38 = scmp.ne.s32.totalorder %s24, %s25
    %p39 = scmp.eq.s32.totalorder %s17, 1
    %p40 = por %p38, %p39
    %p42 = scmp.ne.s32.totalorder %s25, %s41
    %p43 = scmp.eq.s32.totalorder %s17, 0
    %p44 = por %p42, %p43
    %s46 = sadd.s32 %s45, 1
    %p49 = scmp.eq.s32.totalorder %s11, 1
    %p50 = scmp.ne.s32.totalorder %s45, %s47
    %p51 = scmp.eq.s32.totalorder %s11, 0
    %p52 = por %p50, %p51
    %p53 = scmp.ne.s32.totalorder %s45, %s47
    %p54 = scmp.eq.s32.totalorder %s16, 1
    %p55 = por %p53, %p54
    %p56 = scmp.ne.s32.totalorder %s47, %s48
    %p57 = scmp.eq.s32.totalorder %s16, 0
    %p58 = por %p56, %p57
    %p59 = scmp.ne.s32.totalorder %s47, %s48
    %p60 = scmp.eq.s32.totalorder %s17, 1
    %p61 = por %p59, %p60
    %p63 = scmp.ne.s32.totalorder %s48, %s62
    %p64 = scmp.eq.s32.totalorder %s17, 0
    %p65 = por %p63, %p64
    %s67 = sadd.s32 %s66, 1
    %p70 = scmp.eq.s32.totalorder %s11, 1
    %p71 = scmp.ne.s32.totalorder %s66, %s68
    %p72 = scmp.eq.s32.totalorder %s11, 0
    %p73 = por %p71, %p72
    %p74 = scmp.ne.s32.totalorder %s66, %s68
    %p75 = scmp.eq.s32.totalorder %s16, 1
    %p76 = por %p74, %p75
    %p77 = scmp.ne.s32.totalorder %s68, %s69
    %p78 = scmp.eq.s32.totalorder %s16, 0
    %p79 = por %p77, %p78
    %p80 = scmp.ne.s32.totalorder %s68, %s69
    %p81 = scmp.eq.s32.totalorder %s17, 1
    %p82 = por %p80, %p81
    %p84 = scmp.ne.s32.totalorder %s69, %s83
    %p85 = scmp.eq.s32.totalorder %s17, 0
    %p86 = por %p84, %p85
    %s88 = sadd.s32 %s87, 1
    %p91 = scmp.eq.s32.totalorder %s11, 1
    %p92 = scmp.ne.s32.totalorder %s87, %s89
    %p93 = scmp.eq.s32.totalorder %s11, 0
    %p94 = por %p92, %p93
    %p95 = scmp.ne.s32.totalorder %s87, %s89
    %p96 = scmp.eq.s32.totalorder %s16, 1
    %p97 = por %p95, %p96
    %p98 = scmp.ne.s32.totalorder %s89, %s90
    %p99 = scmp.eq.s32.totalorder %s16, 0
    %p100 = por %p98, %p99
    %p101 = scmp.ne.s32.totalorder %s89, %s90
    %p102 = scmp.eq.s32.totalorder %s17, 1
    %p103 = por %p101, %p102
    %p105 = scmp.ne.s32.totalorder %s90, %s104
    %p106 = scmp.eq.s32.totalorder %s17, 0
    %p107 = por %p105, %p106
    %s109 = sadd.s32 %s108, 1
    %p112 = scmp.eq.s32.totalorder %s11, 1
    %p113 = scmp.ne.s32.totalorder %s108, %s110
    %p114 = scmp.eq.s32.totalorder %s11, 0
    %p115 = por %p113, %p114
    %p116 = scmp.ne.s32.totalorder %s108, %s110
    %p117 = scmp.eq.s32.totalorder %s16, 1
    %p118 = por %p116, %p117
    %p119 = scmp.ne.s32.totalorder %s110, %s111
    %p120 = scmp.eq.s32.totalorder %s16, 0
    %p121 = por %p119, %p120
    %p122 = scmp.ne.s32.totalorder %s110, %s111
    %p123 = scmp.eq.s32.totalorder %s17, 1
    %p124 = por %p122, %p123
    %p126 = scmp.ne.s32.totalorder %s111, %s125
    %p127 = scmp.eq.s32.totalorder %s17, 0
    %p128 = por %p126, %p127
    %s129 = ssub.s32 %s11, %s18
    %p130 = scmp.eq.s32.totalorder %s129, 0
    %s132 = sadd.s32 %s131, 1
    %s133 = scalar_select %p130, %s131, %s132
    %p136 = pneg %p130
    %p137 = scmp.eq.s32.totalorder %s11, 1
    %p138 = por %p136, %p137
    %p139 = scmp.ne.s32.totalorder %s131, %s134
    %p140 = scmp.eq.s32.totalorder %s11, 0
    %p141 = por %p139, %p140
    %p142 = scmp.ne.s32.totalorder %s131, %s134
    %p143 = scmp.eq.s32.totalorder %s16, 1
    %p144 = por %p142, %p143
    %p145 = scmp.ne.s32.totalorder %s134, %s135
    %p146 = scmp.eq.s32.totalorder %s16, 0
    %p147 = por %p145, %p146
    %p148 = scmp.ne.s32.totalorder %s134, %s135
    %p149 = scmp.eq.s32.totalorder %s17, 1
    %p150 = por %p148, %p149
    %p152 = scmp.ne.s32.totalorder %s135, %s151
    %p153 = scmp.eq.s32.totalorder %s17, 0
    %p154 = por %p152, %p153
    %p155 = scmp.le.s32.totalorder 1, %s11
    %p156 = scmp.lt.s32.totalorder %s11, 3
    %p157 = pnand %p155, %p156
    %p158 = pneg %p157
    // Predicated region
    $region9: #{mask_fuse_forward.11} parent=5 // pred_check
      _
    $region10: #{mask_fuse_forward.11} parent=5 // pred_check_branch
      %160 = sbr.rel (%p157) target = $region12
    $region11: #{mask_fuse_forward.11} parent=5 // pred_region
      %s161 = ssub.s32 %s11, 1
      // Predicated region
      $region13: #{mask_fuse_forward.11} parent=11 // pred_check
        %p162 = pneg %p58
      $region14: #{mask_fuse_forward.11} parent=11 // pred_check_branch
        %164 = sbr.rel (%p162) target = $region16
      $region15: #{mask_fuse_forward.11} parent=11 // pred_region
        _
      $region16: #{mask_fuse_forward.11} parent=11 // pred_fallthru
        _
      // Predicated region
      $region17: #{mask_fuse_forward.11} parent=11 // pred_check
        %p165 = pneg %p79
      $region18: #{mask_fuse_forward.11} parent=11 // pred_check_branch
        %167 = sbr.rel (%p165) target = $region20
      $region19: #{mask_fuse_forward.11} parent=11 // pred_region
        _
      $region20: #{mask_fuse_forward.11} parent=11 // pred_fallthru
        _
      // Predicated region
      $region21: #{mask_fuse_forward.11} parent=11 // pred_check
        %p168 = pneg %p100
      $region22: #{mask_fuse_forward.11} parent=11 // pred_check_branch
        %170 = sbr.rel (%p168) target = $region24
      $region23: #{mask_fuse_forward.11} parent=11 // pred_region
        _
      $region24: #{mask_fuse_forward.11} parent=11 // pred_fallthru
        _
      // Predicated region
      $region25: #{mask_fuse_forward.11} parent=11 // pred_check
        %p171 = pneg %p121
      $region26: #{mask_fuse_forward.11} parent=11 // pred_check_branch
        %173 = sbr.rel (%p171) target = $region28
      $region27: #{mask_fuse_forward.11} parent=11 // pred_region
        _
      $region28: #{mask_fuse_forward.11} parent=11 // pred_fallthru
        _
    $region12: #{mask_fuse_forward.11} parent=5 // pred_fallthru
      _
    %p174 = scmp.lt.s32.totalorder %s11, 2
    // Predicated region
    $region29: #{mask_fuse_forward.11} parent=5 // pred_check
      %p175 = pneg %p174
    $region30: #{mask_fuse_forward.11} parent=5 // pred_check_branch
      %177 = sbr.rel (%p175) target = $region32
    $region31: #{mask_fuse_forward.11} parent=5 // pred_region
      // Predicated region
      $region33: #{mask_fuse_forward.11} parent=31 // pred_check
        %p178 = pneg %p31
      $region34: #{mask_fuse_forward.11} parent=31 // pred_check_branch
        %180 = sbr.rel (%p178) target = $region36
      $region35: #{mask_fuse_forward.11} parent=31 // pred_region
        %s181 = smul.u32 8, %s11
        %p182 = scmp.lt.s32.totalorder %s181, 15
        %s183 = scalar_select %p182, %s181, 15
        %s184 = smul.addr %s183, 8
        %s185 = scalar_lea.vmem %s0, %s184
        %s186 = smul.u32 8, %s11
      $region36: #{mask_fuse_forward.11} parent=31 // pred_fallthru
        _
    $region32: #{mask_fuse_forward.11} parent=5 // pred_fallthru
      _
    %p187 = scmp.le.s32.totalorder 1, %s11
    %p188 = scmp.lt.s32.totalorder %s11, 3
    %p189 = pnand %p187, %p188
    %p190 = pneg %p189
    // Predicated region
    $region37: #{mask_fuse_forward.11} parent=5 // pred_check
      _
    $region38: #{mask_fuse_forward.11} parent=5 // pred_check_branch
      %192 = sbr.rel (%p189) target = $region40
    $region39: #{mask_fuse_forward.11} parent=5 // pred_region
      %s193 = ssub.s32 %s11, 1
      %s194 = smul.u32 8, %s16
      %p195 = scmp.lt.s32.totalorder %s194, 15
      %s196 = scalar_select %p195, %s194, 15
      %s197 = smul.addr %s196, 8
      %s198 = scalar_lea.vmem %s0, %s197
      %p199 = pneg %p37
      %p200 = pneg %p34
      %p201 = pneg %p58
      %p202 = pneg %p55
      %p203 = pneg %p79
      %p204 = pneg %p76
      %p205 = pneg %p100
      %p206 = pneg %p97
      %p207 = pneg %p121
      %p208 = pneg %p118
      %p209 = pneg %p147
      %p210 = pneg %p144
      %s211 = smul.u32 8, %s16
      %p212 = scmp.lt.s32.totalorder %s211, 15
      %s213 = scalar_select %p212, %s211, 15
      %s214 = smul.addr %s213, 8
      %s215 = scalar_lea.vmem %s5, %s214
      %s216 = smul.u32 8, %s16
      %p217 = scmp.lt.s32.totalorder %s216, 15
      %s218 = scalar_select %p217, %s216, 15
      %s219 = smul.addr %s218, 8
      %s220 = scalar_lea.vmem %s0, %s219
      %s221 = smul.u32 8, %s16
      %s222 = smul.u32 8, %s16
      %p223 = scmp.lt.s32.totalorder %s222, 15
      %s224 = scalar_select %p223, %s222, 15
      %s225 = smul.addr %s224, 8
      %s226 = scalar_lea.vmem %s5, %s225
      %s227 = smul.u32 8, %s16
      %v228 = vld [vmem:[%s220] sm:$0xff]
      %v229 = vld [vmem:[%s220 + $0x8] sm:$0xff]
      %v230 = vld [vmem:[%s220 + $0x10] sm:$0xff]
      %v231 = vld [vmem:[%s220 + $0x18] sm:$0xff]
      %v232 = vld [vmem:[%s220 + $0x20] sm:$0xff]
      %v233 = vld [vmem:[%s220 + $0x28] sm:$0xff]
      %v234 = vld [vmem:[%s220 + $0x30] sm:$0xff]
      %v235 = vld [vmem:[%s220 + $0x38] sm:$0xff]
      %v236 = vld [vmem:[%s1] sm:$0x1]
      %v237 = vld [vmem:[%s2] sm:$0x1]
      %vm238 = vcmask 195584
      %v239 = vsel %vm238, %v228, 0.0
      %240 = vadd.xlane.f32.xlu0 %v239
      %v241 = vpop.xlane.xlu0 %240
      %v242 = vsel %vm238, %v229, 0.0
      %243 = vadd.xlane.f32.xlu0 %v242
      %v244 = vpop.xlane.xlu0 %243
      %v245 = vsel %vm238, %v230, 0.0
      %246 = vadd.xlane.f32.xlu0 %v245
      %v247 = vpop.xlane.xlu0 %246
      %v248 = vsel %vm238, %v231, 0.0
      %249 = vadd.xlane.f32.xlu0 %v248
      %v250 = vpop.xlane.xlu0 %249
      %v251 = vsel %vm238, %v232, 0.0
      %252 = vadd.xlane.f32.xlu0 %v251
      %v253 = vpop.xlane.xlu0 %252
      %v254 = vsel %vm238, %v233, 0.0
      %255 = vadd.xlane.f32.xlu0 %v254
      %v256 = vpop.xlane.xlu0 %255
      %v257 = vsel %vm238, %v234, 0.0
      %258 = vadd.xlane.f32.xlu0 %v257
      %v259 = vpop.xlane.xlu0 %258
      %v260 = vsel %vm238, %v235, 0.0
      %261 = vadd.xlane.f32.xlu0 %v260
      %v262 = vpop.xlane.xlu0 %261
      %v263 = vrcp.pop 24.0
      %v264 = vmul.f32 %v241, %v263
      %v265 = vmul.f32 %v244, %v263
      %v266 = vmul.f32 %v247, %v263
      %v267 = vmul.f32 %v250, %v263
      %v268 = vmul.f32 %v253, %v263
      %v269 = vmul.f32 %v256, %v263
      %v270 = vmul.f32 %v259, %v263
      %v271 = vmul.f32 %v262, %v263
      %v272 = vsub.f32 %v228, %v264
      %v273 = vsub.f32 %v229, %v265
      %v274 = vsub.f32 %v230, %v266
      %v275 = vsub.f32 %v231, %v267
      %v276 = vsub.f32 %v232, %v268
      %v277 = vsub.f32 %v233, %v269
      %v278 = vsub.f32 %v234, %v270
      %v279 = vsub.f32 %v235, %v271
      %v280 = vmul.f32 %v272, %v272
      %v281 = vmul.f32 %v273, %v273
      %v282 = vmul.f32 %v274, %v274
      %v283 = vmul.f32 %v275, %v275
      %v284 = vmul.f32 %v276, %v276
      %v285 = vmul.f32 %v277, %v277
      %v286 = vmul.f32 %v278, %v278
      %v287 = vmul.f32 %v279, %v279
      %v288 = vsel %vm238, %v280, 0.0
      %289 = vadd.xlane.f32.xlu0 %v288
      %v290 = vpop.xlane.xlu0 %289
      %v291 = vsel %vm238, %v281, 0.0
      %292 = vadd.xlane.f32.xlu0 %v291
      %v293 = vpop.xlane.xlu0 %292
      %v294 = vsel %vm238, %v282, 0.0
      %295 = vadd.xlane.f32.xlu0 %v294
      %v296 = vpop.xlane.xlu0 %295
      %v297 = vsel %vm238, %v283, 0.0
      %298 = vadd.xlane.f32.xlu0 %v297
      %v299 = vpop.xlane.xlu0 %298
      %v300 = vsel %vm238, %v284, 0.0
      %301 = vadd.xlane.f32.xlu0 %v300
      %v302 = vpop.xlane.xlu0 %301
      %v303 = vsel %vm238, %v285, 0.0
      %304 = vadd.xlane.f32.xlu0 %v303
      %v305 = vpop.xlane.xlu0 %304
      %v306 = vsel %vm238, %v286, 0.0
      %307 = vadd.xlane.f32.xlu0 %v306
      %v308 = vpop.xlane.xlu0 %307
      %v309 = vsel %vm238, %v287, 0.0
      %310 = vadd.xlane.f32.xlu0 %v309
      %v311 = vpop.xlane.xlu0 %310
      %v312 = vmul.f32 %v290, %v263
      %v313 = vmul.f32 %v293, %v263
      %v314 = vmul.f32 %v296, %v263
      %v315 = vmul.f32 %v299, %v263
      %v316 = vmul.f32 %v302, %v263
      %v317 = vmul.f32 %v305, %v263
      %v318 = vmul.f32 %v308, %v263
      %v319 = vmul.f32 %v311, %v263
      %v320 = vadd.f32 %v312, 1e-05
      %v321 = vadd.f32 %v313, 1e-05
      %v322 = vadd.f32 %v314, 1e-05
      %v323 = vadd.f32 %v315, 1e-05
      %v324 = vadd.f32 %v316, 1e-05
      %v325 = vadd.f32 %v317, 1e-05
      %v326 = vadd.f32 %v318, 1e-05
      %v327 = vadd.f32 %v319, 1e-05
      %v328 = vrsqrt.pop %v320
      %v329 = vrsqrt.pop %v321
      %v330 = vrsqrt.pop %v322
      %v331 = vrsqrt.pop %v323
      %v332 = vrsqrt.pop %v324
      %v333 = vrsqrt.pop %v325
      %v334 = vrsqrt.pop %v326
      %v335 = vrsqrt.pop %v327
      %v336 = vmul.f32 %v272, %v328
      %v337 = vmul.f32 %v273, %v329
      %v338 = vmul.f32 %v274, %v330
      %v339 = vmul.f32 %v275, %v331
      %v340 = vmul.f32 %v276, %v332
      %v341 = vmul.f32 %v277, %v333
      %v342 = vmul.f32 %v278, %v334
      %v343 = vmul.f32 %v279, %v335
      %v345 = vlaneseq
      %v346 = vshrl.u32 %v345, 7
      %v347 = vsub.s32 0, %v346
      %v348 = vrot.slane %v236, %v347
      %v350 = vmul.f32 %v336, %v348
      %v351 = vmul.f32 %v337, %v348
      %v352 = vmul.f32 %v338, %v348
      %v353 = vmul.f32 %v339, %v348
      %v354 = vmul.f32 %v340, %v348
      %v355 = vmul.f32 %v341, %v348
      %v356 = vmul.f32 %v342, %v348
      %v357 = vmul.f32 %v343, %v348
      %v359 = vlaneseq
      %v360 = vshrl.u32 %v359, 7
      %v361 = vsub.s32 0, %v360
      %v362 = vrot.slane %v237, %v361
      %v364 = vadd.f32 %v350, %v362
      %v365 = vadd.f32 %v351, %v362
      %v366 = vadd.f32 %v352, %v362
      %v367 = vadd.f32 %v353, %v362
      %v368 = vadd.f32 %v354, %v362
      %v369 = vadd.f32 %v355, %v362
      %v370 = vadd.f32 %v356, %v362
      %v371 = vadd.f32 %v357, %v362
      %v372 = vld [vmem:[%s3] sm:$0xff]
      %v373 = vld [vmem:[%s3 + $0x8] sm:$0xff]
      %v374 = vld [vmem:[%s3 + $0x10] sm:$0xff]
      %v375 = vld [vmem:[%s4] sm:$0x1]
      %v377 = vlaneseq
      %v378 = vshrl.u32 %v377, 7
      %v379 = vsub.s32 0, %v378
      %v380 = vrot.slane %v375, %v379
      %v383 = vsel %vm238, %v364, 0
      %v386 = vsel %vm238, %v365, 0
      %v389 = vsel %vm238, %v366, 0
      %v392 = vsel %vm238, %v367, 0
      %v395 = vsel %vm238, %v368, 0
      %v398 = vsel %vm238, %v369, 0
      %v401 = vsel %vm238, %v370, 0
      %v404 = vsel %vm238, %v371, 0
      %406 = vmatprep.subr.mxu0 0.0
      %407 = vmatpush1.msra.mxu0 %v372
      %408 = vmatprep.subr.mxu0 0.0
      %409 = vmatpush1.msra.mxu0 %v373
      %410 = vmatprep.subr.mxu0 0.0
      %411 = vmatpush1.msra.mxu0 %v374
      %412 = vmatprep.subr.mxu0 0.0
      %413 = vmatpush1.msra.mxu0 0.0
      %414 = vmatprep.subr.mxu0 0.0
      %415 = vmatpush1.msra.mxu0 0.0
      %416 = vmatprep.subr.mxu0 0.0
      %417 = vmatpush1.msra.mxu0 0.0
      %418 = vmatprep.subr.mxu0 0.0
      %419 = vmatpush1.msra.mxu0 0.0
      %420 = vmatprep.subr.mxu0 0.0
      %421 = vmatpush1.msra.mxu0 0.0
      %422 = vmatprep.subr.mxu0 0.0
      %423 = vmatpush1.msra.mxu0 0.0
      %424 = vmatprep.subr.mxu0 0.0
      %425 = vmatpush1.msra.mxu0 0.0
      %426 = vmatprep.subr.mxu0 0.0
      %427 = vmatpush1.msra.mxu0 0.0
      %428 = vmatprep.subr.mxu0 0.0
      %429 = vmatpush1.msra.mxu0 0.0
      %430 = vmatprep.subr.mxu0 0.0
      %431 = vmatpush1.msra.mxu0 0.0
      %432 = vmatprep.subr.mxu0 0.0
      %433 = vmatpush1.msra.mxu0 0.0
      %434 = vmatprep.subr.mxu0 0.0
      %435 = vmatpush1.msra.mxu0 0.0
      %436 = vmatprep.subr.mxu0 0.0
      %437 = vmatpush1.msra.mxu0 0.0
      %438 = vmatprep.subr.mxu0 0.0
      %439 = vmatpush1.msra.mxu0 0.0
      %440 = vmatprep.subr.mxu0 0.0
      %441 = vmatpush1.msra.mxu0 0.0
      %442 = vmatprep.subr.mxu0 0.0
      %443 = vmatpush1.msra.mxu0 0.0
      %444 = vmatprep.subr.mxu0 0.0
      %445 = vmatpush1.msra.mxu0 0.0
      %446 = vmatprep.subr.mxu0 0.0
      %447 = vmatpush1.msra.mxu0 0.0
      %448 = vmatprep.subr.mxu0 0.0
      %449 = vmatpush1.msra.mxu0 0.0
      %450 = vmatprep.subr.mxu0 0.0
      %451 = vmatpush1.msra.mxu0 0.0
      %452 = vmatprep.subr.mxu0 0.0
      %453 = vmatpush1.msra.mxu0 0.0
      %454 = vmatprep.subr.mxu0 0.0
      %455 = vmatpush1.msra.mxu0 0.0
      %456 = vmatprep.subr.mxu0 0.0
      %457 = vmatpush1.msra.mxu0 0.0
      %458 = vmatprep.subr.mxu0 0.0
      %459 = vmatpush1.msra.mxu0 0.0
      %460 = vmatprep.subr.mxu0 0.0
      %461 = vmatpush1.msra.mxu0 0.0
      %462 = vmatprep.subr.mxu0 0.0
      %463 = vmatpush1.msra.mxu0 0.0
      %464 = vmatprep.subr.mxu0 0.0
      %465 = vmatpush1.msra.mxu0 0.0
      %466 = vmatprep.subr.mxu0 0.0
      %467 = vmatpush1.msra.mxu0 0.0
      %468 = vmatprep.subr.mxu0 0.0
      %469 = vmatpush1.msra.mxu0 0.0
      %470 = vmatprep.mubr.f32.mxu0 0.0
      %471 = vmatmul.mubr.f32.gmra.mrb[0].mxu0 %v383
      %v472 = vpop.f32.mrb[0].mxu0
      %v473 = vadd.f32 %v380, %v472
      %v474 = vpop.f32.mrb[0].mxu0
      %475 = vmatprep.mubr.f32.mxu0 0.0
      %476 = vmatmul.mubr.f32.gmra.mrb[0].mxu0 %v386
      %v477 = vpop.f32.mrb[0].mxu0
      %v478 = vadd.f32 %v380, %v477
      %v479 = vpop.f32.mrb[0].mxu0
      %480 = vmatprep.mubr.f32.mxu0 0.0
      %481 = vmatmul.mubr.f32.gmra.mrb[0].mxu0 %v389
      %v482 = vpop.f32.mrb[0].mxu0
      %v483 = vadd.f32 %v380, %v482
      %v484 = vpop.f32.mrb[0].mxu0
      %485 = vmatprep.mubr.f32.mxu0 0.0
      %486 = vmatmul.mubr.f32.gmra.mrb[0].mxu0 %v392
      %v487 = vpop.f32.mrb[0].mxu0
      %v488 = vadd.f32 %v380, %v487
      %v489 = vpop.f32.mrb[0].mxu0
      %490 = vmatprep.mubr.f32.mxu0 0.0
      %491 = vmatmul.mubr.f32.gmra.mrb[0].mxu0 %v395
      %v492 = vpop.f32.mrb[0].mxu0
      %v493 = vadd.f32 %v380, %v492
      %v494 = vpop.f32.mrb[0].mxu0
      %495 = vmatprep.mubr.f32.mxu0 0.0
      %496 = vmatmul.mubr.f32.gmra.mrb[0].mxu0 %v398
      %v497 = vpop.f32.mrb[0].mxu0
      %v498 = vadd.f32 %v380, %v497
      %v499 = vpop.f32.mrb[0].mxu0
      %500 = vmatprep.mubr.f32.mxu0 0.0
      %501 = vmatmul.mubr.f32.gmra.mrb[0].mxu0 %v401
      %v502 = vpop.f32.mrb[0].mxu0
      %v503 = vadd.f32 %v380, %v502
      %v504 = vpop.f32.mrb[0].mxu0
      %505 = vmatprep.mubr.f32.mxu0 0.0
      %506 = vmatmul.mubr.f32.gmra.mrb[0].mxu0 %v404
      %v507 = vpop.f32.mrb[0].mxu0
      %v508 = vadd.f32 %v380, %v507
      %v509 = vpop.f32.mrb[0].mxu0
      %510 = vdwg.mxu0
      %vm511 = vcmask 588800
      %512 = vst.msk [vmem:[%s226] sm:$0xff] %vm511, %v473
      %513 = vst.msk [vmem:[%s226 + $0x8] sm:$0xff] %vm511, %v478
      %514 = vst.msk [vmem:[%s226 + $0x10] sm:$0xff] %vm511, %v483
      %515 = vst.msk [vmem:[%s226 + $0x18] sm:$0xff] %vm511, %v488
      %516 = vst.msk [vmem:[%s226 + $0x20] sm:$0xff] %vm511, %v493
      %517 = vst.msk [vmem:[%s226 + $0x28] sm:$0xff] %vm511, %v498
      %518 = vst.msk [vmem:[%s226 + $0x30] sm:$0xff] %vm511, %v503
      %519 = vst.msk [vmem:[%s226 + $0x38] sm:$0xff] %vm511, %v508
      %s520 = smul.u32 8, %s16
      %p521 = scmp.lt.s32.totalorder %s520, 15
      %s522 = scalar_select %p521, %s520, 15
      %s523 = smul.addr %s522, 8
      %s524 = scalar_lea.vmem %s5, %s523
      // Predicated region
      $region41: #{mask_fuse_forward.11} parent=39 // pred_check
        %p525 = pneg %p144
      $region42: #{mask_fuse_forward.11} parent=39 // pred_check_branch
        %527 = sbr.rel (%p525) target = $region44
      $region43: #{mask_fuse_forward.11} parent=39 // pred_region
        %s528 = smul.u32 8, %s16
      $region44: #{mask_fuse_forward.11} parent=39 // pred_fallthru
        _
    $region40: #{mask_fuse_forward.11} parent=5 // pred_fallthru
      _
    %p529 = scmp.le.s32.totalorder 2, %s11
    // Predicated region
    $region45: #{mask_fuse_forward.11} parent=5 // pred_check
      %p530 = pneg %p529
    $region46: #{mask_fuse_forward.11} parent=5 // pred_check_branch
      %532 = sbr.rel (%p530) target = $region48
    $region47: #{mask_fuse_forward.11} parent=5 // pred_region
      %s533 = ssub.s32 %s11, 2
      // Predicated region
      $region49: #{mask_fuse_forward.11} parent=47 // pred_check
        %p534 = pneg %p150
      $region50: #{mask_fuse_forward.11} parent=47 // pred_check_branch
        %536 = sbr.rel (%p534) target = $region52
      $region51: #{mask_fuse_forward.11} parent=47 // pred_region
        %s537 = smul.u32 8, %s17
        %p538 = scmp.lt.s32.totalorder %s537, 15
        %s539 = scalar_select %p538, %s537, 15
        %s540 = smul.addr %s539, 8
        %s541 = scalar_lea.vmem %s5, %s540
      $region52: #{mask_fuse_forward.11} parent=47 // pred_fallthru
        _
    $region48: #{mask_fuse_forward.11} parent=5 // pred_fallthru
      _
  $region6: #{mask_fuse_forward.11} parent=0 // loop_footer
    %s15 = sadd.s32 1, %s11
  $region7: #{mask_fuse_forward.11} parent=0 // loop_footer_branch
    %10 = sbr.rel target = $region3
  $region8: #{mask_fuse_forward.11} parent=0 // loop_exit
    _

// kernel: mask_fuse_forward.12
$region0: #{mask_fuse_forward.12}
  #allocation0 [shape = 'u32[]', space=smem, size = 0x4, offset = 0x4, fixed_abs, tag = 'smem constant byte address 0x4 - core index']
  #allocation1 [shape = 'u32[144,128]{1,0:T(1,128)}', space=vmem, size = 0x12000, scoped, tag = 'internal scratch']
  %s0 = inlined_call_operand.vmem [shape: f32[4,4,192], index: 0, kind: input, shape index: {}]
  %s1 = inlined_call_operand.vmem [shape: f32[4,4,192], index: 1, kind: input, shape index: {}]
  %s2 = inlined_call_operand.vmem [shape: f32[4,4,192], index: 2, kind: input, shape index: {}]
  %s3 = inlined_call_operand.vmem [shape: f32[4,4,192], index: 3, kind: input, shape index: {}]
  %s4 = inlined_call_operand.vmem [shape: f32[4,4,192], index: 4, kind: output, shape index: {}]
  %s5 = sld [smem:[#allocation0]]
  $region26: #{mask_fuse_forward.12} parent=0
    _
  %s7 = ssub.s32 1, %s5
  %s8 = scalar_select 0, %s7, %s5
  // Predicated region
  $region2: #{mask_fuse_forward.12} parent=0 // pred_check
    _
  $region3: #{mask_fuse_forward.12} parent=0 // pred_check_branch
    %10 = sbr.rel (0) target = $region5
  $region4: #{mask_fuse_forward.12} parent=0 // pred_region
    _
  $region5: #{mask_fuse_forward.12} parent=0 // pred_fallthru
    _
  // Predicated region
  $region6: #{mask_fuse_forward.12} parent=0 // pred_check
    _
  $region7: #{mask_fuse_forward.12} parent=0 // pred_check_branch
    %12 = sbr.rel (0) target = $region9
  $region8: #{mask_fuse_forward.12} parent=0 // pred_region
    _
  $region9: #{mask_fuse_forward.12} parent=0 // pred_fallthru
    _
  // Predicated region
  $region10: #{mask_fuse_forward.12} parent=0 // pred_check
    _
  $region11: #{mask_fuse_forward.12} parent=0 // pred_check_branch
    %14 = sbr.rel (0) target = $region13
  $region12: #{mask_fuse_forward.12} parent=0 // pred_region
    _
  $region13: #{mask_fuse_forward.12} parent=0 // pred_fallthru
    _
  // Predicated region
  $region14: #{mask_fuse_forward.12} parent=0 // pred_check
    _
  $region15: #{mask_fuse_forward.12} parent=0 // pred_check_branch
    %16 = sbr.rel (0) target = $region17
  $region16: #{mask_fuse_forward.12} parent=0 // pred_region
    _
  $region17: #{mask_fuse_forward.12} parent=0 // pred_fallthru
    _
  %v17 = vld [vmem:[%s0] sm:$0xff]
  %v18 = vld [vmem:[%s0 + $0x8] sm:$0xff]
  %v19 = vld [vmem:[%s0 + $0x10] sm:$0xff]
  %v20 = vld [vmem:[%s0 + $0x18] sm:$0xff]
  %v21 = vld [vmem:[%s1] sm:$0xff]
  %v22 = vld [vmem:[%s1 + $0x8] sm:$0xff]
  %v23 = vld [vmem:[%s1 + $0x10] sm:$0xff]
  %v24 = vld [vmem:[%s1 + $0x18] sm:$0xff]
  %v25 = vld [vmem:[%s2] sm:$0xff]
  %v26 = vld [vmem:[%s2 + $0x8] sm:$0xff]
  %v27 = vld [vmem:[%s2 + $0x10] sm:$0xff]
  %v28 = vld [vmem:[%s2 + $0x18] sm:$0xff]
  %v29 = vld [vmem:[%s3] sm:$0xff]
  %v30 = vld [vmem:[%s3 + $0x8] sm:$0xff]
  %v31 = vld [vmem:[%s3 + $0x10] sm:$0xff]
  %v32 = vld [vmem:[%s3 + $0x18] sm:$0xff]
  %v37 = vlaneseq
  %v38 = vshrl.u32 %v37, 7
  %v39 = vsub.s32 0, %v38
  %v40 = vrot.slane %v17, %v39
  %v41 = vlaneseq
  %v42 = vshrl.u32 %v41, 7
  %v43 = vsub.s32 4, %v42
  %v44 = vrot.slane %v17, %v43
  %v45 = vlaneseq
  %v46 = vshrl.u32 %v45, 7
  %v47 = vsub.s32 0, %v46
  %v48 = vrot.slane %v18, %v47
  %v49 = vlaneseq
  %v50 = vshrl.u32 %v49, 7
  %v51 = vsub.s32 4, %v50
  %v52 = vrot.slane %v18, %v51
  %v53 = vlaneseq
  %v54 = vshrl.u32 %v53, 7
  %v55 = vsub.s32 0, %v54
  %v56 = vrot.slane %v19, %v55
  %v57 = vlaneseq
  %v58 = vshrl.u32 %v57, 7
  %v59 = vsub.s32 4, %v58
  %v60 = vrot.slane %v19, %v59
  %v61 = vlaneseq
  %v62 = vshrl.u32 %v61, 7
  %v63 = vsub.s32 0, %v62
  %v64 = vrot.slane %v20, %v63
  %v65 = vlaneseq
  %v66 = vshrl.u32 %v65, 7
  %v67 = vsub.s32 4, %v66
  %v68 = vrot.slane %v20, %v67
  %v77 = vlaneseq
  %v78 = vshrl.u32 %v77, 7
  %v79 = vsub.s32 0, %v78
  %v80 = vrot.slane %v40, %v79
  %v81 = vlaneseq
  %v82 = vshrl.u32 %v81, 7
  %v83 = vsub.s32 0, %v82
  %v84 = vrot.slane %v44, %v83
  %v85 = vlaneseq
  %v86 = vshrl.u32 %v85, 7
  %v87 = vsub.s32 0, %v86
  %v88 = vrot.slane %v48, %v87
  %v89 = vlaneseq
  %v90 = vshrl.u32 %v89, 7
  %v91 = vsub.s32 0, %v90
  %v92 = vrot.slane %v52, %v91
  %v93 = vlaneseq
  %v94 = vshrl.u32 %v93, 7
  %v95 = vsub.s32 0, %v94
  %v96 = vrot.slane %v56, %v95
  %v97 = vlaneseq
  %v98 = vshrl.u32 %v97, 7
  %v99 = vsub.s32 0, %v98
  %v100 = vrot.slane %v60, %v99
  %v101 = vlaneseq
  %v102 = vshrl.u32 %v101, 7
  %v103 = vsub.s32 0, %v102
  %v104 = vrot.slane %v64, %v103
  %v105 = vlaneseq
  %v106 = vshrl.u32 %v105, 7
  %v107 = vsub.s32 0, %v106
  %v108 = vrot.slane %v68, %v107
  %v110 = vcombine.high %v21, %v21
  %v112 = vmul.f32 %v80, %v21
  %v113 = vmul.f32 %v84, %v110
  %v114 = vmul.f32 %v88, %v21
  %v115 = vmul.f32 %v92, %v110
  %v116 = vmul.f32 %v96, %v21
  %v117 = vmul.f32 %v100, %v110
  %v118 = vmul.f32 %v104, %v21
  %v119 = vmul.f32 %v108, %v110
  %v128 = vcombine.low %v112, %v113
  %v129 = vcombine.low %v114, %v115
  %v130 = vcombine.low %v116, %v117
  %v131 = vcombine.low %v118, %v119
  %v136 = vadd.f32 %v29, %v128
  %v137 = vadd.f32 %v30, %v129
  %v138 = vadd.f32 %v31, %v130
  %v139 = vadd.f32 %v32, %v131
  %v140 = vlaneseq
  %v141 = vshrl.u32 %v140, 7
  %v142 = vsub.s32 1, %v141
  %v143 = vrot.slane %v17, %v142
  %v144 = vlaneseq
  %v145 = vshrl.u32 %v144, 7
  %v146 = vsub.s32 5, %v145
  %v147 = vrot.slane %v17, %v146
  %v148 = vlaneseq
  %v149 = vshrl.u32 %v148, 7
  %v150 = vsub.s32 1, %v149
  %v151 = vrot.slane %v18, %v150
  %v152 = vlaneseq
  %v153 = vshrl.u32 %v152, 7
  %v154 = vsub.s32 5, %v153
  %v155 = vrot.slane %v18, %v154
  %v156 = vlaneseq
  %v157 = vshrl.u32 %v156, 7
  %v158 = vsub.s32 1, %v157
  %v159 = vrot.slane %v19, %v158
  %v160 = vlaneseq
  %v161 = vshrl.u32 %v160, 7
  %v162 = vsub.s32 5, %v161
  %v163 = vrot.slane %v19, %v162
  %v164 = vlaneseq
  %v165 = vshrl.u32 %v164, 7
  %v166 = vsub.s32 1, %v165
  %v167 = vrot.slane %v20, %v166
  %v168 = vlaneseq
  %v169 = vshrl.u32 %v168, 7
  %v170 = vsub.s32 5, %v169
  %v171 = vrot.slane %v20, %v170
  %v180 = vlaneseq
  %v181 = vshrl.u32 %v180, 7
  %v182 = vsub.s32 1, %v181
  %v183 = vrot.slane %v143, %v182
  %v184 = vlaneseq
  %v185 = vshrl.u32 %v184, 7
  %v186 = vsub.s32 1, %v185
  %v187 = vrot.slane %v147, %v186
  %v188 = vlaneseq
  %v189 = vshrl.u32 %v188, 7
  %v190 = vsub.s32 1, %v189
  %v191 = vrot.slane %v151, %v190
  %v192 = vlaneseq
  %v193 = vshrl.u32 %v192, 7
  %v194 = vsub.s32 1, %v193
  %v195 = vrot.slane %v155, %v194
  %v196 = vlaneseq
  %v197 = vshrl.u32 %v196, 7
  %v198 = vsub.s32 1, %v197
  %v199 = vrot.slane %v159, %v198
  %v200 = vlaneseq
  %v201 = vshrl.u32 %v200, 7
  %v202 = vsub.s32 1, %v201
  %v203 = vrot.slane %v163, %v202
  %v204 = vlaneseq
  %v205 = vshrl.u32 %v204, 7
  %v206 = vsub.s32 1, %v205
  %v207 = vrot.slane %v167, %v206
  %v208 = vlaneseq
  %v209 = vshrl.u32 %v208, 7
  %v210 = vsub.s32 1, %v209
  %v211 = vrot.slane %v171, %v210
  %v213 = vcombine.high %v22, %v22
  %v215 = vmul.f32 %v183, %v22
  %v216 = vmul.f32 %v187, %v213
  %v217 = vmul.f32 %v191, %v22
  %v218 = vmul.f32 %v195, %v213
  %v219 = vmul.f32 %v199, %v22
  %v220 = vmul.f32 %v203, %v213
  %v221 = vmul.f32 %v207, %v22
  %v222 = vmul.f32 %v211, %v213
  %v231 = vcombine.low %v215, %v216
  %v232 = vcombine.low %v217, %v218
  %v233 = vcombine.low %v219, %v220
  %v234 = vcombine.low %v221, %v222
  %v239 = vadd.f32 %v136, %v231
  %v240 = vadd.f32 %v137, %v232
  %v241 = vadd.f32 %v138, %v233
  %v242 = vadd.f32 %v139, %v234
  %v243 = vlaneseq
  %v244 = vshrl.u32 %v243, 7
  %v245 = vsub.s32 2, %v244
  %v246 = vrot.slane %v17, %v245
  %v247 = vlaneseq
  %v248 = vshrl.u32 %v247, 7
  %v249 = vsub.s32 6, %v248
  %v250 = vrot.slane %v17, %v249
  %v251 = vlaneseq
  %v252 = vshrl.u32 %v251, 7
  %v253 = vsub.s32 2, %v252
  %v254 = vrot.slane %v18, %v253
  %v255 = vlaneseq
  %v256 = vshrl.u32 %v255, 7
  %v257 = vsub.s32 6, %v256
  %v258 = vrot.slane %v18, %v257
  %v259 = vlaneseq
  %v260 = vshrl.u32 %v259, 7
  %v261 = vsub.s32 2, %v260
  %v262 = vrot.slane %v19, %v261
  %v263 = vlaneseq
  %v264 = vshrl.u32 %v263, 7
  %v265 = vsub.s32 6, %v264
  %v266 = vrot.slane %v19, %v265
  %v267 = vlaneseq
  %v268 = vshrl.u32 %v267, 7
  %v269 = vsub.s32 2, %v268
  %v270 = vrot.slane %v20, %v269
  %v271 = vlaneseq
  %v272 = vshrl.u32 %v271, 7
  %v273 = vsub.s32 6, %v272
  %v274 = vrot.slane %v20, %v273
  %v283 = vlaneseq
  %v284 = vshrl.u32 %v283, 7
  %v285 = vsub.s32 2, %v284
  %v286 = vrot.slane %v246, %v285
  %v287 = vlaneseq
  %v288 = vshrl.u32 %v287, 7
  %v289 = vsub.s32 2, %v288
  %v290 = vrot.slane %v250, %v289
  %v291 = vlaneseq
  %v292 = vshrl.u32 %v291, 7
  %v293 = vsub.s32 2, %v292
  %v294 = vrot.slane %v254, %v293
  %v295 = vlaneseq
  %v296 = vshrl.u32 %v295, 7
  %v297 = vsub.s32 2, %v296
  %v298 = vrot.slane %v258, %v297
  %v299 = vlaneseq
  %v300 = vshrl.u32 %v299, 7
  %v301 = vsub.s32 2, %v300
  %v302 = vrot.slane %v262, %v301
  %v303 = vlaneseq
  %v304 = vshrl.u32 %v303, 7
  %v305 = vsub.s32 2, %v304
  %v306 = vrot.slane %v266, %v305
  %v307 = vlaneseq
  %v308 = vshrl.u32 %v307, 7
  %v309 = vsub.s32 2, %v308
  %v310 = vrot.slane %v270, %v309
  %v311 = vlaneseq
  %v312 = vshrl.u32 %v311, 7
  %v313 = vsub.s32 2, %v312
  %v314 = vrot.slane %v274, %v313
  %v316 = vcombine.high %v23, %v23
  %v318 = vmul.f32 %v286, %v23
  %v319 = vmul.f32 %v290, %v316
  %v320 = vmul.f32 %v294, %v23
  %v321 = vmul.f32 %v298, %v316
  %v322 = vmul.f32 %v302, %v23
  %v323 = vmul.f32 %v306, %v316
  %v324 = vmul.f32 %v310, %v23
  %v325 = vmul.f32 %v314, %v316
  %v334 = vcombine.low %v318, %v319
  %v335 = vcombine.low %v320, %v321
  %v336 = vcombine.low %v322, %v323
  %v337 = vcombine.low %v324, %v325
  %v342 = vadd.f32 %v239, %v334
  %v343 = vadd.f32 %v240, %v335
  %v344 = vadd.f32 %v241, %v336
  %v345 = vadd.f32 %v242, %v337
  %v346 = vlaneseq
  %v347 = vshrl.u32 %v346, 7
  %v348 = vsub.s32 3, %v347
  %v349 = vrot.slane %v17, %v348
  %v350 = vlaneseq
  %v351 = vshrl.u32 %v350, 7
  %v352 = vsub.s32 7, %v351
  %v353 = vrot.slane %v17, %v352
  %v354 = vlaneseq
  %v355 = vshrl.u32 %v354, 7
  %v356 = vsub.s32 3, %v355
  %v357 = vrot.slane %v18, %v356
  %v358 = vlaneseq
  %v359 = vshrl.u32 %v358, 7
  %v360 = vsub.s32 7, %v359
  %v361 = vrot.slane %v18, %v360
  %v362 = vlaneseq
  %v363 = vshrl.u32 %v362, 7
  %v364 = vsub.s32 3, %v363
  %v365 = vrot.slane %v19, %v364
  %v366 = vlaneseq
  %v367 = vshrl.u32 %v366, 7
  %v368 = vsub.s32 7, %v367
  %v369 = vrot.slane %v19, %v368
  %v370 = vlaneseq
  %v371 = vshrl.u32 %v370, 7
  %v372 = vsub.s32 3, %v371
  %v373 = vrot.slane %v20, %v372
  %v374 = vlaneseq
  %v375 = vshrl.u32 %v374, 7
  %v376 = vsub.s32 7, %v375
  %v377 = vrot.slane %v20, %v376
  %v386 = vlaneseq
  %v387 = vshrl.u32 %v386, 7
  %v388 = vsub.s32 3, %v387
  %v389 = vrot.slane %v349, %v388
  %v390 = vlaneseq
  %v391 = vshrl.u32 %v390, 7
  %v392 = vsub.s32 3, %v391
  %v393 = vrot.slane %v353, %v392
  %v394 = vlaneseq
  %v395 = vshrl.u32 %v394, 7
  %v396 = vsub.s32 3, %v395
  %v397 = vrot.slane %v357, %v396
  %v398 = vlaneseq
  %v399 = vshrl.u32 %v398, 7
  %v400 = vsub.s32 3, %v399
  %v401 = vrot.slane %v361, %v400
  %v402 = vlaneseq
  %v403 = vshrl.u32 %v402, 7
  %v404 = vsub.s32 3, %v403
  %v405 = vrot.slane %v365, %v404
  %v406 = vlaneseq
  %v407 = vshrl.u32 %v406, 7
  %v408 = vsub.s32 3, %v407
  %v409 = vrot.slane %v369, %v408
  %v410 = vlaneseq
  %v411 = vshrl.u32 %v410, 7
  %v412 = vsub.s32 3, %v411
  %v413 = vrot.slane %v373, %v412
  %v414 = vlaneseq
  %v415 = vshrl.u32 %v414, 7
  %v416 = vsub.s32 3, %v415
  %v417 = vrot.slane %v377, %v416
  %v419 = vcombine.high %v24, %v24
  %v421 = vmul.f32 %v389, %v24
  %v422 = vmul.f32 %v393, %v419
  %v423 = vmul.f32 %v397, %v24
  %v424 = vmul.f32 %v401, %v419
  %v425 = vmul.f32 %v405, %v24
  %v426 = vmul.f32 %v409, %v419
  %v427 = vmul.f32 %v413, %v24
  %v428 = vmul.f32 %v417, %v419
  %v437 = vcombine.low %v421, %v422
  %v438 = vcombine.low %v423, %v424
  %v439 = vcombine.low %v425, %v426
  %v440 = vcombine.low %v427, %v428
  %v445 = vadd.f32 %v342, %v437
  %v446 = vadd.f32 %v343, %v438
  %v447 = vadd.f32 %v344, %v439
  %v448 = vadd.f32 %v345, %v440
  %v453 = vcombine.high %v445, %v445
  %v454 = vcombine.high %v446, %v446
  %v455 = vcombine.high %v447, %v447
  %v456 = vcombine.high %v448, %v448
  %vm461 = vcmask 1043456
  %v462 = vsel %vm461, %v445, -inf
  %v463 = vrot.slane %v462, 4
  %v464 = vmax.f32 %v462, %v463
  %v465 = vrot.slane %v464, 2
  %v466 = vmax.f32 %v464, %v465
  %v467 = vrot.slane %v466, 1
  %v468 = vmax.f32 %v466, %v467
  %vm469 = vcmask 519168
  %v470 = vsel %vm469, %v453, -inf
  %v471 = vrot.slane %v470, 4
  %v472 = vmax.f32 %v470, %v471
  %v473 = vrot.slane %v472, 2
  %v474 = vmax.f32 %v472, %v473
  %v475 = vrot.slane %v474, 1
  %v476 = vmax.f32 %v474, %v475
  %v477 = vsel %vm461, %v446, -inf
  %v478 = vrot.slane %v477, 4
  %v479 = vmax.f32 %v477, %v478
  %v480 = vrot.slane %v479, 2
  %v481 = vmax.f32 %v479, %v480
  %v482 = vrot.slane %v481, 1
  %v483 = vmax.f32 %v481, %v482
  %v484 = vsel %vm469, %v454, -inf
  %v485 = vrot.slane %v484, 4
  %v486 = vmax.f32 %v484, %v485
  %v487 = vrot.slane %v486, 2
  %v488 = vmax.f32 %v486, %v487
  %v489 = vrot.slane %v488, 1
  %v490 = vmax.f32 %v488, %v489
  %v491 = vsel %vm461, %v447, -inf
  %v492 = vrot.slane %v491, 4
  %v493 = vmax.f32 %v491, %v492
  %v494 = vrot.slane %v493, 2
  %v495 = vmax.f32 %v493, %v494
  %v496 = vrot.slane %v495, 1
  %v497 = vmax.f32 %v495, %v496
  %v498 = vsel %vm469, %v455, -inf
  %v499 = vrot.slane %v498, 4
  %v500 = vmax.f32 %v498, %v499
  %v501 = vrot.slane %v500, 2
  %v502 = vmax.f32 %v500, %v501
  %v503 = vrot.slane %v502, 1
  %v504 = vmax.f32 %v502, %v503
  %v505 = vsel %vm461, %v448, -inf
  %v506 = vrot.slane %v505, 4
  %v507 = vmax.f32 %v505, %v506
  %v508 = vrot.slane %v507, 2
  %v509 = vmax.f32 %v507, %v508
  %v510 = vrot.slane %v509, 1
  %v511 = vmax.f32 %v509, %v510
  %v512 = vsel %vm469, %v456, -inf
  %v513 = vrot.slane %v512, 4
  %v514 = vmax.f32 %v512, %v513
  %v515 = vrot.slane %v514, 2
  %v516 = vmax.f32 %v514, %v515
  %v517 = vrot.slane %v516, 1
  %v518 = vmax.f32 %v516, %v517
  %v527 = vcombine.low %v468, %v476
  %v528 = vcombine.low %v483, %v490
  %v529 = vcombine.low %v497, %v504
  %v530 = vcombine.low %v511, %v518
  %v535 = vsub.f32 %v445, %v527
  %v536 = vsub.f32 %v446, %v528
  %v537 = vsub.f32 %v447, %v529
  %v538 = vsub.f32 %v448, %v530
  %v539 = vmul.f32 %v535, 1.442695
  %v540 = vpow.pop %v539
  %v541 = vmul.f32 %v536, 1.442695
  %v542 = vpow.pop %v541
  %v543 = vmul.f32 %v537, 1.442695
  %v544 = vpow.pop %v543
  %v545 = vmul.f32 %v538, 1.442695
  %v546 = vpow.pop %v545
  %v551 = vcombine.high %v540, %v540
  %v552 = vcombine.high %v542, %v542
  %v553 = vcombine.high %v544, %v544
  %v554 = vcombine.high %v546, %v546
  %v559 = vsel %vm461, %v540, 0.0
  %v560 = vrot.slane %v559, 4
  %v561 = vadd.f32 %v559, %v560
  %v562 = vrot.slane %v561, 2
  %v563 = vadd.f32 %v561, %v562
  %v564 = vrot.slane %v563, 1
  %v565 = vadd.f32 %v563, %v564
  %v566 = vsel %vm469, %v551, 0.0
  %v567 = vrot.slane %v566, 4
  %v568 = vadd.f32 %v566, %v567
  %v569 = vrot.slane %v568, 2
  %v570 = vadd.f32 %v568, %v569
  %v571 = vrot.slane %v570, 1
  %v572 = vadd.f32 %v570, %v571
  %v573 = vsel %vm461, %v542, 0.0
  %v574 = vrot.slane %v573, 4
  %v575 = vadd.f32 %v573, %v574
  %v576 = vrot.slane %v575, 2
  %v577 = vadd.f32 %v575, %v576
  %v578 = vrot.slane %v577, 1
  %v579 = vadd.f32 %v577, %v578
  %v580 = vsel %vm469, %v552, 0.0
  %v581 = vrot.slane %v580, 4
  %v582 = vadd.f32 %v580, %v581
  %v583 = vrot.slane %v582, 2
  %v584 = vadd.f32 %v582, %v583
  %v585 = vrot.slane %v584, 1
  %v586 = vadd.f32 %v584, %v585
  %v587 = vsel %vm461, %v544, 0.0
  %v588 = vrot.slane %v587, 4
  %v589 = vadd.f32 %v587, %v588
  %v590 = vrot.slane %v589, 2
  %v591 = vadd.f32 %v589, %v590
  %v592 = vrot.slane %v591, 1
  %v593 = vadd.f32 %v591, %v592
  %v594 = vsel %vm469, %v553, 0.0
  %v595 = vrot.slane %v594, 4
  %v596 = vadd.f32 %v594, %v595
  %v597 = vrot.slane %v596, 2
  %v598 = vadd.f32 %v596, %v597
  %v599 = vrot.slane %v598, 1
  %v600 = vadd.f32 %v598, %v599
  %v601 = vsel %vm461, %v546, 0.0
  %v602 = vrot.slane %v601, 4
  %v603 = vadd.f32 %v601, %v602
  %v604 = vrot.slane %v603, 2
  %v605 = vadd.f32 %v603, %v604
  %v606 = vrot.slane %v605, 1
  %v607 = vadd.f32 %v605, %v606
  %v608 = vsel %vm469, %v554, 0.0
  %v609 = vrot.slane %v608, 4
  %v610 = vadd.f32 %v608, %v609
  %v611 = vrot.slane %v610, 2
  %v612 = vadd.f32 %v610, %v611
  %v613 = vrot.slane %v612, 1
  %v614 = vadd.f32 %v612, %v613
  %v615 = vrcp.pop %v565
  %v616 = vrcp.pop %v572
  %v617 = vrcp.pop %v579
  %v618 = vrcp.pop %v586
  %v619 = vrcp.pop %v593
  %v620 = vrcp.pop %v600
  %v621 = vrcp.pop %v607
  %v622 = vrcp.pop %v614
  %v631 = vcombine.low %v615, %v616
  %v632 = vcombine.low %v617, %v618
  %v633 = vcombine.low %v619, %v620
  %v634 = vcombine.low %v621, %v622
  %v639 = vmul.f32 %v540, %v631
  %v640 = vmul.f32 %v542, %v632
  %v641 = vmul.f32 %v544, %v633
  %v642 = vmul.f32 %v546, %v634
  %v647 = vlaneseq
  %v648 = vshrl.u32 %v647, 7
  %v649 = vsub.s32 0, %v648
  %v650 = vrot.slane %v639, %v649
  %v651 = vlaneseq
  %v652 = vshrl.u32 %v651, 7
  %v653 = vsub.s32 4, %v652
  %v654 = vrot.slane %v639, %v653
  %v655 = vlaneseq
  %v656 = vshrl.u32 %v655, 7
  %v657 = vsub.s32 0, %v656
  %v658 = vrot.slane %v640, %v657
  %v659 = vlaneseq
  %v660 = vshrl.u32 %v659, 7
  %v661 = vsub.s32 4, %v660
  %v662 = vrot.slane %v640, %v661
  %v663 = vlaneseq
  %v664 = vshrl.u32 %v663, 7
  %v665 = vsub.s32 0, %v664
  %v666 = vrot.slane %v641, %v665
  %v667 = vlaneseq
  %v668 = vshrl.u32 %v667, 7
  %v669 = vsub.s32 4, %v668
  %v670 = vrot.slane %v641, %v669
  %v671 = vlaneseq
  %v672 = vshrl.u32 %v671, 7
  %v673 = vsub.s32 0, %v672
  %v674 = vrot.slane %v642, %v673
  %v675 = vlaneseq
  %v676 = vshrl.u32 %v675, 7
  %v677 = vsub.s32 4, %v676
  %v678 = vrot.slane %v642, %v677
  %v687 = vlaneseq
  %v688 = vshrl.u32 %v687, 7
  %v689 = vsub.s32 0, %v688
  %v690 = vrot.slane %v650, %v689
  %v691 = vlaneseq
  %v692 = vshrl.u32 %v691, 7
  %v693 = vsub.s32 0, %v692
  %v694 = vrot.slane %v654, %v693
  %v695 = vlaneseq
  %v696 = vshrl.u32 %v695, 7
  %v697 = vsub.s32 0, %v696
  %v698 = vrot.slane %v658, %v697
  %v699 = vlaneseq
  %v700 = vshrl.u32 %v699, 7
  %v701 = vsub.s32 0, %v700
  %v702 = vrot.slane %v662, %v701
  %v703 = vlaneseq
  %v704 = vshrl.u32 %v703, 7
  %v705 = vsub.s32 0, %v704
  %v706 = vrot.slane %v666, %v705
  %v707 = vlaneseq
  %v708 = vshrl.u32 %v707, 7
  %v709 = vsub.s32 0, %v708
  %v710 = vrot.slane %v670, %v709
  %v711 = vlaneseq
  %v712 = vshrl.u32 %v711, 7
  %v713 = vsub.s32 0, %v712
  %v714 = vrot.slane %v674, %v713
  %v715 = vlaneseq
  %v716 = vshrl.u32 %v715, 7
  %v717 = vsub.s32 0, %v716
  %v718 = vrot.slane %v678, %v717
  %v720 = vcombine.high %v25, %v25
  %v722 = vmul.f32 %v690, %v25
  %v723 = vmul.f32 %v694, %v720
  %v724 = vmul.f32 %v698, %v25
  %v725 = vmul.f32 %v702, %v720
  %v726 = vmul.f32 %v706, %v25
  %v727 = vmul.f32 %v710, %v720
  %v728 = vmul.f32 %v714, %v25
  %v729 = vmul.f32 %v718, %v720
  %v730 = vlaneseq
  %v731 = vshrl.u32 %v730, 7
  %v732 = vsub.s32 1, %v731
  %v733 = vrot.slane %v639, %v732
  %v734 = vlaneseq
  %v735 = vshrl.u32 %v734, 7
  %v736 = vsub.s32 5, %v735
  %v737 = vrot.slane %v639, %v736
  %v738 = vlaneseq
  %v739 = vshrl.u32 %v738, 7
  %v740 = vsub.s32 1, %v739
  %v741 = vrot.slane %v640, %v740
  %v742 = vlaneseq
  %v743 = vshrl.u32 %v742, 7
  %v744 = vsub.s32 5, %v743
  %v745 = vrot.slane %v640, %v744
  %v746 = vlaneseq
  %v747 = vshrl.u32 %v746, 7
  %v748 = vsub.s32 1, %v747
  %v749 = vrot.slane %v641, %v748
  %v750 = vlaneseq
  %v751 = vshrl.u32 %v750, 7
  %v752 = vsub.s32 5, %v751
  %v753 = vrot.slane %v641, %v752
  %v754 = vlaneseq
  %v755 = vshrl.u32 %v754, 7
  %v756 = vsub.s32 1, %v755
  %v757 = vrot.slane %v642, %v756
  %v758 = vlaneseq
  %v759 = vshrl.u32 %v758, 7
  %v760 = vsub.s32 5, %v759
  %v761 = vrot.slane %v642, %v760
  %v770 = vlaneseq
  %v771 = vshrl.u32 %v770, 7
  %v772 = vsub.s32 1, %v771
  %v773 = vrot.slane %v733, %v772
  %v774 = vlaneseq
  %v775 = vshrl.u32 %v774, 7
  %v776 = vsub.s32 1, %v775
  %v777 = vrot.slane %v737, %v776
  %v778 = vlaneseq
  %v779 = vshrl.u32 %v778, 7
  %v780 = vsub.s32 1, %v779
  %v781 = vrot.slane %v741, %v780
  %v782 = vlaneseq
  %v783 = vshrl.u32 %v782, 7
  %v784 = vsub.s32 1, %v783
  %v785 = vrot.slane %v745, %v784
  %v786 = vlaneseq
  %v787 = vshrl.u32 %v786, 7
  %v788 = vsub.s32 1, %v787
  %v789 = vrot.slane %v749, %v788
  %v790 = vlaneseq
  %v791 = vshrl.u32 %v790, 7
  %v792 = vsub.s32 1, %v791
  %v793 = vrot.slane %v753, %v792
  %v794 = vlaneseq
  %v795 = vshrl.u32 %v794, 7
  %v796 = vsub.s32 1, %v795
  %v797 = vrot.slane %v757, %v796
  %v798 = vlaneseq
  %v799 = vshrl.u32 %v798, 7
  %v800 = vsub.s32 1, %v799
  %v801 = vrot.slane %v761, %v800
  %v803 = vcombine.high %v26, %v26
  %v805 = vmul.f32 %v773, %v26
  %v806 = vmul.f32 %v777, %v803
  %v807 = vmul.f32 %v781, %v26
  %v808 = vmul.f32 %v785, %v803
  %v809 = vmul.f32 %v789, %v26
  %v810 = vmul.f32 %v793, %v803
  %v811 = vmul.f32 %v797, %v26
  %v812 = vmul.f32 %v801, %v803
  %v813 = vadd.f32 %v722, %v805
  %v814 = vadd.f32 %v723, %v806
  %v815 = vadd.f32 %v724, %v807
  %v816 = vadd.f32 %v725, %v808
  %v817 = vadd.f32 %v726, %v809
  %v818 = vadd.f32 %v727, %v810
  %v819 = vadd.f32 %v728, %v811
  %v820 = vadd.f32 %v729, %v812
  %v821 = vlaneseq
  %v822 = vshrl.u32 %v821, 7
  %v823 = vsub.s32 2, %v822
  %v824 = vrot.slane %v639, %v823
  %v825 = vlaneseq
  %v826 = vshrl.u32 %v825, 7
  %v827 = vsub.s32 6, %v826
  %v828 = vrot.slane %v639, %v827
  %v829 = vlaneseq
  %v830 = vshrl.u32 %v829, 7
  %v831 = vsub.s32 2, %v830
  %v832 = vrot.slane %v640, %v831
  %v833 = vlaneseq
  %v834 = vshrl.u32 %v833, 7
  %v835 = vsub.s32 6, %v834
  %v836 = vrot.slane %v640, %v835
  %v837 = vlaneseq
  %v838 = vshrl.u32 %v837, 7
  %v839 = vsub.s32 2, %v838
  %v840 = vrot.slane %v641, %v839
  %v841 = vlaneseq
  %v842 = vshrl.u32 %v841, 7
  %v843 = vsub.s32 6, %v842
  %v844 = vrot.slane %v641, %v843
  %v845 = vlaneseq
  %v846 = vshrl.u32 %v845, 7
  %v847 = vsub.s32 2, %v846
  %v848 = vrot.slane %v642, %v847
  %v849 = vlaneseq
  %v850 = vshrl.u32 %v849, 7
  %v851 = vsub.s32 6, %v850
  %v852 = vrot.slane %v642, %v851
  %v861 = vlaneseq
  %v862 = vshrl.u32 %v861, 7
  %v863 = vsub.s32 2, %v862
  %v864 = vrot.slane %v824, %v863
  %v865 = vlaneseq
  %v866 = vshrl.u32 %v865, 7
  %v867 = vsub.s32 2, %v866
  %v868 = vrot.slane %v828, %v867
  %v869 = vlaneseq
  %v870 = vshrl.u32 %v869, 7
  %v871 = vsub.s32 2, %v870
  %v872 = vrot.slane %v832, %v871
  %v873 = vlaneseq
  %v874 = vshrl.u32 %v873, 7
  %v875 = vsub.s32 2, %v874
  %v876 = vrot.slane %v836, %v875
  %v877 = vlaneseq
  %v878 = vshrl.u32 %v877, 7
  %v879 = vsub.s32 2, %v878
  %v880 = vrot.slane %v840, %v879
  %v881 = vlaneseq
  %v882 = vshrl.u32 %v881, 7
  %v883 = vsub.s32 2, %v882
  %v884 = vrot.slane %v844, %v883
  %v885 = vlaneseq
  %v886 = vshrl.u32 %v885, 7
  %v887 = vsub.s32 2, %v886
  %v888 = vrot.slane %v848, %v887
  %v889 = vlaneseq
  %v890 = vshrl.u32 %v889, 7
  %v891 = vsub.s32 2, %v890
  %v892 = vrot.slane %v852, %v891
  %v894 = vcombine.high %v27, %v27
  %v896 = vmul.f32 %v864, %v27
  %v897 = vmul.f32 %v868, %v894
  %v898 = vmul.f32 %v872, %v27
  %v899 = vmul.f32 %v876, %v894
  %v900 = vmul.f32 %v880, %v27
  %v901 = vmul.f32 %v884, %v894
  %v902 = vmul.f32 %v888, %v27
  %v903 = vmul.f32 %v892, %v894
  %v904 = vadd.f32 %v813, %v896
  %v905 = vadd.f32 %v814, %v897
  %v906 = vadd.f32 %v815, %v898
  %v907 = vadd.f32 %v816, %v899
  %v908 = vadd.f32 %v817, %v900
  %v909 = vadd.f32 %v818, %v901
  %v910 = vadd.f32 %v819, %v902
  %v911 = vadd.f32 %v820, %v903
  %v912 = vlaneseq
  %v913 = vshrl.u32 %v912, 7
  %v914 = vsub.s32 3, %v913
  %v915 = vrot.slane %v639, %v914
  %v916 = vlaneseq
  %v917 = vshrl.u32 %v916, 7
  %v918 = vsub.s32 7, %v917
  %v919 = vrot.slane %v639, %v918
  %v920 = vlaneseq
  %v921 = vshrl.u32 %v920, 7
  %v922 = vsub.s32 3, %v921
  %v923 = vrot.slane %v640, %v922
  %v924 = vlaneseq
  %v925 = vshrl.u32 %v924, 7
  %v926 = vsub.s32 7, %v925
  %v927 = vrot.slane %v640, %v926
  %v928 = vlaneseq
  %v929 = vshrl.u32 %v928, 7
  %v930 = vsub.s32 3, %v929
  %v931 = vrot.slane %v641, %v930
  %v932 = vlaneseq
  %v933 = vshrl.u32 %v932, 7
  %v934 = vsub.s32 7, %v933
  %v935 = vrot.slane %v641, %v934
  %v936 = vlaneseq
  %v937 = vshrl.u32 %v936, 7
  %v938 = vsub.s32 3, %v937
  %v939 = vrot.slane %v642, %v938
  %v940 = vlaneseq
  %v941 = vshrl.u32 %v940, 7
  %v942 = vsub.s32 7, %v941
  %v943 = vrot.slane %v642, %v942
  %v952 = vlaneseq
  %v953 = vshrl.u32 %v952, 7
  %v954 = vsub.s32 3, %v953
  %v955 = vrot.slane %v915, %v954
  %v956 = vlaneseq
  %v957 = vshrl.u32 %v956, 7
  %v958 = vsub.s32 3, %v957
  %v959 = vrot.slane %v919, %v958
  %v960 = vlaneseq
  %v961 = vshrl.u32 %v960, 7
  %v962 = vsub.s32 3, %v961
  %v963 = vrot.slane %v923, %v962
  %v964 = vlaneseq
  %v965 = vshrl.u32 %v964, 7
  %v966 = vsub.s32 3, %v965
  %v967 = vrot.slane %v927, %v966
  %v968 = vlaneseq
  %v969 = vshrl.u32 %v968, 7
  %v970 = vsub.s32 3, %v969
  %v971 = vrot.slane %v931, %v970
  %v972 = vlaneseq
  %v973 = vshrl.u32 %v972, 7
  %v974 = vsub.s32 3, %v973
  %v975 = vrot.slane %v935, %v974
  %v976 = vlaneseq
  %v977 = vshrl.u32 %v976, 7
  %v978 = vsub.s32 3, %v977
  %v979 = vrot.slane %v939, %v978
  %v980 = vlaneseq
  %v981 = vshrl.u32 %v980, 7
  %v982 = vsub.s32 3, %v981
  %v983 = vrot.slane %v943, %v982
  %v985 = vcombine.high %v28, %v28
  %v987 = vmul.f32 %v955, %v28
  %v988 = vmul.f32 %v959, %v985
  %v989 = vmul.f32 %v963, %v28
  %v990 = vmul.f32 %v967, %v985
  %v991 = vmul.f32 %v971, %v28
  %v992 = vmul.f32 %v975, %v985
  %v993 = vmul.f32 %v979, %v28
  %v994 = vmul.f32 %v983, %v985
  %v995 = vadd.f32 %v904, %v987
  %v996 = vadd.f32 %v905, %v988
  %v997 = vadd.f32 %v906, %v989
  %v998 = vadd.f32 %v907, %v990
  %v999 = vadd.f32 %v908, %v991
  %v1000 = vadd.f32 %v909, %v992
  %v1001 = vadd.f32 %v910, %v993
  %v1002 = vadd.f32 %v911, %v994
  %v1011 = vcombine.low %v995, %v996
  %v1012 = vcombine.low %v997, %v998
  %v1013 = vcombine.low %v999, %v1000
  %v1014 = vcombine.low %v1001, %v1002
  %vm1019 = vcmask 523268
  %vm1020 = vmor %vm1019, %vm461
  %1021 = vst.msk [vmem:[%s4] sm:$0xff] %vm1020, %v1011
  %1022 = vst.msk [vmem:[%s4 + $0x8] sm:$0xff] %vm1020, %v1012
  %1023 = vst.msk [vmem:[%s4 + $0x10] sm:$0xff] %vm1020, %v1013
  %1024 = vst.msk [vmem:[%s4 + $0x18] sm:$0xff] %vm1020, %v1014
  // Predicated region
  $region18: #{mask_fuse_forward.12} parent=0 // pred_check
    _
  $region19: #{mask_fuse_forward.12} parent=0 // pred_check_branch
    %1026 = sbr.rel (0) target = $region21
  $region20: #{mask_fuse_forward.12} parent=0 // pred_region
    _
  $region21: #{mask_fuse_forward.12} parent=0 // pred_fallthru
    _
  // Predicated region
  $region22: #{mask_fuse_forward.12} parent=0 // pred_check
    _
  $region23: #{mask_fuse_forward.12} parent=0 // pred_check_branch
    %1028 = sbr.rel (0) target = $region25
  $region24: #{mask_fuse_forward.12} parent=0 // pred_region
    _
  $region25: #{mask_fuse_forward.12} parent=0 // pred_fallthru
    _

// kernel: mask_fuse_forward.13
$region0: #{mask_fuse_forward.13}
  #allocation0 [shape = 'u32[]', space=smem, size = 0x4, offset = 0x4, fixed_abs, tag = 'smem constant byte address 0x4 - core index']
  #allocation1 [shape = 'u32[144,128]{1,0:T(1,128)}', space=vmem, size = 0x12000, scoped, tag = 'internal scratch']
  %s0 = inlined_call_operand.vmem [shape: f32[128,24], index: 0, kind: input, shape index: {}]
  %s1 = inlined_call_operand.vmem [shape: f32[24,24], index: 1, kind: input, shape index: {}]
  %s2 = inlined_call_operand.vmem [shape: f32[1,24], index: 2, kind: input, shape index: {}]
  %s3 = inlined_call_operand.vmem [shape: f32[128,24], index: 3, kind: input, shape index: {}]
  %s4 = inlined_call_operand.vmem [shape: f32[128,24], index: 4, kind: output, shape index: {}]
  %s5 = sld [smem:[#allocation0]]
  $region49: #{mask_fuse_forward.13} parent=0
    _
  %s7 = ssub.s32 1, %s5
  %s8 = scalar_select 0, %s7, %s5
  loop: start=0, step=1, limit=4
  $region2: #{mask_fuse_forward.13} parent=0 // loop_pre_header
    _
  $region3: #{mask_fuse_forward.13} parent=0 // loop_header
    %s10 = sphi 0, %s14
    %p11 = scmp.ge.s32.totalorder %s10, 4
    %s20 = sphi 0, %s22
    %s23 = sphi 0, %s20
    %s24 = sphi 0, %s23
    %s40 = sphi 0, %s24
    %s44 = sphi 0, %s44
    %s46 = sphi 0, %s44
    %s47 = sphi 0, %s46
    %s61 = sphi 0, %s47
    %s65 = sphi 0, %s65
    %s67 = sphi 0, %s65
    %s68 = sphi 0, %s67
    %s82 = sphi 0, %s68
    %s88 = sphi 0, %s90
    %s91 = sphi 0, %s88
    %s92 = sphi 0, %s91
    %s108 = sphi 0, %s92
    %s114 = sphi 0, %s116
    %s117 = sphi 0, %s114
    %s118 = sphi 0, %s117
    %s134 = sphi 0, %s118
  $region4: #{mask_fuse_forward.13} parent=0 // loop_header_branch
    %13 = sbr.rel (%p11) target = $region8
  $region5: #{mask_fuse_forward.13} parent=0 // loop_body
    %s15 = ssub.s32 %s10, 1
    %s16 = ssub.s32 %s10, 2
    %s17 = sadd.s32 %s10, 1
    %s18 = ssub.s32 %s10, %s17
    %p19 = scmp.eq.s32.totalorder %s18, 0
    %s21 = sadd.s32 %s20, 1
    %s22 = scalar_select %p19, %s20, %s21
    %p25 = pneg %p19
    %p26 = scmp.eq.s32.totalorder %s10, 1
    %p27 = por %p25, %p26
    %p28 = scmp.ne.s32.totalorder %s20, %s23
    %p29 = scmp.eq.s32.totalorder %s10, 0
    %p30 = por %p28, %p29
    %p31 = scmp.ne.s32.totalorder %s20, %s23
    %p32 = scmp.eq.s32.totalorder %s15, 1
    %p33 = por %p31, %p32
    %p34 = scmp.ne.s32.totalorder %s23, %s24
    %p35 = scmp.eq.s32.totalorder %s15, 0
    %p36 = por %p34, %p35
    %p37 = scmp.ne.s32.totalorder %s23, %s24
    %p38 = scmp.eq.s32.totalorder %s16, 1
    %p39 = por %p37, %p38
    %p41 = scmp.ne.s32.totalorder %s24, %s40
    %p42 = scmp.eq.s32.totalorder %s16, 0
    %p43 = por %p41, %p42
    %s45 = sadd.s32 %s44, 1
    %p48 = scmp.eq.s32.totalorder %s10, 1
    %p49 = scmp.ne.s32.totalorder %s44, %s46
    %p50 = scmp.eq.s32.totalorder %s10, 0
    %p51 = por %p49, %p50
    %p52 = scmp.ne.s32.totalorder %s44, %s46
    %p53 = scmp.eq.s32.totalorder %s15, 1
    %p54 = por %p52, %p53
    %p55 = scmp.ne.s32.totalorder %s46, %s47
    %p56 = scmp.eq.s32.totalorder %s15, 0
    %p57 = por %p55, %p56
    %p58 = scmp.ne.s32.totalorder %s46, %s47
    %p59 = scmp.eq.s32.totalorder %s16, 1
    %p60 = por %p58, %p59
    %p62 = scmp.ne.s32.totalorder %s47, %s61
    %p63 = scmp.eq.s32.totalorder %s16, 0
    %p64 = por %p62, %p63
    %s66 = sadd.s32 %s65, 1
    %p69 = scmp.eq.s32.totalorder %s10, 1
    %p70 = scmp.ne.s32.totalorder %s65, %s67
    %p71 = scmp.eq.s32.totalorder %s10, 0
    %p72 = por %p70, %p71
    %p73 = scmp.ne.s32.totalorder %s65, %s67
    %p74 = scmp.eq.s32.totalorder %s15, 1
    %p75 = por %p73, %p74
    %p76 = scmp.ne.s32.totalorder %s67, %s68
    %p77 = scmp.eq.s32.totalorder %s15, 0
    %p78 = por %p76, %p77
    %p79 = scmp.ne.s32.totalorder %s67, %s68
    %p80 = scmp.eq.s32.totalorder %s16, 1
    %p81 = por %p79, %p80
    %p83 = scmp.ne.s32.totalorder %s68, %s82
    %p84 = scmp.eq.s32.totalorder %s16, 0
    %p85 = por %p83, %p84
    %s86 = ssub.s32 %s10, %s17
    %p87 = scmp.eq.s32.totalorder %s86, 0
    %s89 = sadd.s32 %s88, 1
    %s90 = scalar_select %p87, %s88, %s89
    %p93 = pneg %p87
    %p94 = scmp.eq.s32.totalorder %s10, 1
    %p95 = por %p93, %p94
    %p96 = scmp.ne.s32.totalorder %s88, %s91
    %p97 = scmp.eq.s32.totalorder %s10, 0
    %p98 = por %p96, %p97
    %p99 = scmp.ne.s32.totalorder %s88, %s91
    %p100 = scmp.eq.s32.totalorder %s15, 1
    %p101 = por %p99, %p100
    %p102 = scmp.ne.s32.totalorder %s91, %s92
    %p103 = scmp.eq.s32.totalorder %s15, 0
    %p104 = por %p102, %p103
    %p105 = scmp.ne.s32.totalorder %s91, %s92
    %p106 = scmp.eq.s32.totalorder %s16, 1
    %p107 = por %p105, %p106
    %p109 = scmp.ne.s32.totalorder %s92, %s108
    %p110 = scmp.eq.s32.totalorder %s16, 0
    %p111 = por %p109, %p110
    %s112 = ssub.s32 %s10, %s17
    %p113 = scmp.eq.s32.totalorder %s112, 0
    %s115 = sadd.s32 %s114, 1
    %s116 = scalar_select %p113, %s114, %s115
    %p119 = pneg %p113
    %p120 = scmp.eq.s32.totalorder %s10, 1
    %p121 = por %p119, %p120
    %p122 = scmp.ne.s32.totalorder %s114, %s117
    %p123 = scmp.eq.s32.totalorder %s10, 0
    %p124 = por %p122, %p123
    %p125 = scmp.ne.s32.totalorder %s114, %s117
    %p126 = scmp.eq.s32.totalorder %s15, 1
    %p127 = por %p125, %p126
    %p128 = scmp.ne.s32.totalorder %s117, %s118
    %p129 = scmp.eq.s32.totalorder %s15, 0
    %p130 = por %p128, %p129
    %p131 = scmp.ne.s32.totalorder %s117, %s118
    %p132 = scmp.eq.s32.totalorder %s16, 1
    %p133 = por %p131, %p132
    %p135 = scmp.ne.s32.totalorder %s118, %s134
    %p136 = scmp.eq.s32.totalorder %s16, 0
    %p137 = por %p135, %p136
    %p138 = scmp.le.s32.totalorder 1, %s10
    %p139 = scmp.lt.s32.totalorder %s10, 3
    %p140 = pnand %p138, %p139
    %p141 = pneg %p140
    // Predicated region
    $region9: #{mask_fuse_forward.13} parent=5 // pred_check
      _
    $region10: #{mask_fuse_forward.13} parent=5 // pred_check_branch
      %143 = sbr.rel (%p140) target = $region12
    $region11: #{mask_fuse_forward.13} parent=5 // pred_region
      %s144 = ssub.s32 %s10, 1
      // Predicated region
      $region13: #{mask_fuse_forward.13} parent=11 // pred_check
        %p145 = pneg %p57
      $region14: #{mask_fuse_forward.13} parent=11 // pred_check_branch
        %147 = sbr.rel (%p145) target = $region16
      $region15: #{mask_fuse_forward.13} parent=11 // pred_region
        _
      $region16: #{mask_fuse_forward.13} parent=11 // pred_fallthru
        _
      // Predicated region
      $region17: #{mask_fuse_forward.13} parent=11 // pred_check
        %p148 = pneg %p78
      $region18: #{mask_fuse_forward.13} parent=11 // pred_check_branch
        %150 = sbr.rel (%p148) target = $region20
      $region19: #{mask_fuse_forward.13} parent=11 // pred_region
        _
      $region20: #{mask_fuse_forward.13} parent=11 // pred_fallthru
        _
    $region12: #{mask_fuse_forward.13} parent=5 // pred_fallthru
      _
    %p151 = scmp.lt.s32.totalorder %s10, 2
    // Predicated region
    $region21: #{mask_fuse_forward.13} parent=5 // pred_check
      %p152 = pneg %p151
    $region22: #{mask_fuse_forward.13} parent=5 // pred_check_branch
      %154 = sbr.rel (%p152) target = $region24
    $region23: #{mask_fuse_forward.13} parent=5 // pred_region
      // Predicated region
      $region25: #{mask_fuse_forward.13} parent=23 // pred_check
        %p155 = pneg %p30
      $region26: #{mask_fuse_forward.13} parent=23 // pred_check_branch
        %157 = sbr.rel (%p155) target = $region28
      $region27: #{mask_fuse_forward.13} parent=23 // pred_region
        %s158 = smul.u32 8, %s10
        %p159 = scmp.lt.s32.totalorder %s158, 15
        %s160 = scalar_select %p159, %s158, 15
        %s161 = smul.addr %s160, 8
        %s162 = scalar_lea.vmem %s0, %s161
        %s163 = smul.u32 8, %s10
      $region28: #{mask_fuse_forward.13} parent=23 // pred_fallthru
        _
      // Predicated region
      $region29: #{mask_fuse_forward.13} parent=23 // pred_check
        %p164 = pneg %p98
      $region30: #{mask_fuse_forward.13} parent=23 // pred_check_branch
        %166 = sbr.rel (%p164) target = $region32
      $region31: #{mask_fuse_forward.13} parent=23 // pred_region
        %s167 = smul.u32 8, %s10
        %p168 = scmp.lt.s32.totalorder %s167, 15
        %s169 = scalar_select %p168, %s167, 15
        %s170 = smul.addr %s169, 8
        %s171 = scalar_lea.vmem %s3, %s170
        %s172 = smul.u32 8, %s10
      $region32: #{mask_fuse_forward.13} parent=23 // pred_fallthru
        _
    $region24: #{mask_fuse_forward.13} parent=5 // pred_fallthru
      _
    %p173 = scmp.le.s32.totalorder 1, %s10
    %p174 = scmp.lt.s32.totalorder %s10, 3
    %p175 = pnand %p173, %p174
    %p176 = pneg %p175
    // Predicated region
    $region33: #{mask_fuse_forward.13} parent=5 // pred_check
      _
    $region34: #{mask_fuse_forward.13} parent=5 // pred_check_branch
      %178 = sbr.rel (%p175) target = $region36
    $region35: #{mask_fuse_forward.13} parent=5 // pred_region
      %s179 = ssub.s32 %s10, 1
      %s180 = smul.u32 8, %s15
      %p181 = scmp.lt.s32.totalorder %s180, 15
      %s182 = scalar_select %p181, %s180, 15
      %s183 = smul.addr %s182, 8
      %s184 = scalar_lea.vmem %s0, %s183
      %p185 = pneg %p36
      %p186 = pneg %p33
      %p187 = pneg %p57
      %p188 = pneg %p54
      %p189 = pneg %p78
      %p190 = pneg %p75
      %s191 = smul.u32 8, %s15
      %p192 = scmp.lt.s32.totalorder %s191, 15
      %s193 = scalar_select %p192, %s191, 15
      %s194 = smul.addr %s193, 8
      %s195 = scalar_lea.vmem %s3, %s194
      %p196 = pneg %p104
      %p197 = pneg %p101
      %p198 = pneg %p130
      %p199 = pneg %p127
      %s200 = smul.u32 8, %s15
      %p201 = scmp.lt.s32.totalorder %s200, 15
      %s202 = scalar_select %p201, %s200, 15
      %s203 = smul.addr %s202, 8
      %s204 = scalar_lea.vmem %s4, %s203
      %s205 = smul.u32 8, %s15
      %p206 = scmp.lt.s32.totalorder %s205, 15
      %s207 = scalar_select %p206, %s205, 15
      %s208 = smul.addr %s207, 8
      %s209 = scalar_lea.vmem %s0, %s208
      %s210 = smul.u32 8, %s15
      %s211 = smul.u32 8, %s15
      %p212 = scmp.lt.s32.totalorder %s211, 15
      %s213 = scalar_select %p212, %s211, 15
      %s214 = smul.addr %s213, 8
      %s215 = scalar_lea.vmem %s3, %s214
      %s216 = smul.u32 8, %s15
      %s217 = smul.u32 8, %s15
      %p218 = scmp.lt.s32.totalorder %s217, 15
      %s219 = scalar_select %p218, %s217, 15
      %s220 = smul.addr %s219, 8
      %s221 = scalar_lea.vmem %s4, %s220
      %s222 = smul.u32 8, %s15
      %v223 = vld [vmem:[%s209] sm:$0xff]
      %v224 = vld [vmem:[%s209 + $0x8] sm:$0xff]
      %v225 = vld [vmem:[%s209 + $0x10] sm:$0xff]
      %v226 = vld [vmem:[%s209 + $0x18] sm:$0xff]
      %v227 = vld [vmem:[%s209 + $0x20] sm:$0xff]
      %v228 = vld [vmem:[%s209 + $0x28] sm:$0xff]
      %v229 = vld [vmem:[%s209 + $0x30] sm:$0xff]
      %v230 = vld [vmem:[%s209 + $0x38] sm:$0xff]
      %v231 = vld [vmem:[%s1] sm:$0xff]
      %v232 = vld [vmem:[%s1 + $0x8] sm:$0xff]
      %v233 = vld [vmem:[%s1 + $0x10] sm:$0xff]
      %v234 = vld [vmem:[%s2] sm:$0x1]
      %v236 = vlaneseq
      %v237 = vshrl.u32 %v236, 7
      %v238 = vsub.s32 0, %v237
      %v239 = vrot.slane %v234, %v238
      %vm241 = vcmask 195584
      %v243 = vsel %vm241, %v223, 0
      %v246 = vsel %vm241, %v224, 0
      %v249 = vsel %vm241, %v225, 0
      %v252 = vsel %vm241, %v226, 0
      %v255 = vsel %vm241, %v227, 0
      %v258 = vsel %vm241, %v228, 0
      %v261 = vsel %vm241, %v229, 0
      %v264 = vsel %vm241, %v230, 0
      %266 = vmatprep.subr.mxu0 0.0
      %267 = vmatpush1.msra.mxu0 %v231
      %268 = vmatprep.subr.mxu0 0.0
      %269 = vmatpush1.msra.mxu0 %v232
      %270 = vmatprep.subr.mxu0 0.0
      %271 = vmatpush1.msra.mxu0 %v233
      %272 = vmatprep.subr.mxu0 0.0
      %273 = vmatpush1.msra.mxu0 0.0
      %274 = vmatprep.subr.mxu0 0.0
      %275 = vmatpush1.msra.mxu0 0.0
      %276 = vmatprep.subr.mxu0 0.0
      %277 = vmatpush1.msra.mxu0 0.0
      %278 = vmatprep.subr.mxu0 0.0
      %279 = vmatpush1.msra.mxu0 0.0
      %280 = vmatprep.subr.mxu0 0.0
      %281 = vmatpush1.msra.mxu0 0.0
      %282 = vmatprep.subr.mxu0 0.0
      %283 = vmatpush1.msra.mxu0 0.0
      %284 = vmatprep.subr.mxu0 0.0
      %285 = vmatpush1.msra.mxu0 0.0
      %286 = vmatprep.subr.mxu0 0.0
      %287 = vmatpush1.msra.mxu0 0.0
      %288 = vmatprep.subr.mxu0 0.0
      %289 = vmatpush1.msra.mxu0 0.0
      %290 = vmatprep.subr.mxu0 0.0
      %291 = vmatpush1.msra.mxu0 0.0
      %292 = vmatprep.subr.mxu0 0.0
      %293 = vmatpush1.msra.mxu0 0.0
      %294 = vmatprep.subr.mxu0 0.0
      %295 = vmatpush1.msra.mxu0 0.0
      %296 = vmatprep.subr.mxu0 0.0
      %297 = vmatpush1.msra.mxu0 0.0
      %298 = vmatprep.subr.mxu0 0.0
      %299 = vmatpush1.msra.mxu0 0.0
      %300 = vmatprep.subr.mxu0 0.0
      %301 = vmatpush1.msra.mxu0 0.0
      %302 = vmatprep.subr.mxu0 0.0
      %303 = vmatpush1.msra.mxu0 0.0
      %304 = vmatprep.subr.mxu0 0.0
      %305 = vmatpush1.msra.mxu0 0.0
      %306 = vmatprep.subr.mxu0 0.0
      %307 = vmatpush1.msra.mxu0 0.0
      %308 = vmatprep.subr.mxu0 0.0
      %309 = vmatpush1.msra.mxu0 0.0
      %310 = vmatprep.subr.mxu0 0.0
      %311 = vmatpush1.msra.mxu0 0.0
      %312 = vmatprep.subr.mxu0 0.0
      %313 = vmatpush1.msra.mxu0 0.0
      %314 = vmatprep.subr.mxu0 0.0
      %315 = vmatpush1.msra.mxu0 0.0
      %316 = vmatprep.subr.mxu0 0.0
      %317 = vmatpush1.msra.mxu0 0.0
      %318 = vmatprep.subr.mxu0 0.0
      %319 = vmatpush1.msra.mxu0 0.0
      %320 = vmatprep.subr.mxu0 0.0
      %321 = vmatpush1.msra.mxu0 0.0
      %322 = vmatprep.subr.mxu0 0.0
      %323 = vmatpush1.msra.mxu0 0.0
      %324 = vmatprep.subr.mxu0 0.0
      %325 = vmatpush1.msra.mxu0 0.0
      %326 = vmatprep.subr.mxu0 0.0
      %327 = vmatpush1.msra.mxu0 0.0
      %328 = vmatprep.subr.mxu0 0.0
      %329 = vmatpush1.msra.mxu0 0.0
      %330 = vmatprep.mubr.f32.mxu0 0.0
      %331 = vmatmul.mubr.f32.gmra.mrb[0].mxu0 %v243
      %v332 = vpop.f32.mrb[0].mxu0
      %v333 = vadd.f32 %v239, %v332
      %v334 = vpop.f32.mrb[0].mxu0
      %335 = vmatprep.mubr.f32.mxu0 0.0
      %336 = vmatmul.mubr.f32.gmra.mrb[0].mxu0 %v246
      %v337 = vpop.f32.mrb[0].mxu0
      %v338 = vadd.f32 %v239, %v337
      %v339 = vpop.f32.mrb[0].mxu0
      %340 = vmatprep.mubr.f32.mxu0 0.0
      %341 = vmatmul.mubr.f32.gmra.mrb[0].mxu0 %v249
      %v342 = vpop.f32.mrb[0].mxu0
      %v343 = vadd.f32 %v239, %v342
      %v344 = vpop.f32.mrb[0].mxu0
      %345 = vmatprep.mubr.f32.mxu0 0.0
      %346 = vmatmul.mubr.f32.gmra.mrb[0].mxu0 %v252
      %v347 = vpop.f32.mrb[0].mxu0
      %v348 = vadd.f32 %v239, %v347
      %v349 = vpop.f32.mrb[0].mxu0
      %350 = vmatprep.mubr.f32.mxu0 0.0
      %351 = vmatmul.mubr.f32.gmra.mrb[0].mxu0 %v255
      %v352 = vpop.f32.mrb[0].mxu0
      %v353 = vadd.f32 %v239, %v352
      %v354 = vpop.f32.mrb[0].mxu0
      %355 = vmatprep.mubr.f32.mxu0 0.0
      %356 = vmatmul.mubr.f32.gmra.mrb[0].mxu0 %v258
      %v357 = vpop.f32.mrb[0].mxu0
      %v358 = vadd.f32 %v239, %v357
      %v359 = vpop.f32.mrb[0].mxu0
      %360 = vmatprep.mubr.f32.mxu0 0.0
      %361 = vmatmul.mubr.f32.gmra.mrb[0].mxu0 %v261
      %v362 = vpop.f32.mrb[0].mxu0
      %v363 = vadd.f32 %v239, %v362
      %v364 = vpop.f32.mrb[0].mxu0
      %365 = vmatprep.mubr.f32.mxu0 0.0
      %366 = vmatmul.mubr.f32.gmra.mrb[0].mxu0 %v264
      %v367 = vpop.f32.mrb[0].mxu0
      %v368 = vadd.f32 %v239, %v367
      %v369 = vpop.f32.mrb[0].mxu0
      %370 = vdwg.mxu0
      %v371 = vld [vmem:[%s215] sm:$0xff]
      %v372 = vld [vmem:[%s215 + $0x8] sm:$0xff]
      %v373 = vld [vmem:[%s215 + $0x10] sm:$0xff]
      %v374 = vld [vmem:[%s215 + $0x18] sm:$0xff]
      %v375 = vld [vmem:[%s215 + $0x20] sm:$0xff]
      %v376 = vld [vmem:[%s215 + $0x28] sm:$0xff]
      %v377 = vld [vmem:[%s215 + $0x30] sm:$0xff]
      %v378 = vld [vmem:[%s215 + $0x38] sm:$0xff]
      %v379 = vadd.f32 %v333, %v371
      %v380 = vadd.f32 %v338, %v372
      %v381 = vadd.f32 %v343, %v373
      %v382 = vadd.f32 %v348, %v374
      %v383 = vadd.f32 %v353, %v375
      %v384 = vadd.f32 %v358, %v376
      %v385 = vadd.f32 %v363, %v377
      %v386 = vadd.f32 %v368, %v378
      %387 = vst.msk [vmem:[%s221] sm:$0xff] %vm241, %v379
      %388 = vst.msk [vmem:[%s221 + $0x8] sm:$0xff] %vm241, %v380
      %389 = vst.msk [vmem:[%s221 + $0x10] sm:$0xff] %vm241, %v381
      %390 = vst.msk [vmem:[%s221 + $0x18] sm:$0xff] %vm241, %v382
      %391 = vst.msk [vmem:[%s221 + $0x20] sm:$0xff] %vm241, %v383
      %392 = vst.msk [vmem:[%s221 + $0x28] sm:$0xff] %vm241, %v384
      %393 = vst.msk [vmem:[%s221 + $0x30] sm:$0xff] %vm241, %v385
      %394 = vst.msk [vmem:[%s221 + $0x38] sm:$0xff] %vm241, %v386
      %s395 = smul.u32 8, %s15
      %p396 = scmp.lt.s32.totalorder %s395, 15
      %s397 = scalar_select %p396, %s395, 15
      %s398 = smul.addr %s397, 8
      %s399 = scalar_lea.vmem %s4, %s398
      // Predicated region
      $region37: #{mask_fuse_forward.13} parent=35 // pred_check
        %p400 = pneg %p127
      $region38: #{mask_fuse_forward.13} parent=35 // pred_check_branch
        %402 = sbr.rel (%p400) target = $region40
      $region39: #{mask_fuse_forward.13} parent=35 // pred_region
        %s403 = smul.u32 8, %s15
      $region40: #{mask_fuse_forward.13} parent=35 // pred_fallthru
        _
    $region36: #{mask_fuse_forward.13} parent=5 // pred_fallthru
      _
    %p404 = scmp.le.s32.totalorder 2, %s10
    // Predicated region
    $region41: #{mask_fuse_forward.13} parent=5 // pred_check
      %p405 = pneg %p404
    $region42: #{mask_fuse_forward.13} parent=5 // pred_check_branch
      %407 = sbr.rel (%p405) target = $region44
    $region43: #{mask_fuse_forward.13} parent=5 // pred_region
      %s408 = ssub.s32 %s10, 2
      // Predicated region
      $region45: #{mask_fuse_forward.13} parent=43 // pred_check
        %p409 = pneg %p133
      $region46: #{mask_fuse_forward.13} parent=43 // pred_check_branch
        %411 = sbr.rel (%p409) target = $region48
      $region47: #{mask_fuse_forward.13} parent=43 // pred_region
        %s412 = smul.u32 8, %s16
        %p413 = scmp.lt.s32.totalorder %s412, 15
        %s414 = scalar_select %p413, %s412, 15
        %s415 = smul.addr %s414, 8
        %s416 = scalar_lea.vmem %s4, %s415
      $region48: #{mask_fuse_forward.13} parent=43 // pred_fallthru
        _
    $region44: #{mask_fuse_forward.13} parent=5 // pred_fallthru
      _
  $region6: #{mask_fuse_forward.13} parent=0 // loop_footer
    %s14 = sadd.s32 1, %s10
  $region7: #{mask_fuse_forward.13} parent=0 // loop_footer_branch
    %9 = sbr.rel target = $region3
  $region8: #{mask_fuse_forward.13} parent=0 // loop_exit
    _

// kernel: mask_fuse_forward.14
$region0: #{mask_fuse_forward.14}
  #allocation0 [shape = 'u32[]', space=smem, size = 0x4, offset = 0x4, fixed_abs, tag = 'smem constant byte address 0x4 - core index']
  #allocation1 [shape = 'u32[144,128]{1,0:T(1,128)}', space=vmem, size = 0x12000, scoped, tag = 'internal scratch']
  %s0 = inlined_call_operand.vmem [shape: f32[128,24], index: 0, kind: input, shape index: {}]
  %s1 = inlined_call_operand.vmem [shape: f32[1,24], index: 1, kind: input, shape index: {}]
  %s2 = inlined_call_operand.vmem [shape: f32[1,24], index: 2, kind: input, shape index: {}]
  %s3 = inlined_call_operand.vmem [shape: f32[24,72], index: 3, kind: input, shape index: {}]
  %s4 = inlined_call_operand.vmem [shape: f32[1,72], index: 4, kind: input, shape index: {}]
  %s5 = inlined_call_operand.vmem [shape: f32[72,24], index: 5, kind: input, shape index: {}]
  %s6 = inlined_call_operand.vmem [shape: f32[1,24], index: 6, kind: input, shape index: {}]
  %s7 = inlined_call_operand.vmem [shape: f32[1,24], index: 7, kind: input, shape index: {}]
  %s8 = inlined_call_operand.vmem [shape: f32[1,24], index: 8, kind: input, shape index: {}]
  %s9 = inlined_call_operand.vmem [shape: f32[128,24], index: 9, kind: output, shape index: {}]
  %s10 = sld [smem:[#allocation0]]
  $region69: #{mask_fuse_forward.14} parent=0
    _
  %s12 = ssub.s32 1, %s10
  %s13 = scalar_select 0, %s12, %s10
  loop: start=0, step=1, limit=4
  $region2: #{mask_fuse_forward.14} parent=0 // loop_pre_header
    _
  $region3: #{mask_fuse_forward.14} parent=0 // loop_header
    %s15 = sphi 0, %s19
    %p16 = scmp.ge.s32.totalorder %s15, 4
    %s25 = sphi 0, %s27
    %s28 = sphi 0, %s25
    %s29 = sphi 0, %s28
    %s45 = sphi 0, %s29
    %s49 = sphi 0, %s49
    %s51 = sphi 0, %s49
    %s52 = sphi 0, %s51
    %s66 = sphi 0, %s52
    %s70 = sphi 0, %s70
    %s72 = sphi 0, %s70
    %s73 = sphi 0, %s72
    %s87 = sphi 0, %s73
    %s91 = sphi 0, %s91
    %s93 = sphi 0, %s91
    %s94 = sphi 0, %s93
    %s108 = sphi 0, %s94
    %s112 = sphi 0, %s112
    %s114 = sphi 0, %s112
    %s115 = sphi 0, %s114
    %s129 = sphi 0, %s115
    %s133 = sphi 0, %s133
    %s135 = sphi 0, %s133
    %s136 = sphi 0, %s135
    %s150 = sphi 0, %s136
    %s154 = sphi 0, %s154
    %s156 = sphi 0, %s154
    %s157 = sphi 0, %s156
    %s171 = sphi 0, %s157
    %s175 = sphi 0, %s175
    %s177 = sphi 0, %s175
    %s178 = sphi 0, %s177
    %s192 = sphi 0, %s178
    %s196 = sphi 0, %s196
    %s198 = sphi 0, %s196
    %s199 = sphi 0, %s198
    %s213 = sphi 0, %s199
    %s219 = sphi 0, %s221
    %s222 = sphi 0, %s219
    %s223 = sphi 0, %s222
    %s239 = sphi 0, %s223
  $region4: #{mask_fuse_forward.14} parent=0 // loop_header_branch
    %18 = sbr.rel (%p16) target = $region8
  $region5: #{mask_fuse_forward.14} parent=0 // loop_body
    %s20 = ssub.s32 %s15, 1
    %s21 = ssub.s32 %s15, 2
    %s22 = sadd.s32 %s15, 1
    %s23 = ssub.s32 %s15, %s22
    %p24 = scmp.eq.s32.totalorder %s23, 0
    %s26 = sadd.s32 %s25, 1
    %s27 = scalar_select %p24, %s25, %s26
    %p30 = pneg %p24
    %p31 = scmp.eq.s32.totalorder %s15, 1
    %p32 = por %p30, %p31
    %p33 = scmp.ne.s32.totalorder %s25, %s28
    %p34 = scmp.eq.s32.totalorder %s15, 0
    %p35 = por %p33, %p34
    %p36 = scmp.ne.s32.totalorder %s25, %s28
    %p37 = scmp.eq.s32.totalorder %s20, 1
    %p38 = por %p36, %p37
    %p39 = scmp.ne.s32.totalorder %s28, %s29
    %p40 = scmp.eq.s32.totalorder %s20, 0
    %p41 = por %p39, %p40
    %p42 = scmp.ne.s32.totalorder %s28, %s29
    %p43 = scmp.eq.s32.totalorder %s21, 1
    %p44 = por %p42, %p43
    %p46 = scmp.ne.s32.totalorder %s29, %s45
    %p47 = scmp.eq.s32.totalorder %s21, 0
    %p48 = por %p46, %p47
    %s50 = sadd.s32 %s49, 1
    %p53 = scmp.eq.s32.totalorder %s15, 1
    %p54 = scmp.ne.s32.totalorder %s49, %s51
    %p55 = scmp.eq.s32.totalorder %s15, 0
    %p56 = por %p54, %p55
    %p57 = scmp.ne.s32.totalorder %s49, %s51
    %p58 = scmp.eq.s32.totalorder %s20, 1
    %p59 = por %p57, %p58
    %p60 = scmp.ne.s32.totalorder %s51, %s52
    %p61 = scmp.eq.s32.totalorder %s20, 0
    %p62 = por %p60, %p61
    %p63 = scmp.ne.s32.totalorder %s51, %s52
    %p64 = scmp.eq.s32.totalorder %s21, 1
    %p65 = por %p63, %p64
    %p67 = scmp.ne.s32.totalorder %s52, %s66
    %p68 = scmp.eq.s32.totalorder %s21, 0
    %p69 = por %p67, %p68
    %s71 = sadd.s32 %s70, 1
    %p74 = scmp.eq.s32.totalorder %s15, 1
    %p75 = scmp.ne.s32.totalorder %s70, %s72
    %p76 = scmp.eq.s32.totalorder %s15, 0
    %p77 = por %p75, %p76
    %p78 = scmp.ne.s32.totalorder %s70, %s72
    %p79 = scmp.eq.s32.totalorder %s20, 1
    %p80 = por %p78, %p79
    %p81 = scmp.ne.s32.totalorder %s72, %s73
    %p82 = scmp.eq.s32.totalorder %s20, 0
    %p83 = por %p81, %p82
    %p84 = scmp.ne.s32.totalorder %s72, %s73
    %p85 = scmp.eq.s32.totalorder %s21, 1
    %p86 = por %p84, %p85
    %p88 = scmp.ne.s32.totalorder %s73, %s87
    %p89 = scmp.eq.s32.totalorder %s21, 0
    %p90 = por %p88, %p89
    %s92 = sadd.s32 %s91, 1
    %p95 = scmp.eq.s32.totalorder %s15, 1
    %p96 = scmp.ne.s32.totalorder %s91, %s93
    %p97 = scmp.eq.s32.totalorder %s15, 0
    %p98 = por %p96, %p97
    %p99 = scmp.ne.s32.totalorder %s91, %s93
    %p100 = scmp.eq.s32.totalorder %s20, 1
    %p101 = por %p99, %p100
    %p102 = scmp.ne.s32.totalorder %s93, %s94
    %p103 = scmp.eq.s32.totalorder %s20, 0
    %p104 = por %p102, %p103
    %p105 = scmp.ne.s32.totalorder %s93, %s94
    %p106 = scmp.eq.s32.totalorder %s21, 1
    %p107 = por %p105, %p106
    %p109 = scmp.ne.s32.totalorder %s94, %s108
    %p110 = scmp.eq.s32.totalorder %s21, 0
    %p111 = por %p109, %p110
    %s113 = sadd.s32 %s112, 1
    %p116 = scmp.eq.s32.totalorder %s15, 1
    %p117 = scmp.ne.s32.totalorder %s112, %s114
    %p118 = scmp.eq.s32.totalorder %s15, 0
    %p119 = por %p117, %p118
    %p120 = scmp.ne.s32.totalorder %s112, %s114
    %p121 = scmp.eq.s32.totalorder %s20, 1
    %p122 = por %p120, %p121
    %p123 = scmp.ne.s32.totalorder %s114, %s115
    %p124 = scmp.eq.s32.totalorder %s20, 0
    %p125 = por %p123, %p124
    %p126 = scmp.ne.s32.totalorder %s114, %s115
    %p127 = scmp.eq.s32.totalorder %s21, 1
    %p128 = por %p126, %p127
    %p130 = scmp.ne.s32.totalorder %s115, %s129
    %p131 = scmp.eq.s32.totalorder %s21, 0
    %p132 = por %p130, %p131
    %s134 = sadd.s32 %s133, 1
    %p137 = scmp.eq.s32.totalorder %s15, 1
    %p138 = scmp.ne.s32.totalorder %s133, %s135
    %p139 = scmp.eq.s32.totalorder %s15, 0
    %p140 = por %p138, %p139
    %p141 = scmp.ne.s32.totalorder %s133, %s135
    %p142 = scmp.eq.s32.totalorder %s20, 1
    %p143 = por %p141, %p142
    %p144 = scmp.ne.s32.totalorder %s135, %s136
    %p145 = scmp.eq.s32.totalorder %s20, 0
    %p146 = por %p144, %p145
    %p147 = scmp.ne.s32.totalorder %s135, %s136
    %p148 = scmp.eq.s32.totalorder %s21, 1
    %p149 = por %p147, %p148
    %p151 = scmp.ne.s32.totalorder %s136, %s150
    %p152 = scmp.eq.s32.totalorder %s21, 0
    %p153 = por %p151, %p152
    %s155 = sadd.s32 %s154, 1
    %p158 = scmp.eq.s32.totalorder %s15, 1
    %p159 = scmp.ne.s32.totalorder %s154, %s156
    %p160 = scmp.eq.s32.totalorder %s15, 0
    %p161 = por %p159, %p160
    %p162 = scmp.ne.s32.totalorder %s154, %s156
    %p163 = scmp.eq.s32.totalorder %s20, 1
    %p164 = por %p162, %p163
    %p165 = scmp.ne.s32.totalorder %s156, %s157
    %p166 = scmp.eq.s32.totalorder %s20, 0
    %p167 = por %p165, %p166
    %p168 = scmp.ne.s32.totalorder %s156, %s157
    %p169 = scmp.eq.s32.totalorder %s21, 1
    %p170 = por %p168, %p169
    %p172 = scmp.ne.s32.totalorder %s157, %s171
    %p173 = scmp.eq.s32.totalorder %s21, 0
    %p174 = por %p172, %p173
    %s176 = sadd.s32 %s175, 1
    %p179 = scmp.eq.s32.totalorder %s15, 1
    %p180 = scmp.ne.s32.totalorder %s175, %s177
    %p181 = scmp.eq.s32.totalorder %s15, 0
    %p182 = por %p180, %p181
    %p183 = scmp.ne.s32.totalorder %s175, %s177
    %p184 = scmp.eq.s32.totalorder %s20, 1
    %p185 = por %p183, %p184
    %p186 = scmp.ne.s32.totalorder %s177, %s178
    %p187 = scmp.eq.s32.totalorder %s20, 0
    %p188 = por %p186, %p187
    %p189 = scmp.ne.s32.totalorder %s177, %s178
    %p190 = scmp.eq.s32.totalorder %s21, 1
    %p191 = por %p189, %p190
    %p193 = scmp.ne.s32.totalorder %s178, %s192
    %p194 = scmp.eq.s32.totalorder %s21, 0
    %p195 = por %p193, %p194
    %s197 = sadd.s32 %s196, 1
    %p200 = scmp.eq.s32.totalorder %s15, 1
    %p201 = scmp.ne.s32.totalorder %s196, %s198
    %p202 = scmp.eq.s32.totalorder %s15, 0
    %p203 = por %p201, %p202
    %p204 = scmp.ne.s32.totalorder %s196, %s198
    %p205 = scmp.eq.s32.totalorder %s20, 1
    %p206 = por %p204, %p205
    %p207 = scmp.ne.s32.totalorder %s198, %s199
    %p208 = scmp.eq.s32.totalorder %s20, 0
    %p209 = por %p207, %p208
    %p210 = scmp.ne.s32.totalorder %s198, %s199
    %p211 = scmp.eq.s32.totalorder %s21, 1
    %p212 = por %p210, %p211
    %p214 = scmp.ne.s32.totalorder %s199, %s213
    %p215 = scmp.eq.s32.totalorder %s21, 0
    %p216 = por %p214, %p215
    %s217 = ssub.s32 %s15, %s22
    %p218 = scmp.eq.s32.totalorder %s217, 0
    %s220 = sadd.s32 %s219, 1
    %s221 = scalar_select %p218, %s219, %s220
    %p224 = pneg %p218
    %p225 = scmp.eq.s32.totalorder %s15, 1
    %p226 = por %p224, %p225
    %p227 = scmp.ne.s32.totalorder %s219, %s222
    %p228 = scmp.eq.s32.totalorder %s15, 0
    %p229 = por %p227, %p228
    %p230 = scmp.ne.s32.totalorder %s219, %s222
    %p231 = scmp.eq.s32.totalorder %s20, 1
    %p232 = por %p230, %p231
    %p233 = scmp.ne.s32.totalorder %s222, %s223
    %p234 = scmp.eq.s32.totalorder %s20, 0
    %p235 = por %p233, %p234
    %p236 = scmp.ne.s32.totalorder %s222, %s223
    %p237 = scmp.eq.s32.totalorder %s21, 1
    %p238 = por %p236, %p237
    %p240 = scmp.ne.s32.totalorder %s223, %s239
    %p241 = scmp.eq.s32.totalorder %s21, 0
    %p242 = por %p240, %p241
    %p243 = scmp.le.s32.totalorder 1, %s15
    %p244 = scmp.lt.s32.totalorder %s15, 3
    %p245 = pnand %p243, %p244
    %p246 = pneg %p245
    // Predicated region
    $region9: #{mask_fuse_forward.14} parent=5 // pred_check
      _
    $region10: #{mask_fuse_forward.14} parent=5 // pred_check_branch
      %248 = sbr.rel (%p245) target = $region12
    $region11: #{mask_fuse_forward.14} parent=5 // pred_region
      %s249 = ssub.s32 %s15, 1
      // Predicated region
      $region13: #{mask_fuse_forward.14} parent=11 // pred_check
        %p250 = pneg %p62
      $region14: #{mask_fuse_forward.14} parent=11 // pred_check_branch
        %252 = sbr.rel (%p250) target = $region16
      $region15: #{mask_fuse_forward.14} parent=11 // pred_region
        _
      $region16: #{mask_fuse_forward.14} parent=11 // pred_fallthru
        _
      // Predicated region
      $region17: #{mask_fuse_forward.14} parent=11 // pred_check
        %p253 = pneg %p83
      $region18: #{mask_fuse_forward.14} parent=11 // pred_check_branch
        %255 = sbr.rel (%p253) target = $region20
      $region19: #{mask_fuse_forward.14} parent=11 // pred_region
        _
      $region20: #{mask_fuse_forward.14} parent=11 // pred_fallthru
        _
      // Predicated region
      $region21: #{mask_fuse_forward.14} parent=11 // pred_check
        %p256 = pneg %p104
      $region22: #{mask_fuse_forward.14} parent=11 // pred_check_branch
        %258 = sbr.rel (%p256) target = $region24
      $region23: #{mask_fuse_forward.14} parent=11 // pred_region
        _
      $region24: #{mask_fuse_forward.14} parent=11 // pred_fallthru
        _
      // Predicated region
      $region25: #{mask_fuse_forward.14} parent=11 // pred_check
        %p259 = pneg %p125
      $region26: #{mask_fuse_forward.14} parent=11 // pred_check_branch
        %261 = sbr.rel (%p259) target = $region28
      $region27: #{mask_fuse_forward.14} parent=11 // pred_region
        _
      $region28: #{mask_fuse_forward.14} parent=11 // pred_fallthru
        _
      // Predicated region
      $region29: #{mask_fuse_forward.14} parent=11 // pred_check
        %p262 = pneg %p146
      $region30: #{mask_fuse_forward.14} parent=11 // pred_check_branch
        %264 = sbr.rel (%p262) target = $region32
      $region31: #{mask_fuse_forward.14} parent=11 // pred_region
        _
      $region32: #{mask_fuse_forward.14} parent=11 // pred_fallthru
        _
      // Predicated region
      $region33: #{mask_fuse_forward.14} parent=11 // pred_check
        %p265 = pneg %p167
      $region34: #{mask_fuse_forward.14} parent=11 // pred_check_branch
        %267 = sbr.rel (%p265) target = $region36
      $region35: #{mask_fuse_forward.14} parent=11 // pred_region
        _
      $region36: #{mask_fuse_forward.14} parent=11 // pred_fallthru
        _
      // Predicated region
      $region37: #{mask_fuse_forward.14} parent=11 // pred_check
        %p268 = pneg %p188
      $region38: #{mask_fuse_forward.14} parent=11 // pred_check_branch
        %270 = sbr.rel (%p268) target = $region40
      $region39: #{mask_fuse_forward.14} parent=11 // pred_region
        _
      $region40: #{mask_fuse_forward.14} parent=11 // pred_fallthru
        _
      // Predicated region
      $region41: #{mask_fuse_forward.14} parent=11 // pred_check
        %p271 = pneg %p209
      $region42: #{mask_fuse_forward.14} parent=11 // pred_check_branch
        %273 = sbr.rel (%p271) target = $region44
      $region43: #{mask_fuse_forward.14} parent=11 // pred_region
        _
      $region44: #{mask_fuse_forward.14} parent=11 // pred_fallthru
        _
    $region12: #{mask_fuse_forward.14} parent=5 // pred_fallthru
      _
    %p274 = scmp.lt.s32.totalorder %s15, 2
    // Predicated region
    $region45: #{mask_fuse_forward.14} parent=5 // pred_check
      %p275 = pneg %p274
    $region46: #{mask_fuse_forward.14} parent=5 // pred_check_branch
      %277 = sbr.rel (%p275) target = $region48
    $region47: #{mask_fuse_forward.14} parent=5 // pred_region
      // Predicated region
      $region49: #{mask_fuse_forward.14} parent=47 // pred_check
        %p278 = pneg %p35
      $region50: #{mask_fuse_forward.14} parent=47 // pred_check_branch
        %280 = sbr.rel (%p278) target = $region52
      $region51: #{mask_fuse_forward.14} parent=47 // pred_region
        %s281 = smul.u32 8, %s15
        %p282 = scmp.lt.s32.totalorder %s281, 15
        %s283 = scalar_select %p282, %s281, 15
        %s284 = smul.addr %s283, 8
        %s285 = scalar_lea.vmem %s0, %s284
        %s286 = smul.u32 8, %s15
      $region52: #{mask_fuse_forward.14} parent=47 // pred_fallthru
        _
    $region48: #{mask_fuse_forward.14} parent=5 // pred_fallthru
      _
    %p287 = scmp.le.s32.totalorder 1, %s15
    %p288 = scmp.lt.s32.totalorder %s15, 3
    %p289 = pnand %p287, %p288
    %p290 = pneg %p289
    // Predicated region
    $region53: #{mask_fuse_forward.14} parent=5 // pred_check
      _
    $region54: #{mask_fuse_forward.14} parent=5 // pred_check_branch
      %292 = sbr.rel (%p289) target = $region56
    $region55: #{mask_fuse_forward.14} parent=5 // pred_region
      %s293 = ssub.s32 %s15, 1
      %s294 = smul.u32 8, %s20
      %p295 = scmp.lt.s32.totalorder %s294, 15
      %s296 = scalar_select %p295, %s294, 15
      %s297 = smul.addr %s296, 8
      %s298 = scalar_lea.vmem %s0, %s297
      %p299 = pneg %p41
      %p300 = pneg %p38
      %p301 = pneg %p62
      %p302 = pneg %p59
      %p303 = pneg %p83
      %p304 = pneg %p80
      %p305 = pneg %p104
      %p306 = pneg %p101
      %p307 = pneg %p125
      %p308 = pneg %p122
      %p309 = pneg %p146
      %p310 = pneg %p143
      %p311 = pneg %p167
      %p312 = pneg %p164
      %p313 = pneg %p188
      %p314 = pneg %p185
      %p315 = pneg %p209
      %p316 = pneg %p206
      %p317 = pneg %p235
      %p318 = pneg %p232
      %s319 = smul.u32 8, %s20
      %p320 = scmp.lt.s32.totalorder %s319, 15
      %s321 = scalar_select %p320, %s319, 15
      %s322 = smul.addr %s321, 8
      %s323 = scalar_lea.vmem %s9, %s322
      %s324 = smul.u32 8, %s20
      %p325 = scmp.lt.s32.totalorder %s324, 15
      %s326 = scalar_select %p325, %s324, 15
      %s327 = smul.addr %s326, 8
      %s328 = scalar_lea.vmem %s0, %s327
      %s329 = smul.u32 8, %s20
      %s330 = smul.u32 8, %s20
      %p331 = scmp.lt.s32.totalorder %s330, 15
      %s332 = scalar_select %p331, %s330, 15
      %s333 = smul.addr %s332, 8
      %s334 = scalar_lea.vmem %s9, %s333
      %s335 = smul.u32 8, %s20
      %v336 = vld [vmem:[%s328] sm:$0xff]
      %v337 = vld [vmem:[%s328 + $0x8] sm:$0xff]
      %v338 = vld [vmem:[%s328 + $0x10] sm:$0xff]
      %v339 = vld [vmem:[%s328 + $0x18] sm:$0xff]
      %v340 = vld [vmem:[%s328 + $0x20] sm:$0xff]
      %v341 = vld [vmem:[%s328 + $0x28] sm:$0xff]
      %v342 = vld [vmem:[%s328 + $0x30] sm:$0xff]
      %v343 = vld [vmem:[%s328 + $0x38] sm:$0xff]
      %v344 = vld [vmem:[%s1] sm:$0x1]
      %v345 = vld [vmem:[%s2] sm:$0x1]
      %vm346 = vcmask 195584
      %v347 = vsel %vm346, %v336, 0.0
      %348 = vadd.xlane.f32.xlu0 %v347
      %v349 = vpop.xlane.xlu0 %348
      %v350 = vsel %vm346, %v337, 0.0
      %351 = vadd.xlane.f32.xlu0 %v350
      %v352 = vpop.xlane.xlu0 %351
      %v353 = vsel %vm346, %v338, 0.0
      %354 = vadd.xlane.f32.xlu0 %v353
      %v355 = vpop.xlane.xlu0 %354
      %v356 = vsel %vm346, %v339, 0.0
      %357 = vadd.xlane.f32.xlu0 %v356
      %v358 = vpop.xlane.xlu0 %357
      %v359 = vsel %vm346, %v340, 0.0
      %360 = vadd.xlane.f32.xlu0 %v359
      %v361 = vpop.xlane.xlu0 %360
      %v362 = vsel %vm346, %v341, 0.0
      %363 = vadd.xlane.f32.xlu0 %v362
      %v364 = vpop.xlane.xlu0 %363
      %v365 = vsel %vm346, %v342, 0.0
      %366 = vadd.xlane.f32.xlu0 %v365
      %v367 = vpop.xlane.xlu0 %366
      %v368 = vsel %vm346, %v343, 0.0
      %369 = vadd.xlane.f32.xlu0 %v368
      %v370 = vpop.xlane.xlu0 %369
      %v371 = vrcp.pop 24.0
      %v372 = vmul.f32 %v349, %v371
      %v373 = vmul.f32 %v352, %v371
      %v374 = vmul.f32 %v355, %v371
      %v375 = vmul.f32 %v358, %v371
      %v376 = vmul.f32 %v361, %v371
      %v377 = vmul.f32 %v364, %v371
      %v378 = vmul.f32 %v367, %v371
      %v379 = vmul.f32 %v370, %v371
      %v380 = vsub.f32 %v336, %v372
      %v381 = vsub.f32 %v337, %v373
      %v382 = vsub.f32 %v338, %v374
      %v383 = vsub.f32 %v339, %v375
      %v384 = vsub.f32 %v340, %v376
      %v385 = vsub.f32 %v341, %v377
      %v386 = vsub.f32 %v342, %v378
      %v387 = vsub.f32 %v343, %v379
      %v388 = vmul.f32 %v380, %v380
      %v389 = vmul.f32 %v381, %v381
      %v390 = vmul.f32 %v382, %v382
      %v391 = vmul.f32 %v383, %v383
      %v392 = vmul.f32 %v384, %v384
      %v393 = vmul.f32 %v385, %v385
      %v394 = vmul.f32 %v386, %v386
      %v395 = vmul.f32 %v387, %v387
      %v396 = vsel %vm346, %v388, 0.0
      %397 = vadd.xlane.f32.xlu0 %v396
      %v398 = vpop.xlane.xlu0 %397
      %v399 = vsel %vm346, %v389, 0.0
      %400 = vadd.xlane.f32.xlu0 %v399
      %v401 = vpop.xlane.xlu0 %400
      %v402 = vsel %vm346, %v390, 0.0
      %403 = vadd.xlane.f32.xlu0 %v402
      %v404 = vpop.xlane.xlu0 %403
      %v405 = vsel %vm346, %v391, 0.0
      %406 = vadd.xlane.f32.xlu0 %v405
      %v407 = vpop.xlane.xlu0 %406
      %v408 = vsel %vm346, %v392, 0.0
      %409 = vadd.xlane.f32.xlu0 %v408
      %v410 = vpop.xlane.xlu0 %409
      %v411 = vsel %vm346, %v393, 0.0
      %412 = vadd.xlane.f32.xlu0 %v411
      %v413 = vpop.xlane.xlu0 %412
      %v414 = vsel %vm346, %v394, 0.0
      %415 = vadd.xlane.f32.xlu0 %v414
      %v416 = vpop.xlane.xlu0 %415
      %v417 = vsel %vm346, %v395, 0.0
      %418 = vadd.xlane.f32.xlu0 %v417
      %v419 = vpop.xlane.xlu0 %418
      %v420 = vmul.f32 %v398, %v371
      %v421 = vmul.f32 %v401, %v371
      %v422 = vmul.f32 %v404, %v371
      %v423 = vmul.f32 %v407, %v371
      %v424 = vmul.f32 %v410, %v371
      %v425 = vmul.f32 %v413, %v371
      %v426 = vmul.f32 %v416, %v371
      %v427 = vmul.f32 %v419, %v371
      %v428 = vadd.f32 %v420, 1e-05
      %v429 = vadd.f32 %v421, 1e-05
      %v430 = vadd.f32 %v422, 1e-05
      %v431 = vadd.f32 %v423, 1e-05
      %v432 = vadd.f32 %v424, 1e-05
      %v433 = vadd.f32 %v425, 1e-05
      %v434 = vadd.f32 %v426, 1e-05
      %v435 = vadd.f32 %v427, 1e-05
      %v436 = vrsqrt.pop %v428
      %v437 = vrsqrt.pop %v429
      %v438 = vrsqrt.pop %v430
      %v439 = vrsqrt.pop %v431
      %v440 = vrsqrt.pop %v432
      %v441 = vrsqrt.pop %v433
      %v442 = vrsqrt.pop %v434
      %v443 = vrsqrt.pop %v435
      %v444 = vmul.f32 %v380, %v436
      %v445 = vmul.f32 %v381, %v437
      %v446 = vmul.f32 %v382, %v438
      %v447 = vmul.f32 %v383, %v439
      %v448 = vmul.f32 %v384, %v440
      %v449 = vmul.f32 %v385, %v441
      %v450 = vmul.f32 %v386, %v442
      %v451 = vmul.f32 %v387, %v443
      %v453 = vlaneseq
      %v454 = vshrl.u32 %v453, 7
      %v455 = vsub.s32 0, %v454
      %v456 = vrot.slane %v344, %v455
      %v458 = vmul.f32 %v444, %v456
      %v459 = vmul.f32 %v445, %v456
      %v460 = vmul.f32 %v446, %v456
      %v461 = vmul.f32 %v447, %v456
      %v462 = vmul.f32 %v448, %v456
      %v463 = vmul.f32 %v449, %v456
      %v464 = vmul.f32 %v450, %v456
      %v465 = vmul.f32 %v451, %v456
      %v467 = vlaneseq
      %v468 = vshrl.u32 %v467, 7
      %v469 = vsub.s32 0, %v468
      %v470 = vrot.slane %v345, %v469
      %v472 = vadd.f32 %v458, %v470
      %v473 = vadd.f32 %v459, %v470
      %v474 = vadd.f32 %v460, %v470
      %v475 = vadd.f32 %v461, %v470
      %v476 = vadd.f32 %v462, %v470
      %v477 = vadd.f32 %v463, %v470
      %v478 = vadd.f32 %v464, %v470
      %v479 = vadd.f32 %v465, %v470
      %v480 = vld [vmem:[%s3] sm:$0xff]
      %v481 = vld [vmem:[%s3 + $0x8] sm:$0xff]
      %v482 = vld [vmem:[%s3 + $0x10] sm:$0xff]
      %v483 = vld [vmem:[%s4] sm:$0x1]
      %v485 = vlaneseq
      %v486 = vshrl.u32 %v485, 7
      %v487 = vsub.s32 0, %v486
      %v488 = vrot.slane %v483, %v487
      %v491 = vsel %vm346, %v472, 0
      %v494 = vsel %vm346, %v473, 0
      %v497 = vsel %vm346, %v474, 0
      %v500 = vsel %vm346, %v475, 0
      %v503 = vsel %vm346, %v476, 0
      %v506 = vsel %vm346, %v477, 0
      %v509 = vsel %vm346, %v478, 0
      %v512 = vsel %vm346, %v479, 0
      %514 = vmatprep.subr.mxu0 0.0
      %515 = vmatpush1.msra.mxu0 %v480
      %516 = vmatprep.subr.mxu0 0.0
      %517 = vmatpush1.msra.mxu0 %v481
      %518 = vmatprep.subr.mxu0 0.0
      %519 = vmatpush1.msra.mxu0 %v482
      %520 = vmatprep.subr.mxu0 0.0
      %521 = vmatpush1.msra.mxu0 0.0
      %522 = vmatprep.subr.mxu0 0.0
      %523 = vmatpush1.msra.mxu0 0.0
      %524 = vmatprep.subr.mxu0 0.0
      %525 = vmatpush1.msra.mxu0 0.0
      %526 = vmatprep.subr.mxu0 0.0
      %527 = vmatpush1.msra.mxu0 0.0
      %528 = vmatprep.subr.mxu0 0.0
      %529 = vmatpush1.msra.mxu0 0.0
      %530 = vmatprep.subr.mxu0 0.0
      %531 = vmatpush1.msra.mxu0 0.0
      %532 = vmatprep.subr.mxu0 0.0
      %533 = vmatpush1.msra.mxu0 0.0
      %534 = vmatprep.subr.mxu0 0.0
      %535 = vmatpush1.msra.mxu0 0.0
      %536 = vmatprep.subr.mxu0 0.0
      %537 = vmatpush1.msra.mxu0 0.0
      %538 = vmatprep.subr.mxu0 0.0
      %539 = vmatpush1.msra.mxu0 0.0
      %540 = vmatprep.subr.mxu0 0.0
      %541 = vmatpush1.msra.mxu0 0.0
      %542 = vmatprep.subr.mxu0 0.0
      %543 = vmatpush1.msra.mxu0 0.0
      %544 = vmatprep.subr.mxu0 0.0
      %545 = vmatpush1.msra.mxu0 0.0
      %546 = vmatprep.subr.mxu0 0.0
      %547 = vmatpush1.msra.mxu0 0.0
      %548 = vmatprep.subr.mxu0 0.0
      %549 = vmatpush1.msra.mxu0 0.0
      %550 = vmatprep.subr.mxu0 0.0
      %551 = vmatpush1.msra.mxu0 0.0
      %552 = vmatprep.subr.mxu0 0.0
      %553 = vmatpush1.msra.mxu0 0.0
      %554 = vmatprep.subr.mxu0 0.0
      %555 = vmatpush1.msra.mxu0 0.0
      %556 = vmatprep.subr.mxu0 0.0
      %557 = vmatpush1.msra.mxu0 0.0
      %558 = vmatprep.subr.mxu0 0.0
      %559 = vmatpush1.msra.mxu0 0.0
      %560 = vmatprep.subr.mxu0 0.0
      %561 = vmatpush1.msra.mxu0 0.0
      %562 = vmatprep.subr.mxu0 0.0
      %563 = vmatpush1.msra.mxu0 0.0
      %564 = vmatprep.subr.mxu0 0.0
      %565 = vmatpush1.msra.mxu0 0.0
      %566 = vmatprep.subr.mxu0 0.0
      %567 = vmatpush1.msra.mxu0 0.0
      %568 = vmatprep.subr.mxu0 0.0
      %569 = vmatpush1.msra.mxu0 0.0
      %570 = vmatprep.subr.mxu0 0.0
      %571 = vmatpush1.msra.mxu0 0.0
      %572 = vmatprep.subr.mxu0 0.0
      %573 = vmatpush1.msra.mxu0 0.0
      %574 = vmatprep.subr.mxu0 0.0
      %575 = vmatpush1.msra.mxu0 0.0
      %576 = vmatprep.subr.mxu0 0.0
      %577 = vmatpush1.msra.mxu0 0.0
      %578 = vmatprep.mubr.f32.mxu0 0.0
      %579 = vmatmul.mubr.f32.gmra.mrb[0].mxu0 %v491
      %v580 = vpop.f32.mrb[0].mxu0
      %v581 = vadd.f32 %v488, %v580
      %v582 = vpop.f32.mrb[0].mxu0
      %583 = vmatprep.mubr.f32.mxu0 0.0
      %584 = vmatmul.mubr.f32.gmra.mrb[0].mxu0 %v494
      %v585 = vpop.f32.mrb[0].mxu0
      %v586 = vadd.f32 %v488, %v585
      %v587 = vpop.f32.mrb[0].mxu0
      %588 = vmatprep.mubr.f32.mxu0 0.0
      %589 = vmatmul.mubr.f32.gmra.mrb[0].mxu0 %v497
      %v590 = vpop.f32.mrb[0].mxu0
      %v591 = vadd.f32 %v488, %v590
      %v592 = vpop.f32.mrb[0].mxu0
      %593 = vmatprep.mubr.f32.mxu0 0.0
      %594 = vmatmul.mubr.f32.gmra.mrb[0].mxu0 %v500
      %v595 = vpop.f32.mrb[0].mxu0
      %v596 = vadd.f32 %v488, %v595
      %v597 = vpop.f32.mrb[0].mxu0
      %598 = vmatprep.mubr.f32.mxu0 0.0
      %599 = vmatmul.mubr.f32.gmra.mrb[0].mxu0 %v503
      %v600 = vpop.f32.mrb[0].mxu0
      %v601 = vadd.f32 %v488, %v600
      %v602 = vpop.f32.mrb[0].mxu0
      %603 = vmatprep.mubr.f32.mxu0 0.0
      %604 = vmatmul.mubr.f32.gmra.mrb[0].mxu0 %v506
      %v605 = vpop.f32.mrb[0].mxu0
      %v606 = vadd.f32 %v488, %v605
      %v607 = vpop.f32.mrb[0].mxu0
      %608 = vmatprep.mubr.f32.mxu0 0.0
      %609 = vmatmul.mubr.f32.gmra.mrb[0].mxu0 %v509
      %v610 = vpop.f32.mrb[0].mxu0
      %v611 = vadd.f32 %v488, %v610
      %v612 = vpop.f32.mrb[0].mxu0
      %613 = vmatprep.mubr.f32.mxu0 0.0
      %614 = vmatmul.mubr.f32.gmra.mrb[0].mxu0 %v512
      %v615 = vpop.f32.mrb[0].mxu0
      %v616 = vadd.f32 %v488, %v615
      %v617 = vpop.f32.mrb[0].mxu0
      %618 = vdwg.mxu0
      %v619 = vmul.f32 %v581, 0.5
      %v620 = vmul.f32 %v586, 0.5
      %v621 = vmul.f32 %v591, 0.5
      %v622 = vmul.f32 %v596, 0.5
      %v623 = vmul.f32 %v601, 0.5
      %v624 = vmul.f32 %v606, 0.5
      %v625 = vmul.f32 %v611, 0.5
      %v626 = vmul.f32 %v616, 0.5
      %v627 = vmul.f32 %v581, 0.70710677
      %v628 = vmul.f32 %v586, 0.70710677
      %v629 = vmul.f32 %v591, 0.70710677
      %v630 = vmul.f32 %v596, 0.70710677
      %v631 = vmul.f32 %v601, 0.70710677
      %v632 = vmul.f32 %v606, 0.70710677
      %v633 = vmul.f32 %v611, 0.70710677
      %v634 = vmul.f32 %v616, 0.70710677
      %v635 = vand.u32 2147483647, %v627
      %v636 = vand.u32 2147483647, %v628
      %v637 = vand.u32 2147483647, %v629
      %v638 = vand.u32 2147483647, %v630
      %v639 = vand.u32 2147483647, %v631
      %v640 = vand.u32 2147483647, %v632
      %v641 = vand.u32 2147483647, %v633
      %v642 = vand.u32 2147483647, %v634
      %v643 = vmul.f32 %v635, 0.3275911
      %v644 = vmul.f32 %v636, 0.3275911
      %v645 = vmul.f32 %v637, 0.3275911
      %v646 = vmul.f32 %v638, 0.3275911
      %v647 = vmul.f32 %v639, 0.3275911
      %v648 = vmul.f32 %v640, 0.3275911
      %v649 = vmul.f32 %v641, 0.3275911
      %v650 = vmul.f32 %v642, 0.3275911
      %v651 = vadd.f32 %v643, 1.0
      %v652 = vadd.f32 %v644, 1.0
      %v653 = vadd.f32 %v645, 1.0
      %v654 = vadd.f32 %v646, 1.0
      %v655 = vadd.f32 %v647, 1.0
      %v656 = vadd.f32 %v648, 1.0
      %v657 = vadd.f32 %v649, 1.0
      %v658 = vadd.f32 %v650, 1.0
      %v659 = vrcp.pop %v651
      %v660 = vmul.f32 1.0, %v659
      %v661 = vrcp.pop %v652
      %v662 = vmul.f32 1.0, %v661
      %v663 = vrcp.pop %v653
      %v664 = vmul.f32 1.0, %v663
      %v665 = vrcp.pop %v654
      %v666 = vmul.f32 1.0, %v665
      %v667 = vrcp.pop %v655
      %v668 = vmul.f32 1.0, %v667
      %v669 = vrcp.pop %v656
      %v670 = vmul.f32 1.0, %v669
      %v671 = vrcp.pop %v657
      %v672 = vmul.f32 1.0, %v671
      %v673 = vrcp.pop %v658
      %v674 = vmul.f32 1.0, %v673
      %v675 = vmul.f32 %v660, 1.0614054
      %v676 = vmul.f32 %v662, 1.0614054
      %v677 = vmul.f32 %v664, 1.0614054
      %v678 = vmul.f32 %v666, 1.0614054
      %v679 = vmul.f32 %v668, 1.0614054
      %v680 = vmul.f32 %v670, 1.0614054
      %v681 = vmul.f32 %v672, 1.0614054
      %v682 = vmul.f32 %v674, 1.0614054
      %v683 = vadd.f32 %v675, -1.4531521
      %v684 = vadd.f32 %v676, -1.4531521
      %v685 = vadd.f32 %v677, -1.4531521
      %v686 = vadd.f32 %v678, -1.4531521
      %v687 = vadd.f32 %v679, -1.4531521
      %v688 = vadd.f32 %v680, -1.4531521
      %v689 = vadd.f32 %v681, -1.4531521
      %v690 = vadd.f32 %v682, -1.4531521
      %v691 = vmul.f32 %v660, %v683
      %v692 = vmul.f32 %v662, %v684
      %v693 = vmul.f32 %v664, %v685
      %v694 = vmul.f32 %v666, %v686
      %v695 = vmul.f32 %v668, %v687
      %v696 = vmul.f32 %v670, %v688
      %v697 = vmul.f32 %v672, %v689
      %v698 = vmul.f32 %v674, %v690
      %v699 = vadd.f32 %v691, 1.4214138
      %v700 = vadd.f32 %v692, 1.4214138
      %v701 = vadd.f32 %v693, 1.4214138
      %v702 = vadd.f32 %v694, 1.4214138
      %v703 = vadd.f32 %v695, 1.4214138
      %v704 = vadd.f32 %v696, 1.4214138
      %v705 = vadd.f32 %v697, 1.4214138
      %v706 = vadd.f32 %v698, 1.4214138
      %v707 = vmul.f32 %v660, %v699
      %v708 = vmul.f32 %v662, %v700
      %v709 = vmul.f32 %v664, %v701
      %v710 = vmul.f32 %v666, %v702
      %v711 = vmul.f32 %v668, %v703
      %v712 = vmul.f32 %v670, %v704
      %v713 = vmul.f32 %v672, %v705
      %v714 = vmul.f32 %v674, %v706
      %v715 = vadd.f32 %v707, -0.28449672
      %v716 = vadd.f32 %v708, -0.28449672
      %v717 = vadd.f32 %v709, -0.28449672
      %v718 = vadd.f32 %v710, -0.28449672
      %v719 = vadd.f32 %v711, -0.28449672
      %v720 = vadd.f32 %v712, -0.28449672
      %v721 = vadd.f32 %v713, -0.28449672
      %v722 = vadd.f32 %v714, -0.28449672
      %v723 = vmul.f32 %v660, %v715
      %v724 = vmul.f32 %v662, %v716
      %v725 = vmul.f32 %v664, %v717
      %v726 = vmul.f32 %v666, %v718
      %v727 = vmul.f32 %v668, %v719
      %v728 = vmul.f32 %v670, %v720
      %v729 = vmul.f32 %v672, %v721
      %v730 = vmul.f32 %v674, %v722
      %v731 = vadd.f32 %v723, 0.2548296
      %v732 = vadd.f32 %v724, 0.2548296
      %v733 = vadd.f32 %v725, 0.2548296
      %v734 = vadd.f32 %v726, 0.2548296
      %v735 = vadd.f32 %v727, 0.2548296
      %v736 = vadd.f32 %v728, 0.2548296
      %v737 = vadd.f32 %v729, 0.2548296
      %v738 = vadd.f32 %v730, 0.2548296
      %v739 = vmul.f32 %v660, %v731
      %v740 = vmul.f32 %v662, %v732
      %v741 = vmul.f32 %v664, %v733
      %v742 = vmul.f32 %v666, %v734
      %v743 = vmul.f32 %v668, %v735
      %v744 = vmul.f32 %v670, %v736
      %v745 = vmul.f32 %v672, %v737
      %v746 = vmul.f32 %v674, %v738
      %v747 = vsub.f32 0.0, %v627
      %v748 = vsub.f32 0.0, %v628
      %v749 = vsub.f32 0.0, %v629
      %v750 = vsub.f32 0.0, %v630
      %v751 = vsub.f32 0.0, %v631
      %v752 = vsub.f32 0.0, %v632
      %v753 = vsub.f32 0.0, %v633
      %v754 = vsub.f32 0.0, %v634
      %v755 = vmul.f32 %v747, %v627
      %v756 = vmul.f32 %v748, %v628
      %v757 = vmul.f32 %v749, %v629
      %v758 = vmul.f32 %v750, %v630
      %v759 = vmul.f32 %v751, %v631
      %v760 = vmul.f32 %v752, %v632
      %v761 = vmul.f32 %v753, %v633
      %v762 = vmul.f32 %v754, %v634
      %v763 = vmul.f32 %v755, 1.442695
      %v764 = vpow.pop %v763
      %v765 = vmul.f32 %v756, 1.442695
      %v766 = vpow.pop %v765
      %v767 = vmul.f32 %v757, 1.442695
      %v768 = vpow.pop %v767
      %v769 = vmul.f32 %v758, 1.442695
      %v770 = vpow.pop %v769
      %v771 = vmul.f32 %v759, 1.442695
      %v772 = vpow.pop %v771
      %v773 = vmul.f32 %v760, 1.442695
      %v774 = vpow.pop %v773
      %v775 = vmul.f32 %v761, 1.442695
      %v776 = vpow.pop %v775
      %v777 = vmul.f32 %v762, 1.442695
      %v778 = vpow.pop %v777
      %v779 = vmul.f32 %v739, %v764
      %v780 = vmul.f32 %v740, %v766
      %v781 = vmul.f32 %v741, %v768
      %v782 = vmul.f32 %v742, %v770
      %v783 = vmul.f32 %v743, %v772
      %v784 = vmul.f32 %v744, %v774
      %v785 = vmul.f32 %v745, %v776
      %v786 = vmul.f32 %v746, %v778
      %v787 = vsub.f32 1.0, %v779
      %v788 = vsub.f32 1.0, %v780
      %v789 = vsub.f32 1.0, %v781
      %v790 = vsub.f32 1.0, %v782
      %v791 = vsub.f32 1.0, %v783
      %v792 = vsub.f32 1.0, %v784
      %v793 = vsub.f32 1.0, %v785
      %v794 = vsub.f32 1.0, %v786
      %vm795 = vcmp.ge.f32.partialorder %v627, 0.0
      %vm796 = vcmp.ge.f32.partialorder %v628, 0.0
      %vm797 = vcmp.ge.f32.partialorder %v629, 0.0
      %vm798 = vcmp.ge.f32.partialorder %v630, 0.0
      %vm799 = vcmp.ge.f32.partialorder %v631, 0.0
      %vm800 = vcmp.ge.f32.partialorder %v632, 0.0
      %vm801 = vcmp.ge.f32.partialorder %v633, 0.0
      %vm802 = vcmp.ge.f32.partialorder %v634, 0.0
      %v803 = vsub.f32 0.0, %v787
      %v804 = vsub.f32 0.0, %v788
      %v805 = vsub.f32 0.0, %v789
      %v806 = vsub.f32 0.0, %v790
      %v807 = vsub.f32 0.0, %v791
      %v808 = vsub.f32 0.0, %v792
      %v809 = vsub.f32 0.0, %v793
      %v810 = vsub.f32 0.0, %v794
      %v811 = vsel %vm795, %v787, %v803
      %v812 = vsel %vm796, %v788, %v804
      %v813 = vsel %vm797, %v789, %v805
      %v814 = vsel %vm798, %v790, %v806
      %v815 = vsel %vm799, %v791, %v807
      %v816 = vsel %vm800, %v792, %v808
      %v817 = vsel %vm801, %v793, %v809
      %v818 = vsel %vm802, %v794, %v810
      %v819 = vadd.f32 %v811, 1.0
      %v820 = vadd.f32 %v812, 1.0
      %v821 = vadd.f32 %v813, 1.0
      %v822 = vadd.f32 %v814, 1.0
      %v823 = vadd.f32 %v815, 1.0
      %v824 = vadd.f32 %v816, 1.0
      %v825 = vadd.f32 %v817, 1.0
      %v826 = vadd.f32 %v818, 1.0
      %v827 = vmul.f32 %v619, %v819
      %v828 = vmul.f32 %v620, %v820
      %v829 = vmul.f32 %v621, %v821
      %v830 = vmul.f32 %v622, %v822
      %v831 = vmul.f32 %v623, %v823
      %v832 = vmul.f32 %v624, %v824
      %v833 = vmul.f32 %v625, %v825
      %v834 = vmul.f32 %v626, %v826
      %v835 = vld [vmem:[%s5] sm:$0xff]
      %v836 = vld [vmem:[%s5 + $0x8] sm:$0xff]
      %v837 = vld [vmem:[%s5 + $0x10] sm:$0xff]
      %v838 = vld [vmem:[%s5 + $0x18] sm:$0xff]
      %v839 = vld [vmem:[%s5 + $0x20] sm:$0xff]
      %v840 = vld [vmem:[%s5 + $0x28] sm:$0xff]
      %v841 = vld [vmem:[%s5 + $0x30] sm:$0xff]
      %v842 = vld [vmem:[%s5 + $0x38] sm:$0xff]
      %v843 = vld [vmem:[%s5 + $0x40] sm:$0xff]
      %vm844 = vcmask 588800
      %v846 = vsel %vm844, %v827, 0
      %v849 = vsel %vm844, %v828, 0
      %v852 = vsel %vm844, %v829, 0
      %v855 = vsel %vm844, %v830, 0
      %v858 = vsel %vm844, %v831, 0
      %v861 = vsel %vm844, %v832, 0
      %v864 = vsel %vm844, %v833, 0
      %v867 = vsel %vm844, %v834, 0
      %869 = vmatprep.subr.mxu0 0.0
      %870 = vmatpush1.msra.mxu0 %v835
      %871 = vmatprep.subr.mxu0 0.0
      %872 = vmatpush1.msra.mxu0 %v836
      %873 = vmatprep.subr.mxu0 0.0
      %874 = vmatpush1.msra.mxu0 %v837
      %875 = vmatprep.subr.mxu0 0.0
      %876 = vmatpush1.msra.mxu0 %v838
      %877 = vmatprep.subr.mxu0 0.0
      %878 = vmatpush1.msra.mxu0 %v839
      %879 = vmatprep.subr.mxu0 0.0
      %880 = vmatpush1.msra.mxu0 %v840
      %881 = vmatprep.subr.mxu0 0.0
      %882 = vmatpush1.msra.mxu0 %v841
      %883 = vmatprep.subr.mxu0 0.0
      %884 = vmatpush1.msra.mxu0 %v842
      %885 = vmatprep.subr.mxu0 0.0
      %886 = vmatpush1.msra.mxu0 %v843
      %887 = vmatprep.subr.mxu0 0.0
      %888 = vmatpush1.msra.mxu0 0.0
      %889 = vmatprep.subr.mxu0 0.0
      %890 = vmatpush1.msra.mxu0 0.0
      %891 = vmatprep.subr.mxu0 0.0
      %892 = vmatpush1.msra.mxu0 0.0
      %893 = vmatprep.subr.mxu0 0.0
      %894 = vmatpush1.msra.mxu0 0.0
      %895 = vmatprep.subr.mxu0 0.0
      %896 = vmatpush1.msra.mxu0 0.0
      %897 = vmatprep.subr.mxu0 0.0
      %898 = vmatpush1.msra.mxu0 0.0
      %899 = vmatprep.subr.mxu0 0.0
      %900 = vmatpush1.msra.mxu0 0.0
      %901 = vmatprep.subr.mxu0 0.0
      %902 = vmatpush1.msra.mxu0 0.0
      %903 = vmatprep.subr.mxu0 0.0
      %904 = vmatpush1.msra.mxu0 0.0
      %905 = vmatprep.subr.mxu0 0.0
      %906 = vmatpush1.msra.mxu0 0.0
      %907 = vmatprep.subr.mxu0 0.0
      %908 = vmatpush1.msra.mxu0 0.0
      %909 = vmatprep.subr.mxu0 0.0
      %910 = vmatpush1.msra.mxu0 0.0
      %911 = vmatprep.subr.mxu0 0.0
      %912 = vmatpush1.msra.mxu0 0.0
      %913 = vmatprep.subr.mxu0 0.0
      %914 = vmatpush1.msra.mxu0 0.0
      %915 = vmatprep.subr.mxu0 0.0
      %916 = vmatpush1.msra.mxu0 0.0
      %917 = vmatprep.subr.mxu0 0.0
      %918 = vmatpush1.msra.mxu0 0.0
      %919 = vmatprep.subr.mxu0 0.0
      %920 = vmatpush1.msra.mxu0 0.0
      %921 = vmatprep.subr.mxu0 0.0
      %922 = vmatpush1.msra.mxu0 0.0
      %923 = vmatprep.subr.mxu0 0.0
      %924 = vmatpush1.msra.mxu0 0.0
      %925 = vmatprep.subr.mxu0 0.0
      %926 = vmatpush1.msra.mxu0 0.0
      %927 = vmatprep.subr.mxu0 0.0
      %928 = vmatpush1.msra.mxu0 0.0
      %929 = vmatprep.subr.mxu0 0.0
      %930 = vmatpush1.msra.mxu0 0.0
      %931 = vmatprep.subr.mxu0 0.0
      %932 = vmatpush1.msra.mxu0 0.0
      %933 = vmatprep.mubr.f32.mxu0 0.0
      %934 = vmatmul.mubr.f32.gmra.mrb[0].mxu0 %v846
      %v935 = vpop.f32.mrb[0].mxu0
      %v936 = vadd.f32 0.0, %v935
      %v937 = vpop.f32.mrb[0].mxu0
      %938 = vmatprep.mubr.f32.mxu0 0.0
      %939 = vmatmul.mubr.f32.gmra.mrb[0].mxu0 %v849
      %v940 = vpop.f32.mrb[0].mxu0
      %v941 = vadd.f32 0.0, %v940
      %v942 = vpop.f32.mrb[0].mxu0
      %943 = vmatprep.mubr.f32.mxu0 0.0
      %944 = vmatmul.mubr.f32.gmra.mrb[0].mxu0 %v852
      %v945 = vpop.f32.mrb[0].mxu0
      %v946 = vadd.f32 0.0, %v945
      %v947 = vpop.f32.mrb[0].mxu0
      %948 = vmatprep.mubr.f32.mxu0 0.0
      %949 = vmatmul.mubr.f32.gmra.mrb[0].mxu0 %v855
      %v950 = vpop.f32.mrb[0].mxu0
      %v951 = vadd.f32 0.0, %v950
      %v952 = vpop.f32.mrb[0].mxu0
      %953 = vmatprep.mubr.f32.mxu0 0.0
      %954 = vmatmul.mubr.f32.gmra.mrb[0].mxu0 %v858
      %v955 = vpop.f32.mrb[0].mxu0
      %v956 = vadd.f32 0.0, %v955
      %v957 = vpop.f32.mrb[0].mxu0
      %958 = vmatprep.mubr.f32.mxu0 0.0
      %959 = vmatmul.mubr.f32.gmra.mrb[0].mxu0 %v861
      %v960 = vpop.f32.mrb[0].mxu0
      %v961 = vadd.f32 0.0, %v960
      %v962 = vpop.f32.mrb[0].mxu0
      %963 = vmatprep.mubr.f32.mxu0 0.0
      %964 = vmatmul.mubr.f32.gmra.mrb[0].mxu0 %v864
      %v965 = vpop.f32.mrb[0].mxu0
      %v966 = vadd.f32 0.0, %v965
      %v967 = vpop.f32.mrb[0].mxu0
      %968 = vmatprep.mubr.f32.mxu0 0.0
      %969 = vmatmul.mubr.f32.gmra.mrb[0].mxu0 %v867
      %v970 = vpop.f32.mrb[0].mxu0
      %v971 = vadd.f32 0.0, %v970
      %v972 = vpop.f32.mrb[0].mxu0
      %973 = vdwg.mxu0
      %v974 = vadd.f32 %v336, %v936
      %v975 = vadd.f32 %v337, %v941
      %v976 = vadd.f32 %v338, %v946
      %v977 = vadd.f32 %v339, %v951
      %v978 = vadd.f32 %v340, %v956
      %v979 = vadd.f32 %v341, %v961
      %v980 = vadd.f32 %v342, %v966
      %v981 = vadd.f32 %v343, %v971
      %v982 = vld [vmem:[%s6] sm:$0x1]
      %v984 = vlaneseq
      %v985 = vshrl.u32 %v984, 7
      %v986 = vsub.s32 0, %v985
      %v987 = vrot.slane %v982, %v986
      %v989 = vadd.f32 %v974, %v987
      %v990 = vadd.f32 %v975, %v987
      %v991 = vadd.f32 %v976, %v987
      %v992 = vadd.f32 %v977, %v987
      %v993 = vadd.f32 %v978, %v987
      %v994 = vadd.f32 %v979, %v987
      %v995 = vadd.f32 %v980, %v987
      %v996 = vadd.f32 %v981, %v987
      %997 = vst.msk [vmem:[%s334] sm:$0xff] %vm346, %v989
      %998 = vst.msk [vmem:[%s334 + $0x8] sm:$0xff] %vm346, %v990
      %999 = vst.msk [vmem:[%s334 + $0x10] sm:$0xff] %vm346, %v991
      %1000 = vst.msk [vmem:[%s334 + $0x18] sm:$0xff] %vm346, %v992
      %1001 = vst.msk [vmem:[%s334 + $0x20] sm:$0xff] %vm346, %v993
      %1002 = vst.msk [vmem:[%s334 + $0x28] sm:$0xff] %vm346, %v994
      %1003 = vst.msk [vmem:[%s334 + $0x30] sm:$0xff] %vm346, %v995
      %1004 = vst.msk [vmem:[%s334 + $0x38] sm:$0xff] %vm346, %v996
      %s1005 = smul.u32 8, %s20
      %p1006 = scmp.lt.s32.totalorder %s1005, 15
      %s1007 = scalar_select %p1006, %s1005, 15
      %s1008 = smul.addr %s1007, 8
      %s1009 = scalar_lea.vmem %s9, %s1008
      // Predicated region
      $region57: #{mask_fuse_forward.14} parent=55 // pred_check
        %p1010 = pneg %p232
      $region58: #{mask_fuse_forward.14} parent=55 // pred_check_branch
        %1012 = sbr.rel (%p1010) target = $region60
      $region59: #{mask_fuse_forward.14} parent=55 // pred_region
        %s1013 = smul.u32 8, %s20
      $region60: #{mask_fuse_forward.14} parent=55 // pred_fallthru
        _
    $region56: #{mask_fuse_forward.14} parent=5 // pred_fallthru
      _
    %p1014 = scmp.le.s32.totalorder 2, %s15
    // Predicated region
    $region61: #{mask_fuse_forward.14} parent=5 // pred_check
      %p1015 = pneg %p1014
    $region62: #{mask_fuse_forward.14} parent=5 // pred_check_branch
      %1017 = sbr.rel (%p1015) target = $region64
    $region63: #{mask_fuse_forward.14} parent=5 // pred_region
      %s1018 = ssub.s32 %s15, 2
      // Predicated region
      $region65: #{mask_fuse_forward.14} parent=63 // pred_check
        %p1019 = pneg %p238
      $region66: #{mask_fuse_forward.14} parent=63 // pred_check_branch
        %1021 = sbr.rel (%p1019) target = $region68
      $region67: #{mask_fuse_forward.14} parent=63 // pred_region
        %s1022 = smul.u32 8, %s21
        %p1023 = scmp.lt.s32.totalorder %s1022, 15
        %s1024 = scalar_select %p1023, %s1022, 15
        %s1025 = smul.addr %s1024, 8
        %s1026 = scalar_lea.vmem %s9, %s1025
      $region68: #{mask_fuse_forward.14} parent=63 // pred_fallthru
        _
    $region64: #{mask_fuse_forward.14} parent=5 // pred_fallthru
      _
  $region6: #{mask_fuse_forward.14} parent=0 // loop_footer
    %s19 = sadd.s32 1, %s15
  $region7: #{mask_fuse_forward.14} parent=0 // loop_footer_branch
    %14 = sbr.rel target = $region3
  $region8: #{mask_fuse_forward.14} parent=0 // loop_exit
    _

// kernel: mask_fuse_forward.18
$region0: #{mask_fuse_forward.18}
  #allocation0 [shape = 'u32[]', space=smem, size = 0x4, offset = 0x4, fixed_abs, tag = 'smem constant byte address 0x4 - core index']
  #allocation1 [shape = 'u32[144,128]{1,0:T(1,128)}', space=vmem, size = 0x12000, scoped, tag = 'internal scratch']
  %s0 = inlined_call_operand.vmem [shape: f32[128,24], index: 0, kind: input, shape index: {}]
  %s1 = inlined_call_operand.vmem [shape: f32[1,24], index: 1, kind: input, shape index: {}]
  %s2 = inlined_call_operand.vmem [shape: f32[1,24], index: 2, kind: input, shape index: {}]
  %s3 = inlined_call_operand.vmem [shape: f32[24,72], index: 3, kind: input, shape index: {}]
  %s4 = inlined_call_operand.vmem [shape: f32[1,72], index: 4, kind: input, shape index: {}]
  %s5 = inlined_call_operand.vmem [shape: f32[72,24], index: 5, kind: input, shape index: {}]
  %s6 = inlined_call_operand.vmem [shape: f32[1,24], index: 6, kind: input, shape index: {}]
  %s7 = inlined_call_operand.vmem [shape: f32[1,24], index: 7, kind: input, shape index: {}]
  %s8 = inlined_call_operand.vmem [shape: f32[1,24], index: 8, kind: input, shape index: {}]
  %s9 = inlined_call_operand.vmem [shape: f32[128,24], index: 9, kind: output, shape index: {}]
  %s10 = sld [smem:[#allocation0]]
  $region69: #{mask_fuse_forward.18} parent=0
    _
  %s12 = ssub.s32 1, %s10
  %s13 = scalar_select 0, %s12, %s10
  loop: start=0, step=1, limit=4
  $region2: #{mask_fuse_forward.18} parent=0 // loop_pre_header
    _
  $region3: #{mask_fuse_forward.18} parent=0 // loop_header
    %s15 = sphi 0, %s19
    %p16 = scmp.ge.s32.totalorder %s15, 4
    %s25 = sphi 0, %s27
    %s28 = sphi 0, %s25
    %s29 = sphi 0, %s28
    %s45 = sphi 0, %s29
    %s49 = sphi 0, %s49
    %s51 = sphi 0, %s49
    %s52 = sphi 0, %s51
    %s66 = sphi 0, %s52
    %s70 = sphi 0, %s70
    %s72 = sphi 0, %s70
    %s73 = sphi 0, %s72
    %s87 = sphi 0, %s73
    %s91 = sphi 0, %s91
    %s93 = sphi 0, %s91
    %s94 = sphi 0, %s93
    %s108 = sphi 0, %s94
    %s112 = sphi 0, %s112
    %s114 = sphi 0, %s112
    %s115 = sphi 0, %s114
    %s129 = sphi 0, %s115
    %s133 = sphi 0, %s133
    %s135 = sphi 0, %s133
    %s136 = sphi 0, %s135
    %s150 = sphi 0, %s136
    %s154 = sphi 0, %s154
    %s156 = sphi 0, %s154
    %s157 = sphi 0, %s156
    %s171 = sphi 0, %s157
    %s175 = sphi 0, %s175
    %s177 = sphi 0, %s175
    %s178 = sphi 0, %s177
    %s192 = sphi 0, %s178
    %s196 = sphi 0, %s196
    %s198 = sphi 0, %s196
    %s199 = sphi 0, %s198
    %s213 = sphi 0, %s199
    %s219 = sphi 0, %s221
    %s222 = sphi 0, %s219
    %s223 = sphi 0, %s222
    %s239 = sphi 0, %s223
  $region4: #{mask_fuse_forward.18} parent=0 // loop_header_branch
    %18 = sbr.rel (%p16) target = $region8
  $region5: #{mask_fuse_forward.18} parent=0 // loop_body
    %s20 = ssub.s32 %s15, 1
    %s21 = ssub.s32 %s15, 2
    %s22 = sadd.s32 %s15, 1
    %s23 = ssub.s32 %s15, %s22
    %p24 = scmp.eq.s32.totalorder %s23, 0
    %s26 = sadd.s32 %s25, 1
    %s27 = scalar_select %p24, %s25, %s26
    %p30 = pneg %p24
    %p31 = scmp.eq.s32.totalorder %s15, 1
    %p32 = por %p30, %p31
    %p33 = scmp.ne.s32.totalorder %s25, %s28
    %p34 = scmp.eq.s32.totalorder %s15, 0
    %p35 = por %p33, %p34
    %p36 = scmp.ne.s32.totalorder %s25, %s28
    %p37 = scmp.eq.s32.totalorder %s20, 1
    %p38 = por %p36, %p37
    %p39 = scmp.ne.s32.totalorder %s28, %s29
    %p40 = scmp.eq.s32.totalorder %s20, 0
    %p41 = por %p39, %p40
    %p42 = scmp.ne.s32.totalorder %s28, %s29
    %p43 = scmp.eq.s32.totalorder %s21, 1
    %p44 = por %p42, %p43
    %p46 = scmp.ne.s32.totalorder %s29, %s45
    %p47 = scmp.eq.s32.totalorder %s21, 0
    %p48 = por %p46, %p47
    %s50 = sadd.s32 %s49, 1
    %p53 = scmp.eq.s32.totalorder %s15, 1
    %p54 = scmp.ne.s32.totalorder %s49, %s51
    %p55 = scmp.eq.s32.totalorder %s15, 0
    %p56 = por %p54, %p55
    %p57 = scmp.ne.s32.totalorder %s49, %s51
    %p58 = scmp.eq.s32.totalorder %s20, 1
    %p59 = por %p57, %p58
    %p60 = scmp.ne.s32.totalorder %s51, %s52
    %p61 = scmp.eq.s32.totalorder %s20, 0
    %p62 = por %p60, %p61
    %p63 = scmp.ne.s32.totalorder %s51, %s52
    %p64 = scmp.eq.s32.totalorder %s21, 1
    %p65 = por %p63, %p64
    %p67 = scmp.ne.s32.totalorder %s52, %s66
    %p68 = scmp.eq.s32.totalorder %s21, 0
    %p69 = por %p67, %p68
    %s71 = sadd.s32 %s70, 1
    %p74 = scmp.eq.s32.totalorder %s15, 1
    %p75 = scmp.ne.s32.totalorder %s70, %s72
    %p76 = scmp.eq.s32.totalorder %s15, 0
    %p77 = por %p75, %p76
    %p78 = scmp.ne.s32.totalorder %s70, %s72
    %p79 = scmp.eq.s32.totalorder %s20, 1
    %p80 = por %p78, %p79
    %p81 = scmp.ne.s32.totalorder %s72, %s73
    %p82 = scmp.eq.s32.totalorder %s20, 0
    %p83 = por %p81, %p82
    %p84 = scmp.ne.s32.totalorder %s72, %s73
    %p85 = scmp.eq.s32.totalorder %s21, 1
    %p86 = por %p84, %p85
    %p88 = scmp.ne.s32.totalorder %s73, %s87
    %p89 = scmp.eq.s32.totalorder %s21, 0
    %p90 = por %p88, %p89
    %s92 = sadd.s32 %s91, 1
    %p95 = scmp.eq.s32.totalorder %s15, 1
    %p96 = scmp.ne.s32.totalorder %s91, %s93
    %p97 = scmp.eq.s32.totalorder %s15, 0
    %p98 = por %p96, %p97
    %p99 = scmp.ne.s32.totalorder %s91, %s93
    %p100 = scmp.eq.s32.totalorder %s20, 1
    %p101 = por %p99, %p100
    %p102 = scmp.ne.s32.totalorder %s93, %s94
    %p103 = scmp.eq.s32.totalorder %s20, 0
    %p104 = por %p102, %p103
    %p105 = scmp.ne.s32.totalorder %s93, %s94
    %p106 = scmp.eq.s32.totalorder %s21, 1
    %p107 = por %p105, %p106
    %p109 = scmp.ne.s32.totalorder %s94, %s108
    %p110 = scmp.eq.s32.totalorder %s21, 0
    %p111 = por %p109, %p110
    %s113 = sadd.s32 %s112, 1
    %p116 = scmp.eq.s32.totalorder %s15, 1
    %p117 = scmp.ne.s32.totalorder %s112, %s114
    %p118 = scmp.eq.s32.totalorder %s15, 0
    %p119 = por %p117, %p118
    %p120 = scmp.ne.s32.totalorder %s112, %s114
    %p121 = scmp.eq.s32.totalorder %s20, 1
    %p122 = por %p120, %p121
    %p123 = scmp.ne.s32.totalorder %s114, %s115
    %p124 = scmp.eq.s32.totalorder %s20, 0
    %p125 = por %p123, %p124
    %p126 = scmp.ne.s32.totalorder %s114, %s115
    %p127 = scmp.eq.s32.totalorder %s21, 1
    %p128 = por %p126, %p127
    %p130 = scmp.ne.s32.totalorder %s115, %s129
    %p131 = scmp.eq.s32.totalorder %s21, 0
    %p132 = por %p130, %p131
    %s134 = sadd.s32 %s133, 1
    %p137 = scmp.eq.s32.totalorder %s15, 1
    %p138 = scmp.ne.s32.totalorder %s133, %s135
    %p139 = scmp.eq.s32.totalorder %s15, 0
    %p140 = por %p138, %p139
    %p141 = scmp.ne.s32.totalorder %s133, %s135
    %p142 = scmp.eq.s32.totalorder %s20, 1
    %p143 = por %p141, %p142
    %p144 = scmp.ne.s32.totalorder %s135, %s136
    %p145 = scmp.eq.s32.totalorder %s20, 0
    %p146 = por %p144, %p145
    %p147 = scmp.ne.s32.totalorder %s135, %s136
    %p148 = scmp.eq.s32.totalorder %s21, 1
    %p149 = por %p147, %p148
    %p151 = scmp.ne.s32.totalorder %s136, %s150
    %p152 = scmp.eq.s32.totalorder %s21, 0
    %p153 = por %p151, %p152
    %s155 = sadd.s32 %s154, 1
    %p158 = scmp.eq.s32.totalorder %s15, 1
    %p159 = scmp.ne.s32.totalorder %s154, %s156
    %p160 = scmp.eq.s32.totalorder %s15, 0
    %p161 = por %p159, %p160
    %p162 = scmp.ne.s32.totalorder %s154, %s156
    %p163 = scmp.eq.s32.totalorder %s20, 1
    %p164 = por %p162, %p163
    %p165 = scmp.ne.s32.totalorder %s156, %s157
    %p166 = scmp.eq.s32.totalorder %s20, 0
    %p167 = por %p165, %p166
    %p168 = scmp.ne.s32.totalorder %s156, %s157
    %p169 = scmp.eq.s32.totalorder %s21, 1
    %p170 = por %p168, %p169
    %p172 = scmp.ne.s32.totalorder %s157, %s171
    %p173 = scmp.eq.s32.totalorder %s21, 0
    %p174 = por %p172, %p173
    %s176 = sadd.s32 %s175, 1
    %p179 = scmp.eq.s32.totalorder %s15, 1
    %p180 = scmp.ne.s32.totalorder %s175, %s177
    %p181 = scmp.eq.s32.totalorder %s15, 0
    %p182 = por %p180, %p181
    %p183 = scmp.ne.s32.totalorder %s175, %s177
    %p184 = scmp.eq.s32.totalorder %s20, 1
    %p185 = por %p183, %p184
    %p186 = scmp.ne.s32.totalorder %s177, %s178
    %p187 = scmp.eq.s32.totalorder %s20, 0
    %p188 = por %p186, %p187
    %p189 = scmp.ne.s32.totalorder %s177, %s178
    %p190 = scmp.eq.s32.totalorder %s21, 1
    %p191 = por %p189, %p190
    %p193 = scmp.ne.s32.totalorder %s178, %s192
    %p194 = scmp.eq.s32.totalorder %s21, 0
    %p195 = por %p193, %p194
    %s197 = sadd.s32 %s196, 1
    %p200 = scmp.eq.s32.totalorder %s15, 1
    %p201 = scmp.ne.s32.totalorder %s196, %s198
    %p202 = scmp.eq.s32.totalorder %s15, 0
    %p203 = por %p201, %p202
    %p204 = scmp.ne.s32.totalorder %s196, %s198
    %p205 = scmp.eq.s32.totalorder %s20, 1
    %p206 = por %p204, %p205
    %p207 = scmp.ne.s32.totalorder %s198, %s199
    %p208 = scmp.eq.s32.totalorder %s20, 0
    %p209 = por %p207, %p208
    %p210 = scmp.ne.s32.totalorder %s198, %s199
    %p211 = scmp.eq.s32.totalorder %s21, 1
    %p212 = por %p210, %p211
    %p214 = scmp.ne.s32.totalorder %s199, %s213
    %p215 = scmp.eq.s32.totalorder %s21, 0
    %p216 = por %p214, %p215
    %s217 = ssub.s32 %s15, %s22
    %p218 = scmp.eq.s32.totalorder %s217, 0
    %s220 = sadd.s32 %s219, 1
    %s221 = scalar_select %p218, %s219, %s220
    %p224 = pneg %p218
    %p225 = scmp.eq.s32.totalorder %s15, 1
    %p226 = por %p224, %p225
    %p227 = scmp.ne.s32.totalorder %s219, %s222
    %p228 = scmp.eq.s32.totalorder %s15, 0
    %p229 = por %p227, %p228
    %p230 = scmp.ne.s32.totalorder %s219, %s222
    %p231 = scmp.eq.s32.totalorder %s20, 1
    %p232 = por %p230, %p231
    %p233 = scmp.ne.s32.totalorder %s222, %s223
    %p234 = scmp.eq.s32.totalorder %s20, 0
    %p235 = por %p233, %p234
    %p236 = scmp.ne.s32.totalorder %s222, %s223
    %p237 = scmp.eq.s32.totalorder %s21, 1
    %p238 = por %p236, %p237
    %p240 = scmp.ne.s32.totalorder %s223, %s239
    %p241 = scmp.eq.s32.totalorder %s21, 0
    %p242 = por %p240, %p241
    %p243 = scmp.le.s32.totalorder 1, %s15
    %p244 = scmp.lt.s32.totalorder %s15, 3
    %p245 = pnand %p243, %p244
    %p246 = pneg %p245
    // Predicated region
    $region9: #{mask_fuse_forward.18} parent=5 // pred_check
      _
    $region10: #{mask_fuse_forward.18} parent=5 // pred_check_branch
      %248 = sbr.rel (%p245) target = $region12
    $region11: #{mask_fuse_forward.18} parent=5 // pred_region
      %s249 = ssub.s32 %s15, 1
      // Predicated region
      $region13: #{mask_fuse_forward.18} parent=11 // pred_check
        %p250 = pneg %p62
      $region14: #{mask_fuse_forward.18} parent=11 // pred_check_branch
        %252 = sbr.rel (%p250) target = $region16
      $region15: #{mask_fuse_forward.18} parent=11 // pred_region
        _
      $region16: #{mask_fuse_forward.18} parent=11 // pred_fallthru
        _
      // Predicated region
      $region17: #{mask_fuse_forward.18} parent=11 // pred_check
        %p253 = pneg %p83
      $region18: #{mask_fuse_forward.18} parent=11 // pred_check_branch
        %255 = sbr.rel (%p253) target = $region20
      $region19: #{mask_fuse_forward.18} parent=11 // pred_region
        _
      $region20: #{mask_fuse_forward.18} parent=11 // pred_fallthru
        _
      // Predicated region
      $region21: #{mask_fuse_forward.18} parent=11 // pred_check
        %p256 = pneg %p104
      $region22: #{mask_fuse_forward.18} parent=11 // pred_check_branch
        %258 = sbr.rel (%p256) target = $region24
      $region23: #{mask_fuse_forward.18} parent=11 // pred_region
        _
      $region24: #{mask_fuse_forward.18} parent=11 // pred_fallthru
        _
      // Predicated region
      $region25: #{mask_fuse_forward.18} parent=11 // pred_check
        %p259 = pneg %p125
      $region26: #{mask_fuse_forward.18} parent=11 // pred_check_branch
        %261 = sbr.rel (%p259) target = $region28
      $region27: #{mask_fuse_forward.18} parent=11 // pred_region
        _
      $region28: #{mask_fuse_forward.18} parent=11 // pred_fallthru
        _
      // Predicated region
      $region29: #{mask_fuse_forward.18} parent=11 // pred_check
        %p262 = pneg %p146
      $region30: #{mask_fuse_forward.18} parent=11 // pred_check_branch
        %264 = sbr.rel (%p262) target = $region32
      $region31: #{mask_fuse_forward.18} parent=11 // pred_region
        _
      $region32: #{mask_fuse_forward.18} parent=11 // pred_fallthru
        _
      // Predicated region
      $region33: #{mask_fuse_forward.18} parent=11 // pred_check
        %p265 = pneg %p167
      $region34: #{mask_fuse_forward.18} parent=11 // pred_check_branch
        %267 = sbr.rel (%p265) target = $region36
      $region35: #{mask_fuse_forward.18} parent=11 // pred_region
        _
      $region36: #{mask_fuse_forward.18} parent=11 // pred_fallthru
        _
      // Predicated region
      $region37: #{mask_fuse_forward.18} parent=11 // pred_check
        %p268 = pneg %p188
      $region38: #{mask_fuse_forward.18} parent=11 // pred_check_branch
        %270 = sbr.rel (%p268) target = $region40
      $region39: #{mask_fuse_forward.18} parent=11 // pred_region
        _
      $region40: #{mask_fuse_forward.18} parent=11 // pred_fallthru
        _
      // Predicated region
      $region41: #{mask_fuse_forward.18} parent=11 // pred_check
        %p271 = pneg %p209
      $region42: #{mask_fuse_forward.18} parent=11 // pred_check_branch
        %273 = sbr.rel (%p271) target = $region44
      $region43: #{mask_fuse_forward.18} parent=11 // pred_region
        _
      $region44: #{mask_fuse_forward.18} parent=11 // pred_fallthru
        _
    $region12: #{mask_fuse_forward.18} parent=5 // pred_fallthru
      _
    %p274 = scmp.lt.s32.totalorder %s15, 2
    // Predicated region
    $region45: #{mask_fuse_forward.18} parent=5 // pred_check
      %p275 = pneg %p274
    $region46: #{mask_fuse_forward.18} parent=5 // pred_check_branch
      %277 = sbr.rel (%p275) target = $region48
    $region47: #{mask_fuse_forward.18} parent=5 // pred_region
      // Predicated region
      $region49: #{mask_fuse_forward.18} parent=47 // pred_check
        %p278 = pneg %p35
      $region50: #{mask_fuse_forward.18} parent=47 // pred_check_branch
        %280 = sbr.rel (%p278) target = $region52
      $region51: #{mask_fuse_forward.18} parent=47 // pred_region
        %s281 = smul.u32 8, %s15
        %p282 = scmp.lt.s32.totalorder %s281, 15
        %s283 = scalar_select %p282, %s281, 15
        %s284 = smul.addr %s283, 8
        %s285 = scalar_lea.vmem %s0, %s284
        %s286 = smul.u32 8, %s15
      $region52: #{mask_fuse_forward.18} parent=47 // pred_fallthru
        _
    $region48: #{mask_fuse_forward.18} parent=5 // pred_fallthru
      _
    %p287 = scmp.le.s32.totalorder 1, %s15
    %p288 = scmp.lt.s32.totalorder %s15, 3
    %p289 = pnand %p287, %p288
    %p290 = pneg %p289
    // Predicated region
    $region53: #{mask_fuse_forward.18} parent=5 // pred_check
      _
    $region54: #{mask_fuse_forward.18} parent=5 // pred_check_branch
      %292 = sbr.rel (%p289) target = $region56
    $region55: #{mask_fuse_forward.18} parent=5 // pred_region
      %s293 = ssub.s32 %s15, 1
      %s294 = smul.u32 8, %s20
      %p295 = scmp.lt.s32.totalorder %s294, 15
      %s296 = scalar_select %p295, %s294, 15
      %s297 = smul.addr %s296, 8
      %s298 = scalar_lea.vmem %s0, %s297
      %p299 = pneg %p41
      %p300 = pneg %p38
      %p301 = pneg %p62
      %p302 = pneg %p59
      %p303 = pneg %p83
      %p304 = pneg %p80
      %p305 = pneg %p104
      %p306 = pneg %p101
      %p307 = pneg %p125
      %p308 = pneg %p122
      %p309 = pneg %p146
      %p310 = pneg %p143
      %p311 = pneg %p167
      %p312 = pneg %p164
      %p313 = pneg %p188
      %p314 = pneg %p185
      %p315 = pneg %p209
      %p316 = pneg %p206
      %p317 = pneg %p235
      %p318 = pneg %p232
      %s319 = smul.u32 8, %s20
      %p320 = scmp.lt.s32.totalorder %s319, 15
      %s321 = scalar_select %p320, %s319, 15
      %s322 = smul.addr %s321, 8
      %s323 = scalar_lea.vmem %s9, %s322
      %s324 = smul.u32 8, %s20
      %p325 = scmp.lt.s32.totalorder %s324, 15
      %s326 = scalar_select %p325, %s324, 15
      %s327 = smul.addr %s326, 8
      %s328 = scalar_lea.vmem %s0, %s327
      %s329 = smul.u32 8, %s20
      %s330 = smul.u32 8, %s20
      %p331 = scmp.lt.s32.totalorder %s330, 15
      %s332 = scalar_select %p331, %s330, 15
      %s333 = smul.addr %s332, 8
      %s334 = scalar_lea.vmem %s9, %s333
      %s335 = smul.u32 8, %s20
      %v336 = vld [vmem:[%s328] sm:$0xff]
      %v337 = vld [vmem:[%s328 + $0x8] sm:$0xff]
      %v338 = vld [vmem:[%s328 + $0x10] sm:$0xff]
      %v339 = vld [vmem:[%s328 + $0x18] sm:$0xff]
      %v340 = vld [vmem:[%s328 + $0x20] sm:$0xff]
      %v341 = vld [vmem:[%s328 + $0x28] sm:$0xff]
      %v342 = vld [vmem:[%s328 + $0x30] sm:$0xff]
      %v343 = vld [vmem:[%s328 + $0x38] sm:$0xff]
      %v344 = vld [vmem:[%s1] sm:$0x1]
      %v345 = vld [vmem:[%s2] sm:$0x1]
      %vm346 = vcmask 195584
      %v347 = vsel %vm346, %v336, 0.0
      %348 = vadd.xlane.f32.xlu0 %v347
      %v349 = vpop.xlane.xlu0 %348
      %v350 = vsel %vm346, %v337, 0.0
      %351 = vadd.xlane.f32.xlu0 %v350
      %v352 = vpop.xlane.xlu0 %351
      %v353 = vsel %vm346, %v338, 0.0
      %354 = vadd.xlane.f32.xlu0 %v353
      %v355 = vpop.xlane.xlu0 %354
      %v356 = vsel %vm346, %v339, 0.0
      %357 = vadd.xlane.f32.xlu0 %v356
      %v358 = vpop.xlane.xlu0 %357
      %v359 = vsel %vm346, %v340, 0.0
      %360 = vadd.xlane.f32.xlu0 %v359
      %v361 = vpop.xlane.xlu0 %360
      %v362 = vsel %vm346, %v341, 0.0
      %363 = vadd.xlane.f32.xlu0 %v362
      %v364 = vpop.xlane.xlu0 %363
      %v365 = vsel %vm346, %v342, 0.0
      %366 = vadd.xlane.f32.xlu0 %v365
      %v367 = vpop.xlane.xlu0 %366
      %v368 = vsel %vm346, %v343, 0.0
      %369 = vadd.xlane.f32.xlu0 %v368
      %v370 = vpop.xlane.xlu0 %369
      %v371 = vrcp.pop 24.0
      %v372 = vmul.f32 %v349, %v371
      %v373 = vmul.f32 %v352, %v371
      %v374 = vmul.f32 %v355, %v371
      %v375 = vmul.f32 %v358, %v371
      %v376 = vmul.f32 %v361, %v371
      %v377 = vmul.f32 %v364, %v371
      %v378 = vmul.f32 %v367, %v371
      %v379 = vmul.f32 %v370, %v371
      %v380 = vsub.f32 %v336, %v372
      %v381 = vsub.f32 %v337, %v373
      %v382 = vsub.f32 %v338, %v374
      %v383 = vsub.f32 %v339, %v375
      %v384 = vsub.f32 %v340, %v376
      %v385 = vsub.f32 %v341, %v377
      %v386 = vsub.f32 %v342, %v378
      %v387 = vsub.f32 %v343, %v379
      %v388 = vmul.f32 %v380, %v380
      %v389 = vmul.f32 %v381, %v381
      %v390 = vmul.f32 %v382, %v382
      %v391 = vmul.f32 %v383, %v383
      %v392 = vmul.f32 %v384, %v384
      %v393 = vmul.f32 %v385, %v385
      %v394 = vmul.f32 %v386, %v386
      %v395 = vmul.f32 %v387, %v387
      %v396 = vsel %vm346, %v388, 0.0
      %397 = vadd.xlane.f32.xlu0 %v396
      %v398 = vpop.xlane.xlu0 %397
      %v399 = vsel %vm346, %v389, 0.0
      %400 = vadd.xlane.f32.xlu0 %v399
      %v401 = vpop.xlane.xlu0 %400
      %v402 = vsel %vm346, %v390, 0.0
      %403 = vadd.xlane.f32.xlu0 %v402
      %v404 = vpop.xlane.xlu0 %403
      %v405 = vsel %vm346, %v391, 0.0
      %406 = vadd.xlane.f32.xlu0 %v405
      %v407 = vpop.xlane.xlu0 %406
      %v408 = vsel %vm346, %v392, 0.0
      %409 = vadd.xlane.f32.xlu0 %v408
      %v410 = vpop.xlane.xlu0 %409
      %v411 = vsel %vm346, %v393, 0.0
      %412 = vadd.xlane.f32.xlu0 %v411
      %v413 = vpop.xlane.xlu0 %412
      %v414 = vsel %vm346, %v394, 0.0
      %415 = vadd.xlane.f32.xlu0 %v414
      %v416 = vpop.xlane.xlu0 %415
      %v417 = vsel %vm346, %v395, 0.0
      %418 = vadd.xlane.f32.xlu0 %v417
      %v419 = vpop.xlane.xlu0 %418
      %v420 = vmul.f32 %v398, %v371
      %v421 = vmul.f32 %v401, %v371
      %v422 = vmul.f32 %v404, %v371
      %v423 = vmul.f32 %v407, %v371
      %v424 = vmul.f32 %v410, %v371
      %v425 = vmul.f32 %v413, %v371
      %v426 = vmul.f32 %v416, %v371
      %v427 = vmul.f32 %v419, %v371
      %v428 = vadd.f32 %v420, 1e-05
      %v429 = vadd.f32 %v421, 1e-05
      %v430 = vadd.f32 %v422, 1e-05
      %v431 = vadd.f32 %v423, 1e-05
      %v432 = vadd.f32 %v424, 1e-05
      %v433 = vadd.f32 %v425, 1e-05
      %v434 = vadd.f32 %v426, 1e-05
      %v435 = vadd.f32 %v427, 1e-05
      %v436 = vrsqrt.pop %v428
      %v437 = vrsqrt.pop %v429
      %v438 = vrsqrt.pop %v430
      %v439 = vrsqrt.pop %v431
      %v440 = vrsqrt.pop %v432
      %v441 = vrsqrt.pop %v433
      %v442 = vrsqrt.pop %v434
      %v443 = vrsqrt.pop %v435
      %v444 = vmul.f32 %v380, %v436
      %v445 = vmul.f32 %v381, %v437
      %v446 = vmul.f32 %v382, %v438
      %v447 = vmul.f32 %v383, %v439
      %v448 = vmul.f32 %v384, %v440
      %v449 = vmul.f32 %v385, %v441
      %v450 = vmul.f32 %v386, %v442
      %v451 = vmul.f32 %v387, %v443
      %v453 = vlaneseq
      %v454 = vshrl.u32 %v453, 7
      %v455 = vsub.s32 0, %v454
      %v456 = vrot.slane %v344, %v455
      %v458 = vmul.f32 %v444, %v456
      %v459 = vmul.f32 %v445, %v456
      %v460 = vmul.f32 %v446, %v456
      %v461 = vmul.f32 %v447, %v456
      %v462 = vmul.f32 %v448, %v456
      %v463 = vmul.f32 %v449, %v456
      %v464 = vmul.f32 %v450, %v456
      %v465 = vmul.f32 %v451, %v456
      %v467 = vlaneseq
      %v468 = vshrl.u32 %v467, 7
      %v469 = vsub.s32 0, %v468
      %v470 = vrot.slane %v345, %v469
      %v472 = vadd.f32 %v458, %v470
      %v473 = vadd.f32 %v459, %v470
      %v474 = vadd.f32 %v460, %v470
      %v475 = vadd.f32 %v461, %v470
      %v476 = vadd.f32 %v462, %v470
      %v477 = vadd.f32 %v463, %v470
      %v478 = vadd.f32 %v464, %v470
      %v479 = vadd.f32 %v465, %v470
      %v480 = vld [vmem:[%s3] sm:$0xff]
      %v481 = vld [vmem:[%s3 + $0x8] sm:$0xff]
      %v482 = vld [vmem:[%s3 + $0x10] sm:$0xff]
      %v483 = vld [vmem:[%s4] sm:$0x1]
      %v485 = vlaneseq
      %v486 = vshrl.u32 %v485, 7
      %v487 = vsub.s32 0, %v486
      %v488 = vrot.slane %v483, %v487
      %v491 = vsel %vm346, %v472, 0
      %v494 = vsel %vm346, %v473, 0
      %v497 = vsel %vm346, %v474, 0
      %v500 = vsel %vm346, %v475, 0
      %v503 = vsel %vm346, %v476, 0
      %v506 = vsel %vm346, %v477, 0
      %v509 = vsel %vm346, %v478, 0
      %v512 = vsel %vm346, %v479, 0
      %514 = vmatprep.subr.mxu0 0.0
      %515 = vmatpush1.msra.mxu0 %v480
      %516 = vmatprep.subr.mxu0 0.0
      %517 = vmatpush1.msra.mxu0 %v481
      %518 = vmatprep.subr.mxu0 0.0
      %519 = vmatpush1.msra.mxu0 %v482
      %520 = vmatprep.subr.mxu0 0.0
      %521 = vmatpush1.msra.mxu0 0.0
      %522 = vmatprep.subr.mxu0 0.0
      %523 = vmatpush1.msra.mxu0 0.0
      %524 = vmatprep.subr.mxu0 0.0
      %525 = vmatpush1.msra.mxu0 0.0
      %526 = vmatprep.subr.mxu0 0.0
      %527 = vmatpush1.msra.mxu0 0.0
      %528 = vmatprep.subr.mxu0 0.0
      %529 = vmatpush1.msra.mxu0 0.0
      %530 = vmatprep.subr.mxu0 0.0
      %531 = vmatpush1.msra.mxu0 0.0
      %532 = vmatprep.subr.mxu0 0.0
      %533 = vmatpush1.msra.mxu0 0.0
      %534 = vmatprep.subr.mxu0 0.0
      %535 = vmatpush1.msra.mxu0 0.0
      %536 = vmatprep.subr.mxu0 0.0
      %537 = vmatpush1.msra.mxu0 0.0
      %538 = vmatprep.subr.mxu0 0.0
      %539 = vmatpush1.msra.mxu0 0.0
      %540 = vmatprep.subr.mxu0 0.0
      %541 = vmatpush1.msra.mxu0 0.0
      %542 = vmatprep.subr.mxu0 0.0
      %543 = vmatpush1.msra.mxu0 0.0
      %544 = vmatprep.subr.mxu0 0.0
      %545 = vmatpush1.msra.mxu0 0.0
      %546 = vmatprep.subr.mxu0 0.0
      %547 = vmatpush1.msra.mxu0 0.0
      %548 = vmatprep.subr.mxu0 0.0
      %549 = vmatpush1.msra.mxu0 0.0
      %550 = vmatprep.subr.mxu0 0.0
      %551 = vmatpush1.msra.mxu0 0.0
      %552 = vmatprep.subr.mxu0 0.0
      %553 = vmatpush1.msra.mxu0 0.0
      %554 = vmatprep.subr.mxu0 0.0
      %555 = vmatpush1.msra.mxu0 0.0
      %556 = vmatprep.subr.mxu0 0.0
      %557 = vmatpush1.msra.mxu0 0.0
      %558 = vmatprep.subr.mxu0 0.0
      %559 = vmatpush1.msra.mxu0 0.0
      %560 = vmatprep.subr.mxu0 0.0
      %561 = vmatpush1.msra.mxu0 0.0
      %562 = vmatprep.subr.mxu0 0.0
      %563 = vmatpush1.msra.mxu0 0.0
      %564 = vmatprep.subr.mxu0 0.0
      %565 = vmatpush1.msra.mxu0 0.0
      %566 = vmatprep.subr.mxu0 0.0
      %567 = vmatpush1.msra.mxu0 0.0
      %568 = vmatprep.subr.mxu0 0.0
      %569 = vmatpush1.msra.mxu0 0.0
      %570 = vmatprep.subr.mxu0 0.0
      %571 = vmatpush1.msra.mxu0 0.0
      %572 = vmatprep.subr.mxu0 0.0
      %573 = vmatpush1.msra.mxu0 0.0
      %574 = vmatprep.subr.mxu0 0.0
      %575 = vmatpush1.msra.mxu0 0.0
      %576 = vmatprep.subr.mxu0 0.0
      %577 = vmatpush1.msra.mxu0 0.0
      %578 = vmatprep.mubr.f32.mxu0 0.0
      %579 = vmatmul.mubr.f32.gmra.mrb[0].mxu0 %v491
      %v580 = vpop.f32.mrb[0].mxu0
      %v581 = vadd.f32 %v488, %v580
      %v582 = vpop.f32.mrb[0].mxu0
      %583 = vmatprep.mubr.f32.mxu0 0.0
      %584 = vmatmul.mubr.f32.gmra.mrb[0].mxu0 %v494
      %v585 = vpop.f32.mrb[0].mxu0
      %v586 = vadd.f32 %v488, %v585
      %v587 = vpop.f32.mrb[0].mxu0
      %588 = vmatprep.mubr.f32.mxu0 0.0
      %589 = vmatmul.mubr.f32.gmra.mrb[0].mxu0 %v497
      %v590 = vpop.f32.mrb[0].mxu0
      %v591 = vadd.f32 %v488, %v590
      %v592 = vpop.f32.mrb[0].mxu0
      %593 = vmatprep.mubr.f32.mxu0 0.0
      %594 = vmatmul.mubr.f32.gmra.mrb[0].mxu0 %v500
      %v595 = vpop.f32.mrb[0].mxu0
      %v596 = vadd.f32 %v488, %v595
      %v597 = vpop.f32.mrb[0].mxu0
      %598 = vmatprep.mubr.f32.mxu0 0.0
      %599 = vmatmul.mubr.f32.gmra.mrb[0].mxu0 %v503
      %v600 = vpop.f32.mrb[0].mxu0
      %v601 = vadd.f32 %v488, %v600
      %v602 = vpop.f32.mrb[0].mxu0
      %603 = vmatprep.mubr.f32.mxu0 0.0
      %604 = vmatmul.mubr.f32.gmra.mrb[0].mxu0 %v506
      %v605 = vpop.f32.mrb[0].mxu0
      %v606 = vadd.f32 %v488, %v605
      %v607 = vpop.f32.mrb[0].mxu0
      %608 = vmatprep.mubr.f32.mxu0 0.0
      %609 = vmatmul.mubr.f32.gmra.mrb[0].mxu0 %v509
      %v610 = vpop.f32.mrb[0].mxu0
      %v611 = vadd.f32 %v488, %v610
      %v612 = vpop.f32.mrb[0].mxu0
      %613 = vmatprep.mubr.f32.mxu0 0.0
      %614 = vmatmul.mubr.f32.gmra.mrb[0].mxu0 %v512
      %v615 = vpop.f32.mrb[0].mxu0
      %v616 = vadd.f32 %v488, %v615
      %v617 = vpop.f32.mrb[0].mxu0
      %618 = vdwg.mxu0
      %v619 = vmul.f32 %v581, 0.5
      %v620 = vmul.f32 %v586, 0.5
      %v621 = vmul.f32 %v591, 0.5
      %v622 = vmul.f32 %v596, 0.5
      %v623 = vmul.f32 %v601, 0.5
      %v624 = vmul.f32 %v606, 0.5
      %v625 = vmul.f32 %v611, 0.5
      %v626 = vmul.f32 %v616, 0.5
      %v627 = vmul.f32 %v581, 0.70710677
      %v628 = vmul.f32 %v586, 0.70710677
      %v629 = vmul.f32 %v591, 0.70710677
      %v630 = vmul.f32 %v596, 0.70710677
      %v631 = vmul.f32 %v601, 0.70710677
      %v632 = vmul.f32 %v606, 0.70710677
      %v633 = vmul.f32 %v611, 0.70710677
      %v634 = vmul.f32 %v616, 0.70710677
      %v635 = vand.u32 2147483647, %v627
      %v636 = vand.u32 2147483647, %v628
      %v637 = vand.u32 2147483647, %v629
      %v638 = vand.u32 2147483647, %v630
      %v639 = vand.u32 2147483647, %v631
      %v640 = vand.u32 2147483647, %v632
      %v641 = vand.u32 2147483647, %v633
      %v642 = vand.u32 2147483647, %v634
      %v643 = vmul.f32 %v635, 0.3275911
      %v644 = vmul.f32 %v636, 0.3275911
      %v645 = vmul.f32 %v637, 0.3275911
      %v646 = vmul.f32 %v638, 0.3275911
      %v647 = vmul.f32 %v639, 0.3275911
      %v648 = vmul.f32 %v640, 0.3275911
      %v649 = vmul.f32 %v641, 0.3275911
      %v650 = vmul.f32 %v642, 0.3275911
      %v651 = vadd.f32 %v643, 1.0
      %v652 = vadd.f32 %v644, 1.0
      %v653 = vadd.f32 %v645, 1.0
      %v654 = vadd.f32 %v646, 1.0
      %v655 = vadd.f32 %v647, 1.0
      %v656 = vadd.f32 %v648, 1.0
      %v657 = vadd.f32 %v649, 1.0
      %v658 = vadd.f32 %v650, 1.0
      %v659 = vrcp.pop %v651
      %v660 = vmul.f32 1.0, %v659
      %v661 = vrcp.pop %v652
      %v662 = vmul.f32 1.0, %v661
      %v663 = vrcp.pop %v653
      %v664 = vmul.f32 1.0, %v663
      %v665 = vrcp.pop %v654
      %v666 = vmul.f32 1.0, %v665
      %v667 = vrcp.pop %v655
      %v668 = vmul.f32 1.0, %v667
      %v669 = vrcp.pop %v656
      %v670 = vmul.f32 1.0, %v669
      %v671 = vrcp.pop %v657
      %v672 = vmul.f32 1.0, %v671
      %v673 = vrcp.pop %v658
      %v674 = vmul.f32 1.0, %v673
      %v675 = vmul.f32 %v660, 1.0614054
      %v676 = vmul.f32 %v662, 1.0614054
      %v677 = vmul.f32 %v664, 1.0614054
      %v678 = vmul.f32 %v666, 1.0614054
      %v679 = vmul.f32 %v668, 1.0614054
      %v680 = vmul.f32 %v670, 1.0614054
      %v681 = vmul.f32 %v672, 1.0614054
      %v682 = vmul.f32 %v674, 1.0614054
      %v683 = vadd.f32 %v675, -1.4531521
      %v684 = vadd.f32 %v676, -1.4531521
      %v685 = vadd.f32 %v677, -1.4531521
      %v686 = vadd.f32 %v678, -1.4531521
      %v687 = vadd.f32 %v679, -1.4531521
      %v688 = vadd.f32 %v680, -1.4531521
      %v689 = vadd.f32 %v681, -1.4531521
      %v690 = vadd.f32 %v682, -1.4531521
      %v691 = vmul.f32 %v660, %v683
      %v692 = vmul.f32 %v662, %v684
      %v693 = vmul.f32 %v664, %v685
      %v694 = vmul.f32 %v666, %v686
      %v695 = vmul.f32 %v668, %v687
      %v696 = vmul.f32 %v670, %v688
      %v697 = vmul.f32 %v672, %v689
      %v698 = vmul.f32 %v674, %v690
      %v699 = vadd.f32 %v691, 1.4214138
      %v700 = vadd.f32 %v692, 1.4214138
      %v701 = vadd.f32 %v693, 1.4214138
      %v702 = vadd.f32 %v694, 1.4214138
      %v703 = vadd.f32 %v695, 1.4214138
      %v704 = vadd.f32 %v696, 1.4214138
      %v705 = vadd.f32 %v697, 1.4214138
      %v706 = vadd.f32 %v698, 1.4214138
      %v707 = vmul.f32 %v660, %v699
      %v708 = vmul.f32 %v662, %v700
      %v709 = vmul.f32 %v664, %v701
      %v710 = vmul.f32 %v666, %v702
      %v711 = vmul.f32 %v668, %v703
      %v712 = vmul.f32 %v670, %v704
      %v713 = vmul.f32 %v672, %v705
      %v714 = vmul.f32 %v674, %v706
      %v715 = vadd.f32 %v707, -0.28449672
      %v716 = vadd.f32 %v708, -0.28449672
      %v717 = vadd.f32 %v709, -0.28449672
      %v718 = vadd.f32 %v710, -0.28449672
      %v719 = vadd.f32 %v711, -0.28449672
      %v720 = vadd.f32 %v712, -0.28449672
      %v721 = vadd.f32 %v713, -0.28449672
      %v722 = vadd.f32 %v714, -0.28449672
      %v723 = vmul.f32 %v660, %v715
      %v724 = vmul.f32 %v662, %v716
      %v725 = vmul.f32 %v664, %v717
      %v726 = vmul.f32 %v666, %v718
      %v727 = vmul.f32 %v668, %v719
      %v728 = vmul.f32 %v670, %v720
      %v729 = vmul.f32 %v672, %v721
      %v730 = vmul.f32 %v674, %v722
      %v731 = vadd.f32 %v723, 0.2548296
      %v732 = vadd.f32 %v724, 0.2548296
      %v733 = vadd.f32 %v725, 0.2548296
      %v734 = vadd.f32 %v726, 0.2548296
      %v735 = vadd.f32 %v727, 0.2548296
      %v736 = vadd.f32 %v728, 0.2548296
      %v737 = vadd.f32 %v729, 0.2548296
      %v738 = vadd.f32 %v730, 0.2548296
      %v739 = vmul.f32 %v660, %v731
      %v740 = vmul.f32 %v662, %v732
      %v741 = vmul.f32 %v664, %v733
      %v742 = vmul.f32 %v666, %v734
      %v743 = vmul.f32 %v668, %v735
      %v744 = vmul.f32 %v670, %v736
      %v745 = vmul.f32 %v672, %v737
      %v746 = vmul.f32 %v674, %v738
      %v747 = vsub.f32 0.0, %v627
      %v748 = vsub.f32 0.0, %v628
      %v749 = vsub.f32 0.0, %v629
      %v750 = vsub.f32 0.0, %v630
      %v751 = vsub.f32 0.0, %v631
      %v752 = vsub.f32 0.0, %v632
      %v753 = vsub.f32 0.0, %v633
      %v754 = vsub.f32 0.0, %v634
      %v755 = vmul.f32 %v747, %v627
      %v756 = vmul.f32 %v748, %v628
      %v757 = vmul.f32 %v749, %v629
      %v758 = vmul.f32 %v750, %v630
      %v759 = vmul.f32 %v751, %v631
      %v760 = vmul.f32 %v752, %v632
      %v761 = vmul.f32 %v753, %v633
      %v762 = vmul.f32 %v754, %v634
      %v763 = vmul.f32 %v755, 1.442695
      %v764 = vpow.pop %v763
      %v765 = vmul.f32 %v756, 1.442695
      %v766 = vpow.pop %v765
      %v767 = vmul.f32 %v757, 1.442695
      %v768 = vpow.pop %v767
      %v769 = vmul.f32 %v758, 1.442695
      %v770 = vpow.pop %v769
      %v771 = vmul.f32 %v759, 1.442695
      %v772 = vpow.pop %v771
      %v773 = vmul.f32 %v760, 1.442695
      %v774 = vpow.pop %v773
      %v775 = vmul.f32 %v761, 1.442695
      %v776 = vpow.pop %v775
      %v777 = vmul.f32 %v762, 1.442695
      %v778 = vpow.pop %v777
      %v779 = vmul.f32 %v739, %v764
      %v780 = vmul.f32 %v740, %v766
      %v781 = vmul.f32 %v741, %v768
      %v782 = vmul.f32 %v742, %v770
      %v783 = vmul.f32 %v743, %v772
      %v784 = vmul.f32 %v744, %v774
      %v785 = vmul.f32 %v745, %v776
      %v786 = vmul.f32 %v746, %v778
      %v787 = vsub.f32 1.0, %v779
      %v788 = vsub.f32 1.0, %v780
      %v789 = vsub.f32 1.0, %v781
      %v790 = vsub.f32 1.0, %v782
      %v791 = vsub.f32 1.0, %v783
      %v792 = vsub.f32 1.0, %v784
      %v793 = vsub.f32 1.0, %v785
      %v794 = vsub.f32 1.0, %v786
      %vm795 = vcmp.ge.f32.partialorder %v627, 0.0
      %vm796 = vcmp.ge.f32.partialorder %v628, 0.0
      %vm797 = vcmp.ge.f32.partialorder %v629, 0.0
      %vm798 = vcmp.ge.f32.partialorder %v630, 0.0
      %vm799 = vcmp.ge.f32.partialorder %v631, 0.0
      %vm800 = vcmp.ge.f32.partialorder %v632, 0.0
      %vm801 = vcmp.ge.f32.partialorder %v633, 0.0
      %vm802 = vcmp.ge.f32.partialorder %v634, 0.0
      %v803 = vsub.f32 0.0, %v787
      %v804 = vsub.f32 0.0, %v788
      %v805 = vsub.f32 0.0, %v789
      %v806 = vsub.f32 0.0, %v790
      %v807 = vsub.f32 0.0, %v791
      %v808 = vsub.f32 0.0, %v792
      %v809 = vsub.f32 0.0, %v793
      %v810 = vsub.f32 0.0, %v794
      %v811 = vsel %vm795, %v787, %v803
      %v812 = vsel %vm796, %v788, %v804
      %v813 = vsel %vm797, %v789, %v805
      %v814 = vsel %vm798, %v790, %v806
      %v815 = vsel %vm799, %v791, %v807
      %v816 = vsel %vm800, %v792, %v808
      %v817 = vsel %vm801, %v793, %v809
      %v818 = vsel %vm802, %v794, %v810
      %v819 = vadd.f32 %v811, 1.0
      %v820 = vadd.f32 %v812, 1.0
      %v821 = vadd.f32 %v813, 1.0
      %v822 = vadd.f32 %v814, 1.0
      %v823 = vadd.f32 %v815, 1.0
      %v824 = vadd.f32 %v816, 1.0
      %v825 = vadd.f32 %v817, 1.0
      %v826 = vadd.f32 %v818, 1.0
      %v827 = vmul.f32 %v619, %v819
      %v828 = vmul.f32 %v620, %v820
      %v829 = vmul.f32 %v621, %v821
      %v830 = vmul.f32 %v622, %v822
      %v831 = vmul.f32 %v623, %v823
      %v832 = vmul.f32 %v624, %v824
      %v833 = vmul.f32 %v625, %v825
      %v834 = vmul.f32 %v626, %v826
      %v835 = vld [vmem:[%s5] sm:$0xff]
      %v836 = vld [vmem:[%s5 + $0x8] sm:$0xff]
      %v837 = vld [vmem:[%s5 + $0x10] sm:$0xff]
      %v838 = vld [vmem:[%s5 + $0x18] sm:$0xff]
      %v839 = vld [vmem:[%s5 + $0x20] sm:$0xff]
      %v840 = vld [vmem:[%s5 + $0x28] sm:$0xff]
      %v841 = vld [vmem:[%s5 + $0x30] sm:$0xff]
      %v842 = vld [vmem:[%s5 + $0x38] sm:$0xff]
      %v843 = vld [vmem:[%s5 + $0x40] sm:$0xff]
      %vm844 = vcmask 588800
      %v846 = vsel %vm844, %v827, 0
      %v849 = vsel %vm844, %v828, 0
      %v852 = vsel %vm844, %v829, 0
      %v855 = vsel %vm844, %v830, 0
      %v858 = vsel %vm844, %v831, 0
      %v861 = vsel %vm844, %v832, 0
      %v864 = vsel %vm844, %v833, 0
      %v867 = vsel %vm844, %v834, 0
      %869 = vmatprep.subr.mxu0 0.0
      %870 = vmatpush1.msra.mxu0 %v835
      %871 = vmatprep.subr.mxu0 0.0
      %872 = vmatpush1.msra.mxu0 %v836
      %873 = vmatprep.subr.mxu0 0.0
      %874 = vmatpush1.msra.mxu0 %v837
      %875 = vmatprep.subr.mxu0 0.0
      %876 = vmatpush1.msra.mxu0 %v838
      %877 = vmatprep.subr.mxu0 0.0
      %878 = vmatpush1.msra.mxu0 %v839
      %879 = vmatprep.subr.mxu0 0.0
      %880 = vmatpush1.msra.mxu0 %v840
      %881 = vmatprep.subr.mxu0 0.0
      %882 = vmatpush1.msra.mxu0 %v841
      %883 = vmatprep.subr.mxu0 0.0
      %884 = vmatpush1.msra.mxu0 %v842
      %885 = vmatprep.subr.mxu0 0.0
      %886 = vmatpush1.msra.mxu0 %v843
      %887 = vmatprep.subr.mxu0 0.0
      %888 = vmatpush1.msra.mxu0 0.0
      %889 = vmatprep.subr.mxu0 0.0
      %890 = vmatpush1.msra.mxu0 0.0
      %891 = vmatprep.subr.mxu0 0.0
      %892 = vmatpush1.msra.mxu0 0.0
      %893 = vmatprep.subr.mxu0 0.0
      %894 = vmatpush1.msra.mxu0 0.0
      %895 = vmatprep.subr.mxu0 0.0
      %896 = vmatpush1.msra.mxu0 0.0
      %897 = vmatprep.subr.mxu0 0.0
      %898 = vmatpush1.msra.mxu0 0.0
      %899 = vmatprep.subr.mxu0 0.0
      %900 = vmatpush1.msra.mxu0 0.0
      %901 = vmatprep.subr.mxu0 0.0
      %902 = vmatpush1.msra.mxu0 0.0
      %903 = vmatprep.subr.mxu0 0.0
      %904 = vmatpush1.msra.mxu0 0.0
      %905 = vmatprep.subr.mxu0 0.0
      %906 = vmatpush1.msra.mxu0 0.0
      %907 = vmatprep.subr.mxu0 0.0
      %908 = vmatpush1.msra.mxu0 0.0
      %909 = vmatprep.subr.mxu0 0.0
      %910 = vmatpush1.msra.mxu0 0.0
      %911 = vmatprep.subr.mxu0 0.0
      %912 = vmatpush1.msra.mxu0 0.0
      %913 = vmatprep.subr.mxu0 0.0
      %914 = vmatpush1.msra.mxu0 0.0
      %915 = vmatprep.subr.mxu0 0.0
      %916 = vmatpush1.msra.mxu0 0.0
      %917 = vmatprep.subr.mxu0 0.0
      %918 = vmatpush1.msra.mxu0 0.0
      %919 = vmatprep.subr.mxu0 0.0
      %920 = vmatpush1.msra.mxu0 0.0
      %921 = vmatprep.subr.mxu0 0.0
      %922 = vmatpush1.msra.mxu0 0.0
      %923 = vmatprep.subr.mxu0 0.0
      %924 = vmatpush1.msra.mxu0 0.0
      %925 = vmatprep.subr.mxu0 0.0
      %926 = vmatpush1.msra.mxu0 0.0
      %927 = vmatprep.subr.mxu0 0.0
      %928 = vmatpush1.msra.mxu0 0.0
      %929 = vmatprep.subr.mxu0 0.0
      %930 = vmatpush1.msra.mxu0 0.0
      %931 = vmatprep.subr.mxu0 0.0
      %932 = vmatpush1.msra.mxu0 0.0
      %933 = vmatprep.mubr.f32.mxu0 0.0
      %934 = vmatmul.mubr.f32.gmra.mrb[0].mxu0 %v846
      %v935 = vpop.f32.mrb[0].mxu0
      %v936 = vadd.f32 0.0, %v935
      %v937 = vpop.f32.mrb[0].mxu0
      %938 = vmatprep.mubr.f32.mxu0 0.0
      %939 = vmatmul.mubr.f32.gmra.mrb[0].mxu0 %v849
      %v940 = vpop.f32.mrb[0].mxu0
      %v941 = vadd.f32 0.0, %v940
      %v942 = vpop.f32.mrb[0].mxu0
      %943 = vmatprep.mubr.f32.mxu0 0.0
      %944 = vmatmul.mubr.f32.gmra.mrb[0].mxu0 %v852
      %v945 = vpop.f32.mrb[0].mxu0
      %v946 = vadd.f32 0.0, %v945
      %v947 = vpop.f32.mrb[0].mxu0
      %948 = vmatprep.mubr.f32.mxu0 0.0
      %949 = vmatmul.mubr.f32.gmra.mrb[0].mxu0 %v855
      %v950 = vpop.f32.mrb[0].mxu0
      %v951 = vadd.f32 0.0, %v950
      %v952 = vpop.f32.mrb[0].mxu0
      %953 = vmatprep.mubr.f32.mxu0 0.0
      %954 = vmatmul.mubr.f32.gmra.mrb[0].mxu0 %v858
      %v955 = vpop.f32.mrb[0].mxu0
      %v956 = vadd.f32 0.0, %v955
      %v957 = vpop.f32.mrb[0].mxu0
      %958 = vmatprep.mubr.f32.mxu0 0.0
      %959 = vmatmul.mubr.f32.gmra.mrb[0].mxu0 %v861
      %v960 = vpop.f32.mrb[0].mxu0
      %v961 = vadd.f32 0.0, %v960
      %v962 = vpop.f32.mrb[0].mxu0
      %963 = vmatprep.mubr.f32.mxu0 0.0
      %964 = vmatmul.mubr.f32.gmra.mrb[0].mxu0 %v864
      %v965 = vpop.f32.mrb[0].mxu0
      %v966 = vadd.f32 0.0, %v965
      %v967 = vpop.f32.mrb[0].mxu0
      %968 = vmatprep.mubr.f32.mxu0 0.0
      %969 = vmatmul.mubr.f32.gmra.mrb[0].mxu0 %v867
      %v970 = vpop.f32.mrb[0].mxu0
      %v971 = vadd.f32 0.0, %v970
      %v972 = vpop.f32.mrb[0].mxu0
      %973 = vdwg.mxu0
      %v974 = vadd.f32 %v336, %v936
      %v975 = vadd.f32 %v337, %v941
      %v976 = vadd.f32 %v338, %v946
      %v977 = vadd.f32 %v339, %v951
      %v978 = vadd.f32 %v340, %v956
      %v979 = vadd.f32 %v341, %v961
      %v980 = vadd.f32 %v342, %v966
      %v981 = vadd.f32 %v343, %v971
      %v982 = vld [vmem:[%s6] sm:$0x1]
      %v984 = vlaneseq
      %v985 = vshrl.u32 %v984, 7
      %v986 = vsub.s32 0, %v985
      %v987 = vrot.slane %v982, %v986
      %v989 = vadd.f32 %v974, %v987
      %v990 = vadd.f32 %v975, %v987
      %v991 = vadd.f32 %v976, %v987
      %v992 = vadd.f32 %v977, %v987
      %v993 = vadd.f32 %v978, %v987
      %v994 = vadd.f32 %v979, %v987
      %v995 = vadd.f32 %v980, %v987
      %v996 = vadd.f32 %v981, %v987
      %v997 = vld [vmem:[%s7] sm:$0x1]
      %v998 = vld [vmem:[%s8] sm:$0x1]
      %v999 = vsel %vm346, %v989, 0.0
      %1000 = vadd.xlane.f32.xlu0 %v999
      %v1001 = vpop.xlane.xlu0 %1000
      %v1002 = vsel %vm346, %v990, 0.0
      %1003 = vadd.xlane.f32.xlu0 %v1002
      %v1004 = vpop.xlane.xlu0 %1003
      %v1005 = vsel %vm346, %v991, 0.0
      %1006 = vadd.xlane.f32.xlu0 %v1005
      %v1007 = vpop.xlane.xlu0 %1006
      %v1008 = vsel %vm346, %v992, 0.0
      %1009 = vadd.xlane.f32.xlu0 %v1008
      %v1010 = vpop.xlane.xlu0 %1009
      %v1011 = vsel %vm346, %v993, 0.0
      %1012 = vadd.xlane.f32.xlu0 %v1011
      %v1013 = vpop.xlane.xlu0 %1012
      %v1014 = vsel %vm346, %v994, 0.0
      %1015 = vadd.xlane.f32.xlu0 %v1014
      %v1016 = vpop.xlane.xlu0 %1015
      %v1017 = vsel %vm346, %v995, 0.0
      %1018 = vadd.xlane.f32.xlu0 %v1017
      %v1019 = vpop.xlane.xlu0 %1018
      %v1020 = vsel %vm346, %v996, 0.0
      %1021 = vadd.xlane.f32.xlu0 %v1020
      %v1022 = vpop.xlane.xlu0 %1021
      %v1023 = vmul.f32 %v1001, %v371
      %v1024 = vmul.f32 %v1004, %v371
      %v1025 = vmul.f32 %v1007, %v371
      %v1026 = vmul.f32 %v1010, %v371
      %v1027 = vmul.f32 %v1013, %v371
      %v1028 = vmul.f32 %v1016, %v371
      %v1029 = vmul.f32 %v1019, %v371
      %v1030 = vmul.f32 %v1022, %v371
      %v1031 = vsub.f32 %v989, %v1023
      %v1032 = vsub.f32 %v990, %v1024
      %v1033 = vsub.f32 %v991, %v1025
      %v1034 = vsub.f32 %v992, %v1026
      %v1035 = vsub.f32 %v993, %v1027
      %v1036 = vsub.f32 %v994, %v1028
      %v1037 = vsub.f32 %v995, %v1029
      %v1038 = vsub.f32 %v996, %v1030
      %v1039 = vmul.f32 %v1031, %v1031
      %v1040 = vmul.f32 %v1032, %v1032
      %v1041 = vmul.f32 %v1033, %v1033
      %v1042 = vmul.f32 %v1034, %v1034
      %v1043 = vmul.f32 %v1035, %v1035
      %v1044 = vmul.f32 %v1036, %v1036
      %v1045 = vmul.f32 %v1037, %v1037
      %v1046 = vmul.f32 %v1038, %v1038
      %v1047 = vsel %vm346, %v1039, 0.0
      %1048 = vadd.xlane.f32.xlu0 %v1047
      %v1049 = vpop.xlane.xlu0 %1048
      %v1050 = vsel %vm346, %v1040, 0.0
      %1051 = vadd.xlane.f32.xlu0 %v1050
      %v1052 = vpop.xlane.xlu0 %1051
      %v1053 = vsel %vm346, %v1041, 0.0
      %1054 = vadd.xlane.f32.xlu0 %v1053
      %v1055 = vpop.xlane.xlu0 %1054
      %v1056 = vsel %vm346, %v1042, 0.0
      %1057 = vadd.xlane.f32.xlu0 %v1056
      %v1058 = vpop.xlane.xlu0 %1057
      %v1059 = vsel %vm346, %v1043, 0.0
      %1060 = vadd.xlane.f32.xlu0 %v1059
      %v1061 = vpop.xlane.xlu0 %1060
      %v1062 = vsel %vm346, %v1044, 0.0
      %1063 = vadd.xlane.f32.xlu0 %v1062
      %v1064 = vpop.xlane.xlu0 %1063
      %v1065 = vsel %vm346, %v1045, 0.0
      %1066 = vadd.xlane.f32.xlu0 %v1065
      %v1067 = vpop.xlane.xlu0 %1066
      %v1068 = vsel %vm346, %v1046, 0.0
      %1069 = vadd.xlane.f32.xlu0 %v1068
      %v1070 = vpop.xlane.xlu0 %1069
      %v1071 = vmul.f32 %v1049, %v371
      %v1072 = vmul.f32 %v1052, %v371
      %v1073 = vmul.f32 %v1055, %v371
      %v1074 = vmul.f32 %v1058, %v371
      %v1075 = vmul.f32 %v1061, %v371
      %v1076 = vmul.f32 %v1064, %v371
      %v1077 = vmul.f32 %v1067, %v371
      %v1078 = vmul.f32 %v1070, %v371
      %v1079 = vadd.f32 %v1071, 1e-05
      %v1080 = vadd.f32 %v1072, 1e-05
      %v1081 = vadd.f32 %v1073, 1e-05
      %v1082 = vadd.f32 %v1074, 1e-05
      %v1083 = vadd.f32 %v1075, 1e-05
      %v1084 = vadd.f32 %v1076, 1e-05
      %v1085 = vadd.f32 %v1077, 1e-05
      %v1086 = vadd.f32 %v1078, 1e-05
      %v1087 = vrsqrt.pop %v1079
      %v1088 = vrsqrt.pop %v1080
      %v1089 = vrsqrt.pop %v1081
      %v1090 = vrsqrt.pop %v1082
      %v1091 = vrsqrt.pop %v1083
      %v1092 = vrsqrt.pop %v1084
      %v1093 = vrsqrt.pop %v1085
      %v1094 = vrsqrt.pop %v1086
      %v1095 = vmul.f32 %v1031, %v1087
      %v1096 = vmul.f32 %v1032, %v1088
      %v1097 = vmul.f32 %v1033, %v1089
      %v1098 = vmul.f32 %v1034, %v1090
      %v1099 = vmul.f32 %v1035, %v1091
      %v1100 = vmul.f32 %v1036, %v1092
      %v1101 = vmul.f32 %v1037, %v1093
      %v1102 = vmul.f32 %v1038, %v1094
      %v1104 = vlaneseq
      %v1105 = vshrl.u32 %v1104, 7
      %v1106 = vsub.s32 0, %v1105
      %v1107 = vrot.slane %v997, %v1106
      %v1109 = vmul.f32 %v1095, %v1107
      %v1110 = vmul.f32 %v1096, %v1107
      %v1111 = vmul.f32 %v1097, %v1107
      %v1112 = vmul.f32 %v1098, %v1107
      %v1113 = vmul.f32 %v1099, %v1107
      %v1114 = vmul.f32 %v1100, %v1107
      %v1115 = vmul.f32 %v1101, %v1107
      %v1116 = vmul.f32 %v1102, %v1107
      %v1118 = vlaneseq
      %v1119 = vshrl.u32 %v1118, 7
      %v1120 = vsub.s32 0, %v1119
      %v1121 = vrot.slane %v998, %v1120
      %v1123 = vadd.f32 %v1109, %v1121
      %v1124 = vadd.f32 %v1110, %v1121
      %v1125 = vadd.f32 %v1111, %v1121
      %v1126 = vadd.f32 %v1112, %v1121
      %v1127 = vadd.f32 %v1113, %v1121
      %v1128 = vadd.f32 %v1114, %v1121
      %v1129 = vadd.f32 %v1115, %v1121
      %v1130 = vadd.f32 %v1116, %v1121
      %1131 = vst.msk [vmem:[%s334] sm:$0xff] %vm346, %v1123
      %1132 = vst.msk [vmem:[%s334 + $0x8] sm:$0xff] %vm346, %v1124
      %1133 = vst.msk [vmem:[%s334 + $0x10] sm:$0xff] %vm346, %v1125
      %1134 = vst.msk [vmem:[%s334 + $0x18] sm:$0xff] %vm346, %v1126
      %1135 = vst.msk [vmem:[%s334 + $0x20] sm:$0xff] %vm346, %v1127
      %1136 = vst.msk [vmem:[%s334 + $0x28] sm:$0xff] %vm346, %v1128
      %1137 = vst.msk [vmem:[%s334 + $0x30] sm:$0xff] %vm346, %v1129
      %1138 = vst.msk [vmem:[%s334 + $0x38] sm:$0xff] %vm346, %v1130
      %s1139 = smul.u32 8, %s20
      %p1140 = scmp.lt.s32.totalorder %s1139, 15
      %s1141 = scalar_select %p1140, %s1139, 15
      %s1142 = smul.addr %s1141, 8
      %s1143 = scalar_lea.vmem %s9, %s1142
      // Predicated region
      $region57: #{mask_fuse_forward.18} parent=55 // pred_check
        %p1144 = pneg %p232
      $region58: #{mask_fuse_forward.18} parent=55 // pred_check_branch
        %1146 = sbr.rel (%p1144) target = $region60
      $region59: #{mask_fuse_forward.18} parent=55 // pred_region
        %s1147 = smul.u32 8, %s20
      $region60: #{mask_fuse_forward.18} parent=55 // pred_fallthru
        _
    $region56: #{mask_fuse_forward.18} parent=5 // pred_fallthru
      _
    %p1148 = scmp.le.s32.totalorder 2, %s15
    // Predicated region
    $region61: #{mask_fuse_forward.18} parent=5 // pred_check
      %p1149 = pneg %p1148
    $region62: #{mask_fuse_forward.18} parent=5 // pred_check_branch
      %1151 = sbr.rel (%p1149) target = $region64
    $region63: #{mask_fuse_forward.18} parent=5 // pred_region
      %s1152 = ssub.s32 %s15, 2
      // Predicated region
      $region65: #{mask_fuse_forward.18} parent=63 // pred_check
        %p1153 = pneg %p238
      $region66: #{mask_fuse_forward.18} parent=63 // pred_check_branch
        %1155 = sbr.rel (%p1153) target = $region68
      $region67: #{mask_fuse_forward.18} parent=63 // pred_region
        %s1156 = smul.u32 8, %s21
        %p1157 = scmp.lt.s32.totalorder %s1156, 15
        %s1158 = scalar_select %p1157, %s1156, 15
        %s1159 = smul.addr %s1158, 8
        %s1160 = scalar_lea.vmem %s9, %s1159
      $region68: #{mask_fuse_forward.18} parent=63 // pred_fallthru
        _
    $region64: #{mask_fuse_forward.18} parent=5 // pred_fallthru
      _
  $region6: #{mask_fuse_forward.18} parent=0 // loop_footer
    %s19 = sadd.s32 1, %s15
  $region7: #{mask_fuse_forward.18} parent=0 // loop_footer_branch
    %14 = sbr.rel target = $region3
  $region8: #{mask_fuse_forward.18} parent=0 // loop_exit
    _

// kernel: mask_fuse_forward.19
$region0: #{mask_fuse_forward.19}
  #allocation0 [shape = 'u32[]', space=smem, size = 0x4, offset = 0x4, fixed_abs, tag = 'smem constant byte address 0x4 - core index']
  #allocation1 [shape = 'u32[144,128]{1,0:T(1,128)}', space=vmem, size = 0x12000, scoped, tag = 'internal scratch']
  %s0 = inlined_call_operand.vmem [shape: f32[128,216], index: 0, kind: input, shape index: {}]
  %s1 = inlined_call_operand.vmem [shape: f32[216,2], index: 1, kind: input, shape index: {}]
  %s2 = inlined_call_operand.vmem [shape: f32[1,2], index: 2, kind: input, shape index: {}]
  %s3 = inlined_call_operand.vmem [shape: f32[128,24], index: 3, kind: input, shape index: {}]
  %s4 = inlined_call_operand.vmem [shape: f32[128,24], index: 4, kind: input, shape index: {}]
  %s5 = inlined_call_operand.hbm [shape: f32[128,24], index: 5, kind: output, shape index: {0}]
  %s6 = inlined_call_operand.vmem [shape: f32[128,2], index: 6, kind: output, shape index: {1}]
  %7 = xla_tuple %s5, %s6
  %s8 = sld [smem:[#allocation0]]
  $region61: #{mask_fuse_forward.19} parent=0
    _
  %s10 = ssub.s32 1, %s8
  %s11 = scalar_select 0, %s10, %s8
  $region1: #{mask_fuse_forward.19} parent=0
    #allocation2 [shape = 'u8[65536]{0}', space=vmem, size = 0x10000, scoped, tag = 'output window, operand 0']
    #allocation3 [shape = 's32[2]{0}', space=sflag, size = 0x8, scoped, tag = 'scoped memory for mask_fuse_forward.19']
    %12 = vsyncpa [#allocation3], 0
    %s13 = scalar_lea.sflag [#allocation3], 1
    %14 = vsyncpa %s13, 0
    loop: start=0, step=1, limit=4
    $region2: #{mask_fuse_forward.19} parent=1 // loop_pre_header
      _
    $region3: #{mask_fuse_forward.19} parent=1 // loop_header
      %s16 = sphi 0, %s20
      %p17 = scmp.ge.s32.totalorder %s16, 4
      %s26 = sphi 0, %s28
      %s29 = sphi 0, %s26
      %s30 = sphi 0, %s29
      %s46 = sphi 0, %s30
      %s50 = sphi 0, %s50
      %s52 = sphi 0, %s50
      %s53 = sphi 0, %s52
      %s67 = sphi 0, %s53
      %s71 = sphi 0, %s71
      %s73 = sphi 0, %s71
      %s74 = sphi 0, %s73
      %s88 = sphi 0, %s74
      %s94 = sphi 0, %s96
      %s97 = sphi 0, %s94
      %s98 = sphi 0, %s97
      %s114 = sphi 0, %s98
      %s120 = sphi 0, %s122
      %s123 = sphi 0, %s120
      %s124 = sphi 0, %s123
      %s140 = sphi 0, %s124
      %s146 = sphi 0, %s148
      %s149 = sphi 0, %s146
      %s150 = sphi 0, %s149
      %s166 = sphi 0, %s150
      %s172 = sphi 0, %s174
      %s175 = sphi 0, %s172
      %s176 = sphi 0, %s175
      %s192 = sphi 0, %s176
    $region4: #{mask_fuse_forward.19} parent=1 // loop_header_branch
      %19 = sbr.rel (%p17) target = $region8
    $region5: #{mask_fuse_forward.19} parent=1 // loop_body
      %s21 = ssub.s32 %s16, 1
      %s22 = ssub.s32 %s16, 2
      %s23 = sadd.s32 %s16, 1
      %s24 = ssub.s32 %s16, %s23
      %p25 = scmp.eq.s32.totalorder %s24, 0
      %s27 = sadd.s32 %s26, 1
      %s28 = scalar_select %p25, %s26, %s27
      %p31 = pneg %p25
      %p32 = scmp.eq.s32.totalorder %s16, 1
      %p33 = por %p31, %p32
      %p34 = scmp.ne.s32.totalorder %s26, %s29
      %p35 = scmp.eq.s32.totalorder %s16, 0
      %p36 = por %p34, %p35
      %p37 = scmp.ne.s32.totalorder %s26, %s29
      %p38 = scmp.eq.s32.totalorder %s21, 1
      %p39 = por %p37, %p38
      %p40 = scmp.ne.s32.totalorder %s29, %s30
      %p41 = scmp.eq.s32.totalorder %s21, 0
      %p42 = por %p40, %p41
      %p43 = scmp.ne.s32.totalorder %s29, %s30
      %p44 = scmp.eq.s32.totalorder %s22, 1
      %p45 = por %p43, %p44
      %p47 = scmp.ne.s32.totalorder %s30, %s46
      %p48 = scmp.eq.s32.totalorder %s22, 0
      %p49 = por %p47, %p48
      %s51 = sadd.s32 %s50, 1
      %p54 = scmp.eq.s32.totalorder %s16, 1
      %p55 = scmp.ne.s32.totalorder %s50, %s52
      %p56 = scmp.eq.s32.totalorder %s16, 0
      %p57 = por %p55, %p56
      %p58 = scmp.ne.s32.totalorder %s50, %s52
      %p59 = scmp.eq.s32.totalorder %s21, 1
      %p60 = por %p58, %p59
      %p61 = scmp.ne.s32.totalorder %s52, %s53
      %p62 = scmp.eq.s32.totalorder %s21, 0
      %p63 = por %p61, %p62
      %p64 = scmp.ne.s32.totalorder %s52, %s53
      %p65 = scmp.eq.s32.totalorder %s22, 1
      %p66 = por %p64, %p65
      %p68 = scmp.ne.s32.totalorder %s53, %s67
      %p69 = scmp.eq.s32.totalorder %s22, 0
      %p70 = por %p68, %p69
      %s72 = sadd.s32 %s71, 1
      %p75 = scmp.eq.s32.totalorder %s16, 1
      %p76 = scmp.ne.s32.totalorder %s71, %s73
      %p77 = scmp.eq.s32.totalorder %s16, 0
      %p78 = por %p76, %p77
      %p79 = scmp.ne.s32.totalorder %s71, %s73
      %p80 = scmp.eq.s32.totalorder %s21, 1
      %p81 = por %p79, %p80
      %p82 = scmp.ne.s32.totalorder %s73, %s74
      %p83 = scmp.eq.s32.totalorder %s21, 0
      %p84 = por %p82, %p83
      %p85 = scmp.ne.s32.totalorder %s73, %s74
      %p86 = scmp.eq.s32.totalorder %s22, 1
      %p87 = por %p85, %p86
      %p89 = scmp.ne.s32.totalorder %s74, %s88
      %p90 = scmp.eq.s32.totalorder %s22, 0
      %p91 = por %p89, %p90
      %s92 = ssub.s32 %s16, %s23
      %p93 = scmp.eq.s32.totalorder %s92, 0
      %s95 = sadd.s32 %s94, 1
      %s96 = scalar_select %p93, %s94, %s95
      %p99 = pneg %p93
      %p100 = scmp.eq.s32.totalorder %s16, 1
      %p101 = por %p99, %p100
      %p102 = scmp.ne.s32.totalorder %s94, %s97
      %p103 = scmp.eq.s32.totalorder %s16, 0
      %p104 = por %p102, %p103
      %p105 = scmp.ne.s32.totalorder %s94, %s97
      %p106 = scmp.eq.s32.totalorder %s21, 1
      %p107 = por %p105, %p106
      %p108 = scmp.ne.s32.totalorder %s97, %s98
      %p109 = scmp.eq.s32.totalorder %s21, 0
      %p110 = por %p108, %p109
      %p111 = scmp.ne.s32.totalorder %s97, %s98
      %p112 = scmp.eq.s32.totalorder %s22, 1
      %p113 = por %p111, %p112
      %p115 = scmp.ne.s32.totalorder %s98, %s114
      %p116 = scmp.eq.s32.totalorder %s22, 0
      %p117 = por %p115, %p116
      %s118 = ssub.s32 %s16, %s23
      %p119 = scmp.eq.s32.totalorder %s118, 0
      %s121 = sadd.s32 %s120, 1
      %s122 = scalar_select %p119, %s120, %s121
      %p125 = pneg %p119
      %p126 = scmp.eq.s32.totalorder %s16, 1
      %p127 = por %p125, %p126
      %p128 = scmp.ne.s32.totalorder %s120, %s123
      %p129 = scmp.eq.s32.totalorder %s16, 0
      %p130 = por %p128, %p129
      %p131 = scmp.ne.s32.totalorder %s120, %s123
      %p132 = scmp.eq.s32.totalorder %s21, 1
      %p133 = por %p131, %p132
      %p134 = scmp.ne.s32.totalorder %s123, %s124
      %p135 = scmp.eq.s32.totalorder %s21, 0
      %p136 = por %p134, %p135
      %p137 = scmp.ne.s32.totalorder %s123, %s124
      %p138 = scmp.eq.s32.totalorder %s22, 1
      %p139 = por %p137, %p138
      %p141 = scmp.ne.s32.totalorder %s124, %s140
      %p142 = scmp.eq.s32.totalorder %s22, 0
      %p143 = por %p141, %p142
      %s144 = ssub.s32 %s16, %s23
      %p145 = scmp.eq.s32.totalorder %s144, 0
      %s147 = sadd.s32 %s146, 1
      %s148 = scalar_select %p145, %s146, %s147
      %p151 = pneg %p145
      %p152 = scmp.eq.s32.totalorder %s16, 1
      %p153 = por %p151, %p152
      %p154 = scmp.ne.s32.totalorder %s146, %s149
      %p155 = scmp.eq.s32.totalorder %s16, 0
      %p156 = por %p154, %p155
      %p157 = scmp.ne.s32.totalorder %s146, %s149
      %p158 = scmp.eq.s32.totalorder %s21, 1
      %p159 = por %p157, %p158
      %p160 = scmp.ne.s32.totalorder %s149, %s150
      %p161 = scmp.eq.s32.totalorder %s21, 0
      %p162 = por %p160, %p161
      %p163 = scmp.ne.s32.totalorder %s149, %s150
      %p164 = scmp.eq.s32.totalorder %s22, 1
      %p165 = por %p163, %p164
      %p167 = scmp.ne.s32.totalorder %s150, %s166
      %p168 = scmp.eq.s32.totalorder %s22, 0
      %p169 = por %p167, %p168
      %s170 = ssub.s32 %s16, %s23
      %p171 = scmp.eq.s32.totalorder %s170, 0
      %s173 = sadd.s32 %s172, 1
      %s174 = scalar_select %p171, %s172, %s173
      %p177 = pneg %p171
      %p178 = scmp.eq.s32.totalorder %s16, 1
      %p179 = por %p177, %p178
      %p180 = scmp.ne.s32.totalorder %s172, %s175
      %p181 = scmp.eq.s32.totalorder %s16, 0
      %p182 = por %p180, %p181
      %p183 = scmp.ne.s32.totalorder %s172, %s175
      %p184 = scmp.eq.s32.totalorder %s21, 1
      %p185 = por %p183, %p184
      %p186 = scmp.ne.s32.totalorder %s175, %s176
      %p187 = scmp.eq.s32.totalorder %s21, 0
      %p188 = por %p186, %p187
      %p189 = scmp.ne.s32.totalorder %s175, %s176
      %p190 = scmp.eq.s32.totalorder %s22, 1
      %p191 = por %p189, %p190
      %p193 = scmp.ne.s32.totalorder %s176, %s192
      %p194 = scmp.eq.s32.totalorder %s22, 0
      %p195 = por %p193, %p194
      %p196 = scmp.le.s32.totalorder 1, %s16
      %p197 = scmp.lt.s32.totalorder %s16, 3
      %p198 = pnand %p196, %p197
      %p199 = pneg %p198
      // Predicated region
      $region9: #{mask_fuse_forward.19} parent=5 // pred_check
        _
      $region10: #{mask_fuse_forward.19} parent=5 // pred_check_branch
        %201 = sbr.rel (%p198) target = $region12
      $region11: #{mask_fuse_forward.19} parent=5 // pred_region
        %s202 = ssub.s32 %s16, 1
        // Predicated region
        $region13: #{mask_fuse_forward.19} parent=11 // pred_check
          %p203 = pneg %p63
        $region14: #{mask_fuse_forward.19} parent=11 // pred_check_branch
          %205 = sbr.rel (%p203) target = $region16
        $region15: #{mask_fuse_forward.19} parent=11 // pred_region
          _
        $region16: #{mask_fuse_forward.19} parent=11 // pred_fallthru
          _
        // Predicated region
        $region17: #{mask_fuse_forward.19} parent=11 // pred_check
          %p206 = pneg %p84
        $region18: #{mask_fuse_forward.19} parent=11 // pred_check_branch
          %208 = sbr.rel (%p206) target = $region20
        $region19: #{mask_fuse_forward.19} parent=11 // pred_region
          _
        $region20: #{mask_fuse_forward.19} parent=11 // pred_fallthru
          _
      $region12: #{mask_fuse_forward.19} parent=5 // pred_fallthru
        _
      %p209 = scmp.lt.s32.totalorder %s16, 2
      // Predicated region
      $region21: #{mask_fuse_forward.19} parent=5 // pred_check
        %p210 = pneg %p209
      $region22: #{mask_fuse_forward.19} parent=5 // pred_check_branch
        %212 = sbr.rel (%p210) target = $region24
      $region23: #{mask_fuse_forward.19} parent=5 // pred_region
        // Predicated region
        $region25: #{mask_fuse_forward.19} parent=23 // pred_check
          %p213 = pneg %p36
        $region26: #{mask_fuse_forward.19} parent=23 // pred_check_branch
          %215 = sbr.rel (%p213) target = $region28
        $region27: #{mask_fuse_forward.19} parent=23 // pred_region
          %s216 = smul.u32 8, %s16
          %p217 = scmp.lt.s32.totalorder %s216, 15
          %s218 = scalar_select %p217, %s216, 15
          %s219 = smul.addr %s218, 2
          %s220 = smul.addr %s219, 8
          %s221 = scalar_lea.vmem %s0, %s220
          %s222 = smul.u32 8, %s16
        $region28: #{mask_fuse_forward.19} parent=23 // pred_fallthru
          _
        // Predicated region
        $region29: #{mask_fuse_forward.19} parent=23 // pred_check
          %p223 = pneg %p104
        $region30: #{mask_fuse_forward.19} parent=23 // pred_check_branch
          %225 = sbr.rel (%p223) target = $region32
        $region31: #{mask_fuse_forward.19} parent=23 // pred_region
          %s226 = smul.u32 8, %s16
          %p227 = scmp.lt.s32.totalorder %s226, 15
          %s228 = scalar_select %p227, %s226, 15
          %s229 = smul.addr %s228, 8
          %s230 = scalar_lea.vmem %s3, %s229
          %s231 = smul.u32 8, %s16
        $region32: #{mask_fuse_forward.19} parent=23 // pred_fallthru
          _
        // Predicated region
        $region33: #{mask_fuse_forward.19} parent=23 // pred_check
          %p232 = pneg %p130
        $region34: #{mask_fuse_forward.19} parent=23 // pred_check_branch
          %234 = sbr.rel (%p232) target = $region36
        $region35: #{mask_fuse_forward.19} parent=23 // pred_region
          %s235 = smul.u32 8, %s16
          %p236 = scmp.lt.s32.totalorder %s235, 15
          %s237 = scalar_select %p236, %s235, 15
          %s238 = smul.addr %s237, 8
          %s239 = scalar_lea.vmem %s4, %s238
          %s240 = smul.u32 8, %s16
        $region36: #{mask_fuse_forward.19} parent=23 // pred_fallthru
          _
      $region24: #{mask_fuse_forward.19} parent=5 // pred_fallthru
        _
      %p241 = scmp.le.s32.totalorder 1, %s16
      %p242 = scmp.lt.s32.totalorder %s16, 3
      %p243 = pnand %p241, %p242
      %p244 = pneg %p243
      // Predicated region
      $region37: #{mask_fuse_forward.19} parent=5 // pred_check
        _
      $region38: #{mask_fuse_forward.19} parent=5 // pred_check_branch
        %246 = sbr.rel (%p243) target = $region40
      $region39: #{mask_fuse_forward.19} parent=5 // pred_region
        %s247 = ssub.s32 %s16, 1
        %s248 = smul.u32 8, %s21
        %p249 = scmp.lt.s32.totalorder %s248, 15
        %s250 = scalar_select %p249, %s248, 15
        %s251 = smul.addr %s250, 2
        %s252 = smul.addr %s251, 8
        %s253 = scalar_lea.vmem %s0, %s252
        %p254 = pneg %p42
        %p255 = pneg %p39
        %p256 = pneg %p63
        %p257 = pneg %p60
        %p258 = pneg %p84
        %p259 = pneg %p81
        %s260 = smul.u32 8, %s21
        %p261 = scmp.lt.s32.totalorder %s260, 15
        %s262 = scalar_select %p261, %s260, 15
        %s263 = smul.addr %s262, 8
        %s264 = scalar_lea.vmem %s3, %s263
        %p265 = pneg %p110
        %p266 = pneg %p107
        %s267 = smul.u32 8, %s21
        %p268 = scmp.lt.s32.totalorder %s267, 15
        %s269 = scalar_select %p268, %s267, 15
        %s270 = smul.addr %s269, 8
        %s271 = scalar_lea.vmem %s4, %s270
        %p272 = pneg %p136
        %p273 = pneg %p133
        %p274 = pneg %p162
        %p275 = pneg %p159
        %s276 = sand.u32 %s149, 1
        %s277 = scalar_lea.sflag [#allocation3], %s276
        %s278 = sand.u32 %s149, 1
        %s279 = smul.addr %s278, 64
        %s280 = scalar_lea.vmem [#allocation2], %s279
        %p281 = pneg %p188
        %p282 = pneg %p185
        %s283 = smul.u32 8, %s21
        %p284 = scmp.lt.s32.totalorder %s283, 15
        %s285 = scalar_select %p284, %s283, 15
        %s286 = smul.addr %s285, 8
        %s287 = scalar_lea.vmem %s6, %s286
        %s288 = smul.u32 8, %s21
        %p289 = scmp.lt.s32.totalorder %s288, 15
        %s290 = scalar_select %p289, %s288, 15
        %s291 = smul.addr %s290, 2
        %s292 = smul.addr %s291, 8
        %s293 = scalar_lea.vmem %s0, %s292
        %s294 = smul.u32 8, %s21
        %s295 = smul.u32 8, %s21
        %p296 = scmp.lt.s32.totalorder %s295, 15
        %s297 = scalar_select %p296, %s295, 15
        %s298 = smul.addr %s297, 8
        %s299 = scalar_lea.vmem %s3, %s298
        %s300 = smul.u32 8, %s21
        %s301 = smul.u32 8, %s21
        %p302 = scmp.lt.s32.totalorder %s301, 15
        %s303 = scalar_select %p302, %s301, 15
        %s304 = smul.addr %s303, 8
        %s305 = scalar_lea.vmem %s4, %s304
        %s306 = smul.u32 8, %s21
        %s307 = smul.u32 8, %s21
        %s308 = smul.u32 8, %s21
        %p309 = scmp.lt.s32.totalorder %s308, 15
        %s310 = scalar_select %p309, %s308, 15
        %s311 = smul.addr %s310, 8
        %s312 = scalar_lea.vmem %s6, %s311
        %s313 = smul.u32 8, %s21
        %v314 = vld [vmem:[%s293] sm:$0xff]
        %v315 = vld [vmem:[%s293 + $0x8] sm:$0xff]
        %v316 = vld [vmem:[%s293 + $0x10] sm:$0xff]
        %v317 = vld [vmem:[%s293 + $0x18] sm:$0xff]
        %v318 = vld [vmem:[%s293 + $0x20] sm:$0xff]
        %v319 = vld [vmem:[%s293 + $0x28] sm:$0xff]
        %v320 = vld [vmem:[%s293 + $0x30] sm:$0xff]
        %v321 = vld [vmem:[%s293 + $0x38] sm:$0xff]
        %v322 = vld [vmem:[%s293 + $0x40] sm:$0xff]
        %v323 = vld [vmem:[%s293 + $0x48] sm:$0xff]
        %v324 = vld [vmem:[%s293 + $0x50] sm:$0xff]
        %v325 = vld [vmem:[%s293 + $0x58] sm:$0xff]
        %v326 = vld [vmem:[%s293 + $0x60] sm:$0xff]
        %v327 = vld [vmem:[%s293 + $0x68] sm:$0xff]
        %v328 = vld [vmem:[%s293 + $0x70] sm:$0xff]
        %v329 = vld [vmem:[%s293 + $0x78] sm:$0xff]
        %v330 = vld [vmem:[%s1] sm:$0xff]
        %v331 = vld [vmem:[%s1 + $0x8] sm:$0xff]
        %v332 = vld [vmem:[%s1 + $0x10] sm:$0xff]
        %v333 = vld [vmem:[%s1 + $0x18] sm:$0xff]
        %v334 = vld [vmem:[%s1 + $0x20] sm:$0xff]
        %v335 = vld [vmem:[%s1 + $0x28] sm:$0xff]
        %v336 = vld [vmem:[%s1 + $0x30] sm:$0xff]
        %v337 = vld [vmem:[%s1 + $0x38] sm:$0xff]
        %v338 = vld [vmem:[%s1 + $0x40] sm:$0xff]
        %v339 = vld [vmem:[%s1 + $0x48] sm:$0xff]
        %v340 = vld [vmem:[%s1 + $0x50] sm:$0xff]
        %v341 = vld [vmem:[%s1 + $0x58] sm:$0xff]
        %v342 = vld [vmem:[%s1 + $0x60] sm:$0xff]
        %v343 = vld [vmem:[%s1 + $0x68] sm:$0xff]
        %v344 = vld [vmem:[%s1 + $0x70] sm:$0xff]
        %v345 = vld [vmem:[%s1 + $0x78] sm:$0xff]
        %v346 = vld [vmem:[%s1 + $0x80] sm:$0xff]
        %v347 = vld [vmem:[%s1 + $0x88] sm:$0xff]
        %v348 = vld [vmem:[%s1 + $0x90] sm:$0xff]
        %v349 = vld [vmem:[%s1 + $0x98] sm:$0xff]
        %v350 = vld [vmem:[%s1 + $0xa0] sm:$0xff]
        %v351 = vld [vmem:[%s1 + $0xa8] sm:$0xff]
        %v352 = vld [vmem:[%s1 + $0xb0] sm:$0xff]
        %v353 = vld [vmem:[%s1 + $0xb8] sm:$0xff]
        %v354 = vld [vmem:[%s1 + $0xc0] sm:$0xff]
        %v355 = vld [vmem:[%s1 + $0xc8] sm:$0xff]
        %v356 = vld [vmem:[%s1 + $0xd0] sm:$0xff]
        %v357 = vld [vmem:[%s2] sm:$0x1]
        %v359 = vlaneseq
        %v360 = vshrl.u32 %v359, 7
        %v361 = vsub.s32 0, %v360
        %v362 = vrot.slane %v357, %v361
        %vm364 = vcmask 719872
        %v366 = vsel %vm364, %v315, 0
        %v369 = vsel %vm364, %v317, 0
        %v372 = vsel %vm364, %v319, 0
        %v375 = vsel %vm364, %v321, 0
        %v378 = vsel %vm364, %v323, 0
        %v381 = vsel %vm364, %v325, 0
        %v384 = vsel %vm364, %v327, 0
        %v387 = vsel %vm364, %v329, 0
        %389 = vmatprep.subr.mxu0 0.0
        %390 = vmatpush1.msra.mxu0 %v330
        %391 = vmatprep.subr.mxu0 0.0
        %392 = vmatpush1.msra.mxu0 %v331
        %393 = vmatprep.subr.mxu0 0.0
        %394 = vmatpush1.msra.mxu0 %v332
        %395 = vmatprep.subr.mxu0 0.0
        %396 = vmatpush1.msra.mxu0 %v333
        %397 = vmatprep.subr.mxu0 0.0
        %398 = vmatpush1.msra.mxu0 %v334
        %399 = vmatprep.subr.mxu0 0.0
        %400 = vmatpush1.msra.mxu0 %v335
        %401 = vmatprep.subr.mxu0 0.0
        %402 = vmatpush1.msra.mxu0 %v336
        %403 = vmatprep.subr.mxu0 0.0
        %404 = vmatpush1.msra.mxu0 %v337
        %405 = vmatprep.subr.mxu0 0.0
        %406 = vmatpush1.msra.mxu0 %v338
        %407 = vmatprep.subr.mxu0 0.0
        %408 = vmatpush1.msra.mxu0 %v339
        %409 = vmatprep.subr.mxu0 0.0
        %410 = vmatpush1.msra.mxu0 %v340
        %411 = vmatprep.subr.mxu0 0.0
        %412 = vmatpush1.msra.mxu0 %v341
        %413 = vmatprep.subr.mxu0 0.0
        %414 = vmatpush1.msra.mxu0 %v342
        %415 = vmatprep.subr.mxu0 0.0
        %416 = vmatpush1.msra.mxu0 %v343
        %417 = vmatprep.subr.mxu0 0.0
        %418 = vmatpush1.msra.mxu0 %v344
        %419 = vmatprep.subr.mxu0 0.0
        %420 = vmatpush1.msra.mxu0 %v345
        %421 = vmatprep.subr.mxu0 0.0
        %422 = vmatpush1.msra.mxu0 %v346
        %423 = vmatprep.subr.mxu0 0.0
        %424 = vmatpush1.msra.mxu0 %v347
        %425 = vmatprep.subr.mxu0 0.0
        %426 = vmatpush1.msra.mxu0 %v348
        %427 = vmatprep.subr.mxu0 0.0
        %428 = vmatpush1.msra.mxu0 %v349
        %429 = vmatprep.subr.mxu0 0.0
        %430 = vmatpush1.msra.mxu0 %v350
        %431 = vmatprep.subr.mxu0 0.0
        %432 = vmatpush1.msra.mxu0 %v351
        %433 = vmatprep.subr.mxu0 0.0
        %434 = vmatpush1.msra.mxu0 %v352
        %435 = vmatprep.subr.mxu0 0.0
        %436 = vmatpush1.msra.mxu0 %v353
        %437 = vmatprep.subr.mxu0 0.0
        %438 = vmatpush1.msra.mxu0 %v354
        %439 = vmatprep.subr.mxu0 0.0
        %440 = vmatpush1.msra.mxu0 %v355
        %441 = vmatprep.subr.mxu0 0.0
        %442 = vmatpush1.msra.mxu0 %v356
        %443 = vmatprep.subr.mxu0 0.0
        %444 = vmatpush1.msra.mxu0 0.0
        %445 = vmatprep.subr.mxu0 0.0
        %446 = vmatpush1.msra.mxu0 0.0
        %447 = vmatprep.subr.mxu0 0.0
        %448 = vmatpush1.msra.mxu0 0.0
        %449 = vmatprep.subr.mxu0 0.0
        %450 = vmatpush1.msra.mxu0 0.0
        %451 = vmatprep.subr.mxu0 0.0
        %452 = vmatpush1.msra.mxu0 0.0
        %453 = vmatprep.mubr.f32.mxu0 %v366
        %454 = vmatmul.mubr.f32.gmra.mrb[0].mxu0 %v314
        %v455 = vpop.f32.mrb[0].mxu0
        %v456 = vadd.f32 %v362, %v455
        %v457 = vpop.f32.mrb[0].mxu0
        %458 = vmatprep.mubr.f32.mxu0 %v369
        %459 = vmatmul.mubr.f32.gmra.mrb[0].mxu0 %v316
        %v460 = vpop.f32.mrb[0].mxu0
        %v461 = vadd.f32 %v362, %v460
        %v462 = vpop.f32.mrb[0].mxu0
        %463 = vmatprep.mubr.f32.mxu0 %v372
        %464 = vmatmul.mubr.f32.gmra.mrb[0].mxu0 %v318
        %v465 = vpop.f32.mrb[0].mxu0
        %v466 = vadd.f32 %v362, %v465
        %v467 = vpop.f32.mrb[0].mxu0
        %468 = vmatprep.mubr.f32.mxu0 %v375
        %469 = vmatmul.mubr.f32.gmra.mrb[0].mxu0 %v320
        %v470 = vpop.f32.mrb[0].mxu0
        %v471 = vadd.f32 %v362, %v470
        %v472 = vpop.f32.mrb[0].mxu0
        %473 = vmatprep.mubr.f32.mxu0 %v378
        %474 = vmatmul.mubr.f32.gmra.mrb[0].mxu0 %v322
        %v475 = vpop.f32.mrb[0].mxu0
        %v476 = vadd.f32 %v362, %v475
        %v477 = vpop.f32.mrb[0].mxu0
        %478 = vmatprep.mubr.f32.mxu0 %v381
        %479 = vmatmul.mubr.f32.gmra.mrb[0].mxu0 %v324
        %v480 = vpop.f32.mrb[0].mxu0
        %v481 = vadd.f32 %v362, %v480
        %v482 = vpop.f32.mrb[0].mxu0
        %483 = vmatprep.mubr.f32.mxu0 %v384
        %484 = vmatmul.mubr.f32.gmra.mrb[0].mxu0 %v326
        %v485 = vpop.f32.mrb[0].mxu0
        %v486 = vadd.f32 %v362, %v485
        %v487 = vpop.f32.mrb[0].mxu0
        %488 = vmatprep.mubr.f32.mxu0 %v387
        %489 = vmatmul.mubr.f32.gmra.mrb[0].mxu0 %v328
        %v490 = vpop.f32.mrb[0].mxu0
        %v491 = vadd.f32 %v362, %v490
        %v492 = vpop.f32.mrb[0].mxu0
        %493 = vdwg.mxu0
        %vm494 = vcmask 15360
        %v495 = vsel %vm494, %v456, -inf
        %496 = vmax.xlane.f32.xlu0 %v495
        %v497 = vpop.xlane.xlu0 %496
        %v498 = vsel %vm494, %v461, -inf
        %499 = vmax.xlane.f32.xlu0 %v498
        %v500 = vpop.xlane.xlu0 %499
        %v501 = vsel %vm494, %v466, -inf
        %502 = vmax.xlane.f32.xlu0 %v501
        %v503 = vpop.xlane.xlu0 %502
        %v504 = vsel %vm494, %v471, -inf
        %505 = vmax.xlane.f32.xlu0 %v504
        %v506 = vpop.xlane.xlu0 %505
        %v507 = vsel %vm494, %v476, -inf
        %508 = vmax.xlane.f32.xlu0 %v507
        %v509 = vpop.xlane.xlu0 %508
        %v510 = vsel %vm494, %v481, -inf
        %511 = vmax.xlane.f32.xlu0 %v510
        %v512 = vpop.xlane.xlu0 %511
        %v513 = vsel %vm494, %v486, -inf
        %514 = vmax.xlane.f32.xlu0 %v513
        %v515 = vpop.xlane.xlu0 %514
        %v516 = vsel %vm494, %v491, -inf
        %517 = vmax.xlane.f32.xlu0 %v516
        %v518 = vpop.xlane.xlu0 %517
        %v519 = vsub.f32 %v456, %v497
        %v520 = vsub.f32 %v461, %v500
        %v521 = vsub.f32 %v466, %v503
        %v522 = vsub.f32 %v471, %v506
        %v523 = vsub.f32 %v476, %v509
        %v524 = vsub.f32 %v481, %v512
        %v525 = vsub.f32 %v486, %v515
        %v526 = vsub.f32 %v491, %v518
        %v527 = vmul.f32 %v519, 1.442695
        %v528 = vpow.pop %v527
        %v529 = vmul.f32 %v520, 1.442695
        %v530 = vpow.pop %v529
        %v531 = vmul.f32 %v521, 1.442695
        %v532 = vpow.pop %v531
        %v533 = vmul.f32 %v522, 1.442695
        %v534 = vpow.pop %v533
        %v535 = vmul.f32 %v523, 1.442695
        %v536 = vpow.pop %v535
        %v537 = vmul.f32 %v524, 1.442695
        %v538 = vpow.pop %v537
        %v539 = vmul.f32 %v525, 1.442695
        %v540 = vpow.pop %v539
        %v541 = vmul.f32 %v526, 1.442695
        %v542 = vpow.pop %v541
        %v543 = vsel %vm494, %v528, 0.0
        %544 = vadd.xlane.f32.xlu0 %v543
        %v545 = vpop.xlane.xlu0 %544
        %v546 = vsel %vm494, %v530, 0.0
        %547 = vadd.xlane.f32.xlu0 %v546
        %v548 = vpop.xlane.xlu0 %547
        %v549 = vsel %vm494, %v532, 0.0
        %550 = vadd.xlane.f32.xlu0 %v549
        %v551 = vpop.xlane.xlu0 %550
        %v552 = vsel %vm494, %v534, 0.0
        %553 = vadd.xlane.f32.xlu0 %v552
        %v554 = vpop.xlane.xlu0 %553
        %v555 = vsel %vm494, %v536, 0.0
        %556 = vadd.xlane.f32.xlu0 %v555
        %v557 = vpop.xlane.xlu0 %556
        %v558 = vsel %vm494, %v538, 0.0
        %559 = vadd.xlane.f32.xlu0 %v558
        %v560 = vpop.xlane.xlu0 %559
        %v561 = vsel %vm494, %v540, 0.0
        %562 = vadd.xlane.f32.xlu0 %v561
        %v563 = vpop.xlane.xlu0 %562
        %v564 = vsel %vm494, %v542, 0.0
        %565 = vadd.xlane.f32.xlu0 %v564
        %v566 = vpop.xlane.xlu0 %565
        %v567 = vrcp.pop %v545
        %v568 = vmul.f32 %v528, %v567
        %v569 = vrcp.pop %v548
        %v570 = vmul.f32 %v530, %v569
        %v571 = vrcp.pop %v551
        %v572 = vmul.f32 %v532, %v571
        %v573 = vrcp.pop %v554
        %v574 = vmul.f32 %v534, %v573
        %v575 = vrcp.pop %v557
        %v576 = vmul.f32 %v536, %v575
        %v577 = vrcp.pop %v560
        %v578 = vmul.f32 %v538, %v577
        %v579 = vrcp.pop %v563
        %v580 = vmul.f32 %v540, %v579
        %v581 = vrcp.pop %v566
        %v582 = vmul.f32 %v542, %v581
        %v583 = vmul.f32 %v568, 5.0
        %v584 = vmul.f32 %v570, 5.0
        %v585 = vmul.f32 %v572, 5.0
        %v586 = vmul.f32 %v574, 5.0
        %v587 = vmul.f32 %v576, 5.0
        %v588 = vmul.f32 %v578, 5.0
        %v589 = vmul.f32 %v580, 5.0
        %v590 = vmul.f32 %v582, 5.0
        %v591 = vsel %vm494, %v583, -inf
        %592 = vmax.xlane.f32.xlu0 %v591
        %v593 = vpop.xlane.xlu0 %592
        %v594 = vsel %vm494, %v584, -inf
        %595 = vmax.xlane.f32.xlu0 %v594
        %v596 = vpop.xlane.xlu0 %595
        %v597 = vsel %vm494, %v585, -inf
        %598 = vmax.xlane.f32.xlu0 %v597
        %v599 = vpop.xlane.xlu0 %598
        %v600 = vsel %vm494, %v586, -inf
        %601 = vmax.xlane.f32.xlu0 %v600
        %v602 = vpop.xlane.xlu0 %601
        %v603 = vsel %vm494, %v587, -inf
        %604 = vmax.xlane.f32.xlu0 %v603
        %v605 = vpop.xlane.xlu0 %604
        %v606 = vsel %vm494, %v588, -inf
        %607 = vmax.xlane.f32.xlu0 %v606
        %v608 = vpop.xlane.xlu0 %607
        %v609 = vsel %vm494, %v589, -inf
        %610 = vmax.xlane.f32.xlu0 %v609
        %v611 = vpop.xlane.xlu0 %610
        %v612 = vsel %vm494, %v590, -inf
        %613 = vmax.xlane.f32.xlu0 %v612
        %v614 = vpop.xlane.xlu0 %613
        %v615 = vsub.f32 %v583, %v593
        %v616 = vsub.f32 %v584, %v596
        %v617 = vsub.f32 %v585, %v599
        %v618 = vsub.f32 %v586, %v602
        %v619 = vsub.f32 %v587, %v605
        %v620 = vsub.f32 %v588, %v608
        %v621 = vsub.f32 %v589, %v611
        %v622 = vsub.f32 %v590, %v614
        %v623 = vmul.f32 %v615, 1.442695
        %v624 = vpow.pop %v623
        %v625 = vmul.f32 %v616, 1.442695
        %v626 = vpow.pop %v625
        %v627 = vmul.f32 %v617, 1.442695
        %v628 = vpow.pop %v627
        %v629 = vmul.f32 %v618, 1.442695
        %v630 = vpow.pop %v629
        %v631 = vmul.f32 %v619, 1.442695
        %v632 = vpow.pop %v631
        %v633 = vmul.f32 %v620, 1.442695
        %v634 = vpow.pop %v633
        %v635 = vmul.f32 %v621, 1.442695
        %v636 = vpow.pop %v635
        %v637 = vmul.f32 %v622, 1.442695
        %v638 = vpow.pop %v637
        %v639 = vsel %vm494, %v624, 0.0
        %640 = vadd.xlane.f32.xlu0 %v639
        %v641 = vpop.xlane.xlu0 %640
        %v642 = vsel %vm494, %v626, 0.0
        %643 = vadd.xlane.f32.xlu0 %v642
        %v644 = vpop.xlane.xlu0 %643
        %v645 = vsel %vm494, %v628, 0.0
        %646 = vadd.xlane.f32.xlu0 %v645
        %v647 = vpop.xlane.xlu0 %646
        %v648 = vsel %vm494, %v630, 0.0
        %649 = vadd.xlane.f32.xlu0 %v648
        %v650 = vpop.xlane.xlu0 %649
        %v651 = vsel %vm494, %v632, 0.0
        %652 = vadd.xlane.f32.xlu0 %v651
        %v653 = vpop.xlane.xlu0 %652
        %v654 = vsel %vm494, %v634, 0.0
        %655 = vadd.xlane.f32.xlu0 %v654
        %v656 = vpop.xlane.xlu0 %655
        %v657 = vsel %vm494, %v636, 0.0
        %658 = vadd.xlane.f32.xlu0 %v657
        %v659 = vpop.xlane.xlu0 %658
        %v660 = vsel %vm494, %v638, 0.0
        %661 = vadd.xlane.f32.xlu0 %v660
        %v662 = vpop.xlane.xlu0 %661
        %v663 = vrcp.pop %v641
        %v664 = vmul.f32 %v624, %v663
        %v665 = vrcp.pop %v644
        %v666 = vmul.f32 %v626, %v665
        %v667 = vrcp.pop %v647
        %v668 = vmul.f32 %v628, %v667
        %v669 = vrcp.pop %v650
        %v670 = vmul.f32 %v630, %v669
        %v671 = vrcp.pop %v653
        %v672 = vmul.f32 %v632, %v671
        %v673 = vrcp.pop %v656
        %v674 = vmul.f32 %v634, %v673
        %v675 = vrcp.pop %v659
        %v676 = vmul.f32 %v636, %v675
        %v677 = vrcp.pop %v662
        %v678 = vmul.f32 %v638, %v677
        %679 = vst.msk [vmem:[%s312] sm:$0xff] %vm494, %v664
        %680 = vst.msk [vmem:[%s312 + $0x8] sm:$0xff] %vm494, %v666
        %681 = vst.msk [vmem:[%s312 + $0x10] sm:$0xff] %vm494, %v668
        %682 = vst.msk [vmem:[%s312 + $0x18] sm:$0xff] %vm494, %v670
        %683 = vst.msk [vmem:[%s312 + $0x20] sm:$0xff] %vm494, %v672
        %684 = vst.msk [vmem:[%s312 + $0x28] sm:$0xff] %vm494, %v674
        %685 = vst.msk [vmem:[%s312 + $0x30] sm:$0xff] %vm494, %v676
        %686 = vst.msk [vmem:[%s312 + $0x38] sm:$0xff] %vm494, %v678
        %v687 = vld [vmem:[%s299] sm:$0xff]
        %v688 = vld [vmem:[%s299 + $0x8] sm:$0xff]
        %v689 = vld [vmem:[%s299 + $0x10] sm:$0xff]
        %v690 = vld [vmem:[%s299 + $0x18] sm:$0xff]
        %v691 = vld [vmem:[%s299 + $0x20] sm:$0xff]
        %v692 = vld [vmem:[%s299 + $0x28] sm:$0xff]
        %v693 = vld [vmem:[%s299 + $0x30] sm:$0xff]
        %v694 = vld [vmem:[%s299 + $0x38] sm:$0xff]
        %696 = vset.pattern.permute.xlu0 1
        %697 = vperm.xlu0 %696, %v568
        %v698 = vpop.permute.xlu0 %697
        %701 = vset.pattern.permute.xlu0 1
        %702 = vperm.xlu0 %701, %v570
        %v703 = vpop.permute.xlu0 %702
        %706 = vset.pattern.permute.xlu0 1
        %707 = vperm.xlu0 %706, %v572
        %v708 = vpop.permute.xlu0 %707
        %711 = vset.pattern.permute.xlu0 1
        %712 = vperm.xlu0 %711, %v574
        %v713 = vpop.permute.xlu0 %712
        %716 = vset.pattern.permute.xlu0 1
        %717 = vperm.xlu0 %716, %v576
        %v718 = vpop.permute.xlu0 %717
        %721 = vset.pattern.permute.xlu0 1
        %722 = vperm.xlu0 %721, %v578
        %v723 = vpop.permute.xlu0 %722
        %726 = vset.pattern.permute.xlu0 1
        %727 = vperm.xlu0 %726, %v580
        %v728 = vpop.permute.xlu0 %727
        %731 = vset.pattern.permute.xlu0 1
        %732 = vperm.xlu0 %731, %v582
        %v733 = vpop.permute.xlu0 %732
        %v735 = vmul.f32 %v687, %v698
        %v736 = vmul.f32 %v688, %v703
        %v737 = vmul.f32 %v689, %v708
        %v738 = vmul.f32 %v690, %v713
        %v739 = vmul.f32 %v691, %v718
        %v740 = vmul.f32 %v692, %v723
        %v741 = vmul.f32 %v693, %v728
        %v742 = vmul.f32 %v694, %v733
        %v743 = vld [vmem:[%s305] sm:$0xff]
        %v744 = vld [vmem:[%s305 + $0x8] sm:$0xff]
        %v745 = vld [vmem:[%s305 + $0x10] sm:$0xff]
        %v746 = vld [vmem:[%s305 + $0x18] sm:$0xff]
        %v747 = vld [vmem:[%s305 + $0x20] sm:$0xff]
        %v748 = vld [vmem:[%s305 + $0x28] sm:$0xff]
        %v749 = vld [vmem:[%s305 + $0x30] sm:$0xff]
        %v750 = vld [vmem:[%s305 + $0x38] sm:$0xff]
        %751 = vset.pattern.permute.xlu0 0
        %752 = vperm.xlu0 %751, %v568
        %v753 = vpop.permute.xlu0 %752
        %755 = vset.pattern.permute.xlu0 0
        %756 = vperm.xlu0 %755, %v570
        %v757 = vpop.permute.xlu0 %756
        %759 = vset.pattern.permute.xlu0 0
        %760 = vperm.xlu0 %759, %v572
        %v761 = vpop.permute.xlu0 %760
        %763 = vset.pattern.permute.xlu0 0
        %764 = vperm.xlu0 %763, %v574
        %v765 = vpop.permute.xlu0 %764
        %767 = vset.pattern.permute.xlu0 0
        %768 = vperm.xlu0 %767, %v576
        %v769 = vpop.permute.xlu0 %768
        %771 = vset.pattern.permute.xlu0 0
        %772 = vperm.xlu0 %771, %v578
        %v773 = vpop.permute.xlu0 %772
        %775 = vset.pattern.permute.xlu0 0
        %776 = vperm.xlu0 %775, %v580
        %v777 = vpop.permute.xlu0 %776
        %779 = vset.pattern.permute.xlu0 0
        %780 = vperm.xlu0 %779, %v582
        %v781 = vpop.permute.xlu0 %780
        %v783 = vmul.f32 %v743, %v753
        %v784 = vmul.f32 %v744, %v757
        %v785 = vmul.f32 %v745, %v761
        %v786 = vmul.f32 %v746, %v765
        %v787 = vmul.f32 %v747, %v769
        %v788 = vmul.f32 %v748, %v773
        %v789 = vmul.f32 %v749, %v777
        %v790 = vmul.f32 %v750, %v781
        %v791 = vadd.f32 %v735, %v783
        %v792 = vadd.f32 %v736, %v784
        %v793 = vadd.f32 %v737, %v785
        %v794 = vadd.f32 %v738, %v786
        %v795 = vadd.f32 %v739, %v787
        %v796 = vadd.f32 %v740, %v788
        %v797 = vadd.f32 %v741, %v789
        %v798 = vadd.f32 %v742, %v790
        %vm799 = vcmask 195584
        %800 = vst.msk [vmem:[%s280] sm:$0xff] %vm799, %v791
        %801 = vst.msk [vmem:[%s280 + $0x8] sm:$0xff] %vm799, %v792
        %802 = vst.msk [vmem:[%s280 + $0x10] sm:$0xff] %vm799, %v793
        %803 = vst.msk [vmem:[%s280 + $0x18] sm:$0xff] %vm799, %v794
        %804 = vst.msk [vmem:[%s280 + $0x20] sm:$0xff] %vm799, %v795
        %805 = vst.msk [vmem:[%s280 + $0x28] sm:$0xff] %vm799, %v796
        %806 = vst.msk [vmem:[%s280 + $0x30] sm:$0xff] %vm799, %v797
        %807 = vst.msk [vmem:[%s280 + $0x38] sm:$0xff] %vm799, %v798
        %s808 = sand.u32 %s149, 1
        %s809 = scalar_lea.sflag [#allocation3], %s808
        %s810 = sand.u32 %s149, 1
        %s811 = smul.addr %s810, 64
        %s812 = scalar_lea.vmem [#allocation2], %s811
        %s813 = smul.u32 8, %s21
        %p814 = scmp.lt.s32.totalorder %s813, 15
        %s815 = scalar_select %p814, %s813, 15
        %s816 = smul.addr %s815, 8
        %s817 = scalar_lea.vmem %s6, %s816
        // Predicated region
        $region41: #{mask_fuse_forward.19} parent=39 // pred_check
          %p818 = pneg %p159
        $region42: #{mask_fuse_forward.19} parent=39 // pred_check_branch
          %820 = sbr.rel (%p818) target = $region44
        $region43: #{mask_fuse_forward.19} parent=39 // pred_region
          %s821 = smul.u32 8, %s21
          %s823 = ssub.s32 1024, 1024
          %824 = vsyncadd %s809, %s823
          %s825 = smul.addr %s821, 128
          %s826 = scalar_lea.hbm %s5, %s825
          %s827 = sshll.u32 %s812, 4
          %s828 = int_to_ptr.vmem [resolvable:$true] %s827
          %833 = dma.vmem_to_hbm [thread:$0]  %s828, 1024, %s826, %s809, 128, 128, 8
        $region44: #{mask_fuse_forward.19} parent=39 // pred_fallthru
          _
        // Predicated region
        $region45: #{mask_fuse_forward.19} parent=39 // pred_check
          %p834 = pneg %p185
        $region46: #{mask_fuse_forward.19} parent=39 // pred_check_branch
          %836 = sbr.rel (%p834) target = $region48
        $region47: #{mask_fuse_forward.19} parent=39 // pred_region
          %s837 = smul.u32 8, %s21
        $region48: #{mask_fuse_forward.19} parent=39 // pred_fallthru
          _
      $region40: #{mask_fuse_forward.19} parent=5 // pred_fallthru
        _
      %p838 = scmp.le.s32.totalorder 2, %s16
      // Predicated region
      $region49: #{mask_fuse_forward.19} parent=5 // pred_check
        %p839 = pneg %p838
      $region50: #{mask_fuse_forward.19} parent=5 // pred_check_branch
        %841 = sbr.rel (%p839) target = $region52
      $region51: #{mask_fuse_forward.19} parent=5 // pred_region
        %s842 = ssub.s32 %s16, 2
        // Predicated region
        $region53: #{mask_fuse_forward.19} parent=51 // pred_check
          %p843 = pneg %p165
        $region54: #{mask_fuse_forward.19} parent=51 // pred_check_branch
          %845 = sbr.rel (%p843) target = $region56
        $region55: #{mask_fuse_forward.19} parent=51 // pred_region
          %s846 = sand.u32 %s150, 1
          %s847 = scalar_lea.sflag [#allocation3], %s846
          %s848 = sand.u32 %s150, 1
          %s849 = smul.addr %s848, 64
          %s850 = scalar_lea.vmem [#allocation2], %s849
          %851 = dma.done %s847, 1024
        $region56: #{mask_fuse_forward.19} parent=51 // pred_fallthru
          _
        // Predicated region
        $region57: #{mask_fuse_forward.19} parent=51 // pred_check
          %p852 = pneg %p191
        $region58: #{mask_fuse_forward.19} parent=51 // pred_check_branch
          %854 = sbr.rel (%p852) target = $region60
        $region59: #{mask_fuse_forward.19} parent=51 // pred_region
          %s855 = smul.u32 8, %s22
          %p856 = scmp.lt.s32.totalorder %s855, 15
          %s857 = scalar_select %p856, %s855, 15
          %s858 = smul.addr %s857, 8
          %s859 = scalar_lea.vmem %s6, %s858
        $region60: #{mask_fuse_forward.19} parent=51 // pred_fallthru
          _
      $region52: #{mask_fuse_forward.19} parent=5 // pred_fallthru
        _
    $region6: #{mask_fuse_forward.19} parent=1 // loop_footer
      %s20 = sadd.s32 1, %s16
    $region7: #{mask_fuse_forward.19} parent=1 // loop_footer_branch
      %15 = sbr.rel target = $region3
    $region8: #{mask_fuse_forward.19} parent=1 // loop_exit
      _
    %860 = vsyncpa [#allocation3], 1
    %s861 = scalar_lea.sflag [#allocation3], 1
    %862 = vsyncpa %s861, 1

</llo_original>
